<compile_context>
chip_gen: v6e
topology: v6e:2x2x1
jax: 0.10.0
libtpu: 0.0.40
codegen_flags: <defaults>
</compile_context>

<pallas_src>
import functools
import math

import jax
import jax.numpy as jnp
from jax import lax
from jax.experimental import pallas as pl
from jax.experimental.pallas import tpu as pltpu


# ----------------------------------------------------------------------------
# VGG16 `features` layer configuration (torchvision ordering, indices 0..30).
# ----------------------------------------------------------------------------
VGG16_FEATURES_CFG = [
    ("conv", 3, 64), ("relu",), ("conv", 64, 64), ("relu",), ("pool",),
    ("conv", 64, 128), ("relu",), ("conv", 128, 128), ("relu",), ("pool",),
    ("conv", 128, 256), ("relu",), ("conv", 256, 256), ("relu",),
    ("conv", 256, 256), ("relu",), ("pool",),
    ("conv", 256, 512), ("relu",), ("conv", 512, 512), ("relu",),
    ("conv", 512, 512), ("relu",), ("pool",),
    ("conv", 512, 512), ("relu",), ("conv", 512, 512), ("relu",),
    ("conv", 512, 512), ("relu",), ("pool",),
]

# Safe on v5e/v6e (128 MiB physical) and v7x (64 MiB physical), above the 32 MiB
# scoped default so larger tiles do not hit the default ceiling.
_VMEM_LIMIT_BYTES = 48 * 1024 * 1024


def _pick_tile(dim, max_tile, quantum):
    """Largest tile <= max_tile dividing dim; prefer multiples of `quantum`."""
    if dim <= max_tile:
        return dim
    for t in range(max_tile, 0, -1):
        if dim % t == 0 and t % quantum == 0:
            return t
    return dim  # fallback: whole dim


# ----------------------------------------------------------------------------
# Pallas kernels
# ----------------------------------------------------------------------------
def _conv3x3_kernel(x_ref, w_ref, b_ref, o_ref, acc_ref, *, TH, W, relu):
    # x_ref : (1, H+2, W+2, Cin) bf16  SAME-padded image (resident across r/c tiles)
    # w_ref : (3, 3*Cin, TCout) bf16   per-ky weight slabs, kx-major over K
    # b_ref : (1, TCout) f32
    # o_ref : (1, TH, W, TCout) bf16
    # acc_ref: (TH*W, TCout) f32 VMEM scratch accumulator
    Cin = x_ref.shape[3]
    TC = o_ref.shape[3]
    r = pl.program_id(1)
    row0 = pl.multiple_of(r * TH, TH)
    slab = x_ref[0, pl.ds(row0, TH + 2), :, :]            # (TH+2, W+2, Cin) bf16
    # Pack the 3 width taps once per row tile (im2col over kx only):
    # cols[y, x, kx*Cin + ci] = xpad[row0+y, x+kx, ci]
    cols = jnp.concatenate([slab[:, kx:kx + W, :] for kx in range(3)], axis=-1)
    for ky in range(3):
        lhs = cols[ky:ky + TH].reshape(TH * W, 3 * Cin)   # bf16 MXU operand
        part = jnp.dot(lhs, w_ref[ky], preferred_element_type=jnp.float32)
        if ky == 0:
            acc_ref[...] = part
        else:
            acc_ref[...] = acc_ref[...] + part
    y = acc_ref[...] + b_ref[...]                          # f32 bias add
    if relu:
        y = jnp.maximum(y, 0.0)
    o_ref[...] = y.reshape(1, TH, W, TC).astype(o_ref.dtype)


def conv3x3(x, w, b, *, relu=False):
    # x: (N, H, W, Cin) f32/bf16; w: (3, 3*Cin, Cout) bf16; b: (1, Cout) f32
    N, H, W, Cin = x.shape
    Cout = w.shape[-1]
    TH = _pick_tile(H, 16, 8)          # row tile
    TC = _pick_tile(Cout, 256, 128)    # output-channel tile
    # SAME pad fused with the bf16 cast (one activation pass, half the bytes).
    xp = jnp.pad(x, ((0, 0), (1, 1), (1, 1), (0, 0))).astype(jnp.bfloat16)
    kern = functools.partial(_conv3x3_kernel, TH=TH, W=W, relu=relu)
    return pl.pallas_call(
        kern,
        out_shape=jax.ShapeDtypeStruct((N, H, W, Cout), jnp.bfloat16),
        grid=(N, H // TH, Cout // TC),
        in_specs=[
            pl.BlockSpec((1, H + 2, W + 2, Cin), lambda n, r, c: (n, 0, 0, 0)),
            pl.BlockSpec((3, 3 * Cin, TC), lambda n, r, c: (0, 0, c)),
            pl.BlockSpec((1, TC), lambda n, r, c: (0, c)),
        ],
        out_specs=pl.BlockSpec((1, TH, W, TC), lambda n, r, c: (n, r, 0, c)),
        scratch_shapes=[pltpu.VMEM((TH * W, TC), jnp.float32)],
        compiler_params=pltpu.CompilerParams(
            dimension_semantics=("parallel", "parallel", "parallel"),
            vmem_limit_bytes=_VMEM_LIMIT_BYTES),
    )(xp, w, b)


def _relu_kernel(x_ref, o_ref):
    o_ref[...] = jnp.maximum(x_ref[...], 0.0).astype(o_ref.dtype)


def relu(x):
    # Tiled, lane-dense elementwise ReLU (only used for convs whose pre-ReLU
    # output is collected; otherwise ReLU is fused into the conv kernel).
    shape = x.shape
    C = shape[-1]
    M = x.size // C
    xf = x.reshape(M, C)
    TR = _pick_tile(M, 1024, 8)
    y = pl.pallas_call(
        _relu_kernel,
        out_shape=jax.ShapeDtypeStruct((M, C), x.dtype),
        grid=(M // TR,),
        in_specs=[pl.BlockSpec((TR, C), lambda i: (i, 0))],
        out_specs=pl.BlockSpec((TR, C), lambda i: (i, 0)),
        compiler_params=pltpu.CompilerParams(
            dimension_semantics=("parallel",)),
    )(xf)
    return y.reshape(shape)


def _maxpool2x2_kernel(x_ref, o_ref):
    # x_ref: (1, TH, 2, Wh, 2*C); o_ref: (1, TH, Wh, C)
    C = o_ref.shape[-1]
    x = x_ref[0]                                  # (TH, 2, Wh, 2C)
    y = jnp.maximum(x[:, 0], x[:, 1])             # pool over height pairs
    o_ref[0] = jnp.maximum(y[..., :C], y[..., C:])  # pool over width pairs (lane halves)


def maxpool2x2(x):
    N, H, W, C = x.shape
    Hh, Wh = H // 2, W // 2
    # Lane-dense layout: last dim holds (dx=0 channels, dx=1 channels) = 2*C lanes.
    xr = x.reshape(N, Hh, 2, Wh, 2 * C)           # glue: contiguous reshape
    TH = _pick_tile(Hh, 32, 8)
    return pl.pallas_call(
        _maxpool2x2_kernel,
        out_shape=jax.ShapeDtypeStruct((N, Hh, Wh, C), x.dtype),
        grid=(N, Hh // TH),
        in_specs=[pl.BlockSpec((1, TH, 2, Wh, 2 * C),
                               lambda n, r: (n, r, 0, 0, 0))],
        out_specs=pl.BlockSpec((1, TH, Wh, C), lambda n, r: (n, r, 0, 0)),
        compiler_params=pltpu.CompilerParams(
            dimension_semantics=("parallel", "parallel"),
            vmem_limit_bytes=_VMEM_LIMIT_BYTES),
    )(xr)


def _absmean_kernel(a_ref, b_ref, o_ref, *, inv_n):
    c = pl.program_id(0)
    d = jnp.abs(a_ref[...].astype(jnp.float32) - b_ref[...].astype(jnp.float32))
    part = jnp.sum(d, axis=1, keepdims=True)      # (N, 1) f32 partial sum

    @pl.when(c == 0)
    def _():
        o_ref[...] = jnp.zeros_like(o_ref)

    o_ref[...] = o_ref[...] + part

    @pl.when(c == pl.num_programs(0) - 1)
    def _():
        o_ref[...] = o_ref[...] * jnp.float32(inv_n)


def per_sample_abs_mean(a, b):
    # torch.abs(a - b).view(N, -1).mean(1), returned as (N, 1) f32.
    N = a.shape[0]
    F = a.size // N
    af = a.reshape(N, F)
    bf = b.reshape(N, F)
    TF = _pick_tile(F, 8192, 128)
    kern = functools.partial(_absmean_kernel, inv_n=1.0 / F)
    return pl.pallas_call(
        kern,
        out_shape=jax.ShapeDtypeStruct((N, 1), jnp.float32),
        grid=(F // TF,),
        in_specs=[pl.BlockSpec((N, TF), lambda c: (0, c)),
                  pl.BlockSpec((N, TF), lambda c: (0, c))],
        out_specs=pl.BlockSpec((N, 1), lambda c: (0, 0)),
        compiler_params=pltpu.CompilerParams(
            dimension_semantics=("arbitrary",)),
    )(af, bf)


# ----------------------------------------------------------------------------
# Module logic (NetVGGFeatures + VGGDistance forward)
# ----------------------------------------------------------------------------
def init_vgg_params(key, last_layer):
    params = {}
    for i, layer in enumerate(VGG16_FEATURES_CFG[: last_layer + 1]):
        if layer[0] == "conv":
            _, cin, cout = layer
            kw, kb = jax.random.split(jax.random.fold_in(key, i))
            w = jax.random.normal(kw, (3, 3, cin, cout), jnp.float32) / math.sqrt(9 * cin)
            b = 0.01 * jax.random.normal(kb, (1, cout), jnp.float32)
            params[i] = (w, b)
    return params


def _prep_params(params):
    # HWIO f32 (3,3,Cin,Cout) -> (3, 3*Cin, Cout) bf16 slabs (kx-major K ordering)
    # matching the in-kernel width-tap im2col; bias stays f32.
    out = {}
    for i, (w, b) in params.items():
        kh, kw, cin, cout = w.shape
        out[i] = (w.reshape(kh, kw * cin, cout).astype(jnp.bfloat16),
                  b.astype(jnp.float32))
    return out


def vgg_features(x, kparams, layer_ids):
    # Mirrors NetVGGFeatures.forward.  ReLU is fused into the preceding conv
    # unless the pre-ReLU conv output itself is collected in layer_ids.
    feats = []
    last = layer_ids[-1]
    i = 0
    while i <= last:
        layer = VGG16_FEATURES_CFG[i]
        if layer[0] == "conv":
            w, b = kparams[i]
            nxt_is_relu = (i + 1 < len(VGG16_FEATURES_CFG)
                           and VGG16_FEATURES_CFG[i + 1][0] == "relu")
            fuse = nxt_is_relu and (i not in layer_ids) and (i + 1 <= last)
            x = conv3x3(x, w, b, relu=fuse)
            if i in layer_ids:
                feats.append(x)
            if fuse:
                i += 1                         # the ReLU layer was consumed
                if i in layer_ids:
                    feats.append(x)            # post-ReLU output == fused output
            i += 1
            continue
        elif layer[0] == "relu":
            x = relu(x)
        else:
            x = maxpool2x2(x)
        if i in layer_ids:
            feats.append(x)
        i += 1
    return feats


def vgg_distance(I1_nchw, I2_nchw, params, layer_ids):
    # Mirrors VGGDistance.forward (inputs are NCHW like PyTorch).
    if I1_nchw.shape[1] == 1:
        I1_nchw = jnp.repeat(I1_nchw, 3, axis=1)
        I2_nchw = jnp.repeat(I2_nchw, 3, axis=1)
    I1 = jnp.transpose(I1_nchw, (0, 2, 3, 1))     # glue: NCHW -> NHWC
    I2 = jnp.transpose(I2_nchw, (0, 2, 3, 1))

    kparams = _prep_params(params)
    f1 = vgg_features(I1, kparams, layer_ids)
    f2 = vgg_features(I2, kparams, layer_ids)

    loss = per_sample_abs_mean(I1, I2)            # (N, 1), f32 on raw images
    for a, b in zip(f1, f2):
        loss = loss + per_sample_abs_mean(a, b)
    return jnp.mean(loss)


# ----------------------------------------------------------------------------
# Pure-JAX reference (f32, for correctness check only)
# ----------------------------------------------------------------------------
def _conv3x3_ref(x, w, b):
    y = lax.conv_general_dilated(
        x, w, window_strides=(1, 1), padding="SAME",
        dimension_numbers=("NHWC", "HWIO", "NHWC"),
        precision=lax.Precision.HIGHEST)
    return y + b.reshape(1, 1, 1, -1)


def _maxpool_ref(x):
    N, H, W, C = x.shape
    return x.reshape(N, H // 2, 2, W // 2, 2, C).max(axis=(2, 4))


def vgg_distance_ref(I1_nchw, I2_nchw, params, layer_ids):
    if I1_nchw.shape[1] == 1:
        I1_nchw = jnp.repeat(I1_nchw, 3, axis=1)
        I2_nchw = jnp.repeat(I2_nchw, 3, axis=1)
    I1 = jnp.transpose(I1_nchw, (0, 2, 3, 1))
    I2 = jnp.transpose(I2_nchw, (0, 2, 3, 1))

    def feats(x):
        out = []
        for i in range(layer_ids[-1] + 1):
            layer = VGG16_FEATURES_CFG[i]
            if layer[0] == "conv":
                w, b = params[i]
                x = _conv3x3_ref(x, w, b)
            elif layer[0] == "relu":
                x = jnp.maximum(x, 0.0)
            else:
                x = _maxpool_ref(x)
            if i in layer_ids:
                out.append(x)
        return out

    f1, f2 = feats(I1), feats(I2)
    N = I1.shape[0]
    loss = jnp.mean(jnp.abs(I1 - I2).reshape(N, -1), axis=1)
    for a, b in zip(f1, f2):
        loss = loss + jnp.mean(jnp.abs(a.astype(jnp.float32)
                                       - b.astype(jnp.float32)).reshape(N, -1), axis=1)
    return jnp.mean(loss)


# ----------------------------------------------------------------------------
# Main
# ----------------------------------------------------------------------------
if __name__ == "__main__":
    # layer_ids (constructor argument of VGGDistance): conv outputs at
    # torchvision feature indices 2 and 7 (collected pre-ReLU -> no fusion there).
    layer_ids = (2, 7)

    key = jax.random.PRNGKey(0)
    kp, k1, k2 = jax.random.split(key, 3)
    params = init_vgg_params(kp, layer_ids[-1])

    # PyTorch-style NCHW inputs (small demo shapes).
    I1 = jax.random.uniform(k1, (2, 3, 16, 16), jnp.float32)
    I2 = jax.random.uniform(k2, (2, 3, 16, 16), jnp.float32)

    run = jax.jit(functools.partial(vgg_distance, layer_ids=layer_ids))
    out = jax.block_until_ready(run(I1, I2, params))

    ref = vgg_distance_ref(I1, I2, params, layer_ids)
    assert out.shape == () and bool(jnp.isfinite(out)), out
    # bf16 MXU operands / bf16 trunk activations with f32 accumulation.
    assert jnp.allclose(out, ref, rtol=2e-2, atol=1e-3), (out, ref)
    print("KERNEL_OK")
</pallas_src>

<mosaic_0001>
module attributes {stable_mosaic.version = 11 : i64} {
  func.func @_conv3x3_kernel(%arg0: i32, %arg1: i32, %arg2: i32, %arg3: memref<1x18x18x3xbf16, #tpu.memory_space<vmem>>, %arg4: memref<3x9x64xbf16, #tpu.memory_space<vmem>>, %arg5: memref<1x64xf32, #tpu.memory_space<vmem>>, %arg6: memref<1x16x16x64xbf16, #tpu.memory_space<vmem>>, %arg7: memref<256x64xf32, #tpu.memory_space<vmem>>) attributes {dimension_semantics = [#tpu.dimension_semantics<parallel>, #tpu.dimension_semantics<parallel>, #tpu.dimension_semantics<parallel>], iteration_bounds = array<i64: 2, 1, 1>, scalar_prefetch = 0 : i64, scratch_operands = 1 : i64, tpu.core_type = #tpu.core_type<tc>, window_params = [{transform_indices = @transform_0, window_bounds = array<i64: 1, 18, 18, 3>}, {transform_indices = @transform_1, window_bounds = array<i64: 3, 9, 64>}, {transform_indices = @transform_2, window_bounds = array<i64: 1, 64>}, {transform_indices = @transform_3, window_bounds = array<i64: 1, 16, 16, 64>}]} {
    %c16_i32 = arith.constant 16 : i32
    %0 = arith.muli %arg1, %c16_i32 : i32
    %1 = tpu.assume_multiple %0, 16 : i32
    %c0 = arith.constant 0 : index
    %2 = arith.index_cast %1 : i32 to index
    %c0_0 = arith.constant 0 : index
    %c0_1 = arith.constant 0 : index
    %3 = vector.load %arg3[%c0, %2, %c0_0, %c0_1] : memref<1x18x18x3xbf16, #tpu.memory_space<vmem>>, vector<1x18x18x3xbf16>
    %4 = vector.shape_cast %3 : vector<1x18x18x3xbf16> to vector<18x18x3xbf16>
    %5 = vector.extract_strided_slice %4 {offsets = [0, 0, 0], sizes = [18, 16, 3], strides = [1, 1, 1]} : vector<18x18x3xbf16> to vector<18x16x3xbf16>
    %6 = vector.extract_strided_slice %4 {offsets = [0, 1, 0], sizes = [18, 16, 3], strides = [1, 1, 1]} : vector<18x18x3xbf16> to vector<18x16x3xbf16>
    %7 = vector.extract_strided_slice %4 {offsets = [0, 2, 0], sizes = [18, 16, 3], strides = [1, 1, 1]} : vector<18x18x3xbf16> to vector<18x16x3xbf16>
    %8 = tpu.concatenate %5, %6, %7 in 2 : vector<18x16x3xbf16>, vector<18x16x3xbf16>, vector<18x16x3xbf16> -> vector<18x16x9xbf16>
    %9 = vector.extract_strided_slice %8 {offsets = [0, 0, 0], sizes = [16, 16, 9], strides = [1, 1, 1]} : vector<18x16x9xbf16> to vector<16x16x9xbf16>
    %10 = vector.shape_cast %9 : vector<16x16x9xbf16> to vector<256x9xbf16>
    %c0_2 = arith.constant 0 : index
    %c0_3 = arith.constant 0 : index
    %c0_4 = arith.constant 0 : index
    %11 = vector.load %arg4[%c0_2, %c0_3, %c0_4] : memref<3x9x64xbf16, #tpu.memory_space<vmem>>, vector<1x9x64xbf16>
    %12 = vector.shape_cast %11 : vector<1x9x64xbf16> to vector<9x64xbf16>
    %cst = arith.constant dense<0.000000e+00> : vector<256x64xf32>
    %13 = tpu.matmul %10, %12, %cst {dimension_numbers = #tpu.dot_dimension_numbers<[1], [0], [0], [1], [0, 0, 1, 1], [], []>} : vector<256x9xbf16>, vector<9x64xbf16>, vector<256x64xf32> -> vector<256x64xf32>
    %c0_5 = arith.constant 0 : index
    %c0_6 = arith.constant 0 : index
    %14 = vector.load %arg7[%c0_5, %c0_6] : memref<256x64xf32, #tpu.memory_space<vmem>>, vector<256x64xf32>
    tpu.vector_store %arg7[%c0_5, %c0_6], %13 {strides = array<i32>} : memref<256x64xf32, #tpu.memory_space<vmem>>, vector<256x64xf32>,
    %15 = vector.extract_strided_slice %8 {offsets = [1, 0, 0], sizes = [16, 16, 9], strides = [1, 1, 1]} : vector<18x16x9xbf16> to vector<16x16x9xbf16>
    %16 = vector.shape_cast %15 : vector<16x16x9xbf16> to vector<256x9xbf16>
    %c1 = arith.constant 1 : index
    %c0_7 = arith.constant 0 : index
    %c0_8 = arith.constant 0 : index
    %17 = vector.load %arg4[%c1, %c0_7, %c0_8] : memref<3x9x64xbf16, #tpu.memory_space<vmem>>, vector<1x9x64xbf16>
    %18 = vector.shape_cast %17 : vector<1x9x64xbf16> to vector<9x64xbf16>
    %cst_9 = arith.constant dense<0.000000e+00> : vector<256x64xf32>
    %19 = tpu.matmul %16, %18, %cst_9 {dimension_numbers = #tpu.dot_dimension_numbers<[1], [0], [0], [1], [0, 0, 1, 1], [], []>} : vector<256x9xbf16>, vector<9x64xbf16>, vector<256x64xf32> -> vector<256x64xf32>
    %c0_10 = arith.constant 0 : index
    %c0_11 = arith.constant 0 : index
    %20 = vector.load %arg7[%c0_10, %c0_11] : memref<256x64xf32, #tpu.memory_space<vmem>>, vector<256x64xf32>
    %21 = arith.addf %20, %19 : vector<256x64xf32>
    %c0_12 = arith.constant 0 : index
    %c0_13 = arith.constant 0 : index
    %22 = vector.load %arg7[%c0_12, %c0_13] : memref<256x64xf32, #tpu.memory_space<vmem>>, vector<256x64xf32>
    tpu.vector_store %arg7[%c0_12, %c0_13], %21 {strides = array<i32>} : memref<256x64xf32, #tpu.memory_space<vmem>>, vector<256x64xf32>,
    %23 = vector.extract_strided_slice %8 {offsets = [2, 0, 0], sizes = [16, 16, 9], strides = [1, 1, 1]} : vector<18x16x9xbf16> to vector<16x16x9xbf16>
    %24 = vector.shape_cast %23 : vector<16x16x9xbf16> to vector<256x9xbf16>
    %c2 = arith.constant 2 : index
    %c0_14 = arith.constant 0 : index
    %c0_15 = arith.constant 0 : index
    %25 = vector.load %arg4[%c2, %c0_14, %c0_15] : memref<3x9x64xbf16, #tpu.memory_space<vmem>>, vector<1x9x64xbf16>
    %26 = vector.shape_cast %25 : vector<1x9x64xbf16> to vector<9x64xbf16>
    %cst_16 = arith.constant dense<0.000000e+00> : vector<256x64xf32>
    %27 = tpu.matmul %24, %26, %cst_16 {dimension_numbers = #tpu.dot_dimension_numbers<[1], [0], [0], [1], [0, 0, 1, 1], [], []>} : vector<256x9xbf16>, vector<9x64xbf16>, vector<256x64xf32> -> vector<256x64xf32>
    %c0_17 = arith.constant 0 : index
    %c0_18 = arith.constant 0 : index
    %28 = vector.load %arg7[%c0_17, %c0_18] : memref<256x64xf32, #tpu.memory_space<vmem>>, vector<256x64xf32>
    %29 = arith.addf %28, %27 : vector<256x64xf32>
    %c0_19 = arith.constant 0 : index
    %c0_20 = arith.constant 0 : index
    %30 = vector.load %arg7[%c0_19, %c0_20] : memref<256x64xf32, #tpu.memory_space<vmem>>, vector<256x64xf32>
    tpu.vector_store %arg7[%c0_19, %c0_20], %29 {strides = array<i32>} : memref<256x64xf32, #tpu.memory_space<vmem>>, vector<256x64xf32>,
    %c0_21 = arith.constant 0 : index
    %c0_22 = arith.constant 0 : index
    %31 = vector.load %arg7[%c0_21, %c0_22] : memref<256x64xf32, #tpu.memory_space<vmem>>, vector<256x64xf32>
    %c0_23 = arith.constant 0 : index
    %c0_24 = arith.constant 0 : index
    %32 = vector.load %arg5[%c0_23, %c0_24] : memref<1x64xf32, #tpu.memory_space<vmem>>, vector<1x64xf32>
    %33 = vector.broadcast %32 : vector<1x64xf32> to vector<256x64xf32>
    %34 = arith.addf %31, %33 : vector<256x64xf32>
    %cst_25 = arith.constant 0.000000e+00 : f32
    %35 = vector.broadcast %cst_25 : f32 to vector<256x64xf32>
    %36 = arith.maximumf %34, %35 : vector<256x64xf32>
    %37 = vector.shape_cast %36 : vector<256x64xf32> to vector<1x16x16x64xf32>
    %38 = arith.truncf %37 : vector<1x16x16x64xf32> to vector<1x16x16x64xbf16>
    %c0_26 = arith.constant 0 : index
    %c0_27 = arith.constant 0 : index
    %c0_28 = arith.constant 0 : index
    %c0_29 = arith.constant 0 : index
    %39 = vector.load %arg6[%c0_26, %c0_27, %c0_28, %c0_29] : memref<1x16x16x64xbf16, #tpu.memory_space<vmem>>, vector<1x16x16x64xbf16>
    tpu.vector_store %arg6[%c0_26, %c0_27, %c0_28, %c0_29], %38 {strides = array<i32>} : memref<1x16x16x64xbf16, #tpu.memory_space<vmem>>, vector<1x16x16x64xbf16>,
    return
  }
  func.func @transform_0(%arg0: i32, %arg1: i32, %arg2: i32) -> (i32, i32, i32, i32) {
    %c0_i32 = arith.constant 0 : i32
    %c0_i32_0 = arith.constant 0 : i32
    %c0_i32_1 = arith.constant 0 : i32
    %c0_i32_2 = arith.constant 0 : i32
    return %arg0, %c0_i32, %c0_i32_0, %c0_i32_1 : i32, i32, i32, i32
  }
  func.func @transform_1(%arg0: i32, %arg1: i32, %arg2: i32) -> (i32, i32, i32) {
    %c0_i32 = arith.constant 0 : i32
    %c0_i32_0 = arith.constant 0 : i32
    %c0_i32_1 = arith.constant 0 : i32
    return %c0_i32, %c0_i32_0, %arg2 : i32, i32, i32
  }
  func.func @transform_2(%arg0: i32, %arg1: i32, %arg2: i32) -> (i32, i32) {
    %c0_i32 = arith.constant 0 : i32
    %c0_i32_0 = arith.constant 0 : i32
    return %c0_i32, %arg2 : i32, i32
  }
  func.func @transform_3(%arg0: i32, %arg1: i32, %arg2: i32) -> (i32, i32, i32, i32) {
    %c0_i32 = arith.constant 0 : i32
    %c0_i32_0 = arith.constant 0 : i32
    return %arg0, %arg1, %c0_i32, %arg2 : i32, i32, i32, i32
  }
}

module attributes {stable_mosaic.version = 11 : i64} {
  func.func @_conv3x3_kernel(%arg0: i32, %arg1: i32, %arg2: i32, %arg3: memref<1x18x18x64xbf16, #tpu.memory_space<vmem>>, %arg4: memref<3x192x64xbf16, #tpu.memory_space<vmem>>, %arg5: memref<1x64xf32, #tpu.memory_space<vmem>>, %arg6: memref<1x16x16x64xbf16, #tpu.memory_space<vmem>>, %arg7: memref<256x64xf32, #tpu.memory_space<vmem>>) attributes {dimension_semantics = [#tpu.dimension_semantics<parallel>, #tpu.dimension_semantics<parallel>, #tpu.dimension_semantics<parallel>], iteration_bounds = array<i64: 2, 1, 1>, scalar_prefetch = 0 : i64, scratch_operands = 1 : i64, tpu.core_type = #tpu.core_type<tc>, window_params = [{transform_indices = @transform_0, window_bounds = array<i64: 1, 18, 18, 64>}, {transform_indices = @transform_1, window_bounds = array<i64: 3, 192, 64>}, {transform_indices = @transform_2, window_bounds = array<i64: 1, 64>}, {transform_indices = @transform_3, window_bounds = array<i64: 1, 16, 16, 64>}]} {
    %c16_i32 = arith.constant 16 : i32
    %0 = arith.muli %arg1, %c16_i32 : i32
    %1 = tpu.assume_multiple %0, 16 : i32
    %c0 = arith.constant 0 : index
    %2 = arith.index_cast %1 : i32 to index
    %c0_0 = arith.constant 0 : index
    %c0_1 = arith.constant 0 : index
    %3 = vector.load %arg3[%c0, %2, %c0_0, %c0_1] : memref<1x18x18x64xbf16, #tpu.memory_space<vmem>>, vector<1x18x18x64xbf16>
    %4 = vector.shape_cast %3 : vector<1x18x18x64xbf16> to vector<18x18x64xbf16>
    %5 = vector.extract_strided_slice %4 {offsets = [0, 0, 0], sizes = [18, 16, 64], strides = [1, 1, 1]} : vector<18x18x64xbf16> to vector<18x16x64xbf16>
    %6 = vector.extract_strided_slice %4 {offsets = [0, 1, 0], sizes = [18, 16, 64], strides = [1, 1, 1]} : vector<18x18x64xbf16> to vector<18x16x64xbf16>
    %7 = vector.extract_strided_slice %4 {offsets = [0, 2, 0], sizes = [18, 16, 64], strides = [1, 1, 1]} : vector<18x18x64xbf16> to vector<18x16x64xbf16>
    %8 = tpu.concatenate %5, %6, %7 in 2 : vector<18x16x64xbf16>, vector<18x16x64xbf16>, vector<18x16x64xbf16> -> vector<18x16x192xbf16>
    %9 = vector.extract_strided_slice %8 {offsets = [0, 0, 0], sizes = [16, 16, 192], strides = [1, 1, 1]} : vector<18x16x192xbf16> to vector<16x16x192xbf16>
    %10 = vector.shape_cast %9 : vector<16x16x192xbf16> to vector<256x192xbf16>
    %c0_2 = arith.constant 0 : index
    %c0_3 = arith.constant 0 : index
    %c0_4 = arith.constant 0 : index
    %11 = vector.load %arg4[%c0_2, %c0_3, %c0_4] : memref<3x192x64xbf16, #tpu.memory_space<vmem>>, vector<1x192x64xbf16>
    %12 = vector.shape_cast %11 : vector<1x192x64xbf16> to vector<192x64xbf16>
    %cst = arith.constant dense<0.000000e+00> : vector<256x64xf32>
    %13 = tpu.matmul %10, %12, %cst {dimension_numbers = #tpu.dot_dimension_numbers<[1], [0], [0], [1], [0, 0, 1, 1], [], []>} : vector<256x192xbf16>, vector<192x64xbf16>, vector<256x64xf32> -> vector<256x64xf32>
    %c0_5 = arith.constant 0 : index
    %c0_6 = arith.constant 0 : index
    %14 = vector.load %arg7[%c0_5, %c0_6] : memref<256x64xf32, #tpu.memory_space<vmem>>, vector<256x64xf32>
    tpu.vector_store %arg7[%c0_5, %c0_6], %13 {strides = array<i32>} : memref<256x64xf32, #tpu.memory_space<vmem>>, vector<256x64xf32>,
    %15 = vector.extract_strided_slice %8 {offsets = [1, 0, 0], sizes = [16, 16, 192], strides = [1, 1, 1]} : vector<18x16x192xbf16> to vector<16x16x192xbf16>
    %16 = vector.shape_cast %15 : vector<16x16x192xbf16> to vector<256x192xbf16>
    %c1 = arith.constant 1 : index
    %c0_7 = arith.constant 0 : index
    %c0_8 = arith.constant 0 : index
    %17 = vector.load %arg4[%c1, %c0_7, %c0_8] : memref<3x192x64xbf16, #tpu.memory_space<vmem>>, vector<1x192x64xbf16>
    %18 = vector.shape_cast %17 : vector<1x192x64xbf16> to vector<192x64xbf16>
    %cst_9 = arith.constant dense<0.000000e+00> : vector<256x64xf32>
    %19 = tpu.matmul %16, %18, %cst_9 {dimension_numbers = #tpu.dot_dimension_numbers<[1], [0], [0], [1], [0, 0, 1, 1], [], []>} : vector<256x192xbf16>, vector<192x64xbf16>, vector<256x64xf32> -> vector<256x64xf32>
    %c0_10 = arith.constant 0 : index
    %c0_11 = arith.constant 0 : index
    %20 = vector.load %arg7[%c0_10, %c0_11] : memref<256x64xf32, #tpu.memory_space<vmem>>, vector<256x64xf32>
    %21 = arith.addf %20, %19 : vector<256x64xf32>
    %c0_12 = arith.constant 0 : index
    %c0_13 = arith.constant 0 : index
    %22 = vector.load %arg7[%c0_12, %c0_13] : memref<256x64xf32, #tpu.memory_space<vmem>>, vector<256x64xf32>
    tpu.vector_store %arg7[%c0_12, %c0_13], %21 {strides = array<i32>} : memref<256x64xf32, #tpu.memory_space<vmem>>, vector<256x64xf32>,
    %23 = vector.extract_strided_slice %8 {offsets = [2, 0, 0], sizes = [16, 16, 192], strides = [1, 1, 1]} : vector<18x16x192xbf16> to vector<16x16x192xbf16>
    %24 = vector.shape_cast %23 : vector<16x16x192xbf16> to vector<256x192xbf16>
    %c2 = arith.constant 2 : index
    %c0_14 = arith.constant 0 : index
    %c0_15 = arith.constant 0 : index
    %25 = vector.load %arg4[%c2, %c0_14, %c0_15] : memref<3x192x64xbf16, #tpu.memory_space<vmem>>, vector<1x192x64xbf16>
    %26 = vector.shape_cast %25 : vector<1x192x64xbf16> to vector<192x64xbf16>
    %cst_16 = arith.constant dense<0.000000e+00> : vector<256x64xf32>
    %27 = tpu.matmul %24, %26, %cst_16 {dimension_numbers = #tpu.dot_dimension_numbers<[1], [0], [0], [1], [0, 0, 1, 1], [], []>} : vector<256x192xbf16>, vector<192x64xbf16>, vector<256x64xf32> -> vector<256x64xf32>
    %c0_17 = arith.constant 0 : index
    %c0_18 = arith.constant 0 : index
    %28 = vector.load %arg7[%c0_17, %c0_18] : memref<256x64xf32, #tpu.memory_space<vmem>>, vector<256x64xf32>
    %29 = arith.addf %28, %27 : vector<256x64xf32>
    %c0_19 = arith.constant 0 : index
    %c0_20 = arith.constant 0 : index
    %30 = vector.load %arg7[%c0_19, %c0_20] : memref<256x64xf32, #tpu.memory_space<vmem>>, vector<256x64xf32>
    tpu.vector_store %arg7[%c0_19, %c0_20], %29 {strides = array<i32>} : memref<256x64xf32, #tpu.memory_space<vmem>>, vector<256x64xf32>,
    %c0_21 = arith.constant 0 : index
    %c0_22 = arith.constant 0 : index
    %31 = vector.load %arg7[%c0_21, %c0_22] : memref<256x64xf32, #tpu.memory_space<vmem>>, vector<256x64xf32>
    %c0_23 = arith.constant 0 : index
    %c0_24 = arith.constant 0 : index
    %32 = vector.load %arg5[%c0_23, %c0_24] : memref<1x64xf32, #tpu.memory_space<vmem>>, vector<1x64xf32>
    %33 = vector.broadcast %32 : vector<1x64xf32> to vector<256x64xf32>
    %34 = arith.addf %31, %33 : vector<256x64xf32>
    %35 = vector.shape_cast %34 : vector<256x64xf32> to vector<1x16x16x64xf32>
    %36 = arith.truncf %35 : vector<1x16x16x64xf32> to vector<1x16x16x64xbf16>
    %c0_25 = arith.constant 0 : index
    %c0_26 = arith.constant 0 : index
    %c0_27 = arith.constant 0 : index
    %c0_28 = arith.constant 0 : index
    %37 = vector.load %arg6[%c0_25, %c0_26, %c0_27, %c0_28] : memref<1x16x16x64xbf16, #tpu.memory_space<vmem>>, vector<1x16x16x64xbf16>
    tpu.vector_store %arg6[%c0_25, %c0_26, %c0_27, %c0_28], %36 {strides = array<i32>} : memref<1x16x16x64xbf16, #tpu.memory_space<vmem>>, vector<1x16x16x64xbf16>,
    return
  }
  func.func @transform_0(%arg0: i32, %arg1: i32, %arg2: i32) -> (i32, i32, i32, i32) {
    %c0_i32 = arith.constant 0 : i32
    %c0_i32_0 = arith.constant 0 : i32
    %c0_i32_1 = arith.constant 0 : i32
    %c0_i32_2 = arith.constant 0 : i32
    return %arg0, %c0_i32, %c0_i32_0, %c0_i32_1 : i32, i32, i32, i32
  }
  func.func @transform_1(%arg0: i32, %arg1: i32, %arg2: i32) -> (i32, i32, i32) {
    %c0_i32 = arith.constant 0 : i32
    %c0_i32_0 = arith.constant 0 : i32
    %c0_i32_1 = arith.constant 0 : i32
    return %c0_i32, %c0_i32_0, %arg2 : i32, i32, i32
  }
  func.func @transform_2(%arg0: i32, %arg1: i32, %arg2: i32) -> (i32, i32) {
    %c0_i32 = arith.constant 0 : i32
    %c0_i32_0 = arith.constant 0 : i32
    return %c0_i32, %arg2 : i32, i32
  }
  func.func @transform_3(%arg0: i32, %arg1: i32, %arg2: i32) -> (i32, i32, i32, i32) {
    %c0_i32 = arith.constant 0 : i32
    %c0_i32_0 = arith.constant 0 : i32
    return %arg0, %arg1, %c0_i32, %arg2 : i32, i32, i32, i32
  }
}

module attributes {stable_mosaic.version = 11 : i64} {
  func.func @_relu_kernel(%arg0: i32, %arg1: memref<512x64xbf16, #tpu.memory_space<vmem>>, %arg2: memref<512x64xbf16, #tpu.memory_space<vmem>>) attributes {dimension_semantics = [#tpu.dimension_semantics<parallel>], iteration_bounds = array<i64: 1>, scalar_prefetch = 0 : i64, scratch_operands = 0 : i64, tpu.core_type = #tpu.core_type<tc>, window_params = [{transform_indices = @transform_0, window_bounds = array<i64: 512, 64>}, {transform_indices = @transform_1, window_bounds = array<i64: 512, 64>}]} {
    %c0 = arith.constant 0 : index
    %c0_0 = arith.constant 0 : index
    %0 = vector.load %arg1[%c0, %c0_0] : memref<512x64xbf16, #tpu.memory_space<vmem>>, vector<512x64xbf16>
    %cst = arith.constant 0.000000e+00 : bf16
    %1 = vector.broadcast %cst : bf16 to vector<512x64xbf16>
    %2 = arith.maximumf %0, %1 : vector<512x64xbf16>
    %c0_1 = arith.constant 0 : index
    %c0_2 = arith.constant 0 : index
    %3 = vector.load %arg2[%c0_1, %c0_2] : memref<512x64xbf16, #tpu.memory_space<vmem>>, vector<512x64xbf16>
    tpu.vector_store %arg2[%c0_1, %c0_2], %2 {strides = array<i32>} : memref<512x64xbf16, #tpu.memory_space<vmem>>, vector<512x64xbf16>,
    return
  }
  func.func @transform_0(%arg0: i32) -> (i32, i32) {
    %c0_i32 = arith.constant 0 : i32
    %c0_i32_0 = arith.constant 0 : i32
    return %arg0, %c0_i32 : i32, i32
  }
  func.func @transform_1(%arg0: i32) -> (i32, i32) {
    %c0_i32 = arith.constant 0 : i32
    %c0_i32_0 = arith.constant 0 : i32
    return %arg0, %c0_i32 : i32, i32
  }
}

module attributes {stable_mosaic.version = 11 : i64} {
  func.func @_maxpool2x2_kernel(%arg0: i32, %arg1: i32, %arg2: memref<1x8x2x8x128xbf16, #tpu.memory_space<vmem>>, %arg3: memref<1x8x8x64xbf16, #tpu.memory_space<vmem>>) attributes {dimension_semantics = [#tpu.dimension_semantics<parallel>, #tpu.dimension_semantics<parallel>], iteration_bounds = array<i64: 2, 1>, scalar_prefetch = 0 : i64, scratch_operands = 0 : i64, tpu.core_type = #tpu.core_type<tc>, window_params = [{transform_indices = @transform_0, window_bounds = array<i64: 1, 8, 2, 8, 128>}, {transform_indices = @transform_1, window_bounds = array<i64: 1, 8, 8, 64>}]} {
    %c0 = arith.constant 0 : index
    %c0_0 = arith.constant 0 : index
    %c0_1 = arith.constant 0 : index
    %c0_2 = arith.constant 0 : index
    %c0_3 = arith.constant 0 : index
    %0 = vector.load %arg2[%c0, %c0_0, %c0_1, %c0_2, %c0_3] : memref<1x8x2x8x128xbf16, #tpu.memory_space<vmem>>, vector<1x8x2x8x128xbf16>
    %1 = vector.shape_cast %0 : vector<1x8x2x8x128xbf16> to vector<8x2x8x128xbf16>
    %2 = vector.extract_strided_slice %1 {offsets = [0, 0, 0, 0], sizes = [8, 1, 8, 128], strides = [1, 1, 1, 1]} : vector<8x2x8x128xbf16> to vector<8x1x8x128xbf16>
    %3 = vector.shape_cast %2 : vector<8x1x8x128xbf16> to vector<8x8x128xbf16>
    %4 = vector.extract_strided_slice %1 {offsets = [0, 1, 0, 0], sizes = [8, 1, 8, 128], strides = [1, 1, 1, 1]} : vector<8x2x8x128xbf16> to vector<8x1x8x128xbf16>
    %5 = vector.shape_cast %4 : vector<8x1x8x128xbf16> to vector<8x8x128xbf16>
    %6 = arith.maximumf %3, %5 : vector<8x8x128xbf16>
    %7 = vector.extract_strided_slice %6 {offsets = [0, 0, 0], sizes = [8, 8, 64], strides = [1, 1, 1]} : vector<8x8x128xbf16> to vector<8x8x64xbf16>
    %8 = vector.extract_strided_slice %6 {offsets = [0, 0, 64], sizes = [8, 8, 64], strides = [1, 1, 1]} : vector<8x8x128xbf16> to vector<8x8x64xbf16>
    %9 = arith.maximumf %7, %8 : vector<8x8x64xbf16>
    %c0_4 = arith.constant 0 : index
    %c0_5 = arith.constant 0 : index
    %c0_6 = arith.constant 0 : index
    %c0_7 = arith.constant 0 : index
    %10 = vector.load %arg3[%c0_4, %c0_5, %c0_6, %c0_7] : memref<1x8x8x64xbf16, #tpu.memory_space<vmem>>, vector<1x8x8x64xbf16>
    %11 = vector.shape_cast %10 : vector<1x8x8x64xbf16> to vector<8x8x64xbf16>
    %12 = vector.shape_cast %9 : vector<8x8x64xbf16> to vector<1x8x8x64xbf16>
    tpu.vector_store %arg3[%c0_4, %c0_5, %c0_6, %c0_7], %12 {strides = array<i32>} : memref<1x8x8x64xbf16, #tpu.memory_space<vmem>>, vector<1x8x8x64xbf16>,
    return
  }
  func.func @transform_0(%arg0: i32, %arg1: i32) -> (i32, i32, i32, i32, i32) {
    %c0_i32 = arith.constant 0 : i32
    %c0_i32_0 = arith.constant 0 : i32
    %c0_i32_1 = arith.constant 0 : i32
    %c0_i32_2 = arith.constant 0 : i32
    return %arg0, %arg1, %c0_i32, %c0_i32_0, %c0_i32_1 : i32, i32, i32, i32, i32
  }
  func.func @transform_1(%arg0: i32, %arg1: i32) -> (i32, i32, i32, i32) {
    %c0_i32 = arith.constant 0 : i32
    %c0_i32_0 = arith.constant 0 : i32
    %c0_i32_1 = arith.constant 0 : i32
    return %arg0, %arg1, %c0_i32, %c0_i32_0 : i32, i32, i32, i32
  }
}

module attributes {stable_mosaic.version = 11 : i64} {
  func.func @_conv3x3_kernel(%arg0: i32, %arg1: i32, %arg2: i32, %arg3: memref<1x10x10x64xbf16, #tpu.memory_space<vmem>>, %arg4: memref<3x192x128xbf16, #tpu.memory_space<vmem>>, %arg5: memref<1x128xf32, #tpu.memory_space<vmem>>, %arg6: memref<1x8x8x128xbf16, #tpu.memory_space<vmem>>, %arg7: memref<64x128xf32, #tpu.memory_space<vmem>>) attributes {dimension_semantics = [#tpu.dimension_semantics<parallel>, #tpu.dimension_semantics<parallel>, #tpu.dimension_semantics<parallel>], iteration_bounds = array<i64: 2, 1, 1>, scalar_prefetch = 0 : i64, scratch_operands = 1 : i64, tpu.core_type = #tpu.core_type<tc>, window_params = [{transform_indices = @transform_0, window_bounds = array<i64: 1, 10, 10, 64>}, {transform_indices = @transform_1, window_bounds = array<i64: 3, 192, 128>}, {transform_indices = @transform_2, window_bounds = array<i64: 1, 128>}, {transform_indices = @transform_3, window_bounds = array<i64: 1, 8, 8, 128>}]} {
    %c8_i32 = arith.constant 8 : i32
    %0 = arith.muli %arg1, %c8_i32 : i32
    %1 = tpu.assume_multiple %0, 8 : i32
    %c0 = arith.constant 0 : index
    %2 = arith.index_cast %1 : i32 to index
    %c0_0 = arith.constant 0 : index
    %c0_1 = arith.constant 0 : index
    %3 = vector.load %arg3[%c0, %2, %c0_0, %c0_1] : memref<1x10x10x64xbf16, #tpu.memory_space<vmem>>, vector<1x10x10x64xbf16>
    %4 = vector.shape_cast %3 : vector<1x10x10x64xbf16> to vector<10x10x64xbf16>
    %5 = vector.extract_strided_slice %4 {offsets = [0, 0, 0], sizes = [10, 8, 64], strides = [1, 1, 1]} : vector<10x10x64xbf16> to vector<10x8x64xbf16>
    %6 = vector.extract_strided_slice %4 {offsets = [0, 1, 0], sizes = [10, 8, 64], strides = [1, 1, 1]} : vector<10x10x64xbf16> to vector<10x8x64xbf16>
    %7 = vector.extract_strided_slice %4 {offsets = [0, 2, 0], sizes = [10, 8, 64], strides = [1, 1, 1]} : vector<10x10x64xbf16> to vector<10x8x64xbf16>
    %8 = tpu.concatenate %5, %6, %7 in 2 : vector<10x8x64xbf16>, vector<10x8x64xbf16>, vector<10x8x64xbf16> -> vector<10x8x192xbf16>
    %9 = vector.extract_strided_slice %8 {offsets = [0, 0, 0], sizes = [8, 8, 192], strides = [1, 1, 1]} : vector<10x8x192xbf16> to vector<8x8x192xbf16>
    %10 = vector.shape_cast %9 : vector<8x8x192xbf16> to vector<64x192xbf16>
    %c0_2 = arith.constant 0 : index
    %c0_3 = arith.constant 0 : index
    %c0_4 = arith.constant 0 : index
    %11 = vector.load %arg4[%c0_2, %c0_3, %c0_4] : memref<3x192x128xbf16, #tpu.memory_space<vmem>>, vector<1x192x128xbf16>
    %12 = vector.shape_cast %11 : vector<1x192x128xbf16> to vector<192x128xbf16>
    %cst = arith.constant dense<0.000000e+00> : vector<64x128xf32>
    %13 = tpu.matmul %10, %12, %cst {dimension_numbers = #tpu.dot_dimension_numbers<[1], [0], [0], [1], [0, 0, 1, 1], [], []>} : vector<64x192xbf16>, vector<192x128xbf16>, vector<64x128xf32> -> vector<64x128xf32>
    %c0_5 = arith.constant 0 : index
    %c0_6 = arith.constant 0 : index
    %14 = vector.load %arg7[%c0_5, %c0_6] : memref<64x128xf32, #tpu.memory_space<vmem>>, vector<64x128xf32>
    tpu.vector_store %arg7[%c0_5, %c0_6], %13 {strides = array<i32>} : memref<64x128xf32, #tpu.memory_space<vmem>>, vector<64x128xf32>,
    %15 = vector.extract_strided_slice %8 {offsets = [1, 0, 0], sizes = [8, 8, 192], strides = [1, 1, 1]} : vector<10x8x192xbf16> to vector<8x8x192xbf16>
    %16 = vector.shape_cast %15 : vector<8x8x192xbf16> to vector<64x192xbf16>
    %c1 = arith.constant 1 : index
    %c0_7 = arith.constant 0 : index
    %c0_8 = arith.constant 0 : index
    %17 = vector.load %arg4[%c1, %c0_7, %c0_8] : memref<3x192x128xbf16, #tpu.memory_space<vmem>>, vector<1x192x128xbf16>
    %18 = vector.shape_cast %17 : vector<1x192x128xbf16> to vector<192x128xbf16>
    %cst_9 = arith.constant dense<0.000000e+00> : vector<64x128xf32>
    %19 = tpu.matmul %16, %18, %cst_9 {dimension_numbers = #tpu.dot_dimension_numbers<[1], [0], [0], [1], [0, 0, 1, 1], [], []>} : vector<64x192xbf16>, vector<192x128xbf16>, vector<64x128xf32> -> vector<64x128xf32>
    %c0_10 = arith.constant 0 : index
    %c0_11 = arith.constant 0 : index
    %20 = vector.load %arg7[%c0_10, %c0_11] : memref<64x128xf32, #tpu.memory_space<vmem>>, vector<64x128xf32>
    %21 = arith.addf %20, %19 : vector<64x128xf32>
    %c0_12 = arith.constant 0 : index
    %c0_13 = arith.constant 0 : index
    %22 = vector.load %arg7[%c0_12, %c0_13] : memref<64x128xf32, #tpu.memory_space<vmem>>, vector<64x128xf32>
    tpu.vector_store %arg7[%c0_12, %c0_13], %21 {strides = array<i32>} : memref<64x128xf32, #tpu.memory_space<vmem>>, vector<64x128xf32>,
    %23 = vector.extract_strided_slice %8 {offsets = [2, 0, 0], sizes = [8, 8, 192], strides = [1, 1, 1]} : vector<10x8x192xbf16> to vector<8x8x192xbf16>
    %24 = vector.shape_cast %23 : vector<8x8x192xbf16> to vector<64x192xbf16>
    %c2 = arith.constant 2 : index
    %c0_14 = arith.constant 0 : index
    %c0_15 = arith.constant 0 : index
    %25 = vector.load %arg4[%c2, %c0_14, %c0_15] : memref<3x192x128xbf16, #tpu.memory_space<vmem>>, vector<1x192x128xbf16>
    %26 = vector.shape_cast %25 : vector<1x192x128xbf16> to vector<192x128xbf16>
    %cst_16 = arith.constant dense<0.000000e+00> : vector<64x128xf32>
    %27 = tpu.matmul %24, %26, %cst_16 {dimension_numbers = #tpu.dot_dimension_numbers<[1], [0], [0], [1], [0, 0, 1, 1], [], []>} : vector<64x192xbf16>, vector<192x128xbf16>, vector<64x128xf32> -> vector<64x128xf32>
    %c0_17 = arith.constant 0 : index
    %c0_18 = arith.constant 0 : index
    %28 = vector.load %arg7[%c0_17, %c0_18] : memref<64x128xf32, #tpu.memory_space<vmem>>, vector<64x128xf32>
    %29 = arith.addf %28, %27 : vector<64x128xf32>
    %c0_19 = arith.constant 0 : index
    %c0_20 = arith.constant 0 : index
    %30 = vector.load %arg7[%c0_19, %c0_20] : memref<64x128xf32, #tpu.memory_space<vmem>>, vector<64x128xf32>
    tpu.vector_store %arg7[%c0_19, %c0_20], %29 {strides = array<i32>} : memref<64x128xf32, #tpu.memory_space<vmem>>, vector<64x128xf32>,
    %c0_21 = arith.constant 0 : index
    %c0_22 = arith.constant 0 : index
    %31 = vector.load %arg7[%c0_21, %c0_22] : memref<64x128xf32, #tpu.memory_space<vmem>>, vector<64x128xf32>
    %c0_23 = arith.constant 0 : index
    %c0_24 = arith.constant 0 : index
    %32 = vector.load %arg5[%c0_23, %c0_24] : memref<1x128xf32, #tpu.memory_space<vmem>>, vector<1x128xf32>
    %33 = vector.broadcast %32 : vector<1x128xf32> to vector<64x128xf32>
    %34 = arith.addf %31, %33 : vector<64x128xf32>
    %cst_25 = arith.constant 0.000000e+00 : f32
    %35 = vector.broadcast %cst_25 : f32 to vector<64x128xf32>
    %36 = arith.maximumf %34, %35 : vector<64x128xf32>
    %37 = vector.shape_cast %36 : vector<64x128xf32> to vector<1x8x8x128xf32>
    %38 = arith.truncf %37 : vector<1x8x8x128xf32> to vector<1x8x8x128xbf16>
    %c0_26 = arith.constant 0 : index
    %c0_27 = arith.constant 0 : index
    %c0_28 = arith.constant 0 : index
    %c0_29 = arith.constant 0 : index
    %39 = vector.load %arg6[%c0_26, %c0_27, %c0_28, %c0_29] : memref<1x8x8x128xbf16, #tpu.memory_space<vmem>>, vector<1x8x8x128xbf16>
    tpu.vector_store %arg6[%c0_26, %c0_27, %c0_28, %c0_29], %38 {strides = array<i32>} : memref<1x8x8x128xbf16, #tpu.memory_space<vmem>>, vector<1x8x8x128xbf16>,
    return
  }
  func.func @transform_0(%arg0: i32, %arg1: i32, %arg2: i32) -> (i32, i32, i32, i32) {
    %c0_i32 = arith.constant 0 : i32
    %c0_i32_0 = arith.constant 0 : i32
    %c0_i32_1 = arith.constant 0 : i32
    %c0_i32_2 = arith.constant 0 : i32
    return %arg0, %c0_i32, %c0_i32_0, %c0_i32_1 : i32, i32, i32, i32
  }
  func.func @transform_1(%arg0: i32, %arg1: i32, %arg2: i32) -> (i32, i32, i32) {
    %c0_i32 = arith.constant 0 : i32
    %c0_i32_0 = arith.constant 0 : i32
    %c0_i32_1 = arith.constant 0 : i32
    return %c0_i32, %c0_i32_0, %arg2 : i32, i32, i32
  }
  func.func @transform_2(%arg0: i32, %arg1: i32, %arg2: i32) -> (i32, i32) {
    %c0_i32 = arith.constant 0 : i32
    %c0_i32_0 = arith.constant 0 : i32
    return %c0_i32, %arg2 : i32, i32
  }
  func.func @transform_3(%arg0: i32, %arg1: i32, %arg2: i32) -> (i32, i32, i32, i32) {
    %c0_i32 = arith.constant 0 : i32
    %c0_i32_0 = arith.constant 0 : i32
    return %arg0, %arg1, %c0_i32, %arg2 : i32, i32, i32, i32
  }
}

module attributes {stable_mosaic.version = 11 : i64} {
  func.func @_absmean_kernel(%arg0: i32, %arg1: memref<2x8192xbf16, #tpu.memory_space<vmem>>, %arg2: memref<2x8192xbf16, #tpu.memory_space<vmem>>, %arg3: memref<2x1xf32, #tpu.memory_space<vmem>>) attributes {dimension_semantics = [#tpu.dimension_semantics<arbitrary>], iteration_bounds = array<i64: 2>, scalar_prefetch = 0 : i64, scratch_operands = 0 : i64, tpu.core_type = #tpu.core_type<tc>, window_params = [{transform_indices = @transform_0, window_bounds = array<i64: 2, 8192>}, {transform_indices = @transform_1, window_bounds = array<i64: 2, 8192>}, {pipeline_mode = #tpu.pipeline_mode<synchronous>, transform_indices = @transform_2, window_bounds = array<i64: 2, 1>}]} {
    %c0 = arith.constant 0 : index
    %c0_0 = arith.constant 0 : index
    %0 = vector.load %arg1[%c0, %c0_0] : memref<2x8192xbf16, #tpu.memory_space<vmem>>, vector<2x8192xbf16>
    %1 = arith.extf %0 : vector<2x8192xbf16> to vector<2x8192xf32>
    %c0_1 = arith.constant 0 : index
    %c0_2 = arith.constant 0 : index
    %2 = vector.load %arg2[%c0_1, %c0_2] : memref<2x8192xbf16, #tpu.memory_space<vmem>>, vector<2x8192xbf16>
    %3 = arith.extf %2 : vector<2x8192xbf16> to vector<2x8192xf32>
    %4 = arith.subf %1, %3 : vector<2x8192xf32>
    %5 = math.absf %4 : vector<2x8192xf32>
    %cst = arith.constant dense<0.000000e+00> : vector<2xf32>
    %6 = vector.multi_reduction <add>, %5, %cst [1] : vector<2x8192xf32> to vector<2xf32>
    %7 = vector.shape_cast %6 : vector<2xf32> to vector<2x1xf32>
    %c0_i32 = arith.constant 0 : i32
    %8 = arith.cmpi eq, %arg0, %c0_i32 : i32
    %9 = arith.extui %8 : i1 to i32
    %c0_i32_3 = arith.constant 0 : i32
    %10 = arith.cmpi ne, %9, %c0_i32_3 : i32
    scf.if %10 {
      %cst_9 = arith.constant 0.000000e+00 : f32
      %17 = vector.broadcast %cst_9 : f32 to vector<2x1xf32>
      %c0_10 = arith.constant 0 : index
      %c0_11 = arith.constant 0 : index
      %18 = vector.load %arg3[%c0_10, %c0_11] : memref<2x1xf32, #tpu.memory_space<vmem>>, vector<2x1xf32>
      tpu.vector_store %arg3[%c0_10, %c0_11], %17 {strides = array<i32>} : memref<2x1xf32, #tpu.memory_space<vmem>>, vector<2x1xf32>,
    } else {
    }
    %c0_4 = arith.constant 0 : index
    %c0_5 = arith.constant 0 : index
    %11 = vector.load %arg3[%c0_4, %c0_5] : memref<2x1xf32, #tpu.memory_space<vmem>>, vector<2x1xf32>
    %12 = arith.addf %11, %7 : vector<2x1xf32>
    %c0_6 = arith.constant 0 : index
    %c0_7 = arith.constant 0 : index
    %13 = vector.load %arg3[%c0_6, %c0_7] : memref<2x1xf32, #tpu.memory_space<vmem>>, vector<2x1xf32>
    tpu.vector_store %arg3[%c0_6, %c0_7], %12 {strides = array<i32>} : memref<2x1xf32, #tpu.memory_space<vmem>>, vector<2x1xf32>,
    %c1_i32 = arith.constant 1 : i32
    %14 = arith.cmpi eq, %arg0, %c1_i32 : i32
    %15 = arith.extui %14 : i1 to i32
    %c0_i32_8 = arith.constant 0 : i32
    %16 = arith.cmpi ne, %15, %c0_i32_8 : i32
    scf.if %16 {
      %c0_9 = arith.constant 0 : index
      %c0_10 = arith.constant 0 : index
      %17 = vector.load %arg3[%c0_9, %c0_10] : memref<2x1xf32, #tpu.memory_space<vmem>>, vector<2x1xf32>
      %cst_11 = arith.constant 6.10351563E-5 : f32
      %18 = vector.broadcast %cst_11 : f32 to vector<2x1xf32>
      %19 = arith.mulf %17, %18 : vector<2x1xf32>
      %c0_12 = arith.constant 0 : index
      %c0_13 = arith.constant 0 : index
      %20 = vector.load %arg3[%c0_12, %c0_13] : memref<2x1xf32, #tpu.memory_space<vmem>>, vector<2x1xf32>
      tpu.vector_store %arg3[%c0_12, %c0_13], %19 {strides = array<i32>} : memref<2x1xf32, #tpu.memory_space<vmem>>, vector<2x1xf32>,
    } else {
    }
    return
  }
  func.func @transform_0(%arg0: i32) -> (i32, i32) {
    %c0_i32 = arith.constant 0 : i32
    %c0_i32_0 = arith.constant 0 : i32
    return %c0_i32, %arg0 : i32, i32
  }
  func.func @transform_1(%arg0: i32) -> (i32, i32) {
    %c0_i32 = arith.constant 0 : i32
    %c0_i32_0 = arith.constant 0 : i32
    return %c0_i32, %arg0 : i32, i32
  }
  func.func @transform_2(%arg0: i32) -> (i32, i32) {
    %c0_i32 = arith.constant 0 : i32
    %c0_i32_0 = arith.constant 0 : i32
    %c0_i32_1 = arith.constant 0 : i32
    return %c0_i32, %c0_i32_0 : i32, i32
  }
}

module attributes {stable_mosaic.version = 11 : i64} {
  func.func @_absmean_kernel(%arg0: i32, %arg1: memref<2x768xf32, #tpu.memory_space<vmem>>, %arg2: memref<2x768xf32, #tpu.memory_space<vmem>>, %arg3: memref<2x1xf32, #tpu.memory_space<vmem>>) attributes {dimension_semantics = [#tpu.dimension_semantics<arbitrary>], iteration_bounds = array<i64: 1>, scalar_prefetch = 0 : i64, scratch_operands = 0 : i64, tpu.core_type = #tpu.core_type<tc>, window_params = [{transform_indices = @transform_0, window_bounds = array<i64: 2, 768>}, {transform_indices = @transform_1, window_bounds = array<i64: 2, 768>}, {pipeline_mode = #tpu.pipeline_mode<synchronous>, transform_indices = @transform_2, window_bounds = array<i64: 2, 1>}]} {
    %c0 = arith.constant 0 : index
    %c0_0 = arith.constant 0 : index
    %0 = vector.load %arg1[%c0, %c0_0] : memref<2x768xf32, #tpu.memory_space<vmem>>, vector<2x768xf32>
    %c0_1 = arith.constant 0 : index
    %c0_2 = arith.constant 0 : index
    %1 = vector.load %arg2[%c0_1, %c0_2] : memref<2x768xf32, #tpu.memory_space<vmem>>, vector<2x768xf32>
    %2 = arith.subf %0, %1 : vector<2x768xf32>
    %3 = math.absf %2 : vector<2x768xf32>
    %cst = arith.constant dense<0.000000e+00> : vector<2xf32>
    %4 = vector.multi_reduction <add>, %3, %cst [1] : vector<2x768xf32> to vector<2xf32>
    %5 = vector.shape_cast %4 : vector<2xf32> to vector<2x1xf32>
    %c0_i32 = arith.constant 0 : i32
    %6 = arith.cmpi eq, %arg0, %c0_i32 : i32
    %7 = arith.extui %6 : i1 to i32
    %c0_i32_3 = arith.constant 0 : i32
    %8 = arith.cmpi ne, %7, %c0_i32_3 : i32
    scf.if %8 {
      %cst_10 = arith.constant 0.000000e+00 : f32
      %15 = vector.broadcast %cst_10 : f32 to vector<2x1xf32>
      %c0_11 = arith.constant 0 : index
      %c0_12 = arith.constant 0 : index
      %16 = vector.load %arg3[%c0_11, %c0_12] : memref<2x1xf32, #tpu.memory_space<vmem>>, vector<2x1xf32>
      tpu.vector_store %arg3[%c0_11, %c0_12], %15 {strides = array<i32>} : memref<2x1xf32, #tpu.memory_space<vmem>>, vector<2x1xf32>,
    } else {
    }
    %c0_4 = arith.constant 0 : index
    %c0_5 = arith.constant 0 : index
    %9 = vector.load %arg3[%c0_4, %c0_5] : memref<2x1xf32, #tpu.memory_space<vmem>>, vector<2x1xf32>
    %10 = arith.addf %9, %5 : vector<2x1xf32>
    %c0_6 = arith.constant 0 : index
    %c0_7 = arith.constant 0 : index
    %11 = vector.load %arg3[%c0_6, %c0_7] : memref<2x1xf32, #tpu.memory_space<vmem>>, vector<2x1xf32>
    tpu.vector_store %arg3[%c0_6, %c0_7], %10 {strides = array<i32>} : memref<2x1xf32, #tpu.memory_space<vmem>>, vector<2x1xf32>,
    %c0_i32_8 = arith.constant 0 : i32
    %12 = arith.cmpi eq, %arg0, %c0_i32_8 : i32
    %13 = arith.extui %12 : i1 to i32
    %c0_i32_9 = arith.constant 0 : i32
    %14 = arith.cmpi ne, %13, %c0_i32_9 : i32
    scf.if %14 {
      %c0_10 = arith.constant 0 : index
      %c0_11 = arith.constant 0 : index
      %15 = vector.load %arg3[%c0_10, %c0_11] : memref<2x1xf32, #tpu.memory_space<vmem>>, vector<2x1xf32>
      %cst_12 = arith.constant 0.00130208337 : f32
      %16 = vector.broadcast %cst_12 : f32 to vector<2x1xf32>
      %17 = arith.mulf %15, %16 : vector<2x1xf32>
      %c0_13 = arith.constant 0 : index
      %c0_14 = arith.constant 0 : index
      %18 = vector.load %arg3[%c0_13, %c0_14] : memref<2x1xf32, #tpu.memory_space<vmem>>, vector<2x1xf32>
      tpu.vector_store %arg3[%c0_13, %c0_14], %17 {strides = array<i32>} : memref<2x1xf32, #tpu.memory_space<vmem>>, vector<2x1xf32>,
    } else {
    }
    return
  }
  func.func @transform_0(%arg0: i32) -> (i32, i32) {
    %c0_i32 = arith.constant 0 : i32
    %c0_i32_0 = arith.constant 0 : i32
    return %c0_i32, %arg0 : i32, i32
  }
  func.func @transform_1(%arg0: i32) -> (i32, i32) {
    %c0_i32 = arith.constant 0 : i32
    %c0_i32_0 = arith.constant 0 : i32
    return %c0_i32, %arg0 : i32, i32
  }
  func.func @transform_2(%arg0: i32) -> (i32, i32) {
    %c0_i32 = arith.constant 0 : i32
    %c0_i32_0 = arith.constant 0 : i32
    %c0_i32_1 = arith.constant 0 : i32
    return %c0_i32, %c0_i32_0 : i32, i32
  }
}

module attributes {stable_mosaic.version = 11 : i64} {
  func.func @_conv3x3_kernel(%arg0: i32, %arg1: i32, %arg2: i32, %arg3: memref<1x10x10x128xbf16, #tpu.memory_space<vmem>>, %arg4: memref<3x384x128xbf16, #tpu.memory_space<vmem>>, %arg5: memref<1x128xf32, #tpu.memory_space<vmem>>, %arg6: memref<1x8x8x128xbf16, #tpu.memory_space<vmem>>, %arg7: memref<64x128xf32, #tpu.memory_space<vmem>>) attributes {dimension_semantics = [#tpu.dimension_semantics<parallel>, #tpu.dimension_semantics<parallel>, #tpu.dimension_semantics<parallel>], iteration_bounds = array<i64: 2, 1, 1>, scalar_prefetch = 0 : i64, scratch_operands = 1 : i64, tpu.core_type = #tpu.core_type<tc>, window_params = [{transform_indices = @transform_0, window_bounds = array<i64: 1, 10, 10, 128>}, {transform_indices = @transform_1, window_bounds = array<i64: 3, 384, 128>}, {transform_indices = @transform_2, window_bounds = array<i64: 1, 128>}, {transform_indices = @transform_3, window_bounds = array<i64: 1, 8, 8, 128>}]} {
    %c8_i32 = arith.constant 8 : i32
    %0 = arith.muli %arg1, %c8_i32 : i32
    %1 = tpu.assume_multiple %0, 8 : i32
    %c0 = arith.constant 0 : index
    %2 = arith.index_cast %1 : i32 to index
    %c0_0 = arith.constant 0 : index
    %c0_1 = arith.constant 0 : index
    %3 = vector.load %arg3[%c0, %2, %c0_0, %c0_1] : memref<1x10x10x128xbf16, #tpu.memory_space<vmem>>, vector<1x10x10x128xbf16>
    %4 = vector.shape_cast %3 : vector<1x10x10x128xbf16> to vector<10x10x128xbf16>
    %5 = vector.extract_strided_slice %4 {offsets = [0, 0, 0], sizes = [10, 8, 128], strides = [1, 1, 1]} : vector<10x10x128xbf16> to vector<10x8x128xbf16>
    %6 = vector.extract_strided_slice %4 {offsets = [0, 1, 0], sizes = [10, 8, 128], strides = [1, 1, 1]} : vector<10x10x128xbf16> to vector<10x8x128xbf16>
    %7 = vector.extract_strided_slice %4 {offsets = [0, 2, 0], sizes = [10, 8, 128], strides = [1, 1, 1]} : vector<10x10x128xbf16> to vector<10x8x128xbf16>
    %8 = tpu.concatenate %5, %6, %7 in 2 : vector<10x8x128xbf16>, vector<10x8x128xbf16>, vector<10x8x128xbf16> -> vector<10x8x384xbf16>
    %9 = vector.extract_strided_slice %8 {offsets = [0, 0, 0], sizes = [8, 8, 384], strides = [1, 1, 1]} : vector<10x8x384xbf16> to vector<8x8x384xbf16>
    %10 = vector.shape_cast %9 : vector<8x8x384xbf16> to vector<64x384xbf16>
    %c0_2 = arith.constant 0 : index
    %c0_3 = arith.constant 0 : index
    %c0_4 = arith.constant 0 : index
    %11 = vector.load %arg4[%c0_2, %c0_3, %c0_4] : memref<3x384x128xbf16, #tpu.memory_space<vmem>>, vector<1x384x128xbf16>
    %12 = vector.shape_cast %11 : vector<1x384x128xbf16> to vector<384x128xbf16>
    %cst = arith.constant dense<0.000000e+00> : vector<64x128xf32>
    %13 = tpu.matmul %10, %12, %cst {dimension_numbers = #tpu.dot_dimension_numbers<[1], [0], [0], [1], [0, 0, 1, 1], [], []>} : vector<64x384xbf16>, vector<384x128xbf16>, vector<64x128xf32> -> vector<64x128xf32>
    %c0_5 = arith.constant 0 : index
    %c0_6 = arith.constant 0 : index
    %14 = vector.load %arg7[%c0_5, %c0_6] : memref<64x128xf32, #tpu.memory_space<vmem>>, vector<64x128xf32>
    tpu.vector_store %arg7[%c0_5, %c0_6], %13 {strides = array<i32>} : memref<64x128xf32, #tpu.memory_space<vmem>>, vector<64x128xf32>,
    %15 = vector.extract_strided_slice %8 {offsets = [1, 0, 0], sizes = [8, 8, 384], strides = [1, 1, 1]} : vector<10x8x384xbf16> to vector<8x8x384xbf16>
    %16 = vector.shape_cast %15 : vector<8x8x384xbf16> to vector<64x384xbf16>
    %c1 = arith.constant 1 : index
    %c0_7 = arith.constant 0 : index
    %c0_8 = arith.constant 0 : index
    %17 = vector.load %arg4[%c1, %c0_7, %c0_8] : memref<3x384x128xbf16, #tpu.memory_space<vmem>>, vector<1x384x128xbf16>
    %18 = vector.shape_cast %17 : vector<1x384x128xbf16> to vector<384x128xbf16>
    %cst_9 = arith.constant dense<0.000000e+00> : vector<64x128xf32>
    %19 = tpu.matmul %16, %18, %cst_9 {dimension_numbers = #tpu.dot_dimension_numbers<[1], [0], [0], [1], [0, 0, 1, 1], [], []>} : vector<64x384xbf16>, vector<384x128xbf16>, vector<64x128xf32> -> vector<64x128xf32>
    %c0_10 = arith.constant 0 : index
    %c0_11 = arith.constant 0 : index
    %20 = vector.load %arg7[%c0_10, %c0_11] : memref<64x128xf32, #tpu.memory_space<vmem>>, vector<64x128xf32>
    %21 = arith.addf %20, %19 : vector<64x128xf32>
    %c0_12 = arith.constant 0 : index
    %c0_13 = arith.constant 0 : index
    %22 = vector.load %arg7[%c0_12, %c0_13] : memref<64x128xf32, #tpu.memory_space<vmem>>, vector<64x128xf32>
    tpu.vector_store %arg7[%c0_12, %c0_13], %21 {strides = array<i32>} : memref<64x128xf32, #tpu.memory_space<vmem>>, vector<64x128xf32>,
    %23 = vector.extract_strided_slice %8 {offsets = [2, 0, 0], sizes = [8, 8, 384], strides = [1, 1, 1]} : vector<10x8x384xbf16> to vector<8x8x384xbf16>
    %24 = vector.shape_cast %23 : vector<8x8x384xbf16> to vector<64x384xbf16>
    %c2 = arith.constant 2 : index
    %c0_14 = arith.constant 0 : index
    %c0_15 = arith.constant 0 : index
    %25 = vector.load %arg4[%c2, %c0_14, %c0_15] : memref<3x384x128xbf16, #tpu.memory_space<vmem>>, vector<1x384x128xbf16>
    %26 = vector.shape_cast %25 : vector<1x384x128xbf16> to vector<384x128xbf16>
    %cst_16 = arith.constant dense<0.000000e+00> : vector<64x128xf32>
    %27 = tpu.matmul %24, %26, %cst_16 {dimension_numbers = #tpu.dot_dimension_numbers<[1], [0], [0], [1], [0, 0, 1, 1], [], []>} : vector<64x384xbf16>, vector<384x128xbf16>, vector<64x128xf32> -> vector<64x128xf32>
    %c0_17 = arith.constant 0 : index
    %c0_18 = arith.constant 0 : index
    %28 = vector.load %arg7[%c0_17, %c0_18] : memref<64x128xf32, #tpu.memory_space<vmem>>, vector<64x128xf32>
    %29 = arith.addf %28, %27 : vector<64x128xf32>
    %c0_19 = arith.constant 0 : index
    %c0_20 = arith.constant 0 : index
    %30 = vector.load %arg7[%c0_19, %c0_20] : memref<64x128xf32, #tpu.memory_space<vmem>>, vector<64x128xf32>
    tpu.vector_store %arg7[%c0_19, %c0_20], %29 {strides = array<i32>} : memref<64x128xf32, #tpu.memory_space<vmem>>, vector<64x128xf32>,
    %c0_21 = arith.constant 0 : index
    %c0_22 = arith.constant 0 : index
    %31 = vector.load %arg7[%c0_21, %c0_22] : memref<64x128xf32, #tpu.memory_space<vmem>>, vector<64x128xf32>
    %c0_23 = arith.constant 0 : index
    %c0_24 = arith.constant 0 : index
    %32 = vector.load %arg5[%c0_23, %c0_24] : memref<1x128xf32, #tpu.memory_space<vmem>>, vector<1x128xf32>
    %33 = vector.broadcast %32 : vector<1x128xf32> to vector<64x128xf32>
    %34 = arith.addf %31, %33 : vector<64x128xf32>
    %35 = vector.shape_cast %34 : vector<64x128xf32> to vector<1x8x8x128xf32>
    %36 = arith.truncf %35 : vector<1x8x8x128xf32> to vector<1x8x8x128xbf16>
    %c0_25 = arith.constant 0 : index
    %c0_26 = arith.constant 0 : index
    %c0_27 = arith.constant 0 : index
    %c0_28 = arith.constant 0 : index
    %37 = vector.load %arg6[%c0_25, %c0_26, %c0_27, %c0_28] : memref<1x8x8x128xbf16, #tpu.memory_space<vmem>>, vector<1x8x8x128xbf16>
    tpu.vector_store %arg6[%c0_25, %c0_26, %c0_27, %c0_28], %36 {strides = array<i32>} : memref<1x8x8x128xbf16, #tpu.memory_space<vmem>>, vector<1x8x8x128xbf16>,
    return
  }
  func.func @transform_0(%arg0: i32, %arg1: i32, %arg2: i32) -> (i32, i32, i32, i32) {
    %c0_i32 = arith.constant 0 : i32
    %c0_i32_0 = arith.constant 0 : i32
    %c0_i32_1 = arith.constant 0 : i32
    %c0_i32_2 = arith.constant 0 : i32
    return %arg0, %c0_i32, %c0_i32_0, %c0_i32_1 : i32, i32, i32, i32
  }
  func.func @transform_1(%arg0: i32, %arg1: i32, %arg2: i32) -> (i32, i32, i32) {
    %c0_i32 = arith.constant 0 : i32
    %c0_i32_0 = arith.constant 0 : i32
    %c0_i32_1 = arith.constant 0 : i32
    return %c0_i32, %c0_i32_0, %arg2 : i32, i32, i32
  }
  func.func @transform_2(%arg0: i32, %arg1: i32, %arg2: i32) -> (i32, i32) {
    %c0_i32 = arith.constant 0 : i32
    %c0_i32_0 = arith.constant 0 : i32
    return %c0_i32, %arg2 : i32, i32
  }
  func.func @transform_3(%arg0: i32, %arg1: i32, %arg2: i32) -> (i32, i32, i32, i32) {
    %c0_i32 = arith.constant 0 : i32
    %c0_i32_0 = arith.constant 0 : i32
    return %arg0, %arg1, %c0_i32, %arg2 : i32, i32, i32, i32
  }
}

module attributes {stable_mosaic.version = 11 : i64} {
  func.func @_absmean_kernel(%arg0: i32, %arg1: memref<2x8192xbf16, #tpu.memory_space<vmem>>, %arg2: memref<2x8192xbf16, #tpu.memory_space<vmem>>, %arg3: memref<2x1xf32, #tpu.memory_space<vmem>>) attributes {dimension_semantics = [#tpu.dimension_semantics<arbitrary>], iteration_bounds = array<i64: 1>, scalar_prefetch = 0 : i64, scratch_operands = 0 : i64, tpu.core_type = #tpu.core_type<tc>, window_params = [{transform_indices = @transform_0, window_bounds = array<i64: 2, 8192>}, {transform_indices = @transform_1, window_bounds = array<i64: 2, 8192>}, {pipeline_mode = #tpu.pipeline_mode<synchronous>, transform_indices = @transform_2, window_bounds = array<i64: 2, 1>}]} {
    %c0 = arith.constant 0 : index
    %c0_0 = arith.constant 0 : index
    %0 = vector.load %arg1[%c0, %c0_0] : memref<2x8192xbf16, #tpu.memory_space<vmem>>, vector<2x8192xbf16>
    %1 = arith.extf %0 : vector<2x8192xbf16> to vector<2x8192xf32>
    %c0_1 = arith.constant 0 : index
    %c0_2 = arith.constant 0 : index
    %2 = vector.load %arg2[%c0_1, %c0_2] : memref<2x8192xbf16, #tpu.memory_space<vmem>>, vector<2x8192xbf16>
    %3 = arith.extf %2 : vector<2x8192xbf16> to vector<2x8192xf32>
    %4 = arith.subf %1, %3 : vector<2x8192xf32>
    %5 = math.absf %4 : vector<2x8192xf32>
    %cst = arith.constant dense<0.000000e+00> : vector<2xf32>
    %6 = vector.multi_reduction <add>, %5, %cst [1] : vector<2x8192xf32> to vector<2xf32>
    %7 = vector.shape_cast %6 : vector<2xf32> to vector<2x1xf32>
    %c0_i32 = arith.constant 0 : i32
    %8 = arith.cmpi eq, %arg0, %c0_i32 : i32
    %9 = arith.extui %8 : i1 to i32
    %c0_i32_3 = arith.constant 0 : i32
    %10 = arith.cmpi ne, %9, %c0_i32_3 : i32
    scf.if %10 {
      %cst_10 = arith.constant 0.000000e+00 : f32
      %17 = vector.broadcast %cst_10 : f32 to vector<2x1xf32>
      %c0_11 = arith.constant 0 : index
      %c0_12 = arith.constant 0 : index
      %18 = vector.load %arg3[%c0_11, %c0_12] : memref<2x1xf32, #tpu.memory_space<vmem>>, vector<2x1xf32>
      tpu.vector_store %arg3[%c0_11, %c0_12], %17 {strides = array<i32>} : memref<2x1xf32, #tpu.memory_space<vmem>>, vector<2x1xf32>,
    } else {
    }
    %c0_4 = arith.constant 0 : index
    %c0_5 = arith.constant 0 : index
    %11 = vector.load %arg3[%c0_4, %c0_5] : memref<2x1xf32, #tpu.memory_space<vmem>>, vector<2x1xf32>
    %12 = arith.addf %11, %7 : vector<2x1xf32>
    %c0_6 = arith.constant 0 : index
    %c0_7 = arith.constant 0 : index
    %13 = vector.load %arg3[%c0_6, %c0_7] : memref<2x1xf32, #tpu.memory_space<vmem>>, vector<2x1xf32>
    tpu.vector_store %arg3[%c0_6, %c0_7], %12 {strides = array<i32>} : memref<2x1xf32, #tpu.memory_space<vmem>>, vector<2x1xf32>,
    %c0_i32_8 = arith.constant 0 : i32
    %14 = arith.cmpi eq, %arg0, %c0_i32_8 : i32
    %15 = arith.extui %14 : i1 to i32
    %c0_i32_9 = arith.constant 0 : i32
    %16 = arith.cmpi ne, %15, %c0_i32_9 : i32
    scf.if %16 {
      %c0_10 = arith.constant 0 : index
      %c0_11 = arith.constant 0 : index
      %17 = vector.load %arg3[%c0_10, %c0_11] : memref<2x1xf32, #tpu.memory_space<vmem>>, vector<2x1xf32>
      %cst_12 = arith.constant 1.22070313E-4 : f32
      %18 = vector.broadcast %cst_12 : f32 to vector<2x1xf32>
      %19 = arith.mulf %17, %18 : vector<2x1xf32>
      %c0_13 = arith.constant 0 : index
      %c0_14 = arith.constant 0 : index
      %20 = vector.load %arg3[%c0_13, %c0_14] : memref<2x1xf32, #tpu.memory_space<vmem>>, vector<2x1xf32>
      tpu.vector_store %arg3[%c0_13, %c0_14], %19 {strides = array<i32>} : memref<2x1xf32, #tpu.memory_space<vmem>>, vector<2x1xf32>,
    } else {
    }
    return
  }
  func.func @transform_0(%arg0: i32) -> (i32, i32) {
    %c0_i32 = arith.constant 0 : i32
    %c0_i32_0 = arith.constant 0 : i32
    return %c0_i32, %arg0 : i32, i32
  }
  func.func @transform_1(%arg0: i32) -> (i32, i32) {
    %c0_i32 = arith.constant 0 : i32
    %c0_i32_0 = arith.constant 0 : i32
    return %c0_i32, %arg0 : i32, i32
  }
  func.func @transform_2(%arg0: i32) -> (i32, i32) {
    %c0_i32 = arith.constant 0 : i32
    %c0_i32_0 = arith.constant 0 : i32
    %c0_i32_1 = arith.constant 0 : i32
    return %c0_i32, %c0_i32_0 : i32, i32
  }
}

</mosaic_0001>

<llo_original>
// kernel: vgg_distance.17
$region0: #{vgg_distance.17}
  #allocation0 [shape = 'u32[]', space=smem, size = 0x4, offset = 0x4, fixed_abs, tag = 'smem constant byte address 0x4 - core index']
  #allocation1 [shape = 'u32[144,128]{1,0:T(1,128)}', space=vmem, size = 0x12000, scoped, tag = 'internal scratch']
  %s0 = inlined_call_operand.vmem [shape: bf16[512,64], index: 0, kind: input, shape index: {}]
  %s1 = inlined_call_operand.vmem [shape: bf16[512,64], index: 1, kind: output, shape index: {}]
  %s2 = sld [smem:[#allocation0]]
  $region14: #{vgg_distance.17} parent=0
    _
  %s4 = ssub.s32 1, %s2
  %s5 = scalar_select 0, %s4, %s2
  // Predicated region
  $region2: #{vgg_distance.17} parent=0 // pred_check
    _
  $region3: #{vgg_distance.17} parent=0 // pred_check_branch
    %7 = sbr.rel (0) target = $region5
  $region4: #{vgg_distance.17} parent=0 // pred_region
    _
  $region5: #{vgg_distance.17} parent=0 // pred_fallthru
    _
  %v9 = vld [vmem:[%s0] sm:$0xf]
  %v10 = vld [vmem:[%s0 + $0x4] sm:$0xf]
  %v11 = vld [vmem:[%s0 + $0x8] sm:$0xf]
  %v12 = vld [vmem:[%s0 + $0xc] sm:$0xf]
  %v13 = vld [vmem:[%s0 + $0x10] sm:$0xf]
  %v14 = vld [vmem:[%s0 + $0x14] sm:$0xf]
  %v15 = vld [vmem:[%s0 + $0x18] sm:$0xf]
  %v16 = vld [vmem:[%s0 + $0x1c] sm:$0xf]
  %v17 = vld [vmem:[%s0 + $0x20] sm:$0xf]
  %v18 = vld [vmem:[%s0 + $0x24] sm:$0xf]
  %v19 = vld [vmem:[%s0 + $0x28] sm:$0xf]
  %v20 = vld [vmem:[%s0 + $0x2c] sm:$0xf]
  %v21 = vld [vmem:[%s0 + $0x30] sm:$0xf]
  %v22 = vld [vmem:[%s0 + $0x34] sm:$0xf]
  %v23 = vld [vmem:[%s0 + $0x38] sm:$0xf]
  %v24 = vld [vmem:[%s0 + $0x3c] sm:$0xf]
  %v25 = vld [vmem:[%s0 + $0x40] sm:$0xf]
  %v26 = vld [vmem:[%s0 + $0x44] sm:$0xf]
  %v27 = vld [vmem:[%s0 + $0x48] sm:$0xf]
  %v28 = vld [vmem:[%s0 + $0x4c] sm:$0xf]
  %v29 = vld [vmem:[%s0 + $0x50] sm:$0xf]
  %v30 = vld [vmem:[%s0 + $0x54] sm:$0xf]
  %v31 = vld [vmem:[%s0 + $0x58] sm:$0xf]
  %v32 = vld [vmem:[%s0 + $0x5c] sm:$0xf]
  %v33 = vld [vmem:[%s0 + $0x60] sm:$0xf]
  %v34 = vld [vmem:[%s0 + $0x64] sm:$0xf]
  %v35 = vld [vmem:[%s0 + $0x68] sm:$0xf]
  %v36 = vld [vmem:[%s0 + $0x6c] sm:$0xf]
  %v37 = vld [vmem:[%s0 + $0x70] sm:$0xf]
  %v38 = vld [vmem:[%s0 + $0x74] sm:$0xf]
  %v39 = vld [vmem:[%s0 + $0x78] sm:$0xf]
  %v40 = vld [vmem:[%s0 + $0x7c] sm:$0xf]
  %v41 = vld [vmem:[%s0 + $0x80] sm:$0xf]
  %v42 = vld [vmem:[%s0 + $0x84] sm:$0xf]
  %v43 = vld [vmem:[%s0 + $0x88] sm:$0xf]
  %v44 = vld [vmem:[%s0 + $0x8c] sm:$0xf]
  %v45 = vld [vmem:[%s0 + $0x90] sm:$0xf]
  %v46 = vld [vmem:[%s0 + $0x94] sm:$0xf]
  %v47 = vld [vmem:[%s0 + $0x98] sm:$0xf]
  %v48 = vld [vmem:[%s0 + $0x9c] sm:$0xf]
  %v49 = vld [vmem:[%s0 + $0xa0] sm:$0xf]
  %v50 = vld [vmem:[%s0 + $0xa4] sm:$0xf]
  %v51 = vld [vmem:[%s0 + $0xa8] sm:$0xf]
  %v52 = vld [vmem:[%s0 + $0xac] sm:$0xf]
  %v53 = vld [vmem:[%s0 + $0xb0] sm:$0xf]
  %v54 = vld [vmem:[%s0 + $0xb4] sm:$0xf]
  %v55 = vld [vmem:[%s0 + $0xb8] sm:$0xf]
  %v56 = vld [vmem:[%s0 + $0xbc] sm:$0xf]
  %v57 = vld [vmem:[%s0 + $0xc0] sm:$0xf]
  %v58 = vld [vmem:[%s0 + $0xc4] sm:$0xf]
  %v59 = vld [vmem:[%s0 + $0xc8] sm:$0xf]
  %v60 = vld [vmem:[%s0 + $0xcc] sm:$0xf]
  %v61 = vld [vmem:[%s0 + $0xd0] sm:$0xf]
  %v62 = vld [vmem:[%s0 + $0xd4] sm:$0xf]
  %v63 = vld [vmem:[%s0 + $0xd8] sm:$0xf]
  %v64 = vld [vmem:[%s0 + $0xdc] sm:$0xf]
  %v65 = vld [vmem:[%s0 + $0xe0] sm:$0xf]
  %v66 = vld [vmem:[%s0 + $0xe4] sm:$0xf]
  %v67 = vld [vmem:[%s0 + $0xe8] sm:$0xf]
  %v68 = vld [vmem:[%s0 + $0xec] sm:$0xf]
  %v69 = vld [vmem:[%s0 + $0xf0] sm:$0xf]
  %v70 = vld [vmem:[%s0 + $0xf4] sm:$0xf]
  %v71 = vld [vmem:[%s0 + $0xf8] sm:$0xf]
  %v72 = vld [vmem:[%s0 + $0xfc] sm:$0xf]
  %v73 = vmax.bf16 %v9, 0
  %v74 = vmax.bf16 %v10, 0
  %v75 = vmax.bf16 %v11, 0
  %v76 = vmax.bf16 %v12, 0
  %v77 = vmax.bf16 %v13, 0
  %v78 = vmax.bf16 %v14, 0
  %v79 = vmax.bf16 %v15, 0
  %v80 = vmax.bf16 %v16, 0
  %v81 = vmax.bf16 %v17, 0
  %v82 = vmax.bf16 %v18, 0
  %v83 = vmax.bf16 %v19, 0
  %v84 = vmax.bf16 %v20, 0
  %v85 = vmax.bf16 %v21, 0
  %v86 = vmax.bf16 %v22, 0
  %v87 = vmax.bf16 %v23, 0
  %v88 = vmax.bf16 %v24, 0
  %v89 = vmax.bf16 %v25, 0
  %v90 = vmax.bf16 %v26, 0
  %v91 = vmax.bf16 %v27, 0
  %v92 = vmax.bf16 %v28, 0
  %v93 = vmax.bf16 %v29, 0
  %v94 = vmax.bf16 %v30, 0
  %v95 = vmax.bf16 %v31, 0
  %v96 = vmax.bf16 %v32, 0
  %v97 = vmax.bf16 %v33, 0
  %v98 = vmax.bf16 %v34, 0
  %v99 = vmax.bf16 %v35, 0
  %v100 = vmax.bf16 %v36, 0
  %v101 = vmax.bf16 %v37, 0
  %v102 = vmax.bf16 %v38, 0
  %v103 = vmax.bf16 %v39, 0
  %v104 = vmax.bf16 %v40, 0
  %v105 = vmax.bf16 %v41, 0
  %v106 = vmax.bf16 %v42, 0
  %v107 = vmax.bf16 %v43, 0
  %v108 = vmax.bf16 %v44, 0
  %v109 = vmax.bf16 %v45, 0
  %v110 = vmax.bf16 %v46, 0
  %v111 = vmax.bf16 %v47, 0
  %v112 = vmax.bf16 %v48, 0
  %v113 = vmax.bf16 %v49, 0
  %v114 = vmax.bf16 %v50, 0
  %v115 = vmax.bf16 %v51, 0
  %v116 = vmax.bf16 %v52, 0
  %v117 = vmax.bf16 %v53, 0
  %v118 = vmax.bf16 %v54, 0
  %v119 = vmax.bf16 %v55, 0
  %v120 = vmax.bf16 %v56, 0
  %v121 = vmax.bf16 %v57, 0
  %v122 = vmax.bf16 %v58, 0
  %v123 = vmax.bf16 %v59, 0
  %v124 = vmax.bf16 %v60, 0
  %v125 = vmax.bf16 %v61, 0
  %v126 = vmax.bf16 %v62, 0
  %v127 = vmax.bf16 %v63, 0
  %v128 = vmax.bf16 %v64, 0
  %v129 = vmax.bf16 %v65, 0
  %v130 = vmax.bf16 %v66, 0
  %v131 = vmax.bf16 %v67, 0
  %v132 = vmax.bf16 %v68, 0
  %v133 = vmax.bf16 %v69, 0
  %v134 = vmax.bf16 %v70, 0
  %v135 = vmax.bf16 %v71, 0
  %v136 = vmax.bf16 %v72, 0
  %vm137 = vcmask 519168
  %138 = vst.msk [vmem:[%s1] sm:$0xf] %vm137, %v73
  %139 = vst.msk [vmem:[%s1 + $0x4] sm:$0xf] %vm137, %v74
  %140 = vst.msk [vmem:[%s1 + $0x8] sm:$0xf] %vm137, %v75
  %141 = vst.msk [vmem:[%s1 + $0xc] sm:$0xf] %vm137, %v76
  %142 = vst.msk [vmem:[%s1 + $0x10] sm:$0xf] %vm137, %v77
  %143 = vst.msk [vmem:[%s1 + $0x14] sm:$0xf] %vm137, %v78
  %144 = vst.msk [vmem:[%s1 + $0x18] sm:$0xf] %vm137, %v79
  %145 = vst.msk [vmem:[%s1 + $0x1c] sm:$0xf] %vm137, %v80
  %146 = vst.msk [vmem:[%s1 + $0x20] sm:$0xf] %vm137, %v81
  %147 = vst.msk [vmem:[%s1 + $0x24] sm:$0xf] %vm137, %v82
  %148 = vst.msk [vmem:[%s1 + $0x28] sm:$0xf] %vm137, %v83
  %149 = vst.msk [vmem:[%s1 + $0x2c] sm:$0xf] %vm137, %v84
  %150 = vst.msk [vmem:[%s1 + $0x30] sm:$0xf] %vm137, %v85
  %151 = vst.msk [vmem:[%s1 + $0x34] sm:$0xf] %vm137, %v86
  %152 = vst.msk [vmem:[%s1 + $0x38] sm:$0xf] %vm137, %v87
  %153 = vst.msk [vmem:[%s1 + $0x3c] sm:$0xf] %vm137, %v88
  %154 = vst.msk [vmem:[%s1 + $0x40] sm:$0xf] %vm137, %v89
  %155 = vst.msk [vmem:[%s1 + $0x44] sm:$0xf] %vm137, %v90
  %156 = vst.msk [vmem:[%s1 + $0x48] sm:$0xf] %vm137, %v91
  %157 = vst.msk [vmem:[%s1 + $0x4c] sm:$0xf] %vm137, %v92
  %158 = vst.msk [vmem:[%s1 + $0x50] sm:$0xf] %vm137, %v93
  %159 = vst.msk [vmem:[%s1 + $0x54] sm:$0xf] %vm137, %v94
  %160 = vst.msk [vmem:[%s1 + $0x58] sm:$0xf] %vm137, %v95
  %161 = vst.msk [vmem:[%s1 + $0x5c] sm:$0xf] %vm137, %v96
  %162 = vst.msk [vmem:[%s1 + $0x60] sm:$0xf] %vm137, %v97
  %163 = vst.msk [vmem:[%s1 + $0x64] sm:$0xf] %vm137, %v98
  %164 = vst.msk [vmem:[%s1 + $0x68] sm:$0xf] %vm137, %v99
  %165 = vst.msk [vmem:[%s1 + $0x6c] sm:$0xf] %vm137, %v100
  %166 = vst.msk [vmem:[%s1 + $0x70] sm:$0xf] %vm137, %v101
  %167 = vst.msk [vmem:[%s1 + $0x74] sm:$0xf] %vm137, %v102
  %168 = vst.msk [vmem:[%s1 + $0x78] sm:$0xf] %vm137, %v103
  %169 = vst.msk [vmem:[%s1 + $0x7c] sm:$0xf] %vm137, %v104
  %170 = vst.msk [vmem:[%s1 + $0x80] sm:$0xf] %vm137, %v105
  %171 = vst.msk [vmem:[%s1 + $0x84] sm:$0xf] %vm137, %v106
  %172 = vst.msk [vmem:[%s1 + $0x88] sm:$0xf] %vm137, %v107
  %173 = vst.msk [vmem:[%s1 + $0x8c] sm:$0xf] %vm137, %v108
  %174 = vst.msk [vmem:[%s1 + $0x90] sm:$0xf] %vm137, %v109
  %175 = vst.msk [vmem:[%s1 + $0x94] sm:$0xf] %vm137, %v110
  %176 = vst.msk [vmem:[%s1 + $0x98] sm:$0xf] %vm137, %v111
  %177 = vst.msk [vmem:[%s1 + $0x9c] sm:$0xf] %vm137, %v112
  %178 = vst.msk [vmem:[%s1 + $0xa0] sm:$0xf] %vm137, %v113
  %179 = vst.msk [vmem:[%s1 + $0xa4] sm:$0xf] %vm137, %v114
  %180 = vst.msk [vmem:[%s1 + $0xa8] sm:$0xf] %vm137, %v115
  %181 = vst.msk [vmem:[%s1 + $0xac] sm:$0xf] %vm137, %v116
  %182 = vst.msk [vmem:[%s1 + $0xb0] sm:$0xf] %vm137, %v117
  %183 = vst.msk [vmem:[%s1 + $0xb4] sm:$0xf] %vm137, %v118
  %184 = vst.msk [vmem:[%s1 + $0xb8] sm:$0xf] %vm137, %v119
  %185 = vst.msk [vmem:[%s1 + $0xbc] sm:$0xf] %vm137, %v120
  %186 = vst.msk [vmem:[%s1 + $0xc0] sm:$0xf] %vm137, %v121
  %187 = vst.msk [vmem:[%s1 + $0xc4] sm:$0xf] %vm137, %v122
  %188 = vst.msk [vmem:[%s1 + $0xc8] sm:$0xf] %vm137, %v123
  %189 = vst.msk [vmem:[%s1 + $0xcc] sm:$0xf] %vm137, %v124
  %190 = vst.msk [vmem:[%s1 + $0xd0] sm:$0xf] %vm137, %v125
  %191 = vst.msk [vmem:[%s1 + $0xd4] sm:$0xf] %vm137, %v126
  %192 = vst.msk [vmem:[%s1 + $0xd8] sm:$0xf] %vm137, %v127
  %193 = vst.msk [vmem:[%s1 + $0xdc] sm:$0xf] %vm137, %v128
  %194 = vst.msk [vmem:[%s1 + $0xe0] sm:$0xf] %vm137, %v129
  %195 = vst.msk [vmem:[%s1 + $0xe4] sm:$0xf] %vm137, %v130
  %196 = vst.msk [vmem:[%s1 + $0xe8] sm:$0xf] %vm137, %v131
  %197 = vst.msk [vmem:[%s1 + $0xec] sm:$0xf] %vm137, %v132
  %198 = vst.msk [vmem:[%s1 + $0xf0] sm:$0xf] %vm137, %v133
  %199 = vst.msk [vmem:[%s1 + $0xf4] sm:$0xf] %vm137, %v134
  %200 = vst.msk [vmem:[%s1 + $0xf8] sm:$0xf] %vm137, %v135
  %201 = vst.msk [vmem:[%s1 + $0xfc] sm:$0xf] %vm137, %v136
  // Predicated region
  $region6: #{vgg_distance.17} parent=0 // pred_check
    _
  $region7: #{vgg_distance.17} parent=0 // pred_check_branch
    %203 = sbr.rel (0) target = $region9
  $region8: #{vgg_distance.17} parent=0 // pred_region
    _
  $region9: #{vgg_distance.17} parent=0 // pred_fallthru
    _
  // Predicated region
  $region10: #{vgg_distance.17} parent=0 // pred_check
    _
  $region11: #{vgg_distance.17} parent=0 // pred_check_branch
    %205 = sbr.rel (0) target = $region13
  $region12: #{vgg_distance.17} parent=0 // pred_region
    _
  $region13: #{vgg_distance.17} parent=0 // pred_fallthru
    _

// kernel: vgg_distance.15
$region0: #{vgg_distance.15}
  #allocation0 [shape = 'u32[]', space=smem, size = 0x4, offset = 0x4, fixed_abs, tag = 'smem constant byte address 0x4 - core index']
  #allocation1 [shape = 'u32[144,128]{1,0:T(1,128)}', space=vmem, size = 0x12000, scoped, tag = 'internal scratch']
  #allocation2 [shape = 'f32[256,64]{1,0:T(8,128)}', space=vmem, size = 0x20000, scoped, tag = 'scratch operand']
  %s0 = inlined_call_operand.vmem [shape: bf16[2,18,18,3], index: 0, kind: input, shape index: {}]
  %s1 = inlined_call_operand.vmem [shape: bf16[3,9,64], index: 1, kind: input, shape index: {}]
  %s2 = inlined_call_operand.vmem [shape: f32[1,64], index: 2, kind: input, shape index: {}]
  %s3 = inlined_call_operand.vmem [shape: bf16[2,16,16,64], index: 3, kind: output, shape index: {}]
  %s4 = sld [smem:[#allocation0]]
  $region45: #{vgg_distance.15} parent=0
    _
  %s6 = ssub.s32 1, %s4
  %s7 = scalar_select 0, %s6, %s4
  loop: start=0, step=1, limit=4
  $region2: #{vgg_distance.15} parent=0 // loop_pre_header
    _
  $region3: #{vgg_distance.15} parent=0 // loop_header
    %s9 = sphi 0, %s13
    %p10 = scmp.ge.s32.totalorder %s9, 4
    %s16 = sphi 0, %s35
    %s17 = sphi 0, %s31
    %s18 = sphi 0, %s27
    %s19 = sphi 0, %s16
    %s20 = sphi 0, %s17
    %s21 = sphi 0, %s18
    %s22 = sphi 0, %s19
    %s23 = sphi 0, %s20
    %s24 = sphi 0, %s21
    %s38 = sphi 0, %s40
    %s41 = sphi 0, %s38
    %s42 = sphi 0, %s41
    %s58 = sphi 0, %s42
    %s64 = sphi 0, %s66
    %s67 = sphi 0, %s64
    %s68 = sphi 0, %s67
    %s84 = sphi 0, %s68
    %s90 = sphi 0, %s92
    %s93 = sphi 0, %s90
    %s94 = sphi 0, %s93
    %s110 = sphi 0, %s94
    %s120 = sphi 0, %s122
    %s123 = sphi 0, %s120
    %s124 = sphi 0, %s123
    %s140 = sphi 0, %s124
  $region4: #{vgg_distance.15} parent=0 // loop_header_branch
    %12 = sbr.rel (%p10) target = $region8
  $region5: #{vgg_distance.15} parent=0 // loop_body
    %s14 = ssub.s32 %s9, 1
    %s15 = ssub.s32 %s9, 2
    %s25 = sadd.s32 1, %s18
    %p26 = scmp.ge.s32.totalorder %s25, 1
    %s27 = scalar_select %p26, 0, %s25
    %s28 = sadd.s32 1, %s17
    %s29 = scalar_select %p26, %s28, %s17
    %p30 = scmp.ge.s32.totalorder %s29, 1
    %s31 = scalar_select %p30, 0, %s29
    %s32 = sadd.s32 1, %s16
    %s33 = scalar_select %p30, %s32, %s16
    %p34 = scmp.ge.s32.totalorder %s33, 2
    %s35 = scalar_select %p34, 0, %s33
    %s36 = ssub.s32 %s16, %s35
    %p37 = scmp.eq.s32.totalorder %s36, 0
    %s39 = sadd.s32 %s38, 1
    %s40 = scalar_select %p37, %s38, %s39
    %p43 = pneg %p37
    %p44 = scmp.eq.s32.totalorder %s9, 1
    %p45 = por %p43, %p44
    %p46 = scmp.ne.s32.totalorder %s38, %s41
    %p47 = scmp.eq.s32.totalorder %s9, 0
    %p48 = por %p46, %p47
    %p49 = scmp.ne.s32.totalorder %s38, %s41
    %p50 = scmp.eq.s32.totalorder %s14, 1
    %p51 = por %p49, %p50
    %p52 = scmp.ne.s32.totalorder %s41, %s42
    %p53 = scmp.eq.s32.totalorder %s14, 0
    %p54 = por %p52, %p53
    %p55 = scmp.ne.s32.totalorder %s41, %s42
    %p56 = scmp.eq.s32.totalorder %s15, 1
    %p57 = por %p55, %p56
    %p59 = scmp.ne.s32.totalorder %s42, %s58
    %p60 = scmp.eq.s32.totalorder %s15, 0
    %p61 = por %p59, %p60
    %s62 = ssub.s32 %s18, %s27
    %p63 = scmp.eq.s32.totalorder %s62, 0
    %s65 = sadd.s32 %s64, 1
    %s66 = scalar_select %p63, %s64, %s65
    %p69 = pneg %p63
    %p70 = scmp.eq.s32.totalorder %s9, 1
    %p71 = por %p69, %p70
    %p72 = scmp.ne.s32.totalorder %s64, %s67
    %p73 = scmp.eq.s32.totalorder %s9, 0
    %p74 = por %p72, %p73
    %p75 = scmp.ne.s32.totalorder %s64, %s67
    %p76 = scmp.eq.s32.totalorder %s14, 1
    %p77 = por %p75, %p76
    %p78 = scmp.ne.s32.totalorder %s67, %s68
    %p79 = scmp.eq.s32.totalorder %s14, 0
    %p80 = por %p78, %p79
    %p81 = scmp.ne.s32.totalorder %s67, %s68
    %p82 = scmp.eq.s32.totalorder %s15, 1
    %p83 = por %p81, %p82
    %p85 = scmp.ne.s32.totalorder %s68, %s84
    %p86 = scmp.eq.s32.totalorder %s15, 0
    %p87 = por %p85, %p86
    %s88 = ssub.s32 %s18, %s27
    %p89 = scmp.eq.s32.totalorder %s88, 0
    %s91 = sadd.s32 %s90, 1
    %s92 = scalar_select %p89, %s90, %s91
    %p95 = pneg %p89
    %p96 = scmp.eq.s32.totalorder %s9, 1
    %p97 = por %p95, %p96
    %p98 = scmp.ne.s32.totalorder %s90, %s93
    %p99 = scmp.eq.s32.totalorder %s9, 0
    %p100 = por %p98, %p99
    %p101 = scmp.ne.s32.totalorder %s90, %s93
    %p102 = scmp.eq.s32.totalorder %s14, 1
    %p103 = por %p101, %p102
    %p104 = scmp.ne.s32.totalorder %s93, %s94
    %p105 = scmp.eq.s32.totalorder %s14, 0
    %p106 = por %p104, %p105
    %p107 = scmp.ne.s32.totalorder %s93, %s94
    %p108 = scmp.eq.s32.totalorder %s15, 1
    %p109 = por %p107, %p108
    %p111 = scmp.ne.s32.totalorder %s94, %s110
    %p112 = scmp.eq.s32.totalorder %s15, 0
    %p113 = por %p111, %p112
    %s114 = ssub.s32 %s16, %s35
    %s115 = ssub.s32 %s17, %s31
    %s116 = sor.u32 %s114, %s115
    %s117 = ssub.s32 %s18, %s27
    %s118 = sor.u32 %s116, %s117
    %p119 = scmp.eq.s32.totalorder %s118, 0
    %s121 = sadd.s32 %s120, 1
    %s122 = scalar_select %p119, %s120, %s121
    %p125 = pneg %p119
    %p126 = scmp.eq.s32.totalorder %s9, 1
    %p127 = por %p125, %p126
    %p128 = scmp.ne.s32.totalorder %s120, %s123
    %p129 = scmp.eq.s32.totalorder %s9, 0
    %p130 = por %p128, %p129
    %p131 = scmp.ne.s32.totalorder %s120, %s123
    %p132 = scmp.eq.s32.totalorder %s14, 1
    %p133 = por %p131, %p132
    %p134 = scmp.ne.s32.totalorder %s123, %s124
    %p135 = scmp.eq.s32.totalorder %s14, 0
    %p136 = por %p134, %p135
    %p137 = scmp.ne.s32.totalorder %s123, %s124
    %p138 = scmp.eq.s32.totalorder %s15, 1
    %p139 = por %p137, %p138
    %p141 = scmp.ne.s32.totalorder %s124, %s140
    %p142 = scmp.eq.s32.totalorder %s15, 0
    %p143 = por %p141, %p142
    %p144 = scmp.le.s32.totalorder 1, %s9
    %p145 = scmp.lt.s32.totalorder %s9, 3
    %p146 = pnand %p144, %p145
    %p147 = pneg %p146
    // Predicated region
    $region9: #{vgg_distance.15} parent=5 // pred_check
      _
    $region10: #{vgg_distance.15} parent=5 // pred_check_branch
      %149 = sbr.rel (%p146) target = $region12
    $region11: #{vgg_distance.15} parent=5 // pred_region
      %s150 = ssub.s32 %s9, 1
      // Predicated region
      $region13: #{vgg_distance.15} parent=11 // pred_check
        %p151 = pneg %p80
      $region14: #{vgg_distance.15} parent=11 // pred_check_branch
        %153 = sbr.rel (%p151) target = $region16
      $region15: #{vgg_distance.15} parent=11 // pred_region
        %p154 = scmp.lt.s32.totalorder %s21, 0
        %s155 = scalar_select %p154, %s21, 0
        %s156 = smul.addr %s155, 4
        %s157 = scalar_lea.vmem %s1, %s156
      $region16: #{vgg_distance.15} parent=11 // pred_fallthru
        _
      // Predicated region
      $region17: #{vgg_distance.15} parent=11 // pred_check
        %p158 = pneg %p106
      $region18: #{vgg_distance.15} parent=11 // pred_check_branch
        %160 = sbr.rel (%p158) target = $region20
      $region19: #{vgg_distance.15} parent=11 // pred_region
        %p161 = scmp.lt.s32.totalorder %s21, 0
        %s162 = scalar_select %p161, %s21, 0
        %s163 = scalar_lea.vmem %s2, %s162
      $region20: #{vgg_distance.15} parent=11 // pred_fallthru
        _
    $region12: #{vgg_distance.15} parent=5 // pred_fallthru
      _
    %p164 = scmp.lt.s32.totalorder %s9, 2
    // Predicated region
    $region21: #{vgg_distance.15} parent=5 // pred_check
      %p165 = pneg %p164
    $region22: #{vgg_distance.15} parent=5 // pred_check_branch
      %167 = sbr.rel (%p165) target = $region24
    $region23: #{vgg_distance.15} parent=5 // pred_region
      // Predicated region
      $region25: #{vgg_distance.15} parent=23 // pred_check
        %p168 = pneg %p48
      $region26: #{vgg_distance.15} parent=23 // pred_check_branch
        %170 = sbr.rel (%p168) target = $region28
      $region27: #{vgg_distance.15} parent=23 // pred_region
        %p171 = scmp.lt.s32.totalorder %s16, 1
        %s172 = scalar_select %p171, %s16, 1
        %s173 = smul.addr %s172, 54
        %s174 = smul.addr %s173, 4
        %s175 = scalar_lea.vmem %s0, %s174
      $region28: #{vgg_distance.15} parent=23 // pred_fallthru
        _
    $region24: #{vgg_distance.15} parent=5 // pred_fallthru
      _
    %p176 = scmp.le.s32.totalorder 1, %s9
    %p177 = scmp.lt.s32.totalorder %s9, 3
    %p178 = pnand %p176, %p177
    %p179 = pneg %p178
    // Predicated region
    $region29: #{vgg_distance.15} parent=5 // pred_check
      _
    $region30: #{vgg_distance.15} parent=5 // pred_check_branch
      %181 = sbr.rel (%p178) target = $region32
    $region31: #{vgg_distance.15} parent=5 // pred_region
      %s182 = ssub.s32 %s9, 1
      %p183 = scmp.lt.s32.totalorder %s19, 1
      %s184 = scalar_select %p183, %s19, 1
      %s185 = smul.addr %s184, 54
      %s186 = smul.addr %s185, 4
      %s187 = scalar_lea.vmem %s0, %s186
      %p188 = pneg %p54
      %p189 = pneg %p51
      %p190 = scmp.lt.s32.totalorder %s21, 0
      %s191 = scalar_select %p190, %s21, 0
      %s192 = smul.addr %s191, 4
      %s193 = scalar_lea.vmem %s1, %s192
      %p194 = pneg %p80
      %p195 = pneg %p77
      %p196 = scmp.lt.s32.totalorder %s21, 0
      %s197 = scalar_select %p196, %s21, 0
      %s198 = scalar_lea.vmem %s2, %s197
      %p199 = pneg %p106
      %p200 = pneg %p103
      %p201 = pneg %p136
      %p202 = pneg %p133
      %s203 = smul.u32 16, %s20
      %p204 = scmp.lt.s32.totalorder %s19, 1
      %s205 = scalar_select %p204, %s19, 1
      %p206 = scmp.lt.s32.totalorder %s203, 15
      %s207 = scalar_select %p206, %s203, 15
      %p208 = scmp.lt.s32.totalorder %s21, 0
      %s209 = scalar_select %p208, %s21, 0
      %s210 = smul.addr %s207, 2
      %s211 = sadd.s32 %s209, %s210
      %s212 = smul.addr %s205, 32
      %s213 = sadd.s32 %s211, %s212
      %s214 = smul.addr %s213, 4
      %s215 = scalar_lea.vmem %s3, %s214
      %p216 = scmp.lt.s32.totalorder %s19, 1
      %s217 = scalar_select %p216, %s19, 1
      %s218 = smul.addr %s217, 54
      %s219 = smul.addr %s218, 4
      %s220 = scalar_lea.vmem %s0, %s219
      %p221 = scmp.lt.s32.totalorder %s21, 0
      %s222 = scalar_select %p221, %s21, 0
      %s223 = smul.addr %s222, 4
      %s224 = scalar_lea.vmem %s1, %s223
      %p225 = scmp.lt.s32.totalorder %s21, 0
      %s226 = scalar_select %p225, %s21, 0
      %s227 = scalar_lea.vmem %s2, %s226
      %s228 = smul.u32 16, %s20
      %p229 = scmp.lt.s32.totalorder %s19, 1
      %s230 = scalar_select %p229, %s19, 1
      %p231 = scmp.lt.s32.totalorder %s228, 15
      %s232 = scalar_select %p231, %s228, 15
      %p233 = scmp.lt.s32.totalorder %s21, 0
      %s234 = scalar_select %p233, %s21, 0
      %s235 = smul.addr %s232, 2
      %s236 = sadd.s32 %s234, %s235
      %s237 = smul.addr %s230, 32
      %s238 = sadd.s32 %s236, %s237
      %s239 = smul.addr %s238, 4
      %s240 = scalar_lea.vmem %s3, %s239
      %s241 = smul.u32 16, %s20
      %s243 = smul.u32 %s20, 16
      %s244 = smul.u32 %s243, 3
      %s245 = smul.addr %s244, 4
      %s246 = scalar_lea.vmem %s220, %s245
      %v247 = vld [vmem:[%s246] sm:$0xf]
      %v248 = vld [vmem:[%s246 + $0x4] sm:$0xf]
      %v249 = vld [vmem:[%s246 + $0x8] sm:$0x1]
      %v250 = vld [vmem:[%s246 + $0xc] sm:$0xf]
      %v251 = vld [vmem:[%s246 + $0x10] sm:$0xf]
      %v252 = vld [vmem:[%s246 + $0x14] sm:$0x1]
      %v253 = vld [vmem:[%s246 + $0x18] sm:$0xf]
      %v254 = vld [vmem:[%s246 + $0x1c] sm:$0xf]
      %v255 = vld [vmem:[%s246 + $0x20] sm:$0x1]
      %v256 = vld [vmem:[%s246 + $0x24] sm:$0xf]
      %v257 = vld [vmem:[%s246 + $0x28] sm:$0xf]
      %v258 = vld [vmem:[%s246 + $0x2c] sm:$0x1]
      %v259 = vld [vmem:[%s246 + $0x30] sm:$0xf]
      %v260 = vld [vmem:[%s246 + $0x34] sm:$0xf]
      %v261 = vld [vmem:[%s246 + $0x38] sm:$0x1]
      %v262 = vld [vmem:[%s246 + $0x3c] sm:$0xf]
      %v263 = vld [vmem:[%s246 + $0x40] sm:$0xf]
      %v264 = vld [vmem:[%s246 + $0x44] sm:$0x1]
      %v265 = vld [vmem:[%s246 + $0x48] sm:$0xf]
      %v266 = vld [vmem:[%s246 + $0x4c] sm:$0xf]
      %v267 = vld [vmem:[%s246 + $0x50] sm:$0x1]
      %v268 = vld [vmem:[%s246 + $0x54] sm:$0xf]
      %v269 = vld [vmem:[%s246 + $0x58] sm:$0xf]
      %v270 = vld [vmem:[%s246 + $0x5c] sm:$0x1]
      %v271 = vld [vmem:[%s246 + $0x60] sm:$0xf]
      %v272 = vld [vmem:[%s246 + $0x64] sm:$0xf]
      %v273 = vld [vmem:[%s246 + $0x68] sm:$0x1]
      %v274 = vld [vmem:[%s246 + $0x6c] sm:$0xf]
      %v275 = vld [vmem:[%s246 + $0x70] sm:$0xf]
      %v276 = vld [vmem:[%s246 + $0x74] sm:$0x1]
      %v277 = vld [vmem:[%s246 + $0x78] sm:$0xf]
      %v278 = vld [vmem:[%s246 + $0x7c] sm:$0xf]
      %v279 = vld [vmem:[%s246 + $0x80] sm:$0x1]
      %v280 = vld [vmem:[%s246 + $0x84] sm:$0xf]
      %v281 = vld [vmem:[%s246 + $0x88] sm:$0xf]
      %v282 = vld [vmem:[%s246 + $0x8c] sm:$0x1]
      %v283 = vld [vmem:[%s246 + $0x90] sm:$0xf]
      %v284 = vld [vmem:[%s246 + $0x94] sm:$0xf]
      %v285 = vld [vmem:[%s246 + $0x98] sm:$0x1]
      %v286 = vld [vmem:[%s246 + $0x9c] sm:$0xf]
      %v287 = vld [vmem:[%s246 + $0xa0] sm:$0xf]
      %v288 = vld [vmem:[%s246 + $0xa4] sm:$0x1]
      %v289 = vld [vmem:[%s246 + $0xa8] sm:$0xf]
      %v290 = vld [vmem:[%s246 + $0xac] sm:$0xf]
      %v291 = vld [vmem:[%s246 + $0xb0] sm:$0x1]
      %v292 = vld [vmem:[%s246 + $0xb4] sm:$0xf]
      %v293 = vld [vmem:[%s246 + $0xb8] sm:$0xf]
      %v294 = vld [vmem:[%s246 + $0xbc] sm:$0x1]
      %v295 = vld [vmem:[%s246 + $0xc0] sm:$0xf]
      %v296 = vld [vmem:[%s246 + $0xc4] sm:$0xf]
      %v297 = vld [vmem:[%s246 + $0xc8] sm:$0x1]
      %v298 = vld [vmem:[%s246 + $0xcc] sm:$0xf]
      %v299 = vld [vmem:[%s246 + $0xd0] sm:$0xf]
      %v300 = vld [vmem:[%s246 + $0xd4] sm:$0x1]
      %v337 = vunpack.c.l.b16 %v247
      %v338 = vunpack.c.l.b16 %v248
      %v339 = vunpack.c.l.b16 %v250
      %v340 = vunpack.c.l.b16 %v251
      %v341 = vunpack.c.l.b16 %v253
      %v342 = vunpack.c.l.b16 %v254
      %v343 = vunpack.c.l.b16 %v256
      %v344 = vunpack.c.l.b16 %v257
      %v345 = vunpack.c.l.b16 %v259
      %v346 = vunpack.c.l.b16 %v260
      %v347 = vunpack.c.l.b16 %v262
      %v348 = vunpack.c.l.b16 %v263
      %v349 = vunpack.c.l.b16 %v265
      %v350 = vunpack.c.l.b16 %v266
      %v351 = vunpack.c.l.b16 %v268
      %v352 = vunpack.c.l.b16 %v269
      %v353 = vunpack.c.l.b16 %v271
      %v354 = vunpack.c.l.b16 %v272
      %v355 = vunpack.c.l.b16 %v274
      %v356 = vunpack.c.l.b16 %v275
      %v357 = vunpack.c.l.b16 %v277
      %v358 = vunpack.c.l.b16 %v278
      %v359 = vunpack.c.l.b16 %v280
      %v360 = vunpack.c.l.b16 %v281
      %v361 = vunpack.c.l.b16 %v283
      %v362 = vunpack.c.l.b16 %v284
      %v363 = vunpack.c.l.b16 %v286
      %v364 = vunpack.c.l.b16 %v287
      %v365 = vunpack.c.l.b16 %v289
      %v366 = vunpack.c.l.b16 %v290
      %v367 = vunpack.c.l.b16 %v292
      %v368 = vunpack.c.l.b16 %v293
      %v369 = vunpack.c.l.b16 %v295
      %v370 = vunpack.c.l.b16 %v296
      %v371 = vunpack.c.l.b16 %v298
      %v372 = vunpack.c.l.b16 %v299
      %v373 = vpack.c.b16 %v338, %v337
      %v374 = vpack.c.b16 %v340, %v339
      %v375 = vpack.c.b16 %v342, %v341
      %v376 = vpack.c.b16 %v344, %v343
      %v377 = vpack.c.b16 %v346, %v345
      %v378 = vpack.c.b16 %v348, %v347
      %v379 = vpack.c.b16 %v350, %v349
      %v380 = vpack.c.b16 %v352, %v351
      %v381 = vpack.c.b16 %v354, %v353
      %v382 = vpack.c.b16 %v356, %v355
      %v383 = vpack.c.b16 %v358, %v357
      %v384 = vpack.c.b16 %v360, %v359
      %v385 = vpack.c.b16 %v362, %v361
      %v386 = vpack.c.b16 %v364, %v363
      %v387 = vpack.c.b16 %v366, %v365
      %v388 = vpack.c.b16 %v368, %v367
      %v389 = vpack.c.b16 %v370, %v369
      %v390 = vpack.c.b16 %v372, %v371
      %v409 = vunpack.c.l.b16 %v249
      %v410 = vunpack.c.l.b16 %v252
      %v411 = vunpack.c.l.b16 %v255
      %v412 = vunpack.c.l.b16 %v258
      %v413 = vunpack.c.l.b16 %v261
      %v414 = vunpack.c.l.b16 %v264
      %v415 = vunpack.c.l.b16 %v267
      %v416 = vunpack.c.l.b16 %v270
      %v417 = vunpack.c.l.b16 %v273
      %v418 = vunpack.c.l.b16 %v276
      %v419 = vunpack.c.l.b16 %v279
      %v420 = vunpack.c.l.b16 %v282
      %v421 = vunpack.c.l.b16 %v285
      %v422 = vunpack.c.l.b16 %v288
      %v423 = vunpack.c.l.b16 %v291
      %v424 = vunpack.c.l.b16 %v294
      %v425 = vunpack.c.l.b16 %v297
      %v426 = vunpack.c.l.b16 %v300
      %v427 = vpack.c.b16 %v409, %v409
      %v428 = vpack.c.b16 %v410, %v410
      %v429 = vpack.c.b16 %v411, %v411
      %v430 = vpack.c.b16 %v412, %v412
      %v431 = vpack.c.b16 %v413, %v413
      %v432 = vpack.c.b16 %v414, %v414
      %v433 = vpack.c.b16 %v415, %v415
      %v434 = vpack.c.b16 %v416, %v416
      %v435 = vpack.c.b16 %v417, %v417
      %v436 = vpack.c.b16 %v418, %v418
      %v437 = vpack.c.b16 %v419, %v419
      %v438 = vpack.c.b16 %v420, %v420
      %v439 = vpack.c.b16 %v421, %v421
      %v440 = vpack.c.b16 %v422, %v422
      %v441 = vpack.c.b16 %v423, %v423
      %v442 = vpack.c.b16 %v424, %v424
      %v443 = vpack.c.b16 %v425, %v425
      %v444 = vpack.c.b16 %v426, %v426
      %vm445 = vsmask.f32 7424
      %v447 = vshrl.u32 %v373, 16
      %v449 = vshll.u32 %v373, 16
      %v451 = vrot.slane %v449, 1
      %v452 = vor.u32 %v447, %v451
      %v454 = vshll.u32 %v427, 16
      %v456 = vrot.slane %v454, 1
      %v457 = vsel %vm445, %v452, %v456
      %v459 = vshrl.u32 %v374, 16
      %v461 = vshll.u32 %v374, 16
      %v463 = vrot.slane %v461, 1
      %v464 = vor.u32 %v459, %v463
      %v466 = vshll.u32 %v428, 16
      %v468 = vrot.slane %v466, 1
      %v469 = vsel %vm445, %v464, %v468
      %v471 = vshrl.u32 %v375, 16
      %v473 = vshll.u32 %v375, 16
      %v475 = vrot.slane %v473, 1
      %v476 = vor.u32 %v471, %v475
      %v478 = vshll.u32 %v429, 16
      %v480 = vrot.slane %v478, 1
      %v481 = vsel %vm445, %v476, %v480
      %v483 = vshrl.u32 %v376, 16
      %v485 = vshll.u32 %v376, 16
      %v487 = vrot.slane %v485, 1
      %v488 = vor.u32 %v483, %v487
      %v490 = vshll.u32 %v430, 16
      %v492 = vrot.slane %v490, 1
      %v493 = vsel %vm445, %v488, %v492
      %v495 = vshrl.u32 %v377, 16
      %v497 = vshll.u32 %v377, 16
      %v499 = vrot.slane %v497, 1
      %v500 = vor.u32 %v495, %v499
      %v502 = vshll.u32 %v431, 16
      %v504 = vrot.slane %v502, 1
      %v505 = vsel %vm445, %v500, %v504
      %v507 = vshrl.u32 %v378, 16
      %v509 = vshll.u32 %v378, 16
      %v511 = vrot.slane %v509, 1
      %v512 = vor.u32 %v507, %v511
      %v514 = vshll.u32 %v432, 16
      %v516 = vrot.slane %v514, 1
      %v517 = vsel %vm445, %v512, %v516
      %v519 = vshrl.u32 %v379, 16
      %v521 = vshll.u32 %v379, 16
      %v523 = vrot.slane %v521, 1
      %v524 = vor.u32 %v519, %v523
      %v526 = vshll.u32 %v433, 16
      %v528 = vrot.slane %v526, 1
      %v529 = vsel %vm445, %v524, %v528
      %v531 = vshrl.u32 %v380, 16
      %v533 = vshll.u32 %v380, 16
      %v535 = vrot.slane %v533, 1
      %v536 = vor.u32 %v531, %v535
      %v538 = vshll.u32 %v434, 16
      %v540 = vrot.slane %v538, 1
      %v541 = vsel %vm445, %v536, %v540
      %v543 = vshrl.u32 %v381, 16
      %v545 = vshll.u32 %v381, 16
      %v547 = vrot.slane %v545, 1
      %v548 = vor.u32 %v543, %v547
      %v550 = vshll.u32 %v435, 16
      %v552 = vrot.slane %v550, 1
      %v553 = vsel %vm445, %v548, %v552
      %v555 = vshrl.u32 %v382, 16
      %v557 = vshll.u32 %v382, 16
      %v559 = vrot.slane %v557, 1
      %v560 = vor.u32 %v555, %v559
      %v562 = vshll.u32 %v436, 16
      %v564 = vrot.slane %v562, 1
      %v565 = vsel %vm445, %v560, %v564
      %v567 = vshrl.u32 %v383, 16
      %v569 = vshll.u32 %v383, 16
      %v571 = vrot.slane %v569, 1
      %v572 = vor.u32 %v567, %v571
      %v574 = vshll.u32 %v437, 16
      %v576 = vrot.slane %v574, 1
      %v577 = vsel %vm445, %v572, %v576
      %v579 = vshrl.u32 %v384, 16
      %v581 = vshll.u32 %v384, 16
      %v583 = vrot.slane %v581, 1
      %v584 = vor.u32 %v579, %v583
      %v586 = vshll.u32 %v438, 16
      %v588 = vrot.slane %v586, 1
      %v589 = vsel %vm445, %v584, %v588
      %v591 = vshrl.u32 %v385, 16
      %v593 = vshll.u32 %v385, 16
      %v595 = vrot.slane %v593, 1
      %v596 = vor.u32 %v591, %v595
      %v598 = vshll.u32 %v439, 16
      %v600 = vrot.slane %v598, 1
      %v601 = vsel %vm445, %v596, %v600
      %v603 = vshrl.u32 %v386, 16
      %v605 = vshll.u32 %v386, 16
      %v607 = vrot.slane %v605, 1
      %v608 = vor.u32 %v603, %v607
      %v610 = vshll.u32 %v440, 16
      %v612 = vrot.slane %v610, 1
      %v613 = vsel %vm445, %v608, %v612
      %v615 = vshrl.u32 %v387, 16
      %v617 = vshll.u32 %v387, 16
      %v619 = vrot.slane %v617, 1
      %v620 = vor.u32 %v615, %v619
      %v622 = vshll.u32 %v441, 16
      %v624 = vrot.slane %v622, 1
      %v625 = vsel %vm445, %v620, %v624
      %v627 = vshrl.u32 %v388, 16
      %v629 = vshll.u32 %v388, 16
      %v631 = vrot.slane %v629, 1
      %v632 = vor.u32 %v627, %v631
      %v634 = vshll.u32 %v442, 16
      %v636 = vrot.slane %v634, 1
      %v637 = vsel %vm445, %v632, %v636
      %v639 = vshrl.u32 %v389, 16
      %v641 = vshll.u32 %v389, 16
      %v643 = vrot.slane %v641, 1
      %v644 = vor.u32 %v639, %v643
      %v646 = vshll.u32 %v443, 16
      %v648 = vrot.slane %v646, 1
      %v649 = vsel %vm445, %v644, %v648
      %v651 = vshrl.u32 %v390, 16
      %v653 = vshll.u32 %v390, 16
      %v655 = vrot.slane %v653, 1
      %v656 = vor.u32 %v651, %v655
      %v658 = vshll.u32 %v444, 16
      %v660 = vrot.slane %v658, 1
      %v661 = vsel %vm445, %v656, %v660
      %662 = vrot.lane.b32.xlu0 %v457, 3
      %v663 = vpop.permute.xlu0 %662
      %664 = vrot.lane.b32.xlu0 %v469, 3
      %v665 = vpop.permute.xlu0 %664
      %666 = vrot.lane.b32.xlu0 %v481, 3
      %v667 = vpop.permute.xlu0 %666
      %668 = vrot.lane.b32.xlu0 %v493, 3
      %v669 = vpop.permute.xlu0 %668
      %670 = vrot.lane.b32.xlu0 %v505, 3
      %v671 = vpop.permute.xlu0 %670
      %672 = vrot.lane.b32.xlu0 %v517, 3
      %v673 = vpop.permute.xlu0 %672
      %674 = vrot.lane.b32.xlu0 %v529, 3
      %v675 = vpop.permute.xlu0 %674
      %676 = vrot.lane.b32.xlu0 %v541, 3
      %v677 = vpop.permute.xlu0 %676
      %678 = vrot.lane.b32.xlu0 %v553, 3
      %v679 = vpop.permute.xlu0 %678
      %680 = vrot.lane.b32.xlu0 %v565, 3
      %v681 = vpop.permute.xlu0 %680
      %682 = vrot.lane.b32.xlu0 %v577, 3
      %v683 = vpop.permute.xlu0 %682
      %684 = vrot.lane.b32.xlu0 %v589, 3
      %v685 = vpop.permute.xlu0 %684
      %686 = vrot.lane.b32.xlu0 %v601, 3
      %v687 = vpop.permute.xlu0 %686
      %688 = vrot.lane.b32.xlu0 %v613, 3
      %v689 = vpop.permute.xlu0 %688
      %690 = vrot.lane.b32.xlu0 %v625, 3
      %v691 = vpop.permute.xlu0 %690
      %692 = vrot.lane.b32.xlu0 %v637, 3
      %v693 = vpop.permute.xlu0 %692
      %694 = vrot.lane.b32.xlu0 %v649, 3
      %v695 = vpop.permute.xlu0 %694
      %696 = vrot.lane.b32.xlu0 %v661, 3
      %v697 = vpop.permute.xlu0 %696
      %vm698 = vcmask 1046528
      %v699 = vrot.slane %v373, 1
      %v700 = vrot.slane %v427, 1
      %v701 = vsel %vm698, %v699, %v700
      %v702 = vrot.slane %v374, 1
      %v703 = vrot.slane %v428, 1
      %v704 = vsel %vm698, %v702, %v703
      %v705 = vrot.slane %v375, 1
      %v706 = vrot.slane %v429, 1
      %v707 = vsel %vm698, %v705, %v706
      %v708 = vrot.slane %v376, 1
      %v709 = vrot.slane %v430, 1
      %v710 = vsel %vm698, %v708, %v709
      %v711 = vrot.slane %v377, 1
      %v712 = vrot.slane %v431, 1
      %v713 = vsel %vm698, %v711, %v712
      %v714 = vrot.slane %v378, 1
      %v715 = vrot.slane %v432, 1
      %v716 = vsel %vm698, %v714, %v715
      %v717 = vrot.slane %v379, 1
      %v718 = vrot.slane %v433, 1
      %v719 = vsel %vm698, %v717, %v718
      %v720 = vrot.slane %v380, 1
      %v721 = vrot.slane %v434, 1
      %v722 = vsel %vm698, %v720, %v721
      %v723 = vrot.slane %v381, 1
      %v724 = vrot.slane %v435, 1
      %v725 = vsel %vm698, %v723, %v724
      %v726 = vrot.slane %v382, 1
      %v727 = vrot.slane %v436, 1
      %v728 = vsel %vm698, %v726, %v727
      %v729 = vrot.slane %v383, 1
      %v730 = vrot.slane %v437, 1
      %v731 = vsel %vm698, %v729, %v730
      %v732 = vrot.slane %v384, 1
      %v733 = vrot.slane %v438, 1
      %v734 = vsel %vm698, %v732, %v733
      %v735 = vrot.slane %v385, 1
      %v736 = vrot.slane %v439, 1
      %v737 = vsel %vm698, %v735, %v736
      %v738 = vrot.slane %v386, 1
      %v739 = vrot.slane %v440, 1
      %v740 = vsel %vm698, %v738, %v739
      %v741 = vrot.slane %v387, 1
      %v742 = vrot.slane %v441, 1
      %v743 = vsel %vm698, %v741, %v742
      %v744 = vrot.slane %v388, 1
      %v745 = vrot.slane %v442, 1
      %v746 = vsel %vm698, %v744, %v745
      %v747 = vrot.slane %v389, 1
      %v748 = vrot.slane %v443, 1
      %v749 = vsel %vm698, %v747, %v748
      %v750 = vrot.slane %v390, 1
      %v751 = vrot.slane %v444, 1
      %v752 = vsel %vm698, %v750, %v751
      %753 = vrot.lane.b32.xlu0 %v701, 6
      %v754 = vpop.permute.xlu0 %753
      %755 = vrot.lane.b32.xlu0 %v704, 6
      %v756 = vpop.permute.xlu0 %755
      %757 = vrot.lane.b32.xlu0 %v707, 6
      %v758 = vpop.permute.xlu0 %757
      %759 = vrot.lane.b32.xlu0 %v710, 6
      %v760 = vpop.permute.xlu0 %759
      %761 = vrot.lane.b32.xlu0 %v713, 6
      %v762 = vpop.permute.xlu0 %761
      %763 = vrot.lane.b32.xlu0 %v716, 6
      %v764 = vpop.permute.xlu0 %763
      %765 = vrot.lane.b32.xlu0 %v719, 6
      %v766 = vpop.permute.xlu0 %765
      %767 = vrot.lane.b32.xlu0 %v722, 6
      %v768 = vpop.permute.xlu0 %767
      %769 = vrot.lane.b32.xlu0 %v725, 6
      %v770 = vpop.permute.xlu0 %769
      %771 = vrot.lane.b32.xlu0 %v728, 6
      %v772 = vpop.permute.xlu0 %771
      %773 = vrot.lane.b32.xlu0 %v731, 6
      %v774 = vpop.permute.xlu0 %773
      %775 = vrot.lane.b32.xlu0 %v734, 6
      %v776 = vpop.permute.xlu0 %775
      %777 = vrot.lane.b32.xlu0 %v737, 6
      %v778 = vpop.permute.xlu0 %777
      %779 = vrot.lane.b32.xlu0 %v740, 6
      %v780 = vpop.permute.xlu0 %779
      %781 = vrot.lane.b32.xlu0 %v743, 6
      %v782 = vpop.permute.xlu0 %781
      %783 = vrot.lane.b32.xlu0 %v746, 6
      %v784 = vpop.permute.xlu0 %783
      %785 = vrot.lane.b32.xlu0 %v749, 6
      %v786 = vpop.permute.xlu0 %785
      %787 = vrot.lane.b32.xlu0 %v752, 6
      %v788 = vpop.permute.xlu0 %787
      %vm789 = vcmask 23552
      %v791 = vsel %vm789, %v373, %v663
      %v793 = vsel %vm789, %v374, %v665
      %v795 = vsel %vm789, %v375, %v667
      %v797 = vsel %vm789, %v376, %v669
      %v799 = vsel %vm789, %v377, %v671
      %v801 = vsel %vm789, %v378, %v673
      %v803 = vsel %vm789, %v379, %v675
      %v805 = vsel %vm789, %v380, %v677
      %v807 = vsel %vm789, %v381, %v679
      %v809 = vsel %vm789, %v382, %v681
      %v811 = vsel %vm789, %v383, %v683
      %v813 = vsel %vm789, %v384, %v685
      %v815 = vsel %vm789, %v385, %v687
      %v817 = vsel %vm789, %v386, %v689
      %v819 = vsel %vm789, %v387, %v691
      %v821 = vsel %vm789, %v388, %v693
      %v823 = vsel %vm789, %v389, %v695
      %v825 = vsel %vm789, %v390, %v697
      %vm826 = vcmask 48128
      %v828 = vsel %vm826, %v791, %v754
      %v830 = vsel %vm826, %v793, %v756
      %v832 = vsel %vm826, %v795, %v758
      %v834 = vsel %vm826, %v797, %v760
      %v836 = vsel %vm826, %v799, %v762
      %v838 = vsel %vm826, %v801, %v764
      %v840 = vsel %vm826, %v803, %v766
      %v842 = vsel %vm826, %v805, %v768
      %v844 = vsel %vm826, %v807, %v770
      %v846 = vsel %vm826, %v809, %v772
      %v848 = vsel %vm826, %v811, %v774
      %v850 = vsel %vm826, %v813, %v776
      %v852 = vsel %vm826, %v815, %v778
      %v854 = vsel %vm826, %v817, %v780
      %v856 = vsel %vm826, %v819, %v782
      %v858 = vsel %vm826, %v821, %v784
      %v860 = vsel %vm826, %v823, %v786
      %v862 = vsel %vm826, %v825, %v788
      %v863 = vld [vmem:[%s224] sm:$0xf]
      %v864 = vld [vmem:[%s224 + $0x4] sm:$0x1]
      %v867 = vunpack.c.l.b16 %v863
      %v868 = vunpack.c.l.b16 %v864
      %v869 = vpack.c.b16 %v868, %v867
      %vm870 = vcmask 72704
      %v871 = vsel %vm870, %v828, 0
      %v873 = vsel %vm870, %v830, 0
      %v875 = vsel %vm870, %v832, 0
      %v877 = vsel %vm870, %v834, 0
      %v879 = vsel %vm870, %v836, 0
      %v881 = vsel %vm870, %v838, 0
      %v883 = vsel %vm870, %v840, 0
      %v885 = vsel %vm870, %v842, 0
      %v887 = vsel %vm870, %v844, 0
      %v889 = vsel %vm870, %v846, 0
      %v891 = vsel %vm870, %v848, 0
      %v893 = vsel %vm870, %v850, 0
      %v895 = vsel %vm870, %v852, 0
      %v897 = vsel %vm870, %v854, 0
      %v899 = vsel %vm870, %v856, 0
      %v901 = vsel %vm870, %v858, 0
      %vm903 = vcmask 1043456
      %vm904 = vcmask 1044480
      %v905 = vsel %vm903, 4294967295, 65535
      %v906 = vsel %vm904, %v905, 0
      %v908 = vand.u32 %v869, %v906
      %910 = vmatprep.subr.bf16.mxu0 0
      %911 = vmatpush1.bf16.msra.mxu0 0
      %912 = vmatprep.subr.bf16.mxu0 0
      %913 = vmatpush1.bf16.msra.mxu0 0
      %914 = vmatprep.subr.bf16.mxu0 0
      %915 = vmatpush1.bf16.msra.mxu0 0
      %916 = vmatprep.subr.bf16.mxu0 0
      %917 = vmatpush1.bf16.msra.mxu0 0
      %918 = vmatprep.subr.bf16.mxu0 0
      %919 = vmatpush1.bf16.msra.mxu0 0
      %920 = vmatprep.subr.bf16.mxu0 0
      %921 = vmatpush1.bf16.msra.mxu0 0
      %922 = vmatprep.subr.bf16.mxu0 0
      %923 = vmatpush1.bf16.msra.mxu0 0
      %924 = vmatprep.subr.bf16.mxu0 0
      %925 = vmatpush1.bf16.msra.mxu0 %v908
      %926 = vmatprep.subr.bf16.mxu0 0
      %927 = vmatpush2.bf16.msra.mxu0 0
      %928 = vmatprep.subr.bf16.mxu0 0
      %929 = vmatpush2.bf16.msra.mxu0 0
      %930 = vmatprep.subr.bf16.mxu0 0
      %931 = vmatpush2.bf16.msra.mxu0 0
      %932 = vmatprep.subr.bf16.mxu0 0
      %933 = vmatpush2.bf16.msra.mxu0 0
      %934 = vmatprep.subr.bf16.mxu0 0
      %935 = vmatpush2.bf16.msra.mxu0 0
      %936 = vmatprep.subr.bf16.mxu0 0
      %937 = vmatpush2.bf16.msra.mxu0 0
      %938 = vmatprep.subr.bf16.mxu0 0
      %939 = vmatpush2.bf16.msra.mxu0 0
      %940 = vmatprep.subr.bf16.mxu0 0
      %941 = vmatpush2.bf16.msra.mxu0 0
      %942 = vmatprep.mubr.bf16.mxu0 0
      %943 = vmatmul.mubr.bf16.gmra.mxu0 %v871
      %v944 = vpop.f32.mrf.mxu0
      %v945 = vadd.f32 0.0, %v944
      %v946 = vpop.f32.mrf.mxu0
      %v947 = vpop.f32.mrf.mxu0
      %v948 = vadd.f32 0.0, %v947
      %v949 = vpop.f32.mrf.mxu0
      %950 = vmatprep.mubr.bf16.mxu0 0
      %951 = vmatmul.mubr.bf16.gmra.mxu0 %v873
      %v952 = vpop.f32.mrf.mxu0
      %v953 = vadd.f32 0.0, %v952
      %v954 = vpop.f32.mrf.mxu0
      %v955 = vpop.f32.mrf.mxu0
      %v956 = vadd.f32 0.0, %v955
      %v957 = vpop.f32.mrf.mxu0
      %958 = vmatprep.mubr.bf16.mxu0 0
      %959 = vmatmul.mubr.bf16.gmra.mxu0 %v875
      %v960 = vpop.f32.mrf.mxu0
      %v961 = vadd.f32 0.0, %v960
      %v962 = vpop.f32.mrf.mxu0
      %v963 = vpop.f32.mrf.mxu0
      %v964 = vadd.f32 0.0, %v963
      %v965 = vpop.f32.mrf.mxu0
      %966 = vmatprep.mubr.bf16.mxu0 0
      %967 = vmatmul.mubr.bf16.gmra.mxu0 %v877
      %v968 = vpop.f32.mrf.mxu0
      %v969 = vadd.f32 0.0, %v968
      %v970 = vpop.f32.mrf.mxu0
      %v971 = vpop.f32.mrf.mxu0
      %v972 = vadd.f32 0.0, %v971
      %v973 = vpop.f32.mrf.mxu0
      %974 = vmatprep.mubr.bf16.mxu0 0
      %975 = vmatmul.mubr.bf16.gmra.mxu0 %v879
      %v976 = vpop.f32.mrf.mxu0
      %v977 = vadd.f32 0.0, %v976
      %v978 = vpop.f32.mrf.mxu0
      %v979 = vpop.f32.mrf.mxu0
      %v980 = vadd.f32 0.0, %v979
      %v981 = vpop.f32.mrf.mxu0
      %982 = vmatprep.mubr.bf16.mxu0 0
      %983 = vmatmul.mubr.bf16.gmra.mxu0 %v881
      %v984 = vpop.f32.mrf.mxu0
      %v985 = vadd.f32 0.0, %v984
      %v986 = vpop.f32.mrf.mxu0
      %v987 = vpop.f32.mrf.mxu0
      %v988 = vadd.f32 0.0, %v987
      %v989 = vpop.f32.mrf.mxu0
      %990 = vmatprep.mubr.bf16.mxu0 0
      %991 = vmatmul.mubr.bf16.gmra.mxu0 %v883
      %v992 = vpop.f32.mrf.mxu0
      %v993 = vadd.f32 0.0, %v992
      %v994 = vpop.f32.mrf.mxu0
      %v995 = vpop.f32.mrf.mxu0
      %v996 = vadd.f32 0.0, %v995
      %v997 = vpop.f32.mrf.mxu0
      %998 = vmatprep.mubr.bf16.mxu0 0
      %999 = vmatmul.mubr.bf16.gmra.mxu0 %v885
      %v1000 = vpop.f32.mrf.mxu0
      %v1001 = vadd.f32 0.0, %v1000
      %v1002 = vpop.f32.mrf.mxu0
      %v1003 = vpop.f32.mrf.mxu0
      %v1004 = vadd.f32 0.0, %v1003
      %v1005 = vpop.f32.mrf.mxu0
      %1006 = vmatprep.mubr.bf16.mxu0 0
      %1007 = vmatmul.mubr.bf16.gmra.mxu0 %v887
      %v1008 = vpop.f32.mrf.mxu0
      %v1009 = vadd.f32 0.0, %v1008
      %v1010 = vpop.f32.mrf.mxu0
      %v1011 = vpop.f32.mrf.mxu0
      %v1012 = vadd.f32 0.0, %v1011
      %v1013 = vpop.f32.mrf.mxu0
      %1014 = vmatprep.mubr.bf16.mxu0 0
      %1015 = vmatmul.mubr.bf16.gmra.mxu0 %v889
      %v1016 = vpop.f32.mrf.mxu0
      %v1017 = vadd.f32 0.0, %v1016
      %v1018 = vpop.f32.mrf.mxu0
      %v1019 = vpop.f32.mrf.mxu0
      %v1020 = vadd.f32 0.0, %v1019
      %v1021 = vpop.f32.mrf.mxu0
      %1022 = vmatprep.mubr.bf16.mxu0 0
      %1023 = vmatmul.mubr.bf16.gmra.mxu0 %v891
      %v1024 = vpop.f32.mrf.mxu0
      %v1025 = vadd.f32 0.0, %v1024
      %v1026 = vpop.f32.mrf.mxu0
      %v1027 = vpop.f32.mrf.mxu0
      %v1028 = vadd.f32 0.0, %v1027
      %v1029 = vpop.f32.mrf.mxu0
      %1030 = vmatprep.mubr.bf16.mxu0 0
      %1031 = vmatmul.mubr.bf16.gmra.mxu0 %v893
      %v1032 = vpop.f32.mrf.mxu0
      %v1033 = vadd.f32 0.0, %v1032
      %v1034 = vpop.f32.mrf.mxu0
      %v1035 = vpop.f32.mrf.mxu0
      %v1036 = vadd.f32 0.0, %v1035
      %v1037 = vpop.f32.mrf.mxu0
      %1038 = vmatprep.mubr.bf16.mxu0 0
      %1039 = vmatmul.mubr.bf16.gmra.mxu0 %v895
      %v1040 = vpop.f32.mrf.mxu0
      %v1041 = vadd.f32 0.0, %v1040
      %v1042 = vpop.f32.mrf.mxu0
      %v1043 = vpop.f32.mrf.mxu0
      %v1044 = vadd.f32 0.0, %v1043
      %v1045 = vpop.f32.mrf.mxu0
      %1046 = vmatprep.mubr.bf16.mxu0 0
      %1047 = vmatmul.mubr.bf16.gmra.mxu0 %v897
      %v1048 = vpop.f32.mrf.mxu0
      %v1049 = vadd.f32 0.0, %v1048
      %v1050 = vpop.f32.mrf.mxu0
      %v1051 = vpop.f32.mrf.mxu0
      %v1052 = vadd.f32 0.0, %v1051
      %v1053 = vpop.f32.mrf.mxu0
      %1054 = vmatprep.mubr.bf16.mxu0 0
      %1055 = vmatmul.mubr.bf16.gmra.mxu0 %v899
      %v1056 = vpop.f32.mrf.mxu0
      %v1057 = vadd.f32 0.0, %v1056
      %v1058 = vpop.f32.mrf.mxu0
      %v1059 = vpop.f32.mrf.mxu0
      %v1060 = vadd.f32 0.0, %v1059
      %v1061 = vpop.f32.mrf.mxu0
      %1062 = vmatprep.mubr.bf16.mxu0 0
      %1063 = vmatmul.mubr.bf16.gmra.mxu0 %v901
      %v1064 = vpop.f32.mrf.mxu0
      %v1065 = vadd.f32 0.0, %v1064
      %v1066 = vpop.f32.mrf.mxu0
      %v1067 = vpop.f32.mrf.mxu0
      %v1068 = vadd.f32 0.0, %v1067
      %v1069 = vpop.f32.mrf.mxu0
      %1070 = vdwg.mxu0
      %vm1071 = vcmask 523264
      %1072 = vst.msk [vmem:[#allocation2] sm:$0xff] %vm1071, %v945
      %1073 = vst.msk [vmem:[#allocation2 + $0x8] sm:$0xff] %vm1071, %v948
      %1074 = vst.msk [vmem:[#allocation2 + $0x10] sm:$0xff] %vm1071, %v953
      %1075 = vst.msk [vmem:[#allocation2 + $0x18] sm:$0xff] %vm1071, %v956
      %1076 = vst.msk [vmem:[#allocation2 + $0x20] sm:$0xff] %vm1071, %v961
      %1077 = vst.msk [vmem:[#allocation2 + $0x28] sm:$0xff] %vm1071, %v964
      %1078 = vst.msk [vmem:[#allocation2 + $0x30] sm:$0xff] %vm1071, %v969
      %1079 = vst.msk [vmem:[#allocation2 + $0x38] sm:$0xff] %vm1071, %v972
      %1080 = vst.msk [vmem:[#allocation2 + $0x40] sm:$0xff] %vm1071, %v977
      %1081 = vst.msk [vmem:[#allocation2 + $0x48] sm:$0xff] %vm1071, %v980
      %1082 = vst.msk [vmem:[#allocation2 + $0x50] sm:$0xff] %vm1071, %v985
      %1083 = vst.msk [vmem:[#allocation2 + $0x58] sm:$0xff] %vm1071, %v988
      %1084 = vst.msk [vmem:[#allocation2 + $0x60] sm:$0xff] %vm1071, %v993
      %1085 = vst.msk [vmem:[#allocation2 + $0x68] sm:$0xff] %vm1071, %v996
      %1086 = vst.msk [vmem:[#allocation2 + $0x70] sm:$0xff] %vm1071, %v1001
      %1087 = vst.msk [vmem:[#allocation2 + $0x78] sm:$0xff] %vm1071, %v1004
      %1088 = vst.msk [vmem:[#allocation2 + $0x80] sm:$0xff] %vm1071, %v1009
      %1089 = vst.msk [vmem:[#allocation2 + $0x88] sm:$0xff] %vm1071, %v1012
      %1090 = vst.msk [vmem:[#allocation2 + $0x90] sm:$0xff] %vm1071, %v1017
      %1091 = vst.msk [vmem:[#allocation2 + $0x98] sm:$0xff] %vm1071, %v1020
      %1092 = vst.msk [vmem:[#allocation2 + $0xa0] sm:$0xff] %vm1071, %v1025
      %1093 = vst.msk [vmem:[#allocation2 + $0xa8] sm:$0xff] %vm1071, %v1028
      %1094 = vst.msk [vmem:[#allocation2 + $0xb0] sm:$0xff] %vm1071, %v1033
      %1095 = vst.msk [vmem:[#allocation2 + $0xb8] sm:$0xff] %vm1071, %v1036
      %1096 = vst.msk [vmem:[#allocation2 + $0xc0] sm:$0xff] %vm1071, %v1041
      %1097 = vst.msk [vmem:[#allocation2 + $0xc8] sm:$0xff] %vm1071, %v1044
      %1098 = vst.msk [vmem:[#allocation2 + $0xd0] sm:$0xff] %vm1071, %v1049
      %1099 = vst.msk [vmem:[#allocation2 + $0xd8] sm:$0xff] %vm1071, %v1052
      %1100 = vst.msk [vmem:[#allocation2 + $0xe0] sm:$0xff] %vm1071, %v1057
      %1101 = vst.msk [vmem:[#allocation2 + $0xe8] sm:$0xff] %vm1071, %v1060
      %1102 = vst.msk [vmem:[#allocation2 + $0xf0] sm:$0xff] %vm1071, %v1065
      %1103 = vst.msk [vmem:[#allocation2 + $0xf8] sm:$0xff] %vm1071, %v1068
      %s1104 = scalar_lea.vmem %s224, 8
      %v1105 = vld [vmem:[%s1104] sm:$0xf]
      %v1106 = vld [vmem:[%s1104 + $0x4] sm:$0x1]
      %v1109 = vunpack.c.l.b16 %v1105
      %v1110 = vunpack.c.l.b16 %v1106
      %v1111 = vpack.c.b16 %v1110, %v1109
      %v1112 = vsel %vm870, %v860, 0
      %v1115 = vand.u32 %v1111, %v906
      %1117 = vmatprep.subr.bf16.mxu0 0
      %1118 = vmatpush1.bf16.msra.mxu0 0
      %1119 = vmatprep.subr.bf16.mxu0 0
      %1120 = vmatpush1.bf16.msra.mxu0 0
      %1121 = vmatprep.subr.bf16.mxu0 0
      %1122 = vmatpush1.bf16.msra.mxu0 0
      %1123 = vmatprep.subr.bf16.mxu0 0
      %1124 = vmatpush1.bf16.msra.mxu0 0
      %1125 = vmatprep.subr.bf16.mxu0 0
      %1126 = vmatpush1.bf16.msra.mxu0 0
      %1127 = vmatprep.subr.bf16.mxu0 0
      %1128 = vmatpush1.bf16.msra.mxu0 0
      %1129 = vmatprep.subr.bf16.mxu0 0
      %1130 = vmatpush1.bf16.msra.mxu0 0
      %1131 = vmatprep.subr.bf16.mxu0 0
      %1132 = vmatpush1.bf16.msra.mxu0 %v1115
      %1133 = vmatprep.subr.bf16.mxu0 0
      %1134 = vmatpush2.bf16.msra.mxu0 0
      %1135 = vmatprep.subr.bf16.mxu0 0
      %1136 = vmatpush2.bf16.msra.mxu0 0
      %1137 = vmatprep.subr.bf16.mxu0 0
      %1138 = vmatpush2.bf16.msra.mxu0 0
      %1139 = vmatprep.subr.bf16.mxu0 0
      %1140 = vmatpush2.bf16.msra.mxu0 0
      %1141 = vmatprep.subr.bf16.mxu0 0
      %1142 = vmatpush2.bf16.msra.mxu0 0
      %1143 = vmatprep.subr.bf16.mxu0 0
      %1144 = vmatpush2.bf16.msra.mxu0 0
      %1145 = vmatprep.subr.bf16.mxu0 0
      %1146 = vmatpush2.bf16.msra.mxu0 0
      %1147 = vmatprep.subr.bf16.mxu0 0
      %1148 = vmatpush2.bf16.msra.mxu0 0
      %1149 = vmatprep.mubr.bf16.mxu0 0
      %1150 = vmatmul.mubr.bf16.gmra.mxu0 %v873
      %v1151 = vpop.f32.mrf.mxu0
      %v1152 = vadd.f32 0.0, %v1151
      %v1153 = vpop.f32.mrf.mxu0
      %v1154 = vpop.f32.mrf.mxu0
      %v1155 = vadd.f32 0.0, %v1154
      %v1156 = vpop.f32.mrf.mxu0
      %1157 = vmatprep.mubr.bf16.mxu0 0
      %1158 = vmatmul.mubr.bf16.gmra.mxu0 %v875
      %v1159 = vpop.f32.mrf.mxu0
      %v1160 = vadd.f32 0.0, %v1159
      %v1161 = vpop.f32.mrf.mxu0
      %v1162 = vpop.f32.mrf.mxu0
      %v1163 = vadd.f32 0.0, %v1162
      %v1164 = vpop.f32.mrf.mxu0
      %1165 = vmatprep.mubr.bf16.mxu0 0
      %1166 = vmatmul.mubr.bf16.gmra.mxu0 %v877
      %v1167 = vpop.f32.mrf.mxu0
      %v1168 = vadd.f32 0.0, %v1167
      %v1169 = vpop.f32.mrf.mxu0
      %v1170 = vpop.f32.mrf.mxu0
      %v1171 = vadd.f32 0.0, %v1170
      %v1172 = vpop.f32.mrf.mxu0
      %1173 = vmatprep.mubr.bf16.mxu0 0
      %1174 = vmatmul.mubr.bf16.gmra.mxu0 %v879
      %v1175 = vpop.f32.mrf.mxu0
      %v1176 = vadd.f32 0.0, %v1175
      %v1177 = vpop.f32.mrf.mxu0
      %v1178 = vpop.f32.mrf.mxu0
      %v1179 = vadd.f32 0.0, %v1178
      %v1180 = vpop.f32.mrf.mxu0
      %1181 = vmatprep.mubr.bf16.mxu0 0
      %1182 = vmatmul.mubr.bf16.gmra.mxu0 %v881
      %v1183 = vpop.f32.mrf.mxu0
      %v1184 = vadd.f32 0.0, %v1183
      %v1185 = vpop.f32.mrf.mxu0
      %v1186 = vpop.f32.mrf.mxu0
      %v1187 = vadd.f32 0.0, %v1186
      %v1188 = vpop.f32.mrf.mxu0
      %1189 = vmatprep.mubr.bf16.mxu0 0
      %1190 = vmatmul.mubr.bf16.gmra.mxu0 %v883
      %v1191 = vpop.f32.mrf.mxu0
      %v1192 = vadd.f32 0.0, %v1191
      %v1193 = vpop.f32.mrf.mxu0
      %v1194 = vpop.f32.mrf.mxu0
      %v1195 = vadd.f32 0.0, %v1194
      %v1196 = vpop.f32.mrf.mxu0
      %1197 = vmatprep.mubr.bf16.mxu0 0
      %1198 = vmatmul.mubr.bf16.gmra.mxu0 %v885
      %v1199 = vpop.f32.mrf.mxu0
      %v1200 = vadd.f32 0.0, %v1199
      %v1201 = vpop.f32.mrf.mxu0
      %v1202 = vpop.f32.mrf.mxu0
      %v1203 = vadd.f32 0.0, %v1202
      %v1204 = vpop.f32.mrf.mxu0
      %1205 = vmatprep.mubr.bf16.mxu0 0
      %1206 = vmatmul.mubr.bf16.gmra.mxu0 %v887
      %v1207 = vpop.f32.mrf.mxu0
      %v1208 = vadd.f32 0.0, %v1207
      %v1209 = vpop.f32.mrf.mxu0
      %v1210 = vpop.f32.mrf.mxu0
      %v1211 = vadd.f32 0.0, %v1210
      %v1212 = vpop.f32.mrf.mxu0
      %1213 = vmatprep.mubr.bf16.mxu0 0
      %1214 = vmatmul.mubr.bf16.gmra.mxu0 %v889
      %v1215 = vpop.f32.mrf.mxu0
      %v1216 = vadd.f32 0.0, %v1215
      %v1217 = vpop.f32.mrf.mxu0
      %v1218 = vpop.f32.mrf.mxu0
      %v1219 = vadd.f32 0.0, %v1218
      %v1220 = vpop.f32.mrf.mxu0
      %1221 = vmatprep.mubr.bf16.mxu0 0
      %1222 = vmatmul.mubr.bf16.gmra.mxu0 %v891
      %v1223 = vpop.f32.mrf.mxu0
      %v1224 = vadd.f32 0.0, %v1223
      %v1225 = vpop.f32.mrf.mxu0
      %v1226 = vpop.f32.mrf.mxu0
      %v1227 = vadd.f32 0.0, %v1226
      %v1228 = vpop.f32.mrf.mxu0
      %1229 = vmatprep.mubr.bf16.mxu0 0
      %1230 = vmatmul.mubr.bf16.gmra.mxu0 %v893
      %v1231 = vpop.f32.mrf.mxu0
      %v1232 = vadd.f32 0.0, %v1231
      %v1233 = vpop.f32.mrf.mxu0
      %v1234 = vpop.f32.mrf.mxu0
      %v1235 = vadd.f32 0.0, %v1234
      %v1236 = vpop.f32.mrf.mxu0
      %1237 = vmatprep.mubr.bf16.mxu0 0
      %1238 = vmatmul.mubr.bf16.gmra.mxu0 %v895
      %v1239 = vpop.f32.mrf.mxu0
      %v1240 = vadd.f32 0.0, %v1239
      %v1241 = vpop.f32.mrf.mxu0
      %v1242 = vpop.f32.mrf.mxu0
      %v1243 = vadd.f32 0.0, %v1242
      %v1244 = vpop.f32.mrf.mxu0
      %1245 = vmatprep.mubr.bf16.mxu0 0
      %1246 = vmatmul.mubr.bf16.gmra.mxu0 %v897
      %v1247 = vpop.f32.mrf.mxu0
      %v1248 = vadd.f32 0.0, %v1247
      %v1249 = vpop.f32.mrf.mxu0
      %v1250 = vpop.f32.mrf.mxu0
      %v1251 = vadd.f32 0.0, %v1250
      %v1252 = vpop.f32.mrf.mxu0
      %1253 = vmatprep.mubr.bf16.mxu0 0
      %1254 = vmatmul.mubr.bf16.gmra.mxu0 %v899
      %v1255 = vpop.f32.mrf.mxu0
      %v1256 = vadd.f32 0.0, %v1255
      %v1257 = vpop.f32.mrf.mxu0
      %v1258 = vpop.f32.mrf.mxu0
      %v1259 = vadd.f32 0.0, %v1258
      %v1260 = vpop.f32.mrf.mxu0
      %1261 = vmatprep.mubr.bf16.mxu0 0
      %1262 = vmatmul.mubr.bf16.gmra.mxu0 %v901
      %v1263 = vpop.f32.mrf.mxu0
      %v1264 = vadd.f32 0.0, %v1263
      %v1265 = vpop.f32.mrf.mxu0
      %v1266 = vpop.f32.mrf.mxu0
      %v1267 = vadd.f32 0.0, %v1266
      %v1268 = vpop.f32.mrf.mxu0
      %1269 = vmatprep.mubr.bf16.mxu0 0
      %1270 = vmatmul.mubr.bf16.gmra.mxu0 %v1112
      %v1271 = vpop.f32.mrf.mxu0
      %v1272 = vadd.f32 0.0, %v1271
      %v1273 = vpop.f32.mrf.mxu0
      %v1274 = vpop.f32.mrf.mxu0
      %v1275 = vadd.f32 0.0, %v1274
      %v1276 = vpop.f32.mrf.mxu0
      %1277 = vdwg.mxu0
      %v1278 = vld [vmem:[#allocation2] sm:$0xff]
      %v1279 = vld [vmem:[#allocation2 + $0x8] sm:$0xff]
      %v1280 = vld [vmem:[#allocation2 + $0x10] sm:$0xff]
      %v1281 = vld [vmem:[#allocation2 + $0x18] sm:$0xff]
      %v1282 = vld [vmem:[#allocation2 + $0x20] sm:$0xff]
      %v1283 = vld [vmem:[#allocation2 + $0x28] sm:$0xff]
      %v1284 = vld [vmem:[#allocation2 + $0x30] sm:$0xff]
      %v1285 = vld [vmem:[#allocation2 + $0x38] sm:$0xff]
      %v1286 = vld [vmem:[#allocation2 + $0x40] sm:$0xff]
      %v1287 = vld [vmem:[#allocation2 + $0x48] sm:$0xff]
      %v1288 = vld [vmem:[#allocation2 + $0x50] sm:$0xff]
      %v1289 = vld [vmem:[#allocation2 + $0x58] sm:$0xff]
      %v1290 = vld [vmem:[#allocation2 + $0x60] sm:$0xff]
      %v1291 = vld [vmem:[#allocation2 + $0x68] sm:$0xff]
      %v1292 = vld [vmem:[#allocation2 + $0x70] sm:$0xff]
      %v1293 = vld [vmem:[#allocation2 + $0x78] sm:$0xff]
      %v1294 = vld [vmem:[#allocation2 + $0x80] sm:$0xff]
      %v1295 = vld [vmem:[#allocation2 + $0x88] sm:$0xff]
      %v1296 = vld [vmem:[#allocation2 + $0x90] sm:$0xff]
      %v1297 = vld [vmem:[#allocation2 + $0x98] sm:$0xff]
      %v1298 = vld [vmem:[#allocation2 + $0xa0] sm:$0xff]
      %v1299 = vld [vmem:[#allocation2 + $0xa8] sm:$0xff]
      %v1300 = vld [vmem:[#allocation2 + $0xb0] sm:$0xff]
      %v1301 = vld [vmem:[#allocation2 + $0xb8] sm:$0xff]
      %v1302 = vld [vmem:[#allocation2 + $0xc0] sm:$0xff]
      %v1303 = vld [vmem:[#allocation2 + $0xc8] sm:$0xff]
      %v1304 = vld [vmem:[#allocation2 + $0xd0] sm:$0xff]
      %v1305 = vld [vmem:[#allocation2 + $0xd8] sm:$0xff]
      %v1306 = vld [vmem:[#allocation2 + $0xe0] sm:$0xff]
      %v1307 = vld [vmem:[#allocation2 + $0xe8] sm:$0xff]
      %v1308 = vld [vmem:[#allocation2 + $0xf0] sm:$0xff]
      %v1309 = vld [vmem:[#allocation2 + $0xf8] sm:$0xff]
      %v1310 = vadd.f32 %v1278, %v1152
      %v1311 = vadd.f32 %v1279, %v1155
      %v1312 = vadd.f32 %v1280, %v1160
      %v1313 = vadd.f32 %v1281, %v1163
      %v1314 = vadd.f32 %v1282, %v1168
      %v1315 = vadd.f32 %v1283, %v1171
      %v1316 = vadd.f32 %v1284, %v1176
      %v1317 = vadd.f32 %v1285, %v1179
      %v1318 = vadd.f32 %v1286, %v1184
      %v1319 = vadd.f32 %v1287, %v1187
      %v1320 = vadd.f32 %v1288, %v1192
      %v1321 = vadd.f32 %v1289, %v1195
      %v1322 = vadd.f32 %v1290, %v1200
      %v1323 = vadd.f32 %v1291, %v1203
      %v1324 = vadd.f32 %v1292, %v1208
      %v1325 = vadd.f32 %v1293, %v1211
      %v1326 = vadd.f32 %v1294, %v1216
      %v1327 = vadd.f32 %v1295, %v1219
      %v1328 = vadd.f32 %v1296, %v1224
      %v1329 = vadd.f32 %v1297, %v1227
      %v1330 = vadd.f32 %v1298, %v1232
      %v1331 = vadd.f32 %v1299, %v1235
      %v1332 = vadd.f32 %v1300, %v1240
      %v1333 = vadd.f32 %v1301, %v1243
      %v1334 = vadd.f32 %v1302, %v1248
      %v1335 = vadd.f32 %v1303, %v1251
      %v1336 = vadd.f32 %v1304, %v1256
      %v1337 = vadd.f32 %v1305, %v1259
      %v1338 = vadd.f32 %v1306, %v1264
      %v1339 = vadd.f32 %v1307, %v1267
      %v1340 = vadd.f32 %v1308, %v1272
      %v1341 = vadd.f32 %v1309, %v1275
      %1342 = vst.msk [vmem:[#allocation2] sm:$0xff] %vm1071, %v1310
      %1343 = vst.msk [vmem:[#allocation2 + $0x8] sm:$0xff] %vm1071, %v1311
      %1344 = vst.msk [vmem:[#allocation2 + $0x10] sm:$0xff] %vm1071, %v1312
      %1345 = vst.msk [vmem:[#allocation2 + $0x18] sm:$0xff] %vm1071, %v1313
      %1346 = vst.msk [vmem:[#allocation2 + $0x20] sm:$0xff] %vm1071, %v1314
      %1347 = vst.msk [vmem:[#allocation2 + $0x28] sm:$0xff] %vm1071, %v1315
      %1348 = vst.msk [vmem:[#allocation2 + $0x30] sm:$0xff] %vm1071, %v1316
      %1349 = vst.msk [vmem:[#allocation2 + $0x38] sm:$0xff] %vm1071, %v1317
      %1350 = vst.msk [vmem:[#allocation2 + $0x40] sm:$0xff] %vm1071, %v1318
      %1351 = vst.msk [vmem:[#allocation2 + $0x48] sm:$0xff] %vm1071, %v1319
      %1352 = vst.msk [vmem:[#allocation2 + $0x50] sm:$0xff] %vm1071, %v1320
      %1353 = vst.msk [vmem:[#allocation2 + $0x58] sm:$0xff] %vm1071, %v1321
      %1354 = vst.msk [vmem:[#allocation2 + $0x60] sm:$0xff] %vm1071, %v1322
      %1355 = vst.msk [vmem:[#allocation2 + $0x68] sm:$0xff] %vm1071, %v1323
      %1356 = vst.msk [vmem:[#allocation2 + $0x70] sm:$0xff] %vm1071, %v1324
      %1357 = vst.msk [vmem:[#allocation2 + $0x78] sm:$0xff] %vm1071, %v1325
      %1358 = vst.msk [vmem:[#allocation2 + $0x80] sm:$0xff] %vm1071, %v1326
      %1359 = vst.msk [vmem:[#allocation2 + $0x88] sm:$0xff] %vm1071, %v1327
      %1360 = vst.msk [vmem:[#allocation2 + $0x90] sm:$0xff] %vm1071, %v1328
      %1361 = vst.msk [vmem:[#allocation2 + $0x98] sm:$0xff] %vm1071, %v1329
      %1362 = vst.msk [vmem:[#allocation2 + $0xa0] sm:$0xff] %vm1071, %v1330
      %1363 = vst.msk [vmem:[#allocation2 + $0xa8] sm:$0xff] %vm1071, %v1331
      %1364 = vst.msk [vmem:[#allocation2 + $0xb0] sm:$0xff] %vm1071, %v1332
      %1365 = vst.msk [vmem:[#allocation2 + $0xb8] sm:$0xff] %vm1071, %v1333
      %1366 = vst.msk [vmem:[#allocation2 + $0xc0] sm:$0xff] %vm1071, %v1334
      %1367 = vst.msk [vmem:[#allocation2 + $0xc8] sm:$0xff] %vm1071, %v1335
      %1368 = vst.msk [vmem:[#allocation2 + $0xd0] sm:$0xff] %vm1071, %v1336
      %1369 = vst.msk [vmem:[#allocation2 + $0xd8] sm:$0xff] %vm1071, %v1337
      %1370 = vst.msk [vmem:[#allocation2 + $0xe0] sm:$0xff] %vm1071, %v1338
      %1371 = vst.msk [vmem:[#allocation2 + $0xe8] sm:$0xff] %vm1071, %v1339
      %1372 = vst.msk [vmem:[#allocation2 + $0xf0] sm:$0xff] %vm1071, %v1340
      %1373 = vst.msk [vmem:[#allocation2 + $0xf8] sm:$0xff] %vm1071, %v1341
      %s1374 = scalar_lea.vmem %s224, 16
      %v1375 = vld [vmem:[%s1374] sm:$0xf]
      %v1376 = vld [vmem:[%s1374 + $0x4] sm:$0x1]
      %v1379 = vunpack.c.l.b16 %v1375
      %v1380 = vunpack.c.l.b16 %v1376
      %v1381 = vpack.c.b16 %v1380, %v1379
      %v1382 = vsel %vm870, %v862, 0
      %v1385 = vand.u32 %v1381, %v906
      %1387 = vmatprep.subr.bf16.mxu0 0
      %1388 = vmatpush1.bf16.msra.mxu0 0
      %1389 = vmatprep.subr.bf16.mxu0 0
      %1390 = vmatpush1.bf16.msra.mxu0 0
      %1391 = vmatprep.subr.bf16.mxu0 0
      %1392 = vmatpush1.bf16.msra.mxu0 0
      %1393 = vmatprep.subr.bf16.mxu0 0
      %1394 = vmatpush1.bf16.msra.mxu0 0
      %1395 = vmatprep.subr.bf16.mxu0 0
      %1396 = vmatpush1.bf16.msra.mxu0 0
      %1397 = vmatprep.subr.bf16.mxu0 0
      %1398 = vmatpush1.bf16.msra.mxu0 0
      %1399 = vmatprep.subr.bf16.mxu0 0
      %1400 = vmatpush1.bf16.msra.mxu0 0
      %1401 = vmatprep.subr.bf16.mxu0 0
      %1402 = vmatpush1.bf16.msra.mxu0 %v1385
      %1403 = vmatprep.subr.bf16.mxu0 0
      %1404 = vmatpush2.bf16.msra.mxu0 0
      %1405 = vmatprep.subr.bf16.mxu0 0
      %1406 = vmatpush2.bf16.msra.mxu0 0
      %1407 = vmatprep.subr.bf16.mxu0 0
      %1408 = vmatpush2.bf16.msra.mxu0 0
      %1409 = vmatprep.subr.bf16.mxu0 0
      %1410 = vmatpush2.bf16.msra.mxu0 0
      %1411 = vmatprep.subr.bf16.mxu0 0
      %1412 = vmatpush2.bf16.msra.mxu0 0
      %1413 = vmatprep.subr.bf16.mxu0 0
      %1414 = vmatpush2.bf16.msra.mxu0 0
      %1415 = vmatprep.subr.bf16.mxu0 0
      %1416 = vmatpush2.bf16.msra.mxu0 0
      %1417 = vmatprep.subr.bf16.mxu0 0
      %1418 = vmatpush2.bf16.msra.mxu0 0
      %1419 = vmatprep.mubr.bf16.mxu0 0
      %1420 = vmatmul.mubr.bf16.gmra.mxu0 %v875
      %v1421 = vpop.f32.mrf.mxu0
      %v1422 = vadd.f32 0.0, %v1421
      %v1423 = vpop.f32.mrf.mxu0
      %v1424 = vpop.f32.mrf.mxu0
      %v1425 = vadd.f32 0.0, %v1424
      %v1426 = vpop.f32.mrf.mxu0
      %1427 = vmatprep.mubr.bf16.mxu0 0
      %1428 = vmatmul.mubr.bf16.gmra.mxu0 %v877
      %v1429 = vpop.f32.mrf.mxu0
      %v1430 = vadd.f32 0.0, %v1429
      %v1431 = vpop.f32.mrf.mxu0
      %v1432 = vpop.f32.mrf.mxu0
      %v1433 = vadd.f32 0.0, %v1432
      %v1434 = vpop.f32.mrf.mxu0
      %1435 = vmatprep.mubr.bf16.mxu0 0
      %1436 = vmatmul.mubr.bf16.gmra.mxu0 %v879
      %v1437 = vpop.f32.mrf.mxu0
      %v1438 = vadd.f32 0.0, %v1437
      %v1439 = vpop.f32.mrf.mxu0
      %v1440 = vpop.f32.mrf.mxu0
      %v1441 = vadd.f32 0.0, %v1440
      %v1442 = vpop.f32.mrf.mxu0
      %1443 = vmatprep.mubr.bf16.mxu0 0
      %1444 = vmatmul.mubr.bf16.gmra.mxu0 %v881
      %v1445 = vpop.f32.mrf.mxu0
      %v1446 = vadd.f32 0.0, %v1445
      %v1447 = vpop.f32.mrf.mxu0
      %v1448 = vpop.f32.mrf.mxu0
      %v1449 = vadd.f32 0.0, %v1448
      %v1450 = vpop.f32.mrf.mxu0
      %1451 = vmatprep.mubr.bf16.mxu0 0
      %1452 = vmatmul.mubr.bf16.gmra.mxu0 %v883
      %v1453 = vpop.f32.mrf.mxu0
      %v1454 = vadd.f32 0.0, %v1453
      %v1455 = vpop.f32.mrf.mxu0
      %v1456 = vpop.f32.mrf.mxu0
      %v1457 = vadd.f32 0.0, %v1456
      %v1458 = vpop.f32.mrf.mxu0
      %1459 = vmatprep.mubr.bf16.mxu0 0
      %1460 = vmatmul.mubr.bf16.gmra.mxu0 %v885
      %v1461 = vpop.f32.mrf.mxu0
      %v1462 = vadd.f32 0.0, %v1461
      %v1463 = vpop.f32.mrf.mxu0
      %v1464 = vpop.f32.mrf.mxu0
      %v1465 = vadd.f32 0.0, %v1464
      %v1466 = vpop.f32.mrf.mxu0
      %1467 = vmatprep.mubr.bf16.mxu0 0
      %1468 = vmatmul.mubr.bf16.gmra.mxu0 %v887
      %v1469 = vpop.f32.mrf.mxu0
      %v1470 = vadd.f32 0.0, %v1469
      %v1471 = vpop.f32.mrf.mxu0
      %v1472 = vpop.f32.mrf.mxu0
      %v1473 = vadd.f32 0.0, %v1472
      %v1474 = vpop.f32.mrf.mxu0
      %1475 = vmatprep.mubr.bf16.mxu0 0
      %1476 = vmatmul.mubr.bf16.gmra.mxu0 %v889
      %v1477 = vpop.f32.mrf.mxu0
      %v1478 = vadd.f32 0.0, %v1477
      %v1479 = vpop.f32.mrf.mxu0
      %v1480 = vpop.f32.mrf.mxu0
      %v1481 = vadd.f32 0.0, %v1480
      %v1482 = vpop.f32.mrf.mxu0
      %1483 = vmatprep.mubr.bf16.mxu0 0
      %1484 = vmatmul.mubr.bf16.gmra.mxu0 %v891
      %v1485 = vpop.f32.mrf.mxu0
      %v1486 = vadd.f32 0.0, %v1485
      %v1487 = vpop.f32.mrf.mxu0
      %v1488 = vpop.f32.mrf.mxu0
      %v1489 = vadd.f32 0.0, %v1488
      %v1490 = vpop.f32.mrf.mxu0
      %1491 = vmatprep.mubr.bf16.mxu0 0
      %1492 = vmatmul.mubr.bf16.gmra.mxu0 %v893
      %v1493 = vpop.f32.mrf.mxu0
      %v1494 = vadd.f32 0.0, %v1493
      %v1495 = vpop.f32.mrf.mxu0
      %v1496 = vpop.f32.mrf.mxu0
      %v1497 = vadd.f32 0.0, %v1496
      %v1498 = vpop.f32.mrf.mxu0
      %1499 = vmatprep.mubr.bf16.mxu0 0
      %1500 = vmatmul.mubr.bf16.gmra.mxu0 %v895
      %v1501 = vpop.f32.mrf.mxu0
      %v1502 = vadd.f32 0.0, %v1501
      %v1503 = vpop.f32.mrf.mxu0
      %v1504 = vpop.f32.mrf.mxu0
      %v1505 = vadd.f32 0.0, %v1504
      %v1506 = vpop.f32.mrf.mxu0
      %1507 = vmatprep.mubr.bf16.mxu0 0
      %1508 = vmatmul.mubr.bf16.gmra.mxu0 %v897
      %v1509 = vpop.f32.mrf.mxu0
      %v1510 = vadd.f32 0.0, %v1509
      %v1511 = vpop.f32.mrf.mxu0
      %v1512 = vpop.f32.mrf.mxu0
      %v1513 = vadd.f32 0.0, %v1512
      %v1514 = vpop.f32.mrf.mxu0
      %1515 = vmatprep.mubr.bf16.mxu0 0
      %1516 = vmatmul.mubr.bf16.gmra.mxu0 %v899
      %v1517 = vpop.f32.mrf.mxu0
      %v1518 = vadd.f32 0.0, %v1517
      %v1519 = vpop.f32.mrf.mxu0
      %v1520 = vpop.f32.mrf.mxu0
      %v1521 = vadd.f32 0.0, %v1520
      %v1522 = vpop.f32.mrf.mxu0
      %1523 = vmatprep.mubr.bf16.mxu0 0
      %1524 = vmatmul.mubr.bf16.gmra.mxu0 %v901
      %v1525 = vpop.f32.mrf.mxu0
      %v1526 = vadd.f32 0.0, %v1525
      %v1527 = vpop.f32.mrf.mxu0
      %v1528 = vpop.f32.mrf.mxu0
      %v1529 = vadd.f32 0.0, %v1528
      %v1530 = vpop.f32.mrf.mxu0
      %1531 = vmatprep.mubr.bf16.mxu0 0
      %1532 = vmatmul.mubr.bf16.gmra.mxu0 %v1112
      %v1533 = vpop.f32.mrf.mxu0
      %v1534 = vadd.f32 0.0, %v1533
      %v1535 = vpop.f32.mrf.mxu0
      %v1536 = vpop.f32.mrf.mxu0
      %v1537 = vadd.f32 0.0, %v1536
      %v1538 = vpop.f32.mrf.mxu0
      %1539 = vmatprep.mubr.bf16.mxu0 0
      %1540 = vmatmul.mubr.bf16.gmra.mxu0 %v1382
      %v1541 = vpop.f32.mrf.mxu0
      %v1542 = vadd.f32 0.0, %v1541
      %v1543 = vpop.f32.mrf.mxu0
      %v1544 = vpop.f32.mrf.mxu0
      %v1545 = vadd.f32 0.0, %v1544
      %v1546 = vpop.f32.mrf.mxu0
      %1547 = vdwg.mxu0
      %v1548 = vld [vmem:[#allocation2] sm:$0xff]
      %v1549 = vld [vmem:[#allocation2 + $0x8] sm:$0xff]
      %v1550 = vld [vmem:[#allocation2 + $0x10] sm:$0xff]
      %v1551 = vld [vmem:[#allocation2 + $0x18] sm:$0xff]
      %v1552 = vld [vmem:[#allocation2 + $0x20] sm:$0xff]
      %v1553 = vld [vmem:[#allocation2 + $0x28] sm:$0xff]
      %v1554 = vld [vmem:[#allocation2 + $0x30] sm:$0xff]
      %v1555 = vld [vmem:[#allocation2 + $0x38] sm:$0xff]
      %v1556 = vld [vmem:[#allocation2 + $0x40] sm:$0xff]
      %v1557 = vld [vmem:[#allocation2 + $0x48] sm:$0xff]
      %v1558 = vld [vmem:[#allocation2 + $0x50] sm:$0xff]
      %v1559 = vld [vmem:[#allocation2 + $0x58] sm:$0xff]
      %v1560 = vld [vmem:[#allocation2 + $0x60] sm:$0xff]
      %v1561 = vld [vmem:[#allocation2 + $0x68] sm:$0xff]
      %v1562 = vld [vmem:[#allocation2 + $0x70] sm:$0xff]
      %v1563 = vld [vmem:[#allocation2 + $0x78] sm:$0xff]
      %v1564 = vld [vmem:[#allocation2 + $0x80] sm:$0xff]
      %v1565 = vld [vmem:[#allocation2 + $0x88] sm:$0xff]
      %v1566 = vld [vmem:[#allocation2 + $0x90] sm:$0xff]
      %v1567 = vld [vmem:[#allocation2 + $0x98] sm:$0xff]
      %v1568 = vld [vmem:[#allocation2 + $0xa0] sm:$0xff]
      %v1569 = vld [vmem:[#allocation2 + $0xa8] sm:$0xff]
      %v1570 = vld [vmem:[#allocation2 + $0xb0] sm:$0xff]
      %v1571 = vld [vmem:[#allocation2 + $0xb8] sm:$0xff]
      %v1572 = vld [vmem:[#allocation2 + $0xc0] sm:$0xff]
      %v1573 = vld [vmem:[#allocation2 + $0xc8] sm:$0xff]
      %v1574 = vld [vmem:[#allocation2 + $0xd0] sm:$0xff]
      %v1575 = vld [vmem:[#allocation2 + $0xd8] sm:$0xff]
      %v1576 = vld [vmem:[#allocation2 + $0xe0] sm:$0xff]
      %v1577 = vld [vmem:[#allocation2 + $0xe8] sm:$0xff]
      %v1578 = vld [vmem:[#allocation2 + $0xf0] sm:$0xff]
      %v1579 = vld [vmem:[#allocation2 + $0xf8] sm:$0xff]
      %v1580 = vadd.f32 %v1548, %v1422
      %v1581 = vadd.f32 %v1549, %v1425
      %v1582 = vadd.f32 %v1550, %v1430
      %v1583 = vadd.f32 %v1551, %v1433
      %v1584 = vadd.f32 %v1552, %v1438
      %v1585 = vadd.f32 %v1553, %v1441
      %v1586 = vadd.f32 %v1554, %v1446
      %v1587 = vadd.f32 %v1555, %v1449
      %v1588 = vadd.f32 %v1556, %v1454
      %v1589 = vadd.f32 %v1557, %v1457
      %v1590 = vadd.f32 %v1558, %v1462
      %v1591 = vadd.f32 %v1559, %v1465
      %v1592 = vadd.f32 %v1560, %v1470
      %v1593 = vadd.f32 %v1561, %v1473
      %v1594 = vadd.f32 %v1562, %v1478
      %v1595 = vadd.f32 %v1563, %v1481
      %v1596 = vadd.f32 %v1564, %v1486
      %v1597 = vadd.f32 %v1565, %v1489
      %v1598 = vadd.f32 %v1566, %v1494
      %v1599 = vadd.f32 %v1567, %v1497
      %v1600 = vadd.f32 %v1568, %v1502
      %v1601 = vadd.f32 %v1569, %v1505
      %v1602 = vadd.f32 %v1570, %v1510
      %v1603 = vadd.f32 %v1571, %v1513
      %v1604 = vadd.f32 %v1572, %v1518
      %v1605 = vadd.f32 %v1573, %v1521
      %v1606 = vadd.f32 %v1574, %v1526
      %v1607 = vadd.f32 %v1575, %v1529
      %v1608 = vadd.f32 %v1576, %v1534
      %v1609 = vadd.f32 %v1577, %v1537
      %v1610 = vadd.f32 %v1578, %v1542
      %v1611 = vadd.f32 %v1579, %v1545
      %1612 = vst.msk [vmem:[#allocation2] sm:$0xff] %vm1071, %v1580
      %1613 = vst.msk [vmem:[#allocation2 + $0x8] sm:$0xff] %vm1071, %v1581
      %1614 = vst.msk [vmem:[#allocation2 + $0x10] sm:$0xff] %vm1071, %v1582
      %1615 = vst.msk [vmem:[#allocation2 + $0x18] sm:$0xff] %vm1071, %v1583
      %1616 = vst.msk [vmem:[#allocation2 + $0x20] sm:$0xff] %vm1071, %v1584
      %1617 = vst.msk [vmem:[#allocation2 + $0x28] sm:$0xff] %vm1071, %v1585
      %1618 = vst.msk [vmem:[#allocation2 + $0x30] sm:$0xff] %vm1071, %v1586
      %1619 = vst.msk [vmem:[#allocation2 + $0x38] sm:$0xff] %vm1071, %v1587
      %1620 = vst.msk [vmem:[#allocation2 + $0x40] sm:$0xff] %vm1071, %v1588
      %1621 = vst.msk [vmem:[#allocation2 + $0x48] sm:$0xff] %vm1071, %v1589
      %1622 = vst.msk [vmem:[#allocation2 + $0x50] sm:$0xff] %vm1071, %v1590
      %1623 = vst.msk [vmem:[#allocation2 + $0x58] sm:$0xff] %vm1071, %v1591
      %1624 = vst.msk [vmem:[#allocation2 + $0x60] sm:$0xff] %vm1071, %v1592
      %1625 = vst.msk [vmem:[#allocation2 + $0x68] sm:$0xff] %vm1071, %v1593
      %1626 = vst.msk [vmem:[#allocation2 + $0x70] sm:$0xff] %vm1071, %v1594
      %1627 = vst.msk [vmem:[#allocation2 + $0x78] sm:$0xff] %vm1071, %v1595
      %1628 = vst.msk [vmem:[#allocation2 + $0x80] sm:$0xff] %vm1071, %v1596
      %1629 = vst.msk [vmem:[#allocation2 + $0x88] sm:$0xff] %vm1071, %v1597
      %1630 = vst.msk [vmem:[#allocation2 + $0x90] sm:$0xff] %vm1071, %v1598
      %1631 = vst.msk [vmem:[#allocation2 + $0x98] sm:$0xff] %vm1071, %v1599
      %1632 = vst.msk [vmem:[#allocation2 + $0xa0] sm:$0xff] %vm1071, %v1600
      %1633 = vst.msk [vmem:[#allocation2 + $0xa8] sm:$0xff] %vm1071, %v1601
      %1634 = vst.msk [vmem:[#allocation2 + $0xb0] sm:$0xff] %vm1071, %v1602
      %1635 = vst.msk [vmem:[#allocation2 + $0xb8] sm:$0xff] %vm1071, %v1603
      %1636 = vst.msk [vmem:[#allocation2 + $0xc0] sm:$0xff] %vm1071, %v1604
      %1637 = vst.msk [vmem:[#allocation2 + $0xc8] sm:$0xff] %vm1071, %v1605
      %1638 = vst.msk [vmem:[#allocation2 + $0xd0] sm:$0xff] %vm1071, %v1606
      %1639 = vst.msk [vmem:[#allocation2 + $0xd8] sm:$0xff] %vm1071, %v1607
      %1640 = vst.msk [vmem:[#allocation2 + $0xe0] sm:$0xff] %vm1071, %v1608
      %1641 = vst.msk [vmem:[#allocation2 + $0xe8] sm:$0xff] %vm1071, %v1609
      %1642 = vst.msk [vmem:[#allocation2 + $0xf0] sm:$0xff] %vm1071, %v1610
      %1643 = vst.msk [vmem:[#allocation2 + $0xf8] sm:$0xff] %vm1071, %v1611
      %v1644 = vld [vmem:[#allocation2] sm:$0xff]
      %v1645 = vld [vmem:[#allocation2 + $0x8] sm:$0xff]
      %v1646 = vld [vmem:[#allocation2 + $0x10] sm:$0xff]
      %v1647 = vld [vmem:[#allocation2 + $0x18] sm:$0xff]
      %v1648 = vld [vmem:[#allocation2 + $0x20] sm:$0xff]
      %v1649 = vld [vmem:[#allocation2 + $0x28] sm:$0xff]
      %v1650 = vld [vmem:[#allocation2 + $0x30] sm:$0xff]
      %v1651 = vld [vmem:[#allocation2 + $0x38] sm:$0xff]
      %v1652 = vld [vmem:[#allocation2 + $0x40] sm:$0xff]
      %v1653 = vld [vmem:[#allocation2 + $0x48] sm:$0xff]
      %v1654 = vld [vmem:[#allocation2 + $0x50] sm:$0xff]
      %v1655 = vld [vmem:[#allocation2 + $0x58] sm:$0xff]
      %v1656 = vld [vmem:[#allocation2 + $0x60] sm:$0xff]
      %v1657 = vld [vmem:[#allocation2 + $0x68] sm:$0xff]
      %v1658 = vld [vmem:[#allocation2 + $0x70] sm:$0xff]
      %v1659 = vld [vmem:[#allocation2 + $0x78] sm:$0xff]
      %v1660 = vld [vmem:[#allocation2 + $0x80] sm:$0xff]
      %v1661 = vld [vmem:[#allocation2 + $0x88] sm:$0xff]
      %v1662 = vld [vmem:[#allocation2 + $0x90] sm:$0xff]
      %v1663 = vld [vmem:[#allocation2 + $0x98] sm:$0xff]
      %v1664 = vld [vmem:[#allocation2 + $0xa0] sm:$0xff]
      %v1665 = vld [vmem:[#allocation2 + $0xa8] sm:$0xff]
      %v1666 = vld [vmem:[#allocation2 + $0xb0] sm:$0xff]
      %v1667 = vld [vmem:[#allocation2 + $0xb8] sm:$0xff]
      %v1668 = vld [vmem:[#allocation2 + $0xc0] sm:$0xff]
      %v1669 = vld [vmem:[#allocation2 + $0xc8] sm:$0xff]
      %v1670 = vld [vmem:[#allocation2 + $0xd0] sm:$0xff]
      %v1671 = vld [vmem:[#allocation2 + $0xd8] sm:$0xff]
      %v1672 = vld [vmem:[#allocation2 + $0xe0] sm:$0xff]
      %v1673 = vld [vmem:[#allocation2 + $0xe8] sm:$0xff]
      %v1674 = vld [vmem:[#allocation2 + $0xf0] sm:$0xff]
      %v1675 = vld [vmem:[#allocation2 + $0xf8] sm:$0xff]
      %v1676 = vld [vmem:[%s227] sm:$0x1]
      %v1678 = vlaneseq
      %v1679 = vshrl.u32 %v1678, 7
      %v1680 = vsub.s32 0, %v1679
      %v1681 = vrot.slane %v1676, %v1680
      %v1683 = vadd.f32 %v1644, %v1681
      %v1684 = vadd.f32 %v1645, %v1681
      %v1685 = vadd.f32 %v1646, %v1681
      %v1686 = vadd.f32 %v1647, %v1681
      %v1687 = vadd.f32 %v1648, %v1681
      %v1688 = vadd.f32 %v1649, %v1681
      %v1689 = vadd.f32 %v1650, %v1681
      %v1690 = vadd.f32 %v1651, %v1681
      %v1691 = vadd.f32 %v1652, %v1681
      %v1692 = vadd.f32 %v1653, %v1681
      %v1693 = vadd.f32 %v1654, %v1681
      %v1694 = vadd.f32 %v1655, %v1681
      %v1695 = vadd.f32 %v1656, %v1681
      %v1696 = vadd.f32 %v1657, %v1681
      %v1697 = vadd.f32 %v1658, %v1681
      %v1698 = vadd.f32 %v1659, %v1681
      %v1699 = vadd.f32 %v1660, %v1681
      %v1700 = vadd.f32 %v1661, %v1681
      %v1701 = vadd.f32 %v1662, %v1681
      %v1702 = vadd.f32 %v1663, %v1681
      %v1703 = vadd.f32 %v1664, %v1681
      %v1704 = vadd.f32 %v1665, %v1681
      %v1705 = vadd.f32 %v1666, %v1681
      %v1706 = vadd.f32 %v1667, %v1681
      %v1707 = vadd.f32 %v1668, %v1681
      %v1708 = vadd.f32 %v1669, %v1681
      %v1709 = vadd.f32 %v1670, %v1681
      %v1710 = vadd.f32 %v1671, %v1681
      %v1711 = vadd.f32 %v1672, %v1681
      %v1712 = vadd.f32 %v1673, %v1681
      %v1713 = vadd.f32 %v1674, %v1681
      %v1714 = vadd.f32 %v1675, %v1681
      %v1715 = vmax.f32 %v1683, 0.0
      %v1716 = vmax.f32 %v1684, 0.0
      %v1717 = vmax.f32 %v1685, 0.0
      %v1718 = vmax.f32 %v1686, 0.0
      %v1719 = vmax.f32 %v1687, 0.0
      %v1720 = vmax.f32 %v1688, 0.0
      %v1721 = vmax.f32 %v1689, 0.0
      %v1722 = vmax.f32 %v1690, 0.0
      %v1723 = vmax.f32 %v1691, 0.0
      %v1724 = vmax.f32 %v1692, 0.0
      %v1725 = vmax.f32 %v1693, 0.0
      %v1726 = vmax.f32 %v1694, 0.0
      %v1727 = vmax.f32 %v1695, 0.0
      %v1728 = vmax.f32 %v1696, 0.0
      %v1729 = vmax.f32 %v1697, 0.0
      %v1730 = vmax.f32 %v1698, 0.0
      %v1731 = vmax.f32 %v1699, 0.0
      %v1732 = vmax.f32 %v1700, 0.0
      %v1733 = vmax.f32 %v1701, 0.0
      %v1734 = vmax.f32 %v1702, 0.0
      %v1735 = vmax.f32 %v1703, 0.0
      %v1736 = vmax.f32 %v1704, 0.0
      %v1737 = vmax.f32 %v1705, 0.0
      %v1738 = vmax.f32 %v1706, 0.0
      %v1739 = vmax.f32 %v1707, 0.0
      %v1740 = vmax.f32 %v1708, 0.0
      %v1741 = vmax.f32 %v1709, 0.0
      %v1742 = vmax.f32 %v1710, 0.0
      %v1743 = vmax.f32 %v1711, 0.0
      %v1744 = vmax.f32 %v1712, 0.0
      %v1745 = vmax.f32 %v1713, 0.0
      %v1746 = vmax.f32 %v1714, 0.0
      %v1747 = vpack.c.bf16 %v1716, %v1715
      %v1748 = vpack.c.bf16 %v1718, %v1717
      %v1749 = vpack.c.bf16 %v1720, %v1719
      %v1750 = vpack.c.bf16 %v1722, %v1721
      %v1751 = vpack.c.bf16 %v1724, %v1723
      %v1752 = vpack.c.bf16 %v1726, %v1725
      %v1753 = vpack.c.bf16 %v1728, %v1727
      %v1754 = vpack.c.bf16 %v1730, %v1729
      %v1755 = vpack.c.bf16 %v1732, %v1731
      %v1756 = vpack.c.bf16 %v1734, %v1733
      %v1757 = vpack.c.bf16 %v1736, %v1735
      %v1758 = vpack.c.bf16 %v1738, %v1737
      %v1759 = vpack.c.bf16 %v1740, %v1739
      %v1760 = vpack.c.bf16 %v1742, %v1741
      %v1761 = vpack.c.bf16 %v1744, %v1743
      %v1762 = vpack.c.bf16 %v1746, %v1745
      %v1779 = vunpack.c.l.b16 %v1747
      %v1780 = vunpack.c.h.b16 %v1747
      %v1781 = vunpack.c.l.b16 %v1748
      %v1782 = vunpack.c.h.b16 %v1748
      %v1783 = vunpack.c.l.b16 %v1749
      %v1784 = vunpack.c.h.b16 %v1749
      %v1785 = vunpack.c.l.b16 %v1750
      %v1786 = vunpack.c.h.b16 %v1750
      %v1787 = vunpack.c.l.b16 %v1751
      %v1788 = vunpack.c.h.b16 %v1751
      %v1789 = vunpack.c.l.b16 %v1752
      %v1790 = vunpack.c.h.b16 %v1752
      %v1791 = vunpack.c.l.b16 %v1753
      %v1792 = vunpack.c.h.b16 %v1753
      %v1793 = vunpack.c.l.b16 %v1754
      %v1794 = vunpack.c.h.b16 %v1754
      %v1795 = vunpack.c.l.b16 %v1755
      %v1796 = vunpack.c.h.b16 %v1755
      %v1797 = vunpack.c.l.b16 %v1756
      %v1798 = vunpack.c.h.b16 %v1756
      %v1799 = vunpack.c.l.b16 %v1757
      %v1800 = vunpack.c.h.b16 %v1757
      %v1801 = vunpack.c.l.b16 %v1758
      %v1802 = vunpack.c.h.b16 %v1758
      %v1803 = vunpack.c.l.b16 %v1759
      %v1804 = vunpack.c.h.b16 %v1759
      %v1805 = vunpack.c.l.b16 %v1760
      %v1806 = vunpack.c.h.b16 %v1760
      %v1807 = vunpack.c.l.b16 %v1761
      %v1808 = vunpack.c.h.b16 %v1761
      %v1809 = vunpack.c.l.b16 %v1762
      %v1810 = vunpack.c.h.b16 %v1762
      %v1811 = vpack.c.b16 %v1779, %v1779
      %v1812 = vpack.c.b16 %v1780, %v1780
      %v1813 = vpack.c.b16 %v1781, %v1781
      %v1814 = vpack.c.b16 %v1782, %v1782
      %v1815 = vpack.c.b16 %v1783, %v1783
      %v1816 = vpack.c.b16 %v1784, %v1784
      %v1817 = vpack.c.b16 %v1785, %v1785
      %v1818 = vpack.c.b16 %v1786, %v1786
      %v1819 = vpack.c.b16 %v1787, %v1787
      %v1820 = vpack.c.b16 %v1788, %v1788
      %v1821 = vpack.c.b16 %v1789, %v1789
      %v1822 = vpack.c.b16 %v1790, %v1790
      %v1823 = vpack.c.b16 %v1791, %v1791
      %v1824 = vpack.c.b16 %v1792, %v1792
      %v1825 = vpack.c.b16 %v1793, %v1793
      %v1826 = vpack.c.b16 %v1794, %v1794
      %v1827 = vpack.c.b16 %v1795, %v1795
      %v1828 = vpack.c.b16 %v1796, %v1796
      %v1829 = vpack.c.b16 %v1797, %v1797
      %v1830 = vpack.c.b16 %v1798, %v1798
      %v1831 = vpack.c.b16 %v1799, %v1799
      %v1832 = vpack.c.b16 %v1800, %v1800
      %v1833 = vpack.c.b16 %v1801, %v1801
      %v1834 = vpack.c.b16 %v1802, %v1802
      %v1835 = vpack.c.b16 %v1803, %v1803
      %v1836 = vpack.c.b16 %v1804, %v1804
      %v1837 = vpack.c.b16 %v1805, %v1805
      %v1838 = vpack.c.b16 %v1806, %v1806
      %v1839 = vpack.c.b16 %v1807, %v1807
      %v1840 = vpack.c.b16 %v1808, %v1808
      %v1841 = vpack.c.b16 %v1809, %v1809
      %v1842 = vpack.c.b16 %v1810, %v1810
      %vm1875 = vcmask 519168
      %1876 = vst.msk [vmem:[%s240] sm:$0xf] %vm1875, %v1811
      %1877 = vst.msk [vmem:[%s240 + $0x4] sm:$0xf] %vm1875, %v1812
      %1878 = vst.msk [vmem:[%s240 + $0x8] sm:$0xf] %vm1875, %v1813
      %1879 = vst.msk [vmem:[%s240 + $0xc] sm:$0xf] %vm1875, %v1814
      %1880 = vst.msk [vmem:[%s240 + $0x10] sm:$0xf] %vm1875, %v1815
      %1881 = vst.msk [vmem:[%s240 + $0x14] sm:$0xf] %vm1875, %v1816
      %1882 = vst.msk [vmem:[%s240 + $0x18] sm:$0xf] %vm1875, %v1817
      %1883 = vst.msk [vmem:[%s240 + $0x1c] sm:$0xf] %vm1875, %v1818
      %1884 = vst.msk [vmem:[%s240 + $0x20] sm:$0xf] %vm1875, %v1819
      %1885 = vst.msk [vmem:[%s240 + $0x24] sm:$0xf] %vm1875, %v1820
      %1886 = vst.msk [vmem:[%s240 + $0x28] sm:$0xf] %vm1875, %v1821
      %1887 = vst.msk [vmem:[%s240 + $0x2c] sm:$0xf] %vm1875, %v1822
      %1888 = vst.msk [vmem:[%s240 + $0x30] sm:$0xf] %vm1875, %v1823
      %1889 = vst.msk [vmem:[%s240 + $0x34] sm:$0xf] %vm1875, %v1824
      %1890 = vst.msk [vmem:[%s240 + $0x38] sm:$0xf] %vm1875, %v1825
      %1891 = vst.msk [vmem:[%s240 + $0x3c] sm:$0xf] %vm1875, %v1826
      %1892 = vst.msk [vmem:[%s240 + $0x40] sm:$0xf] %vm1875, %v1827
      %1893 = vst.msk [vmem:[%s240 + $0x44] sm:$0xf] %vm1875, %v1828
      %1894 = vst.msk [vmem:[%s240 + $0x48] sm:$0xf] %vm1875, %v1829
      %1895 = vst.msk [vmem:[%s240 + $0x4c] sm:$0xf] %vm1875, %v1830
      %1896 = vst.msk [vmem:[%s240 + $0x50] sm:$0xf] %vm1875, %v1831
      %1897 = vst.msk [vmem:[%s240 + $0x54] sm:$0xf] %vm1875, %v1832
      %1898 = vst.msk [vmem:[%s240 + $0x58] sm:$0xf] %vm1875, %v1833
      %1899 = vst.msk [vmem:[%s240 + $0x5c] sm:$0xf] %vm1875, %v1834
      %1900 = vst.msk [vmem:[%s240 + $0x60] sm:$0xf] %vm1875, %v1835
      %1901 = vst.msk [vmem:[%s240 + $0x64] sm:$0xf] %vm1875, %v1836
      %1902 = vst.msk [vmem:[%s240 + $0x68] sm:$0xf] %vm1875, %v1837
      %1903 = vst.msk [vmem:[%s240 + $0x6c] sm:$0xf] %vm1875, %v1838
      %1904 = vst.msk [vmem:[%s240 + $0x70] sm:$0xf] %vm1875, %v1839
      %1905 = vst.msk [vmem:[%s240 + $0x74] sm:$0xf] %vm1875, %v1840
      %1906 = vst.msk [vmem:[%s240 + $0x78] sm:$0xf] %vm1875, %v1841
      %1907 = vst.msk [vmem:[%s240 + $0x7c] sm:$0xf] %vm1875, %v1842
      %s1908 = smul.u32 16, %s20
      %p1909 = scmp.lt.s32.totalorder %s19, 1
      %s1910 = scalar_select %p1909, %s19, 1
      %p1911 = scmp.lt.s32.totalorder %s1908, 15
      %s1912 = scalar_select %p1911, %s1908, 15
      %p1913 = scmp.lt.s32.totalorder %s21, 0
      %s1914 = scalar_select %p1913, %s21, 0
      %s1915 = smul.addr %s1912, 2
      %s1916 = sadd.s32 %s1914, %s1915
      %s1917 = smul.addr %s1910, 32
      %s1918 = sadd.s32 %s1916, %s1917
      %s1919 = smul.addr %s1918, 4
      %s1920 = scalar_lea.vmem %s3, %s1919
      // Predicated region
      $region33: #{vgg_distance.15} parent=31 // pred_check
        %p1921 = pneg %p133
      $region34: #{vgg_distance.15} parent=31 // pred_check_branch
        %1923 = sbr.rel (%p1921) target = $region36
      $region35: #{vgg_distance.15} parent=31 // pred_region
        %s1924 = smul.u32 16, %s20
      $region36: #{vgg_distance.15} parent=31 // pred_fallthru
        _
    $region32: #{vgg_distance.15} parent=5 // pred_fallthru
      _
    %p1925 = scmp.le.s32.totalorder 2, %s9
    // Predicated region
    $region37: #{vgg_distance.15} parent=5 // pred_check
      %p1926 = pneg %p1925
    $region38: #{vgg_distance.15} parent=5 // pred_check_branch
      %1928 = sbr.rel (%p1926) target = $region40
    $region39: #{vgg_distance.15} parent=5 // pred_region
      %s1929 = ssub.s32 %s9, 2
      // Predicated region
      $region41: #{vgg_distance.15} parent=39 // pred_check
        %p1930 = pneg %p139
      $region42: #{vgg_distance.15} parent=39 // pred_check_branch
        %1932 = sbr.rel (%p1930) target = $region44
      $region43: #{vgg_distance.15} parent=39 // pred_region
        %s1933 = smul.u32 16, %s23
        %p1934 = scmp.lt.s32.totalorder %s22, 1
        %s1935 = scalar_select %p1934, %s22, 1
        %p1936 = scmp.lt.s32.totalorder %s1933, 15
        %s1937 = scalar_select %p1936, %s1933, 15
        %p1938 = scmp.lt.s32.totalorder %s24, 0
        %s1939 = scalar_select %p1938, %s24, 0
        %s1940 = smul.addr %s1937, 2
        %s1941 = sadd.s32 %s1939, %s1940
        %s1942 = smul.addr %s1935, 32
        %s1943 = sadd.s32 %s1941, %s1942
        %s1944 = smul.addr %s1943, 4
        %s1945 = scalar_lea.vmem %s3, %s1944
      $region44: #{vgg_distance.15} parent=39 // pred_fallthru
        _
    $region40: #{vgg_distance.15} parent=5 // pred_fallthru
      _
  $region6: #{vgg_distance.15} parent=0 // loop_footer
    %s13 = sadd.s32 1, %s9
  $region7: #{vgg_distance.15} parent=0 // loop_footer_branch
    %8 = sbr.rel target = $region3
  $region8: #{vgg_distance.15} parent=0 // loop_exit
    _

// kernel: vgg_distance.18
$region0: #{vgg_distance.18}
  #allocation0 [shape = 'u32[]', space=smem, size = 0x4, offset = 0x4, fixed_abs, tag = 'smem constant byte address 0x4 - core index']
  #allocation1 [shape = 'u32[144,128]{1,0:T(1,128)}', space=vmem, size = 0x12000, scoped, tag = 'internal scratch']
  %s0 = inlined_call_operand.vmem [shape: bf16[2,8,2,8,128], index: 0, kind: input, shape index: {}]
  %s1 = inlined_call_operand.vmem [shape: bf16[2,8,8,64], index: 1, kind: output, shape index: {}]
  %s2 = sld [smem:[#allocation0]]
  $region37: #{vgg_distance.18} parent=0
    _
  %s4 = ssub.s32 1, %s2
  %s5 = scalar_select 0, %s4, %s2
  loop: start=0, step=1, limit=4
  $region2: #{vgg_distance.18} parent=0 // loop_pre_header
    _
  $region3: #{vgg_distance.18} parent=0 // loop_header
    %s7 = sphi 0, %s11
    %p8 = scmp.ge.s32.totalorder %s7, 4
    %s14 = sphi 0, %s26
    %s15 = sphi 0, %s22
    %s16 = sphi 0, %s14
    %s17 = sphi 0, %s15
    %s18 = sphi 0, %s16
    %s19 = sphi 0, %s17
    %s31 = sphi 0, %s33
    %s34 = sphi 0, %s31
    %s35 = sphi 0, %s34
    %s51 = sphi 0, %s35
    %s59 = sphi 0, %s61
    %s62 = sphi 0, %s59
    %s63 = sphi 0, %s62
    %s79 = sphi 0, %s63
  $region4: #{vgg_distance.18} parent=0 // loop_header_branch
    %10 = sbr.rel (%p8) target = $region8
  $region5: #{vgg_distance.18} parent=0 // loop_body
    %s12 = ssub.s32 %s7, 1
    %s13 = ssub.s32 %s7, 2
    %s20 = sadd.s32 1, %s15
    %p21 = scmp.ge.s32.totalorder %s20, 1
    %s22 = scalar_select %p21, 0, %s20
    %s23 = sadd.s32 1, %s14
    %s24 = scalar_select %p21, %s23, %s14
    %p25 = scmp.ge.s32.totalorder %s24, 2
    %s26 = scalar_select %p25, 0, %s24
    %s27 = ssub.s32 %s14, %s26
    %s28 = ssub.s32 %s15, %s22
    %s29 = sor.u32 %s27, %s28
    %p30 = scmp.eq.s32.totalorder %s29, 0
    %s32 = sadd.s32 %s31, 1
    %s33 = scalar_select %p30, %s31, %s32
    %p36 = pneg %p30
    %p37 = scmp.eq.s32.totalorder %s7, 1
    %p38 = por %p36, %p37
    %p39 = scmp.ne.s32.totalorder %s31, %s34
    %p40 = scmp.eq.s32.totalorder %s7, 0
    %p41 = por %p39, %p40
    %p42 = scmp.ne.s32.totalorder %s31, %s34
    %p43 = scmp.eq.s32.totalorder %s12, 1
    %p44 = por %p42, %p43
    %p45 = scmp.ne.s32.totalorder %s34, %s35
    %p46 = scmp.eq.s32.totalorder %s12, 0
    %p47 = por %p45, %p46
    %p48 = scmp.ne.s32.totalorder %s34, %s35
    %p49 = scmp.eq.s32.totalorder %s13, 1
    %p50 = por %p48, %p49
    %p52 = scmp.ne.s32.totalorder %s35, %s51
    %p53 = scmp.eq.s32.totalorder %s13, 0
    %p54 = por %p52, %p53
    %s55 = ssub.s32 %s14, %s26
    %s56 = ssub.s32 %s15, %s22
    %s57 = sor.u32 %s55, %s56
    %p58 = scmp.eq.s32.totalorder %s57, 0
    %s60 = sadd.s32 %s59, 1
    %s61 = scalar_select %p58, %s59, %s60
    %p64 = pneg %p58
    %p65 = scmp.eq.s32.totalorder %s7, 1
    %p66 = por %p64, %p65
    %p67 = scmp.ne.s32.totalorder %s59, %s62
    %p68 = scmp.eq.s32.totalorder %s7, 0
    %p69 = por %p67, %p68
    %p70 = scmp.ne.s32.totalorder %s59, %s62
    %p71 = scmp.eq.s32.totalorder %s12, 1
    %p72 = por %p70, %p71
    %p73 = scmp.ne.s32.totalorder %s62, %s63
    %p74 = scmp.eq.s32.totalorder %s12, 0
    %p75 = por %p73, %p74
    %p76 = scmp.ne.s32.totalorder %s62, %s63
    %p77 = scmp.eq.s32.totalorder %s13, 1
    %p78 = por %p76, %p77
    %p80 = scmp.ne.s32.totalorder %s63, %s79
    %p81 = scmp.eq.s32.totalorder %s13, 0
    %p82 = por %p80, %p81
    %p83 = scmp.le.s32.totalorder 1, %s7
    %p84 = scmp.lt.s32.totalorder %s7, 3
    %p85 = pnand %p83, %p84
    %p86 = pneg %p85
    // Predicated region
    $region9: #{vgg_distance.18} parent=5 // pred_check
      _
    $region10: #{vgg_distance.18} parent=5 // pred_check_branch
      %88 = sbr.rel (%p85) target = $region12
    $region11: #{vgg_distance.18} parent=5 // pred_region
      %s89 = ssub.s32 %s7, 1
    $region12: #{vgg_distance.18} parent=5 // pred_fallthru
      _
    %p90 = scmp.lt.s32.totalorder %s7, 2
    // Predicated region
    $region13: #{vgg_distance.18} parent=5 // pred_check
      %p91 = pneg %p90
    $region14: #{vgg_distance.18} parent=5 // pred_check_branch
      %93 = sbr.rel (%p91) target = $region16
    $region15: #{vgg_distance.18} parent=5 // pred_region
      // Predicated region
      $region17: #{vgg_distance.18} parent=15 // pred_check
        %p94 = pneg %p41
      $region18: #{vgg_distance.18} parent=15 // pred_check_branch
        %96 = sbr.rel (%p94) target = $region20
      $region19: #{vgg_distance.18} parent=15 // pred_region
        %s97 = smul.u32 8, %s15
        %p98 = scmp.lt.s32.totalorder %s14, 1
        %s99 = scalar_select %p98, %s14, 1
        %p100 = scmp.lt.s32.totalorder %s97, 7
        %s101 = scalar_select %p100, %s97, 7
        %s102 = smul.addr %s101, 2
        %s103 = smul.addr %s99, 16
        %s104 = sadd.s32 %s102, %s103
        %s105 = smul.addr %s104, 4
        %s106 = scalar_lea.vmem %s0, %s105
        %s107 = smul.u32 8, %s15
      $region20: #{vgg_distance.18} parent=15 // pred_fallthru
        _
    $region16: #{vgg_distance.18} parent=5 // pred_fallthru
      _
    %p108 = scmp.le.s32.totalorder 1, %s7
    %p109 = scmp.lt.s32.totalorder %s7, 3
    %p110 = pnand %p108, %p109
    %p111 = pneg %p110
    // Predicated region
    $region21: #{vgg_distance.18} parent=5 // pred_check
      _
    $region22: #{vgg_distance.18} parent=5 // pred_check_branch
      %113 = sbr.rel (%p110) target = $region24
    $region23: #{vgg_distance.18} parent=5 // pred_region
      %s114 = ssub.s32 %s7, 1
      %s115 = smul.u32 8, %s17
      %p116 = scmp.lt.s32.totalorder %s16, 1
      %s117 = scalar_select %p116, %s16, 1
      %p118 = scmp.lt.s32.totalorder %s115, 7
      %s119 = scalar_select %p118, %s115, 7
      %s120 = smul.addr %s119, 2
      %s121 = smul.addr %s117, 16
      %s122 = sadd.s32 %s120, %s121
      %s123 = smul.addr %s122, 4
      %s124 = scalar_lea.vmem %s0, %s123
      %p125 = pneg %p47
      %p126 = pneg %p44
      %p127 = pneg %p75
      %p128 = pneg %p72
      %s129 = smul.u32 8, %s17
      %p130 = scmp.lt.s32.totalorder %s16, 1
      %s131 = scalar_select %p130, %s16, 1
      %p132 = scmp.lt.s32.totalorder %s129, 7
      %s133 = scalar_select %p132, %s129, 7
      %s134 = smul.addr %s131, 8
      %s135 = sadd.s32 %s133, %s134
      %s136 = smul.addr %s135, 4
      %s137 = scalar_lea.vmem %s1, %s136
      %s138 = smul.u32 8, %s17
      %p139 = scmp.lt.s32.totalorder %s16, 1
      %s140 = scalar_select %p139, %s16, 1
      %p141 = scmp.lt.s32.totalorder %s138, 7
      %s142 = scalar_select %p141, %s138, 7
      %s143 = smul.addr %s142, 2
      %s144 = smul.addr %s140, 16
      %s145 = sadd.s32 %s143, %s144
      %s146 = smul.addr %s145, 4
      %s147 = scalar_lea.vmem %s0, %s146
      %s148 = smul.u32 8, %s17
      %s149 = smul.u32 8, %s17
      %p150 = scmp.lt.s32.totalorder %s16, 1
      %s151 = scalar_select %p150, %s16, 1
      %p152 = scmp.lt.s32.totalorder %s149, 7
      %s153 = scalar_select %p152, %s149, 7
      %s154 = smul.addr %s151, 8
      %s155 = sadd.s32 %s153, %s154
      %s156 = smul.addr %s155, 4
      %s157 = scalar_lea.vmem %s1, %s156
      %s158 = smul.u32 8, %s17
      %v159 = vld [vmem:[%s147] sm:$0xf]
      %v160 = vld [vmem:[%s147 + $0x4] sm:$0xf]
      %v161 = vld [vmem:[%s147 + $0x8] sm:$0xf]
      %v162 = vld [vmem:[%s147 + $0xc] sm:$0xf]
      %v163 = vld [vmem:[%s147 + $0x10] sm:$0xf]
      %v164 = vld [vmem:[%s147 + $0x14] sm:$0xf]
      %v165 = vld [vmem:[%s147 + $0x18] sm:$0xf]
      %v166 = vld [vmem:[%s147 + $0x1c] sm:$0xf]
      %v167 = vld [vmem:[%s147 + $0x20] sm:$0xf]
      %v168 = vld [vmem:[%s147 + $0x24] sm:$0xf]
      %v169 = vld [vmem:[%s147 + $0x28] sm:$0xf]
      %v170 = vld [vmem:[%s147 + $0x2c] sm:$0xf]
      %v171 = vld [vmem:[%s147 + $0x30] sm:$0xf]
      %v172 = vld [vmem:[%s147 + $0x34] sm:$0xf]
      %v173 = vld [vmem:[%s147 + $0x38] sm:$0xf]
      %v174 = vld [vmem:[%s147 + $0x3c] sm:$0xf]
      %v175 = vmax.bf16 %v159, %v160
      %v176 = vmax.bf16 %v161, %v162
      %v177 = vmax.bf16 %v163, %v164
      %v178 = vmax.bf16 %v165, %v166
      %v179 = vmax.bf16 %v167, %v168
      %v180 = vmax.bf16 %v169, %v170
      %v181 = vmax.bf16 %v171, %v172
      %v182 = vmax.bf16 %v173, %v174
      %191 = vrot.lane.b32.xlu0 %v175, 64
      %v192 = vpop.permute.xlu0 %191
      %193 = vrot.lane.b32.xlu0 %v176, 64
      %v194 = vpop.permute.xlu0 %193
      %195 = vrot.lane.b32.xlu0 %v177, 64
      %v196 = vpop.permute.xlu0 %195
      %197 = vrot.lane.b32.xlu0 %v178, 64
      %v198 = vpop.permute.xlu0 %197
      %199 = vrot.lane.b32.xlu0 %v179, 64
      %v200 = vpop.permute.xlu0 %199
      %201 = vrot.lane.b32.xlu0 %v180, 64
      %v202 = vpop.permute.xlu0 %201
      %203 = vrot.lane.b32.xlu0 %v181, 64
      %v204 = vpop.permute.xlu0 %203
      %205 = vrot.lane.b32.xlu0 %v182, 64
      %v206 = vpop.permute.xlu0 %205
      %v215 = vmax.bf16 %v175, %v192
      %v216 = vmax.bf16 %v176, %v194
      %v217 = vmax.bf16 %v177, %v196
      %v218 = vmax.bf16 %v178, %v198
      %v219 = vmax.bf16 %v179, %v200
      %v220 = vmax.bf16 %v180, %v202
      %v221 = vmax.bf16 %v181, %v204
      %v222 = vmax.bf16 %v182, %v206
      %vm223 = vcmask 519168
      %224 = vst.msk [vmem:[%s157] sm:$0xf] %vm223, %v215
      %225 = vst.msk [vmem:[%s157 + $0x4] sm:$0xf] %vm223, %v216
      %226 = vst.msk [vmem:[%s157 + $0x8] sm:$0xf] %vm223, %v217
      %227 = vst.msk [vmem:[%s157 + $0xc] sm:$0xf] %vm223, %v218
      %228 = vst.msk [vmem:[%s157 + $0x10] sm:$0xf] %vm223, %v219
      %229 = vst.msk [vmem:[%s157 + $0x14] sm:$0xf] %vm223, %v220
      %230 = vst.msk [vmem:[%s157 + $0x18] sm:$0xf] %vm223, %v221
      %231 = vst.msk [vmem:[%s157 + $0x1c] sm:$0xf] %vm223, %v222
      %s232 = smul.u32 8, %s17
      %p233 = scmp.lt.s32.totalorder %s16, 1
      %s234 = scalar_select %p233, %s16, 1
      %p235 = scmp.lt.s32.totalorder %s232, 7
      %s236 = scalar_select %p235, %s232, 7
      %s237 = smul.addr %s234, 8
      %s238 = sadd.s32 %s236, %s237
      %s239 = smul.addr %s238, 4
      %s240 = scalar_lea.vmem %s1, %s239
      // Predicated region
      $region25: #{vgg_distance.18} parent=23 // pred_check
        %p241 = pneg %p72
      $region26: #{vgg_distance.18} parent=23 // pred_check_branch
        %243 = sbr.rel (%p241) target = $region28
      $region27: #{vgg_distance.18} parent=23 // pred_region
        %s244 = smul.u32 8, %s17
      $region28: #{vgg_distance.18} parent=23 // pred_fallthru
        _
    $region24: #{vgg_distance.18} parent=5 // pred_fallthru
      _
    %p245 = scmp.le.s32.totalorder 2, %s7
    // Predicated region
    $region29: #{vgg_distance.18} parent=5 // pred_check
      %p246 = pneg %p245
    $region30: #{vgg_distance.18} parent=5 // pred_check_branch
      %248 = sbr.rel (%p246) target = $region32
    $region31: #{vgg_distance.18} parent=5 // pred_region
      %s249 = ssub.s32 %s7, 2
      // Predicated region
      $region33: #{vgg_distance.18} parent=31 // pred_check
        %p250 = pneg %p78
      $region34: #{vgg_distance.18} parent=31 // pred_check_branch
        %252 = sbr.rel (%p250) target = $region36
      $region35: #{vgg_distance.18} parent=31 // pred_region
        %s253 = smul.u32 8, %s19
        %p254 = scmp.lt.s32.totalorder %s18, 1
        %s255 = scalar_select %p254, %s18, 1
        %p256 = scmp.lt.s32.totalorder %s253, 7
        %s257 = scalar_select %p256, %s253, 7
        %s258 = smul.addr %s255, 8
        %s259 = sadd.s32 %s257, %s258
        %s260 = smul.addr %s259, 4
        %s261 = scalar_lea.vmem %s1, %s260
      $region36: #{vgg_distance.18} parent=31 // pred_fallthru
        _
    $region32: #{vgg_distance.18} parent=5 // pred_fallthru
      _
  $region6: #{vgg_distance.18} parent=0 // loop_footer
    %s11 = sadd.s32 1, %s7
  $region7: #{vgg_distance.18} parent=0 // loop_footer_branch
    %6 = sbr.rel target = $region3
  $region8: #{vgg_distance.18} parent=0 // loop_exit
    _

// kernel: vgg_distance.16
$region0: #{vgg_distance.16}
  #allocation0 [shape = 'u32[]', space=smem, size = 0x4, offset = 0x4, fixed_abs, tag = 'smem constant byte address 0x4 - core index']
  #allocation1 [shape = 'u32[144,128]{1,0:T(1,128)}', space=vmem, size = 0x12000, scoped, tag = 'internal scratch']
  #allocation2 [shape = 'f32[256,64]{1,0:T(8,128)}', space=vmem, size = 0x20000, scoped, tag = 'scratch operand']
  %s0 = inlined_call_operand.vmem [shape: bf16[2,18,18,64], index: 0, kind: input, shape index: {}]
  %s1 = inlined_call_operand.vmem [shape: bf16[3,192,64], index: 1, kind: input, shape index: {}]
  %s2 = inlined_call_operand.vmem [shape: f32[1,64], index: 2, kind: input, shape index: {}]
  %s3 = inlined_call_operand.vmem [shape: bf16[2,16,16,64], index: 3, kind: output, shape index: {}]
  %s4 = sld [smem:[#allocation0]]
  $region45: #{vgg_distance.16} parent=0
    _
  %s6 = ssub.s32 1, %s4
  %s7 = scalar_select 0, %s6, %s4
  loop: start=0, step=1, limit=4
  $region2: #{vgg_distance.16} parent=0 // loop_pre_header
    _
  $region3: #{vgg_distance.16} parent=0 // loop_header
    %s9 = sphi 0, %s13
    %p10 = scmp.ge.s32.totalorder %s9, 4
    %s16 = sphi 0, %s35
    %s17 = sphi 0, %s31
    %s18 = sphi 0, %s27
    %s19 = sphi 0, %s16
    %s20 = sphi 0, %s17
    %s21 = sphi 0, %s18
    %s22 = sphi 0, %s19
    %s23 = sphi 0, %s20
    %s24 = sphi 0, %s21
    %s38 = sphi 0, %s40
    %s41 = sphi 0, %s38
    %s42 = sphi 0, %s41
    %s58 = sphi 0, %s42
    %s64 = sphi 0, %s66
    %s67 = sphi 0, %s64
    %s68 = sphi 0, %s67
    %s84 = sphi 0, %s68
    %s90 = sphi 0, %s92
    %s93 = sphi 0, %s90
    %s94 = sphi 0, %s93
    %s110 = sphi 0, %s94
    %s120 = sphi 0, %s122
    %s123 = sphi 0, %s120
    %s124 = sphi 0, %s123
    %s140 = sphi 0, %s124
  $region4: #{vgg_distance.16} parent=0 // loop_header_branch
    %12 = sbr.rel (%p10) target = $region8
  $region5: #{vgg_distance.16} parent=0 // loop_body
    %s14 = ssub.s32 %s9, 1
    %s15 = ssub.s32 %s9, 2
    %s25 = sadd.s32 1, %s18
    %p26 = scmp.ge.s32.totalorder %s25, 1
    %s27 = scalar_select %p26, 0, %s25
    %s28 = sadd.s32 1, %s17
    %s29 = scalar_select %p26, %s28, %s17
    %p30 = scmp.ge.s32.totalorder %s29, 1
    %s31 = scalar_select %p30, 0, %s29
    %s32 = sadd.s32 1, %s16
    %s33 = scalar_select %p30, %s32, %s16
    %p34 = scmp.ge.s32.totalorder %s33, 2
    %s35 = scalar_select %p34, 0, %s33
    %s36 = ssub.s32 %s16, %s35
    %p37 = scmp.eq.s32.totalorder %s36, 0
    %s39 = sadd.s32 %s38, 1
    %s40 = scalar_select %p37, %s38, %s39
    %p43 = pneg %p37
    %p44 = scmp.eq.s32.totalorder %s9, 1
    %p45 = por %p43, %p44
    %p46 = scmp.ne.s32.totalorder %s38, %s41
    %p47 = scmp.eq.s32.totalorder %s9, 0
    %p48 = por %p46, %p47
    %p49 = scmp.ne.s32.totalorder %s38, %s41
    %p50 = scmp.eq.s32.totalorder %s14, 1
    %p51 = por %p49, %p50
    %p52 = scmp.ne.s32.totalorder %s41, %s42
    %p53 = scmp.eq.s32.totalorder %s14, 0
    %p54 = por %p52, %p53
    %p55 = scmp.ne.s32.totalorder %s41, %s42
    %p56 = scmp.eq.s32.totalorder %s15, 1
    %p57 = por %p55, %p56
    %p59 = scmp.ne.s32.totalorder %s42, %s58
    %p60 = scmp.eq.s32.totalorder %s15, 0
    %p61 = por %p59, %p60
    %s62 = ssub.s32 %s18, %s27
    %p63 = scmp.eq.s32.totalorder %s62, 0
    %s65 = sadd.s32 %s64, 1
    %s66 = scalar_select %p63, %s64, %s65
    %p69 = pneg %p63
    %p70 = scmp.eq.s32.totalorder %s9, 1
    %p71 = por %p69, %p70
    %p72 = scmp.ne.s32.totalorder %s64, %s67
    %p73 = scmp.eq.s32.totalorder %s9, 0
    %p74 = por %p72, %p73
    %p75 = scmp.ne.s32.totalorder %s64, %s67
    %p76 = scmp.eq.s32.totalorder %s14, 1
    %p77 = por %p75, %p76
    %p78 = scmp.ne.s32.totalorder %s67, %s68
    %p79 = scmp.eq.s32.totalorder %s14, 0
    %p80 = por %p78, %p79
    %p81 = scmp.ne.s32.totalorder %s67, %s68
    %p82 = scmp.eq.s32.totalorder %s15, 1
    %p83 = por %p81, %p82
    %p85 = scmp.ne.s32.totalorder %s68, %s84
    %p86 = scmp.eq.s32.totalorder %s15, 0
    %p87 = por %p85, %p86
    %s88 = ssub.s32 %s18, %s27
    %p89 = scmp.eq.s32.totalorder %s88, 0
    %s91 = sadd.s32 %s90, 1
    %s92 = scalar_select %p89, %s90, %s91
    %p95 = pneg %p89
    %p96 = scmp.eq.s32.totalorder %s9, 1
    %p97 = por %p95, %p96
    %p98 = scmp.ne.s32.totalorder %s90, %s93
    %p99 = scmp.eq.s32.totalorder %s9, 0
    %p100 = por %p98, %p99
    %p101 = scmp.ne.s32.totalorder %s90, %s93
    %p102 = scmp.eq.s32.totalorder %s14, 1
    %p103 = por %p101, %p102
    %p104 = scmp.ne.s32.totalorder %s93, %s94
    %p105 = scmp.eq.s32.totalorder %s14, 0
    %p106 = por %p104, %p105
    %p107 = scmp.ne.s32.totalorder %s93, %s94
    %p108 = scmp.eq.s32.totalorder %s15, 1
    %p109 = por %p107, %p108
    %p111 = scmp.ne.s32.totalorder %s94, %s110
    %p112 = scmp.eq.s32.totalorder %s15, 0
    %p113 = por %p111, %p112
    %s114 = ssub.s32 %s16, %s35
    %s115 = ssub.s32 %s17, %s31
    %s116 = sor.u32 %s114, %s115
    %s117 = ssub.s32 %s18, %s27
    %s118 = sor.u32 %s116, %s117
    %p119 = scmp.eq.s32.totalorder %s118, 0
    %s121 = sadd.s32 %s120, 1
    %s122 = scalar_select %p119, %s120, %s121
    %p125 = pneg %p119
    %p126 = scmp.eq.s32.totalorder %s9, 1
    %p127 = por %p125, %p126
    %p128 = scmp.ne.s32.totalorder %s120, %s123
    %p129 = scmp.eq.s32.totalorder %s9, 0
    %p130 = por %p128, %p129
    %p131 = scmp.ne.s32.totalorder %s120, %s123
    %p132 = scmp.eq.s32.totalorder %s14, 1
    %p133 = por %p131, %p132
    %p134 = scmp.ne.s32.totalorder %s123, %s124
    %p135 = scmp.eq.s32.totalorder %s14, 0
    %p136 = por %p134, %p135
    %p137 = scmp.ne.s32.totalorder %s123, %s124
    %p138 = scmp.eq.s32.totalorder %s15, 1
    %p139 = por %p137, %p138
    %p141 = scmp.ne.s32.totalorder %s124, %s140
    %p142 = scmp.eq.s32.totalorder %s15, 0
    %p143 = por %p141, %p142
    %p144 = scmp.le.s32.totalorder 1, %s9
    %p145 = scmp.lt.s32.totalorder %s9, 3
    %p146 = pnand %p144, %p145
    %p147 = pneg %p146
    // Predicated region
    $region9: #{vgg_distance.16} parent=5 // pred_check
      _
    $region10: #{vgg_distance.16} parent=5 // pred_check_branch
      %149 = sbr.rel (%p146) target = $region12
    $region11: #{vgg_distance.16} parent=5 // pred_region
      %s150 = ssub.s32 %s9, 1
      // Predicated region
      $region13: #{vgg_distance.16} parent=11 // pred_check
        %p151 = pneg %p80
      $region14: #{vgg_distance.16} parent=11 // pred_check_branch
        %153 = sbr.rel (%p151) target = $region16
      $region15: #{vgg_distance.16} parent=11 // pred_region
        %p154 = scmp.lt.s32.totalorder %s21, 0
        %s155 = scalar_select %p154, %s21, 0
        %s156 = smul.addr %s155, 4
        %s157 = scalar_lea.vmem %s1, %s156
      $region16: #{vgg_distance.16} parent=11 // pred_fallthru
        _
      // Predicated region
      $region17: #{vgg_distance.16} parent=11 // pred_check
        %p158 = pneg %p106
      $region18: #{vgg_distance.16} parent=11 // pred_check_branch
        %160 = sbr.rel (%p158) target = $region20
      $region19: #{vgg_distance.16} parent=11 // pred_region
        %p161 = scmp.lt.s32.totalorder %s21, 0
        %s162 = scalar_select %p161, %s21, 0
        %s163 = scalar_lea.vmem %s2, %s162
      $region20: #{vgg_distance.16} parent=11 // pred_fallthru
        _
    $region12: #{vgg_distance.16} parent=5 // pred_fallthru
      _
    %p164 = scmp.lt.s32.totalorder %s9, 2
    // Predicated region
    $region21: #{vgg_distance.16} parent=5 // pred_check
      %p165 = pneg %p164
    $region22: #{vgg_distance.16} parent=5 // pred_check_branch
      %167 = sbr.rel (%p165) target = $region24
    $region23: #{vgg_distance.16} parent=5 // pred_region
      // Predicated region
      $region25: #{vgg_distance.16} parent=23 // pred_check
        %p168 = pneg %p48
      $region26: #{vgg_distance.16} parent=23 // pred_check_branch
        %170 = sbr.rel (%p168) target = $region28
      $region27: #{vgg_distance.16} parent=23 // pred_region
        %p171 = scmp.lt.s32.totalorder %s16, 1
        %s172 = scalar_select %p171, %s16, 1
        %s173 = smul.addr %s172, 54
        %s174 = smul.addr %s173, 4
        %s175 = scalar_lea.vmem %s0, %s174
      $region28: #{vgg_distance.16} parent=23 // pred_fallthru
        _
    $region24: #{vgg_distance.16} parent=5 // pred_fallthru
      _
    %p176 = scmp.le.s32.totalorder 1, %s9
    %p177 = scmp.lt.s32.totalorder %s9, 3
    %p178 = pnand %p176, %p177
    %p179 = pneg %p178
    // Predicated region
    $region29: #{vgg_distance.16} parent=5 // pred_check
      _
    $region30: #{vgg_distance.16} parent=5 // pred_check_branch
      %181 = sbr.rel (%p178) target = $region32
    $region31: #{vgg_distance.16} parent=5 // pred_region
      %s182 = ssub.s32 %s9, 1
      %p183 = scmp.lt.s32.totalorder %s19, 1
      %s184 = scalar_select %p183, %s19, 1
      %s185 = smul.addr %s184, 54
      %s186 = smul.addr %s185, 4
      %s187 = scalar_lea.vmem %s0, %s186
      %p188 = pneg %p54
      %p189 = pneg %p51
      %p190 = scmp.lt.s32.totalorder %s21, 0
      %s191 = scalar_select %p190, %s21, 0
      %s192 = smul.addr %s191, 4
      %s193 = scalar_lea.vmem %s1, %s192
      %p194 = pneg %p80
      %p195 = pneg %p77
      %p196 = scmp.lt.s32.totalorder %s21, 0
      %s197 = scalar_select %p196, %s21, 0
      %s198 = scalar_lea.vmem %s2, %s197
      %p199 = pneg %p106
      %p200 = pneg %p103
      %p201 = pneg %p136
      %p202 = pneg %p133
      %s203 = smul.u32 16, %s20
      %p204 = scmp.lt.s32.totalorder %s19, 1
      %s205 = scalar_select %p204, %s19, 1
      %p206 = scmp.lt.s32.totalorder %s203, 15
      %s207 = scalar_select %p206, %s203, 15
      %p208 = scmp.lt.s32.totalorder %s21, 0
      %s209 = scalar_select %p208, %s21, 0
      %s210 = smul.addr %s207, 2
      %s211 = sadd.s32 %s209, %s210
      %s212 = smul.addr %s205, 32
      %s213 = sadd.s32 %s211, %s212
      %s214 = smul.addr %s213, 4
      %s215 = scalar_lea.vmem %s3, %s214
      %p216 = scmp.lt.s32.totalorder %s19, 1
      %s217 = scalar_select %p216, %s19, 1
      %s218 = smul.addr %s217, 54
      %s219 = smul.addr %s218, 4
      %s220 = scalar_lea.vmem %s0, %s219
      %p221 = scmp.lt.s32.totalorder %s21, 0
      %s222 = scalar_select %p221, %s21, 0
      %s223 = smul.addr %s222, 4
      %s224 = scalar_lea.vmem %s1, %s223
      %p225 = scmp.lt.s32.totalorder %s21, 0
      %s226 = scalar_select %p225, %s21, 0
      %s227 = scalar_lea.vmem %s2, %s226
      %s228 = smul.u32 16, %s20
      %p229 = scmp.lt.s32.totalorder %s19, 1
      %s230 = scalar_select %p229, %s19, 1
      %p231 = scmp.lt.s32.totalorder %s228, 15
      %s232 = scalar_select %p231, %s228, 15
      %p233 = scmp.lt.s32.totalorder %s21, 0
      %s234 = scalar_select %p233, %s21, 0
      %s235 = smul.addr %s232, 2
      %s236 = sadd.s32 %s234, %s235
      %s237 = smul.addr %s230, 32
      %s238 = sadd.s32 %s236, %s237
      %s239 = smul.addr %s238, 4
      %s240 = scalar_lea.vmem %s3, %s239
      %s241 = smul.u32 16, %s20
      %s243 = smul.u32 %s20, 16
      %s244 = smul.u32 %s243, 3
      %s245 = smul.addr %s244, 4
      %s246 = scalar_lea.vmem %s220, %s245
      %v247 = vld [vmem:[%s246] sm:$0xf]
      %v248 = vld [vmem:[%s246 + $0x4] sm:$0xf]
      %v249 = vld [vmem:[%s246 + $0x8] sm:$0x1]
      %v250 = vld [vmem:[%s246 + $0xc] sm:$0xf]
      %v251 = vld [vmem:[%s246 + $0x10] sm:$0xf]
      %v252 = vld [vmem:[%s246 + $0x14] sm:$0x1]
      %v253 = vld [vmem:[%s246 + $0x18] sm:$0xf]
      %v254 = vld [vmem:[%s246 + $0x1c] sm:$0xf]
      %v255 = vld [vmem:[%s246 + $0x20] sm:$0x1]
      %v256 = vld [vmem:[%s246 + $0x24] sm:$0xf]
      %v257 = vld [vmem:[%s246 + $0x28] sm:$0xf]
      %v258 = vld [vmem:[%s246 + $0x2c] sm:$0x1]
      %v259 = vld [vmem:[%s246 + $0x30] sm:$0xf]
      %v260 = vld [vmem:[%s246 + $0x34] sm:$0xf]
      %v261 = vld [vmem:[%s246 + $0x38] sm:$0x1]
      %v262 = vld [vmem:[%s246 + $0x3c] sm:$0xf]
      %v263 = vld [vmem:[%s246 + $0x40] sm:$0xf]
      %v264 = vld [vmem:[%s246 + $0x44] sm:$0x1]
      %v265 = vld [vmem:[%s246 + $0x48] sm:$0xf]
      %v266 = vld [vmem:[%s246 + $0x4c] sm:$0xf]
      %v267 = vld [vmem:[%s246 + $0x50] sm:$0x1]
      %v268 = vld [vmem:[%s246 + $0x54] sm:$0xf]
      %v269 = vld [vmem:[%s246 + $0x58] sm:$0xf]
      %v270 = vld [vmem:[%s246 + $0x5c] sm:$0x1]
      %v271 = vld [vmem:[%s246 + $0x60] sm:$0xf]
      %v272 = vld [vmem:[%s246 + $0x64] sm:$0xf]
      %v273 = vld [vmem:[%s246 + $0x68] sm:$0x1]
      %v274 = vld [vmem:[%s246 + $0x6c] sm:$0xf]
      %v275 = vld [vmem:[%s246 + $0x70] sm:$0xf]
      %v276 = vld [vmem:[%s246 + $0x74] sm:$0x1]
      %v277 = vld [vmem:[%s246 + $0x78] sm:$0xf]
      %v278 = vld [vmem:[%s246 + $0x7c] sm:$0xf]
      %v279 = vld [vmem:[%s246 + $0x80] sm:$0x1]
      %v280 = vld [vmem:[%s246 + $0x84] sm:$0xf]
      %v281 = vld [vmem:[%s246 + $0x88] sm:$0xf]
      %v282 = vld [vmem:[%s246 + $0x8c] sm:$0x1]
      %v283 = vld [vmem:[%s246 + $0x90] sm:$0xf]
      %v284 = vld [vmem:[%s246 + $0x94] sm:$0xf]
      %v285 = vld [vmem:[%s246 + $0x98] sm:$0x1]
      %v286 = vld [vmem:[%s246 + $0x9c] sm:$0xf]
      %v287 = vld [vmem:[%s246 + $0xa0] sm:$0xf]
      %v288 = vld [vmem:[%s246 + $0xa4] sm:$0x1]
      %v289 = vld [vmem:[%s246 + $0xa8] sm:$0xf]
      %v290 = vld [vmem:[%s246 + $0xac] sm:$0xf]
      %v291 = vld [vmem:[%s246 + $0xb0] sm:$0x1]
      %v292 = vld [vmem:[%s246 + $0xb4] sm:$0xf]
      %v293 = vld [vmem:[%s246 + $0xb8] sm:$0xf]
      %v294 = vld [vmem:[%s246 + $0xbc] sm:$0x1]
      %v295 = vld [vmem:[%s246 + $0xc0] sm:$0xf]
      %v296 = vld [vmem:[%s246 + $0xc4] sm:$0xf]
      %v297 = vld [vmem:[%s246 + $0xc8] sm:$0x1]
      %v298 = vld [vmem:[%s246 + $0xcc] sm:$0xf]
      %v299 = vld [vmem:[%s246 + $0xd0] sm:$0xf]
      %v300 = vld [vmem:[%s246 + $0xd4] sm:$0x1]
      %v337 = vunpack.c.l.b16 %v247
      %v338 = vunpack.c.l.b16 %v248
      %v339 = vunpack.c.l.b16 %v250
      %v340 = vunpack.c.l.b16 %v251
      %v341 = vunpack.c.l.b16 %v253
      %v342 = vunpack.c.l.b16 %v254
      %v343 = vunpack.c.l.b16 %v256
      %v344 = vunpack.c.l.b16 %v257
      %v345 = vunpack.c.l.b16 %v259
      %v346 = vunpack.c.l.b16 %v260
      %v347 = vunpack.c.l.b16 %v262
      %v348 = vunpack.c.l.b16 %v263
      %v349 = vunpack.c.l.b16 %v265
      %v350 = vunpack.c.l.b16 %v266
      %v351 = vunpack.c.l.b16 %v268
      %v352 = vunpack.c.l.b16 %v269
      %v353 = vunpack.c.l.b16 %v271
      %v354 = vunpack.c.l.b16 %v272
      %v355 = vunpack.c.l.b16 %v274
      %v356 = vunpack.c.l.b16 %v275
      %v357 = vunpack.c.l.b16 %v277
      %v358 = vunpack.c.l.b16 %v278
      %v359 = vunpack.c.l.b16 %v280
      %v360 = vunpack.c.l.b16 %v281
      %v361 = vunpack.c.l.b16 %v283
      %v362 = vunpack.c.l.b16 %v284
      %v363 = vunpack.c.l.b16 %v286
      %v364 = vunpack.c.l.b16 %v287
      %v365 = vunpack.c.l.b16 %v289
      %v366 = vunpack.c.l.b16 %v290
      %v367 = vunpack.c.l.b16 %v292
      %v368 = vunpack.c.l.b16 %v293
      %v369 = vunpack.c.l.b16 %v295
      %v370 = vunpack.c.l.b16 %v296
      %v371 = vunpack.c.l.b16 %v298
      %v372 = vunpack.c.l.b16 %v299
      %v373 = vpack.c.b16 %v338, %v337
      %v374 = vpack.c.b16 %v340, %v339
      %v375 = vpack.c.b16 %v342, %v341
      %v376 = vpack.c.b16 %v344, %v343
      %v377 = vpack.c.b16 %v346, %v345
      %v378 = vpack.c.b16 %v348, %v347
      %v379 = vpack.c.b16 %v350, %v349
      %v380 = vpack.c.b16 %v352, %v351
      %v381 = vpack.c.b16 %v354, %v353
      %v382 = vpack.c.b16 %v356, %v355
      %v383 = vpack.c.b16 %v358, %v357
      %v384 = vpack.c.b16 %v360, %v359
      %v385 = vpack.c.b16 %v362, %v361
      %v386 = vpack.c.b16 %v364, %v363
      %v387 = vpack.c.b16 %v366, %v365
      %v388 = vpack.c.b16 %v368, %v367
      %v389 = vpack.c.b16 %v370, %v369
      %v390 = vpack.c.b16 %v372, %v371
      %v409 = vunpack.c.l.b16 %v249
      %v410 = vunpack.c.l.b16 %v252
      %v411 = vunpack.c.l.b16 %v255
      %v412 = vunpack.c.l.b16 %v258
      %v413 = vunpack.c.l.b16 %v261
      %v414 = vunpack.c.l.b16 %v264
      %v415 = vunpack.c.l.b16 %v267
      %v416 = vunpack.c.l.b16 %v270
      %v417 = vunpack.c.l.b16 %v273
      %v418 = vunpack.c.l.b16 %v276
      %v419 = vunpack.c.l.b16 %v279
      %v420 = vunpack.c.l.b16 %v282
      %v421 = vunpack.c.l.b16 %v285
      %v422 = vunpack.c.l.b16 %v288
      %v423 = vunpack.c.l.b16 %v291
      %v424 = vunpack.c.l.b16 %v294
      %v425 = vunpack.c.l.b16 %v297
      %v426 = vunpack.c.l.b16 %v300
      %v427 = vpack.c.b16 %v409, %v409
      %v428 = vpack.c.b16 %v410, %v410
      %v429 = vpack.c.b16 %v411, %v411
      %v430 = vpack.c.b16 %v412, %v412
      %v431 = vpack.c.b16 %v413, %v413
      %v432 = vpack.c.b16 %v414, %v414
      %v433 = vpack.c.b16 %v415, %v415
      %v434 = vpack.c.b16 %v416, %v416
      %v435 = vpack.c.b16 %v417, %v417
      %v436 = vpack.c.b16 %v418, %v418
      %v437 = vpack.c.b16 %v419, %v419
      %v438 = vpack.c.b16 %v420, %v420
      %v439 = vpack.c.b16 %v421, %v421
      %v440 = vpack.c.b16 %v422, %v422
      %v441 = vpack.c.b16 %v423, %v423
      %v442 = vpack.c.b16 %v424, %v424
      %v443 = vpack.c.b16 %v425, %v425
      %v444 = vpack.c.b16 %v426, %v426
      %vm445 = vsmask.f32 7424
      %v447 = vshrl.u32 %v373, 16
      %v449 = vshll.u32 %v373, 16
      %v451 = vrot.slane %v449, 1
      %v452 = vor.u32 %v447, %v451
      %v454 = vshll.u32 %v427, 16
      %v456 = vrot.slane %v454, 1
      %v457 = vsel %vm445, %v452, %v456
      %v459 = vshrl.u32 %v374, 16
      %v461 = vshll.u32 %v374, 16
      %v463 = vrot.slane %v461, 1
      %v464 = vor.u32 %v459, %v463
      %v466 = vshll.u32 %v428, 16
      %v468 = vrot.slane %v466, 1
      %v469 = vsel %vm445, %v464, %v468
      %v471 = vshrl.u32 %v375, 16
      %v473 = vshll.u32 %v375, 16
      %v475 = vrot.slane %v473, 1
      %v476 = vor.u32 %v471, %v475
      %v478 = vshll.u32 %v429, 16
      %v480 = vrot.slane %v478, 1
      %v481 = vsel %vm445, %v476, %v480
      %v483 = vshrl.u32 %v376, 16
      %v485 = vshll.u32 %v376, 16
      %v487 = vrot.slane %v485, 1
      %v488 = vor.u32 %v483, %v487
      %v490 = vshll.u32 %v430, 16
      %v492 = vrot.slane %v490, 1
      %v493 = vsel %vm445, %v488, %v492
      %v495 = vshrl.u32 %v377, 16
      %v497 = vshll.u32 %v377, 16
      %v499 = vrot.slane %v497, 1
      %v500 = vor.u32 %v495, %v499
      %v502 = vshll.u32 %v431, 16
      %v504 = vrot.slane %v502, 1
      %v505 = vsel %vm445, %v500, %v504
      %v507 = vshrl.u32 %v378, 16
      %v509 = vshll.u32 %v378, 16
      %v511 = vrot.slane %v509, 1
      %v512 = vor.u32 %v507, %v511
      %v514 = vshll.u32 %v432, 16
      %v516 = vrot.slane %v514, 1
      %v517 = vsel %vm445, %v512, %v516
      %v519 = vshrl.u32 %v379, 16
      %v521 = vshll.u32 %v379, 16
      %v523 = vrot.slane %v521, 1
      %v524 = vor.u32 %v519, %v523
      %v526 = vshll.u32 %v433, 16
      %v528 = vrot.slane %v526, 1
      %v529 = vsel %vm445, %v524, %v528
      %v531 = vshrl.u32 %v380, 16
      %v533 = vshll.u32 %v380, 16
      %v535 = vrot.slane %v533, 1
      %v536 = vor.u32 %v531, %v535
      %v538 = vshll.u32 %v434, 16
      %v540 = vrot.slane %v538, 1
      %v541 = vsel %vm445, %v536, %v540
      %v543 = vshrl.u32 %v381, 16
      %v545 = vshll.u32 %v381, 16
      %v547 = vrot.slane %v545, 1
      %v548 = vor.u32 %v543, %v547
      %v550 = vshll.u32 %v435, 16
      %v552 = vrot.slane %v550, 1
      %v553 = vsel %vm445, %v548, %v552
      %v555 = vshrl.u32 %v382, 16
      %v557 = vshll.u32 %v382, 16
      %v559 = vrot.slane %v557, 1
      %v560 = vor.u32 %v555, %v559
      %v562 = vshll.u32 %v436, 16
      %v564 = vrot.slane %v562, 1
      %v565 = vsel %vm445, %v560, %v564
      %v567 = vshrl.u32 %v383, 16
      %v569 = vshll.u32 %v383, 16
      %v571 = vrot.slane %v569, 1
      %v572 = vor.u32 %v567, %v571
      %v574 = vshll.u32 %v437, 16
      %v576 = vrot.slane %v574, 1
      %v577 = vsel %vm445, %v572, %v576
      %v579 = vshrl.u32 %v384, 16
      %v581 = vshll.u32 %v384, 16
      %v583 = vrot.slane %v581, 1
      %v584 = vor.u32 %v579, %v583
      %v586 = vshll.u32 %v438, 16
      %v588 = vrot.slane %v586, 1
      %v589 = vsel %vm445, %v584, %v588
      %v591 = vshrl.u32 %v385, 16
      %v593 = vshll.u32 %v385, 16
      %v595 = vrot.slane %v593, 1
      %v596 = vor.u32 %v591, %v595
      %v598 = vshll.u32 %v439, 16
      %v600 = vrot.slane %v598, 1
      %v601 = vsel %vm445, %v596, %v600
      %v603 = vshrl.u32 %v386, 16
      %v605 = vshll.u32 %v386, 16
      %v607 = vrot.slane %v605, 1
      %v608 = vor.u32 %v603, %v607
      %v610 = vshll.u32 %v440, 16
      %v612 = vrot.slane %v610, 1
      %v613 = vsel %vm445, %v608, %v612
      %v615 = vshrl.u32 %v387, 16
      %v617 = vshll.u32 %v387, 16
      %v619 = vrot.slane %v617, 1
      %v620 = vor.u32 %v615, %v619
      %v622 = vshll.u32 %v441, 16
      %v624 = vrot.slane %v622, 1
      %v625 = vsel %vm445, %v620, %v624
      %v627 = vshrl.u32 %v388, 16
      %v629 = vshll.u32 %v388, 16
      %v631 = vrot.slane %v629, 1
      %v632 = vor.u32 %v627, %v631
      %v634 = vshll.u32 %v442, 16
      %v636 = vrot.slane %v634, 1
      %v637 = vsel %vm445, %v632, %v636
      %v639 = vshrl.u32 %v389, 16
      %v641 = vshll.u32 %v389, 16
      %v643 = vrot.slane %v641, 1
      %v644 = vor.u32 %v639, %v643
      %v646 = vshll.u32 %v443, 16
      %v648 = vrot.slane %v646, 1
      %v649 = vsel %vm445, %v644, %v648
      %v651 = vshrl.u32 %v390, 16
      %v653 = vshll.u32 %v390, 16
      %v655 = vrot.slane %v653, 1
      %v656 = vor.u32 %v651, %v655
      %v658 = vshll.u32 %v444, 16
      %v660 = vrot.slane %v658, 1
      %v661 = vsel %vm445, %v656, %v660
      %662 = vrot.lane.b32.xlu0 %v457, 64
      %v663 = vpop.permute.xlu0 %662
      %664 = vrot.lane.b32.xlu0 %v469, 64
      %v665 = vpop.permute.xlu0 %664
      %666 = vrot.lane.b32.xlu0 %v481, 64
      %v667 = vpop.permute.xlu0 %666
      %668 = vrot.lane.b32.xlu0 %v493, 64
      %v669 = vpop.permute.xlu0 %668
      %670 = vrot.lane.b32.xlu0 %v505, 64
      %v671 = vpop.permute.xlu0 %670
      %672 = vrot.lane.b32.xlu0 %v517, 64
      %v673 = vpop.permute.xlu0 %672
      %674 = vrot.lane.b32.xlu0 %v529, 64
      %v675 = vpop.permute.xlu0 %674
      %676 = vrot.lane.b32.xlu0 %v541, 64
      %v677 = vpop.permute.xlu0 %676
      %678 = vrot.lane.b32.xlu0 %v553, 64
      %v679 = vpop.permute.xlu0 %678
      %680 = vrot.lane.b32.xlu0 %v565, 64
      %v681 = vpop.permute.xlu0 %680
      %682 = vrot.lane.b32.xlu0 %v577, 64
      %v683 = vpop.permute.xlu0 %682
      %684 = vrot.lane.b32.xlu0 %v589, 64
      %v685 = vpop.permute.xlu0 %684
      %686 = vrot.lane.b32.xlu0 %v601, 64
      %v687 = vpop.permute.xlu0 %686
      %688 = vrot.lane.b32.xlu0 %v613, 64
      %v689 = vpop.permute.xlu0 %688
      %690 = vrot.lane.b32.xlu0 %v625, 64
      %v691 = vpop.permute.xlu0 %690
      %692 = vrot.lane.b32.xlu0 %v637, 64
      %v693 = vpop.permute.xlu0 %692
      %694 = vrot.lane.b32.xlu0 %v649, 64
      %v695 = vpop.permute.xlu0 %694
      %696 = vrot.lane.b32.xlu0 %v661, 64
      %v697 = vpop.permute.xlu0 %696
      %vm698 = vcmask 1046528
      %v699 = vrot.slane %v373, 1
      %v700 = vrot.slane %v427, 1
      %v701 = vsel %vm698, %v699, %v700
      %v702 = vrot.slane %v374, 1
      %v703 = vrot.slane %v428, 1
      %v704 = vsel %vm698, %v702, %v703
      %v705 = vrot.slane %v375, 1
      %v706 = vrot.slane %v429, 1
      %v707 = vsel %vm698, %v705, %v706
      %v708 = vrot.slane %v376, 1
      %v709 = vrot.slane %v430, 1
      %v710 = vsel %vm698, %v708, %v709
      %v711 = vrot.slane %v377, 1
      %v712 = vrot.slane %v431, 1
      %v713 = vsel %vm698, %v711, %v712
      %v714 = vrot.slane %v378, 1
      %v715 = vrot.slane %v432, 1
      %v716 = vsel %vm698, %v714, %v715
      %v717 = vrot.slane %v379, 1
      %v718 = vrot.slane %v433, 1
      %v719 = vsel %vm698, %v717, %v718
      %v720 = vrot.slane %v380, 1
      %v721 = vrot.slane %v434, 1
      %v722 = vsel %vm698, %v720, %v721
      %v723 = vrot.slane %v381, 1
      %v724 = vrot.slane %v435, 1
      %v725 = vsel %vm698, %v723, %v724
      %v726 = vrot.slane %v382, 1
      %v727 = vrot.slane %v436, 1
      %v728 = vsel %vm698, %v726, %v727
      %v729 = vrot.slane %v383, 1
      %v730 = vrot.slane %v437, 1
      %v731 = vsel %vm698, %v729, %v730
      %v732 = vrot.slane %v384, 1
      %v733 = vrot.slane %v438, 1
      %v734 = vsel %vm698, %v732, %v733
      %v735 = vrot.slane %v385, 1
      %v736 = vrot.slane %v439, 1
      %v737 = vsel %vm698, %v735, %v736
      %v738 = vrot.slane %v386, 1
      %v739 = vrot.slane %v440, 1
      %v740 = vsel %vm698, %v738, %v739
      %v741 = vrot.slane %v387, 1
      %v742 = vrot.slane %v441, 1
      %v743 = vsel %vm698, %v741, %v742
      %v744 = vrot.slane %v388, 1
      %v745 = vrot.slane %v442, 1
      %v746 = vsel %vm698, %v744, %v745
      %v747 = vrot.slane %v389, 1
      %v748 = vrot.slane %v443, 1
      %v749 = vsel %vm698, %v747, %v748
      %v750 = vrot.slane %v390, 1
      %v751 = vrot.slane %v444, 1
      %v752 = vsel %vm698, %v750, %v751
      %vm753 = vcmask 523264
      %v755 = vsel %vm753, %v373, %v663
      %v758 = vsel %vm753, %v374, %v665
      %v761 = vsel %vm753, %v375, %v667
      %v764 = vsel %vm753, %v376, %v669
      %v767 = vsel %vm753, %v377, %v671
      %v770 = vsel %vm753, %v378, %v673
      %v773 = vsel %vm753, %v379, %v675
      %v776 = vsel %vm753, %v380, %v677
      %v779 = vsel %vm753, %v381, %v679
      %v782 = vsel %vm753, %v382, %v681
      %v785 = vsel %vm753, %v383, %v683
      %v788 = vsel %vm753, %v384, %v685
      %v791 = vsel %vm753, %v385, %v687
      %v794 = vsel %vm753, %v386, %v689
      %v797 = vsel %vm753, %v387, %v691
      %v800 = vsel %vm753, %v388, %v693
      %v803 = vsel %vm753, %v389, %v695
      %v806 = vsel %vm753, %v390, %v697
      %v808 = vld [vmem:[%s224] sm:$0xf]
      %v809 = vld [vmem:[%s224 + $0x4] sm:$0xf]
      %v810 = vld [vmem:[%s224 + $0x8] sm:$0xf]
      %v811 = vld [vmem:[%s224 + $0xc] sm:$0xf]
      %v812 = vld [vmem:[%s224 + $0x10] sm:$0xf]
      %v813 = vld [vmem:[%s224 + $0x14] sm:$0xf]
      %v814 = vld [vmem:[%s224 + $0x18] sm:$0xf]
      %v815 = vld [vmem:[%s224 + $0x1c] sm:$0xf]
      %v816 = vld [vmem:[%s224 + $0x20] sm:$0xf]
      %v817 = vld [vmem:[%s224 + $0x24] sm:$0xf]
      %v818 = vld [vmem:[%s224 + $0x28] sm:$0xf]
      %v819 = vld [vmem:[%s224 + $0x2c] sm:$0xf]
      %v820 = vld [vmem:[%s224 + $0x30] sm:$0xf]
      %v821 = vld [vmem:[%s224 + $0x34] sm:$0xf]
      %v822 = vld [vmem:[%s224 + $0x38] sm:$0xf]
      %v823 = vld [vmem:[%s224 + $0x3c] sm:$0xf]
      %v824 = vld [vmem:[%s224 + $0x40] sm:$0xf]
      %v825 = vld [vmem:[%s224 + $0x44] sm:$0xf]
      %v826 = vld [vmem:[%s224 + $0x48] sm:$0xf]
      %v827 = vld [vmem:[%s224 + $0x4c] sm:$0xf]
      %v828 = vld [vmem:[%s224 + $0x50] sm:$0xf]
      %v829 = vld [vmem:[%s224 + $0x54] sm:$0xf]
      %v830 = vld [vmem:[%s224 + $0x58] sm:$0xf]
      %v831 = vld [vmem:[%s224 + $0x5c] sm:$0xf]
      %v856 = vunpack.c.l.b16 %v808
      %v857 = vunpack.c.l.b16 %v809
      %v858 = vunpack.c.l.b16 %v810
      %v859 = vunpack.c.l.b16 %v811
      %v860 = vunpack.c.l.b16 %v812
      %v861 = vunpack.c.l.b16 %v813
      %v862 = vunpack.c.l.b16 %v814
      %v863 = vunpack.c.l.b16 %v815
      %v864 = vunpack.c.l.b16 %v816
      %v865 = vunpack.c.l.b16 %v817
      %v866 = vunpack.c.l.b16 %v818
      %v867 = vunpack.c.l.b16 %v819
      %v868 = vunpack.c.l.b16 %v820
      %v869 = vunpack.c.l.b16 %v821
      %v870 = vunpack.c.l.b16 %v822
      %v871 = vunpack.c.l.b16 %v823
      %v872 = vunpack.c.l.b16 %v824
      %v873 = vunpack.c.l.b16 %v825
      %v874 = vunpack.c.l.b16 %v826
      %v875 = vunpack.c.l.b16 %v827
      %v876 = vunpack.c.l.b16 %v828
      %v877 = vunpack.c.l.b16 %v829
      %v878 = vunpack.c.l.b16 %v830
      %v879 = vunpack.c.l.b16 %v831
      %v880 = vpack.c.b16 %v857, %v856
      %v881 = vpack.c.b16 %v859, %v858
      %v882 = vpack.c.b16 %v861, %v860
      %v883 = vpack.c.b16 %v863, %v862
      %v884 = vpack.c.b16 %v865, %v864
      %v885 = vpack.c.b16 %v867, %v866
      %v886 = vpack.c.b16 %v869, %v868
      %v887 = vpack.c.b16 %v871, %v870
      %v888 = vpack.c.b16 %v873, %v872
      %v889 = vpack.c.b16 %v875, %v874
      %v890 = vpack.c.b16 %v877, %v876
      %v891 = vpack.c.b16 %v879, %v878
      %v905 = vsel %vm753, %v701, 0
      %v908 = vsel %vm753, %v704, 0
      %v911 = vsel %vm753, %v707, 0
      %v914 = vsel %vm753, %v710, 0
      %v917 = vsel %vm753, %v713, 0
      %v920 = vsel %vm753, %v716, 0
      %v923 = vsel %vm753, %v719, 0
      %v926 = vsel %vm753, %v722, 0
      %v929 = vsel %vm753, %v725, 0
      %v932 = vsel %vm753, %v728, 0
      %v935 = vsel %vm753, %v731, 0
      %v938 = vsel %vm753, %v734, 0
      %v941 = vsel %vm753, %v737, 0
      %v944 = vsel %vm753, %v740, 0
      %v947 = vsel %vm753, %v743, 0
      %v950 = vsel %vm753, %v746, 0
      %952 = vmatprep.subr.bf16.mxu0 0
      %953 = vmatpush1.bf16.msra.mxu0 %v887
      %954 = vmatprep.subr.bf16.mxu0 0
      %955 = vmatpush1.bf16.msra.mxu0 %v886
      %956 = vmatprep.subr.bf16.mxu0 0
      %957 = vmatpush1.bf16.msra.mxu0 %v885
      %958 = vmatprep.subr.bf16.mxu0 0
      %959 = vmatpush1.bf16.msra.mxu0 %v884
      %960 = vmatprep.subr.bf16.mxu0 0
      %961 = vmatpush1.bf16.msra.mxu0 %v883
      %962 = vmatprep.subr.bf16.mxu0 0
      %963 = vmatpush1.bf16.msra.mxu0 %v882
      %964 = vmatprep.subr.bf16.mxu0 0
      %965 = vmatpush1.bf16.msra.mxu0 %v881
      %966 = vmatprep.subr.bf16.mxu0 0
      %967 = vmatpush1.bf16.msra.mxu0 %v880
      %968 = vmatprep.subr.bf16.mxu0 0
      %969 = vmatpush2.bf16.msra.mxu0 0
      %970 = vmatprep.subr.bf16.mxu0 0
      %971 = vmatpush2.bf16.msra.mxu0 0
      %972 = vmatprep.subr.bf16.mxu0 0
      %973 = vmatpush2.bf16.msra.mxu0 0
      %974 = vmatprep.subr.bf16.mxu0 0
      %975 = vmatpush2.bf16.msra.mxu0 0
      %976 = vmatprep.subr.bf16.mxu0 0
      %977 = vmatpush2.bf16.msra.mxu0 %v891
      %978 = vmatprep.subr.bf16.mxu0 0
      %979 = vmatpush2.bf16.msra.mxu0 %v890
      %980 = vmatprep.subr.bf16.mxu0 0
      %981 = vmatpush2.bf16.msra.mxu0 %v889
      %982 = vmatprep.subr.bf16.mxu0 0
      %983 = vmatpush2.bf16.msra.mxu0 %v888
      %984 = vmatprep.mubr.bf16.mxu0 %v905
      %985 = vmatmul.mubr.bf16.gmra.mxu0 %v755
      %v986 = vpop.f32.mrf.mxu0
      %v987 = vadd.f32 0.0, %v986
      %v988 = vpop.f32.mrf.mxu0
      %v989 = vpop.f32.mrf.mxu0
      %v990 = vadd.f32 0.0, %v989
      %v991 = vpop.f32.mrf.mxu0
      %992 = vmatprep.mubr.bf16.mxu0 %v908
      %993 = vmatmul.mubr.bf16.gmra.mxu0 %v758
      %v994 = vpop.f32.mrf.mxu0
      %v995 = vadd.f32 0.0, %v994
      %v996 = vpop.f32.mrf.mxu0
      %v997 = vpop.f32.mrf.mxu0
      %v998 = vadd.f32 0.0, %v997
      %v999 = vpop.f32.mrf.mxu0
      %1000 = vmatprep.mubr.bf16.mxu0 %v911
      %1001 = vmatmul.mubr.bf16.gmra.mxu0 %v761
      %v1002 = vpop.f32.mrf.mxu0
      %v1003 = vadd.f32 0.0, %v1002
      %v1004 = vpop.f32.mrf.mxu0
      %v1005 = vpop.f32.mrf.mxu0
      %v1006 = vadd.f32 0.0, %v1005
      %v1007 = vpop.f32.mrf.mxu0
      %1008 = vmatprep.mubr.bf16.mxu0 %v914
      %1009 = vmatmul.mubr.bf16.gmra.mxu0 %v764
      %v1010 = vpop.f32.mrf.mxu0
      %v1011 = vadd.f32 0.0, %v1010
      %v1012 = vpop.f32.mrf.mxu0
      %v1013 = vpop.f32.mrf.mxu0
      %v1014 = vadd.f32 0.0, %v1013
      %v1015 = vpop.f32.mrf.mxu0
      %1016 = vmatprep.mubr.bf16.mxu0 %v917
      %1017 = vmatmul.mubr.bf16.gmra.mxu0 %v767
      %v1018 = vpop.f32.mrf.mxu0
      %v1019 = vadd.f32 0.0, %v1018
      %v1020 = vpop.f32.mrf.mxu0
      %v1021 = vpop.f32.mrf.mxu0
      %v1022 = vadd.f32 0.0, %v1021
      %v1023 = vpop.f32.mrf.mxu0
      %1024 = vmatprep.mubr.bf16.mxu0 %v920
      %1025 = vmatmul.mubr.bf16.gmra.mxu0 %v770
      %v1026 = vpop.f32.mrf.mxu0
      %v1027 = vadd.f32 0.0, %v1026
      %v1028 = vpop.f32.mrf.mxu0
      %v1029 = vpop.f32.mrf.mxu0
      %v1030 = vadd.f32 0.0, %v1029
      %v1031 = vpop.f32.mrf.mxu0
      %1032 = vmatprep.mubr.bf16.mxu0 %v923
      %1033 = vmatmul.mubr.bf16.gmra.mxu0 %v773
      %v1034 = vpop.f32.mrf.mxu0
      %v1035 = vadd.f32 0.0, %v1034
      %v1036 = vpop.f32.mrf.mxu0
      %v1037 = vpop.f32.mrf.mxu0
      %v1038 = vadd.f32 0.0, %v1037
      %v1039 = vpop.f32.mrf.mxu0
      %1040 = vmatprep.mubr.bf16.mxu0 %v926
      %1041 = vmatmul.mubr.bf16.gmra.mxu0 %v776
      %v1042 = vpop.f32.mrf.mxu0
      %v1043 = vadd.f32 0.0, %v1042
      %v1044 = vpop.f32.mrf.mxu0
      %v1045 = vpop.f32.mrf.mxu0
      %v1046 = vadd.f32 0.0, %v1045
      %v1047 = vpop.f32.mrf.mxu0
      %1048 = vmatprep.mubr.bf16.mxu0 %v929
      %1049 = vmatmul.mubr.bf16.gmra.mxu0 %v779
      %v1050 = vpop.f32.mrf.mxu0
      %v1051 = vadd.f32 0.0, %v1050
      %v1052 = vpop.f32.mrf.mxu0
      %v1053 = vpop.f32.mrf.mxu0
      %v1054 = vadd.f32 0.0, %v1053
      %v1055 = vpop.f32.mrf.mxu0
      %1056 = vmatprep.mubr.bf16.mxu0 %v932
      %1057 = vmatmul.mubr.bf16.gmra.mxu0 %v782
      %v1058 = vpop.f32.mrf.mxu0
      %v1059 = vadd.f32 0.0, %v1058
      %v1060 = vpop.f32.mrf.mxu0
      %v1061 = vpop.f32.mrf.mxu0
      %v1062 = vadd.f32 0.0, %v1061
      %v1063 = vpop.f32.mrf.mxu0
      %1064 = vmatprep.mubr.bf16.mxu0 %v935
      %1065 = vmatmul.mubr.bf16.gmra.mxu0 %v785
      %v1066 = vpop.f32.mrf.mxu0
      %v1067 = vadd.f32 0.0, %v1066
      %v1068 = vpop.f32.mrf.mxu0
      %v1069 = vpop.f32.mrf.mxu0
      %v1070 = vadd.f32 0.0, %v1069
      %v1071 = vpop.f32.mrf.mxu0
      %1072 = vmatprep.mubr.bf16.mxu0 %v938
      %1073 = vmatmul.mubr.bf16.gmra.mxu0 %v788
      %v1074 = vpop.f32.mrf.mxu0
      %v1075 = vadd.f32 0.0, %v1074
      %v1076 = vpop.f32.mrf.mxu0
      %v1077 = vpop.f32.mrf.mxu0
      %v1078 = vadd.f32 0.0, %v1077
      %v1079 = vpop.f32.mrf.mxu0
      %1080 = vmatprep.mubr.bf16.mxu0 %v941
      %1081 = vmatmul.mubr.bf16.gmra.mxu0 %v791
      %v1082 = vpop.f32.mrf.mxu0
      %v1083 = vadd.f32 0.0, %v1082
      %v1084 = vpop.f32.mrf.mxu0
      %v1085 = vpop.f32.mrf.mxu0
      %v1086 = vadd.f32 0.0, %v1085
      %v1087 = vpop.f32.mrf.mxu0
      %1088 = vmatprep.mubr.bf16.mxu0 %v944
      %1089 = vmatmul.mubr.bf16.gmra.mxu0 %v794
      %v1090 = vpop.f32.mrf.mxu0
      %v1091 = vadd.f32 0.0, %v1090
      %v1092 = vpop.f32.mrf.mxu0
      %v1093 = vpop.f32.mrf.mxu0
      %v1094 = vadd.f32 0.0, %v1093
      %v1095 = vpop.f32.mrf.mxu0
      %1096 = vmatprep.mubr.bf16.mxu0 %v947
      %1097 = vmatmul.mubr.bf16.gmra.mxu0 %v797
      %v1098 = vpop.f32.mrf.mxu0
      %v1099 = vadd.f32 0.0, %v1098
      %v1100 = vpop.f32.mrf.mxu0
      %v1101 = vpop.f32.mrf.mxu0
      %v1102 = vadd.f32 0.0, %v1101
      %v1103 = vpop.f32.mrf.mxu0
      %1104 = vmatprep.mubr.bf16.mxu0 %v950
      %1105 = vmatmul.mubr.bf16.gmra.mxu0 %v800
      %v1106 = vpop.f32.mrf.mxu0
      %v1107 = vadd.f32 0.0, %v1106
      %v1108 = vpop.f32.mrf.mxu0
      %v1109 = vpop.f32.mrf.mxu0
      %v1110 = vadd.f32 0.0, %v1109
      %v1111 = vpop.f32.mrf.mxu0
      %1112 = vdwg.mxu0
      %1113 = vst.msk [vmem:[#allocation2] sm:$0xff] %vm753, %v987
      %1114 = vst.msk [vmem:[#allocation2 + $0x8] sm:$0xff] %vm753, %v990
      %1115 = vst.msk [vmem:[#allocation2 + $0x10] sm:$0xff] %vm753, %v995
      %1116 = vst.msk [vmem:[#allocation2 + $0x18] sm:$0xff] %vm753, %v998
      %1117 = vst.msk [vmem:[#allocation2 + $0x20] sm:$0xff] %vm753, %v1003
      %1118 = vst.msk [vmem:[#allocation2 + $0x28] sm:$0xff] %vm753, %v1006
      %1119 = vst.msk [vmem:[#allocation2 + $0x30] sm:$0xff] %vm753, %v1011
      %1120 = vst.msk [vmem:[#allocation2 + $0x38] sm:$0xff] %vm753, %v1014
      %1121 = vst.msk [vmem:[#allocation2 + $0x40] sm:$0xff] %vm753, %v1019
      %1122 = vst.msk [vmem:[#allocation2 + $0x48] sm:$0xff] %vm753, %v1022
      %1123 = vst.msk [vmem:[#allocation2 + $0x50] sm:$0xff] %vm753, %v1027
      %1124 = vst.msk [vmem:[#allocation2 + $0x58] sm:$0xff] %vm753, %v1030
      %1125 = vst.msk [vmem:[#allocation2 + $0x60] sm:$0xff] %vm753, %v1035
      %1126 = vst.msk [vmem:[#allocation2 + $0x68] sm:$0xff] %vm753, %v1038
      %1127 = vst.msk [vmem:[#allocation2 + $0x70] sm:$0xff] %vm753, %v1043
      %1128 = vst.msk [vmem:[#allocation2 + $0x78] sm:$0xff] %vm753, %v1046
      %1129 = vst.msk [vmem:[#allocation2 + $0x80] sm:$0xff] %vm753, %v1051
      %1130 = vst.msk [vmem:[#allocation2 + $0x88] sm:$0xff] %vm753, %v1054
      %1131 = vst.msk [vmem:[#allocation2 + $0x90] sm:$0xff] %vm753, %v1059
      %1132 = vst.msk [vmem:[#allocation2 + $0x98] sm:$0xff] %vm753, %v1062
      %1133 = vst.msk [vmem:[#allocation2 + $0xa0] sm:$0xff] %vm753, %v1067
      %1134 = vst.msk [vmem:[#allocation2 + $0xa8] sm:$0xff] %vm753, %v1070
      %1135 = vst.msk [vmem:[#allocation2 + $0xb0] sm:$0xff] %vm753, %v1075
      %1136 = vst.msk [vmem:[#allocation2 + $0xb8] sm:$0xff] %vm753, %v1078
      %1137 = vst.msk [vmem:[#allocation2 + $0xc0] sm:$0xff] %vm753, %v1083
      %1138 = vst.msk [vmem:[#allocation2 + $0xc8] sm:$0xff] %vm753, %v1086
      %1139 = vst.msk [vmem:[#allocation2 + $0xd0] sm:$0xff] %vm753, %v1091
      %1140 = vst.msk [vmem:[#allocation2 + $0xd8] sm:$0xff] %vm753, %v1094
      %1141 = vst.msk [vmem:[#allocation2 + $0xe0] sm:$0xff] %vm753, %v1099
      %1142 = vst.msk [vmem:[#allocation2 + $0xe8] sm:$0xff] %vm753, %v1102
      %1143 = vst.msk [vmem:[#allocation2 + $0xf0] sm:$0xff] %vm753, %v1107
      %1144 = vst.msk [vmem:[#allocation2 + $0xf8] sm:$0xff] %vm753, %v1110
      %s1145 = scalar_lea.vmem %s224, 96
      %v1146 = vld [vmem:[%s1145] sm:$0xf]
      %v1147 = vld [vmem:[%s1145 + $0x4] sm:$0xf]
      %v1148 = vld [vmem:[%s1145 + $0x8] sm:$0xf]
      %v1149 = vld [vmem:[%s1145 + $0xc] sm:$0xf]
      %v1150 = vld [vmem:[%s1145 + $0x10] sm:$0xf]
      %v1151 = vld [vmem:[%s1145 + $0x14] sm:$0xf]
      %v1152 = vld [vmem:[%s1145 + $0x18] sm:$0xf]
      %v1153 = vld [vmem:[%s1145 + $0x1c] sm:$0xf]
      %v1154 = vld [vmem:[%s1145 + $0x20] sm:$0xf]
      %v1155 = vld [vmem:[%s1145 + $0x24] sm:$0xf]
      %v1156 = vld [vmem:[%s1145 + $0x28] sm:$0xf]
      %v1157 = vld [vmem:[%s1145 + $0x2c] sm:$0xf]
      %v1158 = vld [vmem:[%s1145 + $0x30] sm:$0xf]
      %v1159 = vld [vmem:[%s1145 + $0x34] sm:$0xf]
      %v1160 = vld [vmem:[%s1145 + $0x38] sm:$0xf]
      %v1161 = vld [vmem:[%s1145 + $0x3c] sm:$0xf]
      %v1162 = vld [vmem:[%s1145 + $0x40] sm:$0xf]
      %v1163 = vld [vmem:[%s1145 + $0x44] sm:$0xf]
      %v1164 = vld [vmem:[%s1145 + $0x48] sm:$0xf]
      %v1165 = vld [vmem:[%s1145 + $0x4c] sm:$0xf]
      %v1166 = vld [vmem:[%s1145 + $0x50] sm:$0xf]
      %v1167 = vld [vmem:[%s1145 + $0x54] sm:$0xf]
      %v1168 = vld [vmem:[%s1145 + $0x58] sm:$0xf]
      %v1169 = vld [vmem:[%s1145 + $0x5c] sm:$0xf]
      %v1194 = vunpack.c.l.b16 %v1146
      %v1195 = vunpack.c.l.b16 %v1147
      %v1196 = vunpack.c.l.b16 %v1148
      %v1197 = vunpack.c.l.b16 %v1149
      %v1198 = vunpack.c.l.b16 %v1150
      %v1199 = vunpack.c.l.b16 %v1151
      %v1200 = vunpack.c.l.b16 %v1152
      %v1201 = vunpack.c.l.b16 %v1153
      %v1202 = vunpack.c.l.b16 %v1154
      %v1203 = vunpack.c.l.b16 %v1155
      %v1204 = vunpack.c.l.b16 %v1156
      %v1205 = vunpack.c.l.b16 %v1157
      %v1206 = vunpack.c.l.b16 %v1158
      %v1207 = vunpack.c.l.b16 %v1159
      %v1208 = vunpack.c.l.b16 %v1160
      %v1209 = vunpack.c.l.b16 %v1161
      %v1210 = vunpack.c.l.b16 %v1162
      %v1211 = vunpack.c.l.b16 %v1163
      %v1212 = vunpack.c.l.b16 %v1164
      %v1213 = vunpack.c.l.b16 %v1165
      %v1214 = vunpack.c.l.b16 %v1166
      %v1215 = vunpack.c.l.b16 %v1167
      %v1216 = vunpack.c.l.b16 %v1168
      %v1217 = vunpack.c.l.b16 %v1169
      %v1218 = vpack.c.b16 %v1195, %v1194
      %v1219 = vpack.c.b16 %v1197, %v1196
      %v1220 = vpack.c.b16 %v1199, %v1198
      %v1221 = vpack.c.b16 %v1201, %v1200
      %v1222 = vpack.c.b16 %v1203, %v1202
      %v1223 = vpack.c.b16 %v1205, %v1204
      %v1224 = vpack.c.b16 %v1207, %v1206
      %v1225 = vpack.c.b16 %v1209, %v1208
      %v1226 = vpack.c.b16 %v1211, %v1210
      %v1227 = vpack.c.b16 %v1213, %v1212
      %v1228 = vpack.c.b16 %v1215, %v1214
      %v1229 = vpack.c.b16 %v1217, %v1216
      %v1243 = vsel %vm753, %v749, 0
      %1245 = vmatprep.subr.bf16.mxu0 0
      %1246 = vmatpush1.bf16.msra.mxu0 %v1225
      %1247 = vmatprep.subr.bf16.mxu0 0
      %1248 = vmatpush1.bf16.msra.mxu0 %v1224
      %1249 = vmatprep.subr.bf16.mxu0 0
      %1250 = vmatpush1.bf16.msra.mxu0 %v1223
      %1251 = vmatprep.subr.bf16.mxu0 0
      %1252 = vmatpush1.bf16.msra.mxu0 %v1222
      %1253 = vmatprep.subr.bf16.mxu0 0
      %1254 = vmatpush1.bf16.msra.mxu0 %v1221
      %1255 = vmatprep.subr.bf16.mxu0 0
      %1256 = vmatpush1.bf16.msra.mxu0 %v1220
      %1257 = vmatprep.subr.bf16.mxu0 0
      %1258 = vmatpush1.bf16.msra.mxu0 %v1219
      %1259 = vmatprep.subr.bf16.mxu0 0
      %1260 = vmatpush1.bf16.msra.mxu0 %v1218
      %1261 = vmatprep.subr.bf16.mxu0 0
      %1262 = vmatpush2.bf16.msra.mxu0 0
      %1263 = vmatprep.subr.bf16.mxu0 0
      %1264 = vmatpush2.bf16.msra.mxu0 0
      %1265 = vmatprep.subr.bf16.mxu0 0
      %1266 = vmatpush2.bf16.msra.mxu0 0
      %1267 = vmatprep.subr.bf16.mxu0 0
      %1268 = vmatpush2.bf16.msra.mxu0 0
      %1269 = vmatprep.subr.bf16.mxu0 0
      %1270 = vmatpush2.bf16.msra.mxu0 %v1229
      %1271 = vmatprep.subr.bf16.mxu0 0
      %1272 = vmatpush2.bf16.msra.mxu0 %v1228
      %1273 = vmatprep.subr.bf16.mxu0 0
      %1274 = vmatpush2.bf16.msra.mxu0 %v1227
      %1275 = vmatprep.subr.bf16.mxu0 0
      %1276 = vmatpush2.bf16.msra.mxu0 %v1226
      %1277 = vmatprep.mubr.bf16.mxu0 %v908
      %1278 = vmatmul.mubr.bf16.gmra.mxu0 %v758
      %v1279 = vpop.f32.mrf.mxu0
      %v1280 = vadd.f32 0.0, %v1279
      %v1281 = vpop.f32.mrf.mxu0
      %v1282 = vpop.f32.mrf.mxu0
      %v1283 = vadd.f32 0.0, %v1282
      %v1284 = vpop.f32.mrf.mxu0
      %1285 = vmatprep.mubr.bf16.mxu0 %v911
      %1286 = vmatmul.mubr.bf16.gmra.mxu0 %v761
      %v1287 = vpop.f32.mrf.mxu0
      %v1288 = vadd.f32 0.0, %v1287
      %v1289 = vpop.f32.mrf.mxu0
      %v1290 = vpop.f32.mrf.mxu0
      %v1291 = vadd.f32 0.0, %v1290
      %v1292 = vpop.f32.mrf.mxu0
      %1293 = vmatprep.mubr.bf16.mxu0 %v914
      %1294 = vmatmul.mubr.bf16.gmra.mxu0 %v764
      %v1295 = vpop.f32.mrf.mxu0
      %v1296 = vadd.f32 0.0, %v1295
      %v1297 = vpop.f32.mrf.mxu0
      %v1298 = vpop.f32.mrf.mxu0
      %v1299 = vadd.f32 0.0, %v1298
      %v1300 = vpop.f32.mrf.mxu0
      %1301 = vmatprep.mubr.bf16.mxu0 %v917
      %1302 = vmatmul.mubr.bf16.gmra.mxu0 %v767
      %v1303 = vpop.f32.mrf.mxu0
      %v1304 = vadd.f32 0.0, %v1303
      %v1305 = vpop.f32.mrf.mxu0
      %v1306 = vpop.f32.mrf.mxu0
      %v1307 = vadd.f32 0.0, %v1306
      %v1308 = vpop.f32.mrf.mxu0
      %1309 = vmatprep.mubr.bf16.mxu0 %v920
      %1310 = vmatmul.mubr.bf16.gmra.mxu0 %v770
      %v1311 = vpop.f32.mrf.mxu0
      %v1312 = vadd.f32 0.0, %v1311
      %v1313 = vpop.f32.mrf.mxu0
      %v1314 = vpop.f32.mrf.mxu0
      %v1315 = vadd.f32 0.0, %v1314
      %v1316 = vpop.f32.mrf.mxu0
      %1317 = vmatprep.mubr.bf16.mxu0 %v923
      %1318 = vmatmul.mubr.bf16.gmra.mxu0 %v773
      %v1319 = vpop.f32.mrf.mxu0
      %v1320 = vadd.f32 0.0, %v1319
      %v1321 = vpop.f32.mrf.mxu0
      %v1322 = vpop.f32.mrf.mxu0
      %v1323 = vadd.f32 0.0, %v1322
      %v1324 = vpop.f32.mrf.mxu0
      %1325 = vmatprep.mubr.bf16.mxu0 %v926
      %1326 = vmatmul.mubr.bf16.gmra.mxu0 %v776
      %v1327 = vpop.f32.mrf.mxu0
      %v1328 = vadd.f32 0.0, %v1327
      %v1329 = vpop.f32.mrf.mxu0
      %v1330 = vpop.f32.mrf.mxu0
      %v1331 = vadd.f32 0.0, %v1330
      %v1332 = vpop.f32.mrf.mxu0
      %1333 = vmatprep.mubr.bf16.mxu0 %v929
      %1334 = vmatmul.mubr.bf16.gmra.mxu0 %v779
      %v1335 = vpop.f32.mrf.mxu0
      %v1336 = vadd.f32 0.0, %v1335
      %v1337 = vpop.f32.mrf.mxu0
      %v1338 = vpop.f32.mrf.mxu0
      %v1339 = vadd.f32 0.0, %v1338
      %v1340 = vpop.f32.mrf.mxu0
      %1341 = vmatprep.mubr.bf16.mxu0 %v932
      %1342 = vmatmul.mubr.bf16.gmra.mxu0 %v782
      %v1343 = vpop.f32.mrf.mxu0
      %v1344 = vadd.f32 0.0, %v1343
      %v1345 = vpop.f32.mrf.mxu0
      %v1346 = vpop.f32.mrf.mxu0
      %v1347 = vadd.f32 0.0, %v1346
      %v1348 = vpop.f32.mrf.mxu0
      %1349 = vmatprep.mubr.bf16.mxu0 %v935
      %1350 = vmatmul.mubr.bf16.gmra.mxu0 %v785
      %v1351 = vpop.f32.mrf.mxu0
      %v1352 = vadd.f32 0.0, %v1351
      %v1353 = vpop.f32.mrf.mxu0
      %v1354 = vpop.f32.mrf.mxu0
      %v1355 = vadd.f32 0.0, %v1354
      %v1356 = vpop.f32.mrf.mxu0
      %1357 = vmatprep.mubr.bf16.mxu0 %v938
      %1358 = vmatmul.mubr.bf16.gmra.mxu0 %v788
      %v1359 = vpop.f32.mrf.mxu0
      %v1360 = vadd.f32 0.0, %v1359
      %v1361 = vpop.f32.mrf.mxu0
      %v1362 = vpop.f32.mrf.mxu0
      %v1363 = vadd.f32 0.0, %v1362
      %v1364 = vpop.f32.mrf.mxu0
      %1365 = vmatprep.mubr.bf16.mxu0 %v941
      %1366 = vmatmul.mubr.bf16.gmra.mxu0 %v791
      %v1367 = vpop.f32.mrf.mxu0
      %v1368 = vadd.f32 0.0, %v1367
      %v1369 = vpop.f32.mrf.mxu0
      %v1370 = vpop.f32.mrf.mxu0
      %v1371 = vadd.f32 0.0, %v1370
      %v1372 = vpop.f32.mrf.mxu0
      %1373 = vmatprep.mubr.bf16.mxu0 %v944
      %1374 = vmatmul.mubr.bf16.gmra.mxu0 %v794
      %v1375 = vpop.f32.mrf.mxu0
      %v1376 = vadd.f32 0.0, %v1375
      %v1377 = vpop.f32.mrf.mxu0
      %v1378 = vpop.f32.mrf.mxu0
      %v1379 = vadd.f32 0.0, %v1378
      %v1380 = vpop.f32.mrf.mxu0
      %1381 = vmatprep.mubr.bf16.mxu0 %v947
      %1382 = vmatmul.mubr.bf16.gmra.mxu0 %v797
      %v1383 = vpop.f32.mrf.mxu0
      %v1384 = vadd.f32 0.0, %v1383
      %v1385 = vpop.f32.mrf.mxu0
      %v1386 = vpop.f32.mrf.mxu0
      %v1387 = vadd.f32 0.0, %v1386
      %v1388 = vpop.f32.mrf.mxu0
      %1389 = vmatprep.mubr.bf16.mxu0 %v950
      %1390 = vmatmul.mubr.bf16.gmra.mxu0 %v800
      %v1391 = vpop.f32.mrf.mxu0
      %v1392 = vadd.f32 0.0, %v1391
      %v1393 = vpop.f32.mrf.mxu0
      %v1394 = vpop.f32.mrf.mxu0
      %v1395 = vadd.f32 0.0, %v1394
      %v1396 = vpop.f32.mrf.mxu0
      %1397 = vmatprep.mubr.bf16.mxu0 %v1243
      %1398 = vmatmul.mubr.bf16.gmra.mxu0 %v803
      %v1399 = vpop.f32.mrf.mxu0
      %v1400 = vadd.f32 0.0, %v1399
      %v1401 = vpop.f32.mrf.mxu0
      %v1402 = vpop.f32.mrf.mxu0
      %v1403 = vadd.f32 0.0, %v1402
      %v1404 = vpop.f32.mrf.mxu0
      %1405 = vdwg.mxu0
      %v1406 = vld [vmem:[#allocation2] sm:$0xff]
      %v1407 = vld [vmem:[#allocation2 + $0x8] sm:$0xff]
      %v1408 = vld [vmem:[#allocation2 + $0x10] sm:$0xff]
      %v1409 = vld [vmem:[#allocation2 + $0x18] sm:$0xff]
      %v1410 = vld [vmem:[#allocation2 + $0x20] sm:$0xff]
      %v1411 = vld [vmem:[#allocation2 + $0x28] sm:$0xff]
      %v1412 = vld [vmem:[#allocation2 + $0x30] sm:$0xff]
      %v1413 = vld [vmem:[#allocation2 + $0x38] sm:$0xff]
      %v1414 = vld [vmem:[#allocation2 + $0x40] sm:$0xff]
      %v1415 = vld [vmem:[#allocation2 + $0x48] sm:$0xff]
      %v1416 = vld [vmem:[#allocation2 + $0x50] sm:$0xff]
      %v1417 = vld [vmem:[#allocation2 + $0x58] sm:$0xff]
      %v1418 = vld [vmem:[#allocation2 + $0x60] sm:$0xff]
      %v1419 = vld [vmem:[#allocation2 + $0x68] sm:$0xff]
      %v1420 = vld [vmem:[#allocation2 + $0x70] sm:$0xff]
      %v1421 = vld [vmem:[#allocation2 + $0x78] sm:$0xff]
      %v1422 = vld [vmem:[#allocation2 + $0x80] sm:$0xff]
      %v1423 = vld [vmem:[#allocation2 + $0x88] sm:$0xff]
      %v1424 = vld [vmem:[#allocation2 + $0x90] sm:$0xff]
      %v1425 = vld [vmem:[#allocation2 + $0x98] sm:$0xff]
      %v1426 = vld [vmem:[#allocation2 + $0xa0] sm:$0xff]
      %v1427 = vld [vmem:[#allocation2 + $0xa8] sm:$0xff]
      %v1428 = vld [vmem:[#allocation2 + $0xb0] sm:$0xff]
      %v1429 = vld [vmem:[#allocation2 + $0xb8] sm:$0xff]
      %v1430 = vld [vmem:[#allocation2 + $0xc0] sm:$0xff]
      %v1431 = vld [vmem:[#allocation2 + $0xc8] sm:$0xff]
      %v1432 = vld [vmem:[#allocation2 + $0xd0] sm:$0xff]
      %v1433 = vld [vmem:[#allocation2 + $0xd8] sm:$0xff]
      %v1434 = vld [vmem:[#allocation2 + $0xe0] sm:$0xff]
      %v1435 = vld [vmem:[#allocation2 + $0xe8] sm:$0xff]
      %v1436 = vld [vmem:[#allocation2 + $0xf0] sm:$0xff]
      %v1437 = vld [vmem:[#allocation2 + $0xf8] sm:$0xff]
      %v1438 = vadd.f32 %v1406, %v1280
      %v1439 = vadd.f32 %v1407, %v1283
      %v1440 = vadd.f32 %v1408, %v1288
      %v1441 = vadd.f32 %v1409, %v1291
      %v1442 = vadd.f32 %v1410, %v1296
      %v1443 = vadd.f32 %v1411, %v1299
      %v1444 = vadd.f32 %v1412, %v1304
      %v1445 = vadd.f32 %v1413, %v1307
      %v1446 = vadd.f32 %v1414, %v1312
      %v1447 = vadd.f32 %v1415, %v1315
      %v1448 = vadd.f32 %v1416, %v1320
      %v1449 = vadd.f32 %v1417, %v1323
      %v1450 = vadd.f32 %v1418, %v1328
      %v1451 = vadd.f32 %v1419, %v1331
      %v1452 = vadd.f32 %v1420, %v1336
      %v1453 = vadd.f32 %v1421, %v1339
      %v1454 = vadd.f32 %v1422, %v1344
      %v1455 = vadd.f32 %v1423, %v1347
      %v1456 = vadd.f32 %v1424, %v1352
      %v1457 = vadd.f32 %v1425, %v1355
      %v1458 = vadd.f32 %v1426, %v1360
      %v1459 = vadd.f32 %v1427, %v1363
      %v1460 = vadd.f32 %v1428, %v1368
      %v1461 = vadd.f32 %v1429, %v1371
      %v1462 = vadd.f32 %v1430, %v1376
      %v1463 = vadd.f32 %v1431, %v1379
      %v1464 = vadd.f32 %v1432, %v1384
      %v1465 = vadd.f32 %v1433, %v1387
      %v1466 = vadd.f32 %v1434, %v1392
      %v1467 = vadd.f32 %v1435, %v1395
      %v1468 = vadd.f32 %v1436, %v1400
      %v1469 = vadd.f32 %v1437, %v1403
      %1470 = vst.msk [vmem:[#allocation2] sm:$0xff] %vm753, %v1438
      %1471 = vst.msk [vmem:[#allocation2 + $0x8] sm:$0xff] %vm753, %v1439
      %1472 = vst.msk [vmem:[#allocation2 + $0x10] sm:$0xff] %vm753, %v1440
      %1473 = vst.msk [vmem:[#allocation2 + $0x18] sm:$0xff] %vm753, %v1441
      %1474 = vst.msk [vmem:[#allocation2 + $0x20] sm:$0xff] %vm753, %v1442
      %1475 = vst.msk [vmem:[#allocation2 + $0x28] sm:$0xff] %vm753, %v1443
      %1476 = vst.msk [vmem:[#allocation2 + $0x30] sm:$0xff] %vm753, %v1444
      %1477 = vst.msk [vmem:[#allocation2 + $0x38] sm:$0xff] %vm753, %v1445
      %1478 = vst.msk [vmem:[#allocation2 + $0x40] sm:$0xff] %vm753, %v1446
      %1479 = vst.msk [vmem:[#allocation2 + $0x48] sm:$0xff] %vm753, %v1447
      %1480 = vst.msk [vmem:[#allocation2 + $0x50] sm:$0xff] %vm753, %v1448
      %1481 = vst.msk [vmem:[#allocation2 + $0x58] sm:$0xff] %vm753, %v1449
      %1482 = vst.msk [vmem:[#allocation2 + $0x60] sm:$0xff] %vm753, %v1450
      %1483 = vst.msk [vmem:[#allocation2 + $0x68] sm:$0xff] %vm753, %v1451
      %1484 = vst.msk [vmem:[#allocation2 + $0x70] sm:$0xff] %vm753, %v1452
      %1485 = vst.msk [vmem:[#allocation2 + $0x78] sm:$0xff] %vm753, %v1453
      %1486 = vst.msk [vmem:[#allocation2 + $0x80] sm:$0xff] %vm753, %v1454
      %1487 = vst.msk [vmem:[#allocation2 + $0x88] sm:$0xff] %vm753, %v1455
      %1488 = vst.msk [vmem:[#allocation2 + $0x90] sm:$0xff] %vm753, %v1456
      %1489 = vst.msk [vmem:[#allocation2 + $0x98] sm:$0xff] %vm753, %v1457
      %1490 = vst.msk [vmem:[#allocation2 + $0xa0] sm:$0xff] %vm753, %v1458
      %1491 = vst.msk [vmem:[#allocation2 + $0xa8] sm:$0xff] %vm753, %v1459
      %1492 = vst.msk [vmem:[#allocation2 + $0xb0] sm:$0xff] %vm753, %v1460
      %1493 = vst.msk [vmem:[#allocation2 + $0xb8] sm:$0xff] %vm753, %v1461
      %1494 = vst.msk [vmem:[#allocation2 + $0xc0] sm:$0xff] %vm753, %v1462
      %1495 = vst.msk [vmem:[#allocation2 + $0xc8] sm:$0xff] %vm753, %v1463
      %1496 = vst.msk [vmem:[#allocation2 + $0xd0] sm:$0xff] %vm753, %v1464
      %1497 = vst.msk [vmem:[#allocation2 + $0xd8] sm:$0xff] %vm753, %v1465
      %1498 = vst.msk [vmem:[#allocation2 + $0xe0] sm:$0xff] %vm753, %v1466
      %1499 = vst.msk [vmem:[#allocation2 + $0xe8] sm:$0xff] %vm753, %v1467
      %1500 = vst.msk [vmem:[#allocation2 + $0xf0] sm:$0xff] %vm753, %v1468
      %1501 = vst.msk [vmem:[#allocation2 + $0xf8] sm:$0xff] %vm753, %v1469
      %s1502 = scalar_lea.vmem %s224, 192
      %v1503 = vld [vmem:[%s1502] sm:$0xf]
      %v1504 = vld [vmem:[%s1502 + $0x4] sm:$0xf]
      %v1505 = vld [vmem:[%s1502 + $0x8] sm:$0xf]
      %v1506 = vld [vmem:[%s1502 + $0xc] sm:$0xf]
      %v1507 = vld [vmem:[%s1502 + $0x10] sm:$0xf]
      %v1508 = vld [vmem:[%s1502 + $0x14] sm:$0xf]
      %v1509 = vld [vmem:[%s1502 + $0x18] sm:$0xf]
      %v1510 = vld [vmem:[%s1502 + $0x1c] sm:$0xf]
      %v1511 = vld [vmem:[%s1502 + $0x20] sm:$0xf]
      %v1512 = vld [vmem:[%s1502 + $0x24] sm:$0xf]
      %v1513 = vld [vmem:[%s1502 + $0x28] sm:$0xf]
      %v1514 = vld [vmem:[%s1502 + $0x2c] sm:$0xf]
      %v1515 = vld [vmem:[%s1502 + $0x30] sm:$0xf]
      %v1516 = vld [vmem:[%s1502 + $0x34] sm:$0xf]
      %v1517 = vld [vmem:[%s1502 + $0x38] sm:$0xf]
      %v1518 = vld [vmem:[%s1502 + $0x3c] sm:$0xf]
      %v1519 = vld [vmem:[%s1502 + $0x40] sm:$0xf]
      %v1520 = vld [vmem:[%s1502 + $0x44] sm:$0xf]
      %v1521 = vld [vmem:[%s1502 + $0x48] sm:$0xf]
      %v1522 = vld [vmem:[%s1502 + $0x4c] sm:$0xf]
      %v1523 = vld [vmem:[%s1502 + $0x50] sm:$0xf]
      %v1524 = vld [vmem:[%s1502 + $0x54] sm:$0xf]
      %v1525 = vld [vmem:[%s1502 + $0x58] sm:$0xf]
      %v1526 = vld [vmem:[%s1502 + $0x5c] sm:$0xf]
      %v1551 = vunpack.c.l.b16 %v1503
      %v1552 = vunpack.c.l.b16 %v1504
      %v1553 = vunpack.c.l.b16 %v1505
      %v1554 = vunpack.c.l.b16 %v1506
      %v1555 = vunpack.c.l.b16 %v1507
      %v1556 = vunpack.c.l.b16 %v1508
      %v1557 = vunpack.c.l.b16 %v1509
      %v1558 = vunpack.c.l.b16 %v1510
      %v1559 = vunpack.c.l.b16 %v1511
      %v1560 = vunpack.c.l.b16 %v1512
      %v1561 = vunpack.c.l.b16 %v1513
      %v1562 = vunpack.c.l.b16 %v1514
      %v1563 = vunpack.c.l.b16 %v1515
      %v1564 = vunpack.c.l.b16 %v1516
      %v1565 = vunpack.c.l.b16 %v1517
      %v1566 = vunpack.c.l.b16 %v1518
      %v1567 = vunpack.c.l.b16 %v1519
      %v1568 = vunpack.c.l.b16 %v1520
      %v1569 = vunpack.c.l.b16 %v1521
      %v1570 = vunpack.c.l.b16 %v1522
      %v1571 = vunpack.c.l.b16 %v1523
      %v1572 = vunpack.c.l.b16 %v1524
      %v1573 = vunpack.c.l.b16 %v1525
      %v1574 = vunpack.c.l.b16 %v1526
      %v1575 = vpack.c.b16 %v1552, %v1551
      %v1576 = vpack.c.b16 %v1554, %v1553
      %v1577 = vpack.c.b16 %v1556, %v1555
      %v1578 = vpack.c.b16 %v1558, %v1557
      %v1579 = vpack.c.b16 %v1560, %v1559
      %v1580 = vpack.c.b16 %v1562, %v1561
      %v1581 = vpack.c.b16 %v1564, %v1563
      %v1582 = vpack.c.b16 %v1566, %v1565
      %v1583 = vpack.c.b16 %v1568, %v1567
      %v1584 = vpack.c.b16 %v1570, %v1569
      %v1585 = vpack.c.b16 %v1572, %v1571
      %v1586 = vpack.c.b16 %v1574, %v1573
      %v1600 = vsel %vm753, %v752, 0
      %1602 = vmatprep.subr.bf16.mxu0 0
      %1603 = vmatpush1.bf16.msra.mxu0 %v1582
      %1604 = vmatprep.subr.bf16.mxu0 0
      %1605 = vmatpush1.bf16.msra.mxu0 %v1581
      %1606 = vmatprep.subr.bf16.mxu0 0
      %1607 = vmatpush1.bf16.msra.mxu0 %v1580
      %1608 = vmatprep.subr.bf16.mxu0 0
      %1609 = vmatpush1.bf16.msra.mxu0 %v1579
      %1610 = vmatprep.subr.bf16.mxu0 0
      %1611 = vmatpush1.bf16.msra.mxu0 %v1578
      %1612 = vmatprep.subr.bf16.mxu0 0
      %1613 = vmatpush1.bf16.msra.mxu0 %v1577
      %1614 = vmatprep.subr.bf16.mxu0 0
      %1615 = vmatpush1.bf16.msra.mxu0 %v1576
      %1616 = vmatprep.subr.bf16.mxu0 0
      %1617 = vmatpush1.bf16.msra.mxu0 %v1575
      %1618 = vmatprep.subr.bf16.mxu0 0
      %1619 = vmatpush2.bf16.msra.mxu0 0
      %1620 = vmatprep.subr.bf16.mxu0 0
      %1621 = vmatpush2.bf16.msra.mxu0 0
      %1622 = vmatprep.subr.bf16.mxu0 0
      %1623 = vmatpush2.bf16.msra.mxu0 0
      %1624 = vmatprep.subr.bf16.mxu0 0
      %1625 = vmatpush2.bf16.msra.mxu0 0
      %1626 = vmatprep.subr.bf16.mxu0 0
      %1627 = vmatpush2.bf16.msra.mxu0 %v1586
      %1628 = vmatprep.subr.bf16.mxu0 0
      %1629 = vmatpush2.bf16.msra.mxu0 %v1585
      %1630 = vmatprep.subr.bf16.mxu0 0
      %1631 = vmatpush2.bf16.msra.mxu0 %v1584
      %1632 = vmatprep.subr.bf16.mxu0 0
      %1633 = vmatpush2.bf16.msra.mxu0 %v1583
      %1634 = vmatprep.mubr.bf16.mxu0 %v911
      %1635 = vmatmul.mubr.bf16.gmra.mxu0 %v761
      %v1636 = vpop.f32.mrf.mxu0
      %v1637 = vadd.f32 0.0, %v1636
      %v1638 = vpop.f32.mrf.mxu0
      %v1639 = vpop.f32.mrf.mxu0
      %v1640 = vadd.f32 0.0, %v1639
      %v1641 = vpop.f32.mrf.mxu0
      %1642 = vmatprep.mubr.bf16.mxu0 %v914
      %1643 = vmatmul.mubr.bf16.gmra.mxu0 %v764
      %v1644 = vpop.f32.mrf.mxu0
      %v1645 = vadd.f32 0.0, %v1644
      %v1646 = vpop.f32.mrf.mxu0
      %v1647 = vpop.f32.mrf.mxu0
      %v1648 = vadd.f32 0.0, %v1647
      %v1649 = vpop.f32.mrf.mxu0
      %1650 = vmatprep.mubr.bf16.mxu0 %v917
      %1651 = vmatmul.mubr.bf16.gmra.mxu0 %v767
      %v1652 = vpop.f32.mrf.mxu0
      %v1653 = vadd.f32 0.0, %v1652
      %v1654 = vpop.f32.mrf.mxu0
      %v1655 = vpop.f32.mrf.mxu0
      %v1656 = vadd.f32 0.0, %v1655
      %v1657 = vpop.f32.mrf.mxu0
      %1658 = vmatprep.mubr.bf16.mxu0 %v920
      %1659 = vmatmul.mubr.bf16.gmra.mxu0 %v770
      %v1660 = vpop.f32.mrf.mxu0
      %v1661 = vadd.f32 0.0, %v1660
      %v1662 = vpop.f32.mrf.mxu0
      %v1663 = vpop.f32.mrf.mxu0
      %v1664 = vadd.f32 0.0, %v1663
      %v1665 = vpop.f32.mrf.mxu0
      %1666 = vmatprep.mubr.bf16.mxu0 %v923
      %1667 = vmatmul.mubr.bf16.gmra.mxu0 %v773
      %v1668 = vpop.f32.mrf.mxu0
      %v1669 = vadd.f32 0.0, %v1668
      %v1670 = vpop.f32.mrf.mxu0
      %v1671 = vpop.f32.mrf.mxu0
      %v1672 = vadd.f32 0.0, %v1671
      %v1673 = vpop.f32.mrf.mxu0
      %1674 = vmatprep.mubr.bf16.mxu0 %v926
      %1675 = vmatmul.mubr.bf16.gmra.mxu0 %v776
      %v1676 = vpop.f32.mrf.mxu0
      %v1677 = vadd.f32 0.0, %v1676
      %v1678 = vpop.f32.mrf.mxu0
      %v1679 = vpop.f32.mrf.mxu0
      %v1680 = vadd.f32 0.0, %v1679
      %v1681 = vpop.f32.mrf.mxu0
      %1682 = vmatprep.mubr.bf16.mxu0 %v929
      %1683 = vmatmul.mubr.bf16.gmra.mxu0 %v779
      %v1684 = vpop.f32.mrf.mxu0
      %v1685 = vadd.f32 0.0, %v1684
      %v1686 = vpop.f32.mrf.mxu0
      %v1687 = vpop.f32.mrf.mxu0
      %v1688 = vadd.f32 0.0, %v1687
      %v1689 = vpop.f32.mrf.mxu0
      %1690 = vmatprep.mubr.bf16.mxu0 %v932
      %1691 = vmatmul.mubr.bf16.gmra.mxu0 %v782
      %v1692 = vpop.f32.mrf.mxu0
      %v1693 = vadd.f32 0.0, %v1692
      %v1694 = vpop.f32.mrf.mxu0
      %v1695 = vpop.f32.mrf.mxu0
      %v1696 = vadd.f32 0.0, %v1695
      %v1697 = vpop.f32.mrf.mxu0
      %1698 = vmatprep.mubr.bf16.mxu0 %v935
      %1699 = vmatmul.mubr.bf16.gmra.mxu0 %v785
      %v1700 = vpop.f32.mrf.mxu0
      %v1701 = vadd.f32 0.0, %v1700
      %v1702 = vpop.f32.mrf.mxu0
      %v1703 = vpop.f32.mrf.mxu0
      %v1704 = vadd.f32 0.0, %v1703
      %v1705 = vpop.f32.mrf.mxu0
      %1706 = vmatprep.mubr.bf16.mxu0 %v938
      %1707 = vmatmul.mubr.bf16.gmra.mxu0 %v788
      %v1708 = vpop.f32.mrf.mxu0
      %v1709 = vadd.f32 0.0, %v1708
      %v1710 = vpop.f32.mrf.mxu0
      %v1711 = vpop.f32.mrf.mxu0
      %v1712 = vadd.f32 0.0, %v1711
      %v1713 = vpop.f32.mrf.mxu0
      %1714 = vmatprep.mubr.bf16.mxu0 %v941
      %1715 = vmatmul.mubr.bf16.gmra.mxu0 %v791
      %v1716 = vpop.f32.mrf.mxu0
      %v1717 = vadd.f32 0.0, %v1716
      %v1718 = vpop.f32.mrf.mxu0
      %v1719 = vpop.f32.mrf.mxu0
      %v1720 = vadd.f32 0.0, %v1719
      %v1721 = vpop.f32.mrf.mxu0
      %1722 = vmatprep.mubr.bf16.mxu0 %v944
      %1723 = vmatmul.mubr.bf16.gmra.mxu0 %v794
      %v1724 = vpop.f32.mrf.mxu0
      %v1725 = vadd.f32 0.0, %v1724
      %v1726 = vpop.f32.mrf.mxu0
      %v1727 = vpop.f32.mrf.mxu0
      %v1728 = vadd.f32 0.0, %v1727
      %v1729 = vpop.f32.mrf.mxu0
      %1730 = vmatprep.mubr.bf16.mxu0 %v947
      %1731 = vmatmul.mubr.bf16.gmra.mxu0 %v797
      %v1732 = vpop.f32.mrf.mxu0
      %v1733 = vadd.f32 0.0, %v1732
      %v1734 = vpop.f32.mrf.mxu0
      %v1735 = vpop.f32.mrf.mxu0
      %v1736 = vadd.f32 0.0, %v1735
      %v1737 = vpop.f32.mrf.mxu0
      %1738 = vmatprep.mubr.bf16.mxu0 %v950
      %1739 = vmatmul.mubr.bf16.gmra.mxu0 %v800
      %v1740 = vpop.f32.mrf.mxu0
      %v1741 = vadd.f32 0.0, %v1740
      %v1742 = vpop.f32.mrf.mxu0
      %v1743 = vpop.f32.mrf.mxu0
      %v1744 = vadd.f32 0.0, %v1743
      %v1745 = vpop.f32.mrf.mxu0
      %1746 = vmatprep.mubr.bf16.mxu0 %v1243
      %1747 = vmatmul.mubr.bf16.gmra.mxu0 %v803
      %v1748 = vpop.f32.mrf.mxu0
      %v1749 = vadd.f32 0.0, %v1748
      %v1750 = vpop.f32.mrf.mxu0
      %v1751 = vpop.f32.mrf.mxu0
      %v1752 = vadd.f32 0.0, %v1751
      %v1753 = vpop.f32.mrf.mxu0
      %1754 = vmatprep.mubr.bf16.mxu0 %v1600
      %1755 = vmatmul.mubr.bf16.gmra.mxu0 %v806
      %v1756 = vpop.f32.mrf.mxu0
      %v1757 = vadd.f32 0.0, %v1756
      %v1758 = vpop.f32.mrf.mxu0
      %v1759 = vpop.f32.mrf.mxu0
      %v1760 = vadd.f32 0.0, %v1759
      %v1761 = vpop.f32.mrf.mxu0
      %1762 = vdwg.mxu0
      %v1763 = vld [vmem:[#allocation2] sm:$0xff]
      %v1764 = vld [vmem:[#allocation2 + $0x8] sm:$0xff]
      %v1765 = vld [vmem:[#allocation2 + $0x10] sm:$0xff]
      %v1766 = vld [vmem:[#allocation2 + $0x18] sm:$0xff]
      %v1767 = vld [vmem:[#allocation2 + $0x20] sm:$0xff]
      %v1768 = vld [vmem:[#allocation2 + $0x28] sm:$0xff]
      %v1769 = vld [vmem:[#allocation2 + $0x30] sm:$0xff]
      %v1770 = vld [vmem:[#allocation2 + $0x38] sm:$0xff]
      %v1771 = vld [vmem:[#allocation2 + $0x40] sm:$0xff]
      %v1772 = vld [vmem:[#allocation2 + $0x48] sm:$0xff]
      %v1773 = vld [vmem:[#allocation2 + $0x50] sm:$0xff]
      %v1774 = vld [vmem:[#allocation2 + $0x58] sm:$0xff]
      %v1775 = vld [vmem:[#allocation2 + $0x60] sm:$0xff]
      %v1776 = vld [vmem:[#allocation2 + $0x68] sm:$0xff]
      %v1777 = vld [vmem:[#allocation2 + $0x70] sm:$0xff]
      %v1778 = vld [vmem:[#allocation2 + $0x78] sm:$0xff]
      %v1779 = vld [vmem:[#allocation2 + $0x80] sm:$0xff]
      %v1780 = vld [vmem:[#allocation2 + $0x88] sm:$0xff]
      %v1781 = vld [vmem:[#allocation2 + $0x90] sm:$0xff]
      %v1782 = vld [vmem:[#allocation2 + $0x98] sm:$0xff]
      %v1783 = vld [vmem:[#allocation2 + $0xa0] sm:$0xff]
      %v1784 = vld [vmem:[#allocation2 + $0xa8] sm:$0xff]
      %v1785 = vld [vmem:[#allocation2 + $0xb0] sm:$0xff]
      %v1786 = vld [vmem:[#allocation2 + $0xb8] sm:$0xff]
      %v1787 = vld [vmem:[#allocation2 + $0xc0] sm:$0xff]
      %v1788 = vld [vmem:[#allocation2 + $0xc8] sm:$0xff]
      %v1789 = vld [vmem:[#allocation2 + $0xd0] sm:$0xff]
      %v1790 = vld [vmem:[#allocation2 + $0xd8] sm:$0xff]
      %v1791 = vld [vmem:[#allocation2 + $0xe0] sm:$0xff]
      %v1792 = vld [vmem:[#allocation2 + $0xe8] sm:$0xff]
      %v1793 = vld [vmem:[#allocation2 + $0xf0] sm:$0xff]
      %v1794 = vld [vmem:[#allocation2 + $0xf8] sm:$0xff]
      %v1795 = vadd.f32 %v1763, %v1637
      %v1796 = vadd.f32 %v1764, %v1640
      %v1797 = vadd.f32 %v1765, %v1645
      %v1798 = vadd.f32 %v1766, %v1648
      %v1799 = vadd.f32 %v1767, %v1653
      %v1800 = vadd.f32 %v1768, %v1656
      %v1801 = vadd.f32 %v1769, %v1661
      %v1802 = vadd.f32 %v1770, %v1664
      %v1803 = vadd.f32 %v1771, %v1669
      %v1804 = vadd.f32 %v1772, %v1672
      %v1805 = vadd.f32 %v1773, %v1677
      %v1806 = vadd.f32 %v1774, %v1680
      %v1807 = vadd.f32 %v1775, %v1685
      %v1808 = vadd.f32 %v1776, %v1688
      %v1809 = vadd.f32 %v1777, %v1693
      %v1810 = vadd.f32 %v1778, %v1696
      %v1811 = vadd.f32 %v1779, %v1701
      %v1812 = vadd.f32 %v1780, %v1704
      %v1813 = vadd.f32 %v1781, %v1709
      %v1814 = vadd.f32 %v1782, %v1712
      %v1815 = vadd.f32 %v1783, %v1717
      %v1816 = vadd.f32 %v1784, %v1720
      %v1817 = vadd.f32 %v1785, %v1725
      %v1818 = vadd.f32 %v1786, %v1728
      %v1819 = vadd.f32 %v1787, %v1733
      %v1820 = vadd.f32 %v1788, %v1736
      %v1821 = vadd.f32 %v1789, %v1741
      %v1822 = vadd.f32 %v1790, %v1744
      %v1823 = vadd.f32 %v1791, %v1749
      %v1824 = vadd.f32 %v1792, %v1752
      %v1825 = vadd.f32 %v1793, %v1757
      %v1826 = vadd.f32 %v1794, %v1760
      %1827 = vst.msk [vmem:[#allocation2] sm:$0xff] %vm753, %v1795
      %1828 = vst.msk [vmem:[#allocation2 + $0x8] sm:$0xff] %vm753, %v1796
      %1829 = vst.msk [vmem:[#allocation2 + $0x10] sm:$0xff] %vm753, %v1797
      %1830 = vst.msk [vmem:[#allocation2 + $0x18] sm:$0xff] %vm753, %v1798
      %1831 = vst.msk [vmem:[#allocation2 + $0x20] sm:$0xff] %vm753, %v1799
      %1832 = vst.msk [vmem:[#allocation2 + $0x28] sm:$0xff] %vm753, %v1800
      %1833 = vst.msk [vmem:[#allocation2 + $0x30] sm:$0xff] %vm753, %v1801
      %1834 = vst.msk [vmem:[#allocation2 + $0x38] sm:$0xff] %vm753, %v1802
      %1835 = vst.msk [vmem:[#allocation2 + $0x40] sm:$0xff] %vm753, %v1803
      %1836 = vst.msk [vmem:[#allocation2 + $0x48] sm:$0xff] %vm753, %v1804
      %1837 = vst.msk [vmem:[#allocation2 + $0x50] sm:$0xff] %vm753, %v1805
      %1838 = vst.msk [vmem:[#allocation2 + $0x58] sm:$0xff] %vm753, %v1806
      %1839 = vst.msk [vmem:[#allocation2 + $0x60] sm:$0xff] %vm753, %v1807
      %1840 = vst.msk [vmem:[#allocation2 + $0x68] sm:$0xff] %vm753, %v1808
      %1841 = vst.msk [vmem:[#allocation2 + $0x70] sm:$0xff] %vm753, %v1809
      %1842 = vst.msk [vmem:[#allocation2 + $0x78] sm:$0xff] %vm753, %v1810
      %1843 = vst.msk [vmem:[#allocation2 + $0x80] sm:$0xff] %vm753, %v1811
      %1844 = vst.msk [vmem:[#allocation2 + $0x88] sm:$0xff] %vm753, %v1812
      %1845 = vst.msk [vmem:[#allocation2 + $0x90] sm:$0xff] %vm753, %v1813
      %1846 = vst.msk [vmem:[#allocation2 + $0x98] sm:$0xff] %vm753, %v1814
      %1847 = vst.msk [vmem:[#allocation2 + $0xa0] sm:$0xff] %vm753, %v1815
      %1848 = vst.msk [vmem:[#allocation2 + $0xa8] sm:$0xff] %vm753, %v1816
      %1849 = vst.msk [vmem:[#allocation2 + $0xb0] sm:$0xff] %vm753, %v1817
      %1850 = vst.msk [vmem:[#allocation2 + $0xb8] sm:$0xff] %vm753, %v1818
      %1851 = vst.msk [vmem:[#allocation2 + $0xc0] sm:$0xff] %vm753, %v1819
      %1852 = vst.msk [vmem:[#allocation2 + $0xc8] sm:$0xff] %vm753, %v1820
      %1853 = vst.msk [vmem:[#allocation2 + $0xd0] sm:$0xff] %vm753, %v1821
      %1854 = vst.msk [vmem:[#allocation2 + $0xd8] sm:$0xff] %vm753, %v1822
      %1855 = vst.msk [vmem:[#allocation2 + $0xe0] sm:$0xff] %vm753, %v1823
      %1856 = vst.msk [vmem:[#allocation2 + $0xe8] sm:$0xff] %vm753, %v1824
      %1857 = vst.msk [vmem:[#allocation2 + $0xf0] sm:$0xff] %vm753, %v1825
      %1858 = vst.msk [vmem:[#allocation2 + $0xf8] sm:$0xff] %vm753, %v1826
      %v1859 = vld [vmem:[#allocation2] sm:$0xff]
      %v1860 = vld [vmem:[#allocation2 + $0x8] sm:$0xff]
      %v1861 = vld [vmem:[#allocation2 + $0x10] sm:$0xff]
      %v1862 = vld [vmem:[#allocation2 + $0x18] sm:$0xff]
      %v1863 = vld [vmem:[#allocation2 + $0x20] sm:$0xff]
      %v1864 = vld [vmem:[#allocation2 + $0x28] sm:$0xff]
      %v1865 = vld [vmem:[#allocation2 + $0x30] sm:$0xff]
      %v1866 = vld [vmem:[#allocation2 + $0x38] sm:$0xff]
      %v1867 = vld [vmem:[#allocation2 + $0x40] sm:$0xff]
      %v1868 = vld [vmem:[#allocation2 + $0x48] sm:$0xff]
      %v1869 = vld [vmem:[#allocation2 + $0x50] sm:$0xff]
      %v1870 = vld [vmem:[#allocation2 + $0x58] sm:$0xff]
      %v1871 = vld [vmem:[#allocation2 + $0x60] sm:$0xff]
      %v1872 = vld [vmem:[#allocation2 + $0x68] sm:$0xff]
      %v1873 = vld [vmem:[#allocation2 + $0x70] sm:$0xff]
      %v1874 = vld [vmem:[#allocation2 + $0x78] sm:$0xff]
      %v1875 = vld [vmem:[#allocation2 + $0x80] sm:$0xff]
      %v1876 = vld [vmem:[#allocation2 + $0x88] sm:$0xff]
      %v1877 = vld [vmem:[#allocation2 + $0x90] sm:$0xff]
      %v1878 = vld [vmem:[#allocation2 + $0x98] sm:$0xff]
      %v1879 = vld [vmem:[#allocation2 + $0xa0] sm:$0xff]
      %v1880 = vld [vmem:[#allocation2 + $0xa8] sm:$0xff]
      %v1881 = vld [vmem:[#allocation2 + $0xb0] sm:$0xff]
      %v1882 = vld [vmem:[#allocation2 + $0xb8] sm:$0xff]
      %v1883 = vld [vmem:[#allocation2 + $0xc0] sm:$0xff]
      %v1884 = vld [vmem:[#allocation2 + $0xc8] sm:$0xff]
      %v1885 = vld [vmem:[#allocation2 + $0xd0] sm:$0xff]
      %v1886 = vld [vmem:[#allocation2 + $0xd8] sm:$0xff]
      %v1887 = vld [vmem:[#allocation2 + $0xe0] sm:$0xff]
      %v1888 = vld [vmem:[#allocation2 + $0xe8] sm:$0xff]
      %v1889 = vld [vmem:[#allocation2 + $0xf0] sm:$0xff]
      %v1890 = vld [vmem:[#allocation2 + $0xf8] sm:$0xff]
      %v1891 = vld [vmem:[%s227] sm:$0x1]
      %v1893 = vlaneseq
      %v1894 = vshrl.u32 %v1893, 7
      %v1895 = vsub.s32 0, %v1894
      %v1896 = vrot.slane %v1891, %v1895
      %v1898 = vadd.f32 %v1859, %v1896
      %v1899 = vadd.f32 %v1860, %v1896
      %v1900 = vadd.f32 %v1861, %v1896
      %v1901 = vadd.f32 %v1862, %v1896
      %v1902 = vadd.f32 %v1863, %v1896
      %v1903 = vadd.f32 %v1864, %v1896
      %v1904 = vadd.f32 %v1865, %v1896
      %v1905 = vadd.f32 %v1866, %v1896
      %v1906 = vadd.f32 %v1867, %v1896
      %v1907 = vadd.f32 %v1868, %v1896
      %v1908 = vadd.f32 %v1869, %v1896
      %v1909 = vadd.f32 %v1870, %v1896
      %v1910 = vadd.f32 %v1871, %v1896
      %v1911 = vadd.f32 %v1872, %v1896
      %v1912 = vadd.f32 %v1873, %v1896
      %v1913 = vadd.f32 %v1874, %v1896
      %v1914 = vadd.f32 %v1875, %v1896
      %v1915 = vadd.f32 %v1876, %v1896
      %v1916 = vadd.f32 %v1877, %v1896
      %v1917 = vadd.f32 %v1878, %v1896
      %v1918 = vadd.f32 %v1879, %v1896
      %v1919 = vadd.f32 %v1880, %v1896
      %v1920 = vadd.f32 %v1881, %v1896
      %v1921 = vadd.f32 %v1882, %v1896
      %v1922 = vadd.f32 %v1883, %v1896
      %v1923 = vadd.f32 %v1884, %v1896
      %v1924 = vadd.f32 %v1885, %v1896
      %v1925 = vadd.f32 %v1886, %v1896
      %v1926 = vadd.f32 %v1887, %v1896
      %v1927 = vadd.f32 %v1888, %v1896
      %v1928 = vadd.f32 %v1889, %v1896
      %v1929 = vadd.f32 %v1890, %v1896
      %v1930 = vpack.c.bf16 %v1899, %v1898
      %v1931 = vpack.c.bf16 %v1901, %v1900
      %v1932 = vpack.c.bf16 %v1903, %v1902
      %v1933 = vpack.c.bf16 %v1905, %v1904
      %v1934 = vpack.c.bf16 %v1907, %v1906
      %v1935 = vpack.c.bf16 %v1909, %v1908
      %v1936 = vpack.c.bf16 %v1911, %v1910
      %v1937 = vpack.c.bf16 %v1913, %v1912
      %v1938 = vpack.c.bf16 %v1915, %v1914
      %v1939 = vpack.c.bf16 %v1917, %v1916
      %v1940 = vpack.c.bf16 %v1919, %v1918
      %v1941 = vpack.c.bf16 %v1921, %v1920
      %v1942 = vpack.c.bf16 %v1923, %v1922
      %v1943 = vpack.c.bf16 %v1925, %v1924
      %v1944 = vpack.c.bf16 %v1927, %v1926
      %v1945 = vpack.c.bf16 %v1929, %v1928
      %v1962 = vunpack.c.l.b16 %v1930
      %v1963 = vunpack.c.h.b16 %v1930
      %v1964 = vunpack.c.l.b16 %v1931
      %v1965 = vunpack.c.h.b16 %v1931
      %v1966 = vunpack.c.l.b16 %v1932
      %v1967 = vunpack.c.h.b16 %v1932
      %v1968 = vunpack.c.l.b16 %v1933
      %v1969 = vunpack.c.h.b16 %v1933
      %v1970 = vunpack.c.l.b16 %v1934
      %v1971 = vunpack.c.h.b16 %v1934
      %v1972 = vunpack.c.l.b16 %v1935
      %v1973 = vunpack.c.h.b16 %v1935
      %v1974 = vunpack.c.l.b16 %v1936
      %v1975 = vunpack.c.h.b16 %v1936
      %v1976 = vunpack.c.l.b16 %v1937
      %v1977 = vunpack.c.h.b16 %v1937
      %v1978 = vunpack.c.l.b16 %v1938
      %v1979 = vunpack.c.h.b16 %v1938
      %v1980 = vunpack.c.l.b16 %v1939
      %v1981 = vunpack.c.h.b16 %v1939
      %v1982 = vunpack.c.l.b16 %v1940
      %v1983 = vunpack.c.h.b16 %v1940
      %v1984 = vunpack.c.l.b16 %v1941
      %v1985 = vunpack.c.h.b16 %v1941
      %v1986 = vunpack.c.l.b16 %v1942
      %v1987 = vunpack.c.h.b16 %v1942
      %v1988 = vunpack.c.l.b16 %v1943
      %v1989 = vunpack.c.h.b16 %v1943
      %v1990 = vunpack.c.l.b16 %v1944
      %v1991 = vunpack.c.h.b16 %v1944
      %v1992 = vunpack.c.l.b16 %v1945
      %v1993 = vunpack.c.h.b16 %v1945
      %v1994 = vpack.c.b16 %v1962, %v1962
      %v1995 = vpack.c.b16 %v1963, %v1963
      %v1996 = vpack.c.b16 %v1964, %v1964
      %v1997 = vpack.c.b16 %v1965, %v1965
      %v1998 = vpack.c.b16 %v1966, %v1966
      %v1999 = vpack.c.b16 %v1967, %v1967
      %v2000 = vpack.c.b16 %v1968, %v1968
      %v2001 = vpack.c.b16 %v1969, %v1969
      %v2002 = vpack.c.b16 %v1970, %v1970
      %v2003 = vpack.c.b16 %v1971, %v1971
      %v2004 = vpack.c.b16 %v1972, %v1972
      %v2005 = vpack.c.b16 %v1973, %v1973
      %v2006 = vpack.c.b16 %v1974, %v1974
      %v2007 = vpack.c.b16 %v1975, %v1975
      %v2008 = vpack.c.b16 %v1976, %v1976
      %v2009 = vpack.c.b16 %v1977, %v1977
      %v2010 = vpack.c.b16 %v1978, %v1978
      %v2011 = vpack.c.b16 %v1979, %v1979
      %v2012 = vpack.c.b16 %v1980, %v1980
      %v2013 = vpack.c.b16 %v1981, %v1981
      %v2014 = vpack.c.b16 %v1982, %v1982
      %v2015 = vpack.c.b16 %v1983, %v1983
      %v2016 = vpack.c.b16 %v1984, %v1984
      %v2017 = vpack.c.b16 %v1985, %v1985
      %v2018 = vpack.c.b16 %v1986, %v1986
      %v2019 = vpack.c.b16 %v1987, %v1987
      %v2020 = vpack.c.b16 %v1988, %v1988
      %v2021 = vpack.c.b16 %v1989, %v1989
      %v2022 = vpack.c.b16 %v1990, %v1990
      %v2023 = vpack.c.b16 %v1991, %v1991
      %v2024 = vpack.c.b16 %v1992, %v1992
      %v2025 = vpack.c.b16 %v1993, %v1993
      %vm2058 = vcmask 519168
      %2059 = vst.msk [vmem:[%s240] sm:$0xf] %vm2058, %v1994
      %2060 = vst.msk [vmem:[%s240 + $0x4] sm:$0xf] %vm2058, %v1995
      %2061 = vst.msk [vmem:[%s240 + $0x8] sm:$0xf] %vm2058, %v1996
      %2062 = vst.msk [vmem:[%s240 + $0xc] sm:$0xf] %vm2058, %v1997
      %2063 = vst.msk [vmem:[%s240 + $0x10] sm:$0xf] %vm2058, %v1998
      %2064 = vst.msk [vmem:[%s240 + $0x14] sm:$0xf] %vm2058, %v1999
      %2065 = vst.msk [vmem:[%s240 + $0x18] sm:$0xf] %vm2058, %v2000
      %2066 = vst.msk [vmem:[%s240 + $0x1c] sm:$0xf] %vm2058, %v2001
      %2067 = vst.msk [vmem:[%s240 + $0x20] sm:$0xf] %vm2058, %v2002
      %2068 = vst.msk [vmem:[%s240 + $0x24] sm:$0xf] %vm2058, %v2003
      %2069 = vst.msk [vmem:[%s240 + $0x28] sm:$0xf] %vm2058, %v2004
      %2070 = vst.msk [vmem:[%s240 + $0x2c] sm:$0xf] %vm2058, %v2005
      %2071 = vst.msk [vmem:[%s240 + $0x30] sm:$0xf] %vm2058, %v2006
      %2072 = vst.msk [vmem:[%s240 + $0x34] sm:$0xf] %vm2058, %v2007
      %2073 = vst.msk [vmem:[%s240 + $0x38] sm:$0xf] %vm2058, %v2008
      %2074 = vst.msk [vmem:[%s240 + $0x3c] sm:$0xf] %vm2058, %v2009
      %2075 = vst.msk [vmem:[%s240 + $0x40] sm:$0xf] %vm2058, %v2010
      %2076 = vst.msk [vmem:[%s240 + $0x44] sm:$0xf] %vm2058, %v2011
      %2077 = vst.msk [vmem:[%s240 + $0x48] sm:$0xf] %vm2058, %v2012
      %2078 = vst.msk [vmem:[%s240 + $0x4c] sm:$0xf] %vm2058, %v2013
      %2079 = vst.msk [vmem:[%s240 + $0x50] sm:$0xf] %vm2058, %v2014
      %2080 = vst.msk [vmem:[%s240 + $0x54] sm:$0xf] %vm2058, %v2015
      %2081 = vst.msk [vmem:[%s240 + $0x58] sm:$0xf] %vm2058, %v2016
      %2082 = vst.msk [vmem:[%s240 + $0x5c] sm:$0xf] %vm2058, %v2017
      %2083 = vst.msk [vmem:[%s240 + $0x60] sm:$0xf] %vm2058, %v2018
      %2084 = vst.msk [vmem:[%s240 + $0x64] sm:$0xf] %vm2058, %v2019
      %2085 = vst.msk [vmem:[%s240 + $0x68] sm:$0xf] %vm2058, %v2020
      %2086 = vst.msk [vmem:[%s240 + $0x6c] sm:$0xf] %vm2058, %v2021
      %2087 = vst.msk [vmem:[%s240 + $0x70] sm:$0xf] %vm2058, %v2022
      %2088 = vst.msk [vmem:[%s240 + $0x74] sm:$0xf] %vm2058, %v2023
      %2089 = vst.msk [vmem:[%s240 + $0x78] sm:$0xf] %vm2058, %v2024
      %2090 = vst.msk [vmem:[%s240 + $0x7c] sm:$0xf] %vm2058, %v2025
      %s2091 = smul.u32 16, %s20
      %p2092 = scmp.lt.s32.totalorder %s19, 1
      %s2093 = scalar_select %p2092, %s19, 1
      %p2094 = scmp.lt.s32.totalorder %s2091, 15
      %s2095 = scalar_select %p2094, %s2091, 15
      %p2096 = scmp.lt.s32.totalorder %s21, 0
      %s2097 = scalar_select %p2096, %s21, 0
      %s2098 = smul.addr %s2095, 2
      %s2099 = sadd.s32 %s2097, %s2098
      %s2100 = smul.addr %s2093, 32
      %s2101 = sadd.s32 %s2099, %s2100
      %s2102 = smul.addr %s2101, 4
      %s2103 = scalar_lea.vmem %s3, %s2102
      // Predicated region
      $region33: #{vgg_distance.16} parent=31 // pred_check
        %p2104 = pneg %p133
      $region34: #{vgg_distance.16} parent=31 // pred_check_branch
        %2106 = sbr.rel (%p2104) target = $region36
      $region35: #{vgg_distance.16} parent=31 // pred_region
        %s2107 = smul.u32 16, %s20
      $region36: #{vgg_distance.16} parent=31 // pred_fallthru
        _
    $region32: #{vgg_distance.16} parent=5 // pred_fallthru
      _
    %p2108 = scmp.le.s32.totalorder 2, %s9
    // Predicated region
    $region37: #{vgg_distance.16} parent=5 // pred_check
      %p2109 = pneg %p2108
    $region38: #{vgg_distance.16} parent=5 // pred_check_branch
      %2111 = sbr.rel (%p2109) target = $region40
    $region39: #{vgg_distance.16} parent=5 // pred_region
      %s2112 = ssub.s32 %s9, 2
      // Predicated region
      $region41: #{vgg_distance.16} parent=39 // pred_check
        %p2113 = pneg %p139
      $region42: #{vgg_distance.16} parent=39 // pred_check_branch
        %2115 = sbr.rel (%p2113) target = $region44
      $region43: #{vgg_distance.16} parent=39 // pred_region
        %s2116 = smul.u32 16, %s23
        %p2117 = scmp.lt.s32.totalorder %s22, 1
        %s2118 = scalar_select %p2117, %s22, 1
        %p2119 = scmp.lt.s32.totalorder %s2116, 15
        %s2120 = scalar_select %p2119, %s2116, 15
        %p2121 = scmp.lt.s32.totalorder %s24, 0
        %s2122 = scalar_select %p2121, %s24, 0
        %s2123 = smul.addr %s2120, 2
        %s2124 = sadd.s32 %s2122, %s2123
        %s2125 = smul.addr %s2118, 32
        %s2126 = sadd.s32 %s2124, %s2125
        %s2127 = smul.addr %s2126, 4
        %s2128 = scalar_lea.vmem %s3, %s2127
      $region44: #{vgg_distance.16} parent=39 // pred_fallthru
        _
    $region40: #{vgg_distance.16} parent=5 // pred_fallthru
      _
  $region6: #{vgg_distance.16} parent=0 // loop_footer
    %s13 = sadd.s32 1, %s9
  $region7: #{vgg_distance.16} parent=0 // loop_footer_branch
    %8 = sbr.rel target = $region3
  $region8: #{vgg_distance.16} parent=0 // loop_exit
    _

// kernel: vgg_distance.27
$region0: #{vgg_distance.27}
  #allocation0 [shape = 'u32[]', space=smem, size = 0x4, offset = 0x4, fixed_abs, tag = 'smem constant byte address 0x4 - core index']
  #allocation1 [shape = 'u32[144,128]{1,0:T(1,128)}', space=vmem, size = 0x12000, scoped, tag = 'internal scratch']
  %s0 = inlined_call_operand.vmem [shape: f32[2,768], index: 0, kind: input, shape index: {}]
  %s1 = inlined_call_operand.vmem [shape: f32[2,768], index: 1, kind: input, shape index: {}]
  %s2 = inlined_call_operand.vmem [shape: f32[2,1], index: 2, kind: output, shape index: {}]
  %s3 = sld [smem:[#allocation0]]
  $region26: #{vgg_distance.27} parent=0
    _
  %s5 = ssub.s32 1, %s3
  %s6 = scalar_select 0, %s5, %s3
  // Predicated region
  $region2: #{vgg_distance.27} parent=0 // pred_check
    _
  $region3: #{vgg_distance.27} parent=0 // pred_check_branch
    %8 = sbr.rel (0) target = $region5
  $region4: #{vgg_distance.27} parent=0 // pred_region
    _
  $region5: #{vgg_distance.27} parent=0 // pred_fallthru
    _
  // Predicated region
  $region6: #{vgg_distance.27} parent=0 // pred_check
    _
  $region7: #{vgg_distance.27} parent=0 // pred_check_branch
    %10 = sbr.rel (0) target = $region9
  $region8: #{vgg_distance.27} parent=0 // pred_region
    _
  $region9: #{vgg_distance.27} parent=0 // pred_fallthru
    _
  %v11 = vld [vmem:[%s0] sm:$0xff]
  %v12 = vld [vmem:[%s0 + $0x8] sm:$0xf]
  %v13 = vld [vmem:[%s1] sm:$0xff]
  %v14 = vld [vmem:[%s1 + $0x8] sm:$0xf]
  %v15 = vsub.f32 %v11, %v13
  %v16 = vsub.f32 %v12, %v14
  %v17 = vand.u32 2147483647, %v15
  %v18 = vand.u32 2147483647, %v16
  %v21 = vcombine.high %v17, %v17
  %v23 = vunpack.c.l.s4 1983009808
  %v24 = vunpack.c.0.s8 %v23
  %v25 = vlaneseq
  %v26 = vshrl.u32 %v25, 7
  %v27 = vsub.s32 %v24, %v26
  %v28 = vrot.slane %v17, %v27
  %v30 = vunpack.c.l.s4 1983009808
  %v31 = vunpack.c.0.s8 %v30
  %v32 = vlaneseq
  %v33 = vshrl.u32 %v32, 7
  %v34 = vsub.s32 %v31, %v33
  %v35 = vrot.slane %v21, %v34
  %v36 = vcombine.high %v28, %v28
  %v37 = vcombine.high %v35, %v35
  %v39 = vunpack.c.l.s4 1983009808
  %v40 = vunpack.c.0.s8 %v39
  %v41 = vlaneseq
  %v42 = vshrl.u32 %v41, 7
  %v43 = vsub.s32 %v40, %v42
  %v44 = vrot.slane %v18, %v43
  %v45 = vcombine.high %v44, %v44
  %vm52 = vcmask 1041408
  %v53 = vsel %vm52, %v28, 0.0
  %v54 = vsel %vm52, %v36, 0.0
  %v55 = vadd.f32 %v53, %v54
  %v56 = vsel %vm52, %v35, 0.0
  %v57 = vadd.f32 %v55, %v56
  %v58 = vsel %vm52, %v37, 0.0
  %v59 = vadd.f32 %v57, %v58
  %v60 = vsel %vm52, %v44, 0.0
  %v61 = vadd.f32 %v59, %v60
  %v62 = vsel %vm52, %v45, 0.0
  %v63 = vadd.f32 %v61, %v62
  %64 = vadd.xlane.f32.xlu0 %v63
  %v65 = vpop.xlane.xlu0 %64
  %p66 = scmp.eq.s32.totalorder 0, 0
  // Predicated region
  $region10: #{vgg_distance.27} parent=0 // pred_check
    %p67 = pneg %p66
  $region11: #{vgg_distance.27} parent=0 // pred_check_branch
    %69 = sbr.rel (%p67) target = $region13
  $region12: #{vgg_distance.27} parent=0 // pred_region
    %vm70 = vcmask 1024
    %71 = vst.msk [vmem:[%s2] sm:$0x3] %vm70, 0.0
  $region13: #{vgg_distance.27} parent=0 // pred_fallthru
    _
  %v72 = vld [vmem:[%s2] sm:$0x3]
  %v73 = vadd.f32 %v72, %v65
  %vm74 = vcmask 1024
  %75 = vst.msk [vmem:[%s2] sm:$0x3] %vm74, %v73
  // Predicated region
  $region14: #{vgg_distance.27} parent=0 // pred_check
    %p76 = pneg %p66
  $region15: #{vgg_distance.27} parent=0 // pred_check_branch
    %78 = sbr.rel (%p76) target = $region17
  $region16: #{vgg_distance.27} parent=0 // pred_region
    %v79 = vld [vmem:[%s2] sm:$0x3]
    %v80 = vmul.f32 %v79, 0.0013020834
    %81 = vst.msk [vmem:[%s2] sm:$0x3] %vm74, %v80
  $region17: #{vgg_distance.27} parent=0 // pred_fallthru
    _
  // Predicated region
  $region18: #{vgg_distance.27} parent=0 // pred_check
    _
  $region19: #{vgg_distance.27} parent=0 // pred_check_branch
    %83 = sbr.rel (0) target = $region21
  $region20: #{vgg_distance.27} parent=0 // pred_region
    _
  $region21: #{vgg_distance.27} parent=0 // pred_fallthru
    _
  // Predicated region
  $region22: #{vgg_distance.27} parent=0 // pred_check
    _
  $region23: #{vgg_distance.27} parent=0 // pred_check_branch
    %85 = sbr.rel (0) target = $region25
  $region24: #{vgg_distance.27} parent=0 // pred_region
    _
  $region25: #{vgg_distance.27} parent=0 // pred_fallthru
    _

// kernel: vgg_distance.28
$region0: #{vgg_distance.28}
  #allocation0 [shape = 'u32[]', space=smem, size = 0x4, offset = 0x4, fixed_abs, tag = 'smem constant byte address 0x4 - core index']
  #allocation1 [shape = 'u32[144,128]{1,0:T(1,128)}', space=vmem, size = 0x12000, scoped, tag = 'internal scratch']
  %s0 = inlined_call_operand.vmem [shape: bf16[2,16384], index: 0, kind: input, shape index: {}]
  %s1 = inlined_call_operand.vmem [shape: bf16[2,16384], index: 1, kind: input, shape index: {}]
  %s2 = inlined_call_operand.vmem [shape: f32[2,1], index: 2, kind: output, shape index: {}]
  %s3 = sld [smem:[#allocation0]]
  $region49: #{vgg_distance.28} parent=0
    _
  %s5 = ssub.s32 1, %s3
  %s6 = scalar_select 0, %s5, %s3
  loop: start=0, step=1, limit=4
  $region2: #{vgg_distance.28} parent=0 // loop_pre_header
    _
  $region3: #{vgg_distance.28} parent=0 // loop_header
    %s8 = sphi 0, %s12
    %p9 = scmp.ge.s32.totalorder %s8, 4
    %s18 = sphi 0, %s20
    %s21 = sphi 0, %s18
    %s22 = sphi 0, %s21
    %s38 = sphi 0, %s22
    %s44 = sphi 0, %s46
    %s47 = sphi 0, %s44
    %s48 = sphi 0, %s47
    %s64 = sphi 0, %s48
    %s68 = sphi 0, %s68
    %s70 = sphi 0, %s68
    %s71 = sphi 0, %s70
    %s85 = sphi 0, %s71
  $region4: #{vgg_distance.28} parent=0 // loop_header_branch
    %11 = sbr.rel (%p9) target = $region8
  $region5: #{vgg_distance.28} parent=0 // loop_body
    %s13 = ssub.s32 %s8, 1
    %s14 = ssub.s32 %s8, 2
    %s15 = sadd.s32 %s8, 1
    %s16 = ssub.s32 %s8, %s15
    %p17 = scmp.eq.s32.totalorder %s16, 0
    %s19 = sadd.s32 %s18, 1
    %s20 = scalar_select %p17, %s18, %s19
    %p23 = pneg %p17
    %p24 = scmp.eq.s32.totalorder %s8, 1
    %p25 = por %p23, %p24
    %p26 = scmp.ne.s32.totalorder %s18, %s21
    %p27 = scmp.eq.s32.totalorder %s8, 0
    %p28 = por %p26, %p27
    %p29 = scmp.ne.s32.totalorder %s18, %s21
    %p30 = scmp.eq.s32.totalorder %s13, 1
    %p31 = por %p29, %p30
    %p32 = scmp.ne.s32.totalorder %s21, %s22
    %p33 = scmp.eq.s32.totalorder %s13, 0
    %p34 = por %p32, %p33
    %p35 = scmp.ne.s32.totalorder %s21, %s22
    %p36 = scmp.eq.s32.totalorder %s14, 1
    %p37 = por %p35, %p36
    %p39 = scmp.ne.s32.totalorder %s22, %s38
    %p40 = scmp.eq.s32.totalorder %s14, 0
    %p41 = por %p39, %p40
    %s42 = ssub.s32 %s8, %s15
    %p43 = scmp.eq.s32.totalorder %s42, 0
    %s45 = sadd.s32 %s44, 1
    %s46 = scalar_select %p43, %s44, %s45
    %p49 = pneg %p43
    %p50 = scmp.eq.s32.totalorder %s8, 1
    %p51 = por %p49, %p50
    %p52 = scmp.ne.s32.totalorder %s44, %s47
    %p53 = scmp.eq.s32.totalorder %s8, 0
    %p54 = por %p52, %p53
    %p55 = scmp.ne.s32.totalorder %s44, %s47
    %p56 = scmp.eq.s32.totalorder %s13, 1
    %p57 = por %p55, %p56
    %p58 = scmp.ne.s32.totalorder %s47, %s48
    %p59 = scmp.eq.s32.totalorder %s13, 0
    %p60 = por %p58, %p59
    %p61 = scmp.ne.s32.totalorder %s47, %s48
    %p62 = scmp.eq.s32.totalorder %s14, 1
    %p63 = por %p61, %p62
    %p65 = scmp.ne.s32.totalorder %s48, %s64
    %p66 = scmp.eq.s32.totalorder %s14, 0
    %p67 = por %p65, %p66
    %s69 = sadd.s32 %s68, 1
    %p72 = scmp.eq.s32.totalorder %s8, 1
    %p73 = scmp.ne.s32.totalorder %s68, %s70
    %p74 = scmp.eq.s32.totalorder %s8, 0
    %p75 = por %p73, %p74
    %p76 = scmp.ne.s32.totalorder %s68, %s70
    %p77 = scmp.eq.s32.totalorder %s13, 1
    %p78 = por %p76, %p77
    %p79 = scmp.ne.s32.totalorder %s70, %s71
    %p80 = scmp.eq.s32.totalorder %s13, 0
    %p81 = por %p79, %p80
    %p82 = scmp.ne.s32.totalorder %s70, %s71
    %p83 = scmp.eq.s32.totalorder %s14, 1
    %p84 = por %p82, %p83
    %p86 = scmp.ne.s32.totalorder %s71, %s85
    %p87 = scmp.eq.s32.totalorder %s14, 0
    %p88 = por %p86, %p87
    %p89 = scmp.le.s32.totalorder 1, %s8
    %p90 = scmp.lt.s32.totalorder %s8, 3
    %p91 = pnand %p89, %p90
    %p92 = pneg %p91
    // Predicated region
    $region9: #{vgg_distance.28} parent=5 // pred_check
      _
    $region10: #{vgg_distance.28} parent=5 // pred_check_branch
      %94 = sbr.rel (%p91) target = $region12
    $region11: #{vgg_distance.28} parent=5 // pred_region
      %s95 = ssub.s32 %s8, 1
    $region12: #{vgg_distance.28} parent=5 // pred_fallthru
      _
    %p96 = scmp.lt.s32.totalorder %s8, 2
    // Predicated region
    $region13: #{vgg_distance.28} parent=5 // pred_check
      %p97 = pneg %p96
    $region14: #{vgg_distance.28} parent=5 // pred_check_branch
      %99 = sbr.rel (%p97) target = $region16
    $region15: #{vgg_distance.28} parent=5 // pred_region
      // Predicated region
      $region17: #{vgg_distance.28} parent=15 // pred_check
        %p100 = pneg %p28
      $region18: #{vgg_distance.28} parent=15 // pred_check_branch
        %102 = sbr.rel (%p100) target = $region20
      $region19: #{vgg_distance.28} parent=15 // pred_region
        %s103 = smul.u32 64, %s8
        %p104 = scmp.lt.s32.totalorder %s103, 127
        %s105 = scalar_select %p104, %s103, 127
        %s106 = scalar_lea.vmem %s0, %s105
        %s107 = smul.u32 64, %s8
      $region20: #{vgg_distance.28} parent=15 // pred_fallthru
        _
      // Predicated region
      $region21: #{vgg_distance.28} parent=15 // pred_check
        %p108 = pneg %p54
      $region22: #{vgg_distance.28} parent=15 // pred_check_branch
        %110 = sbr.rel (%p108) target = $region24
      $region23: #{vgg_distance.28} parent=15 // pred_region
        %s111 = smul.u32 64, %s8
        %p112 = scmp.lt.s32.totalorder %s111, 127
        %s113 = scalar_select %p112, %s111, 127
        %s114 = scalar_lea.vmem %s1, %s113
        %s115 = smul.u32 64, %s8
      $region24: #{vgg_distance.28} parent=15 // pred_fallthru
        _
    $region16: #{vgg_distance.28} parent=5 // pred_fallthru
      _
    %p116 = scmp.le.s32.totalorder 1, %s8
    %p117 = scmp.lt.s32.totalorder %s8, 3
    %p118 = pnand %p116, %p117
    %p119 = pneg %p118
    // Predicated region
    $region25: #{vgg_distance.28} parent=5 // pred_check
      _
    $region26: #{vgg_distance.28} parent=5 // pred_check_branch
      %121 = sbr.rel (%p118) target = $region28
    $region27: #{vgg_distance.28} parent=5 // pred_region
      %s122 = ssub.s32 %s8, 1
      %s123 = smul.u32 64, %s13
      %p124 = scmp.lt.s32.totalorder %s123, 127
      %s125 = scalar_select %p124, %s123, 127
      %s126 = scalar_lea.vmem %s0, %s125
      %p127 = pneg %p34
      %p128 = pneg %p31
      %s129 = smul.u32 64, %s13
      %p130 = scmp.lt.s32.totalorder %s129, 127
      %s131 = scalar_select %p130, %s129, 127
      %s132 = scalar_lea.vmem %s1, %s131
      %p133 = pneg %p60
      %p134 = pneg %p57
      %p135 = pneg %p81
      %p136 = pneg %p78
      %s137 = smul.u32 64, %s13
      %p138 = scmp.lt.s32.totalorder %s137, 127
      %s139 = scalar_select %p138, %s137, 127
      %s140 = scalar_lea.vmem %s0, %s139
      %s141 = smul.u32 64, %s13
      %s142 = smul.u32 64, %s13
      %p143 = scmp.lt.s32.totalorder %s142, 127
      %s144 = scalar_select %p143, %s142, 127
      %s145 = scalar_lea.vmem %s1, %s144
      %s146 = smul.u32 64, %s13
      %v147 = vld [vmem:[%s140] sm:$0xff]
      %v148 = vld [vmem:[%s140 + $0x8] sm:$0xff]
      %v149 = vld [vmem:[%s140 + $0x10] sm:$0xff]
      %v150 = vld [vmem:[%s140 + $0x18] sm:$0xff]
      %v151 = vld [vmem:[%s140 + $0x20] sm:$0xff]
      %v152 = vld [vmem:[%s140 + $0x28] sm:$0xff]
      %v153 = vld [vmem:[%s140 + $0x30] sm:$0xff]
      %v154 = vld [vmem:[%s140 + $0x38] sm:$0xff]
      %v155 = vunpack.c.l.bf16 %v147
      %v156 = vunpack.c.h.bf16 %v147
      %v157 = vunpack.c.l.bf16 %v148
      %v158 = vunpack.c.h.bf16 %v148
      %v159 = vunpack.c.l.bf16 %v149
      %v160 = vunpack.c.h.bf16 %v149
      %v161 = vunpack.c.l.bf16 %v150
      %v162 = vunpack.c.h.bf16 %v150
      %v163 = vunpack.c.l.bf16 %v151
      %v164 = vunpack.c.h.bf16 %v151
      %v165 = vunpack.c.l.bf16 %v152
      %v166 = vunpack.c.h.bf16 %v152
      %v167 = vunpack.c.l.bf16 %v153
      %v168 = vunpack.c.h.bf16 %v153
      %v169 = vunpack.c.l.bf16 %v154
      %v170 = vunpack.c.h.bf16 %v154
      %v171 = vld [vmem:[%s145] sm:$0xff]
      %v172 = vld [vmem:[%s145 + $0x8] sm:$0xff]
      %v173 = vld [vmem:[%s145 + $0x10] sm:$0xff]
      %v174 = vld [vmem:[%s145 + $0x18] sm:$0xff]
      %v175 = vld [vmem:[%s145 + $0x20] sm:$0xff]
      %v176 = vld [vmem:[%s145 + $0x28] sm:$0xff]
      %v177 = vld [vmem:[%s145 + $0x30] sm:$0xff]
      %v178 = vld [vmem:[%s145 + $0x38] sm:$0xff]
      %v179 = vunpack.c.l.bf16 %v171
      %v180 = vunpack.c.h.bf16 %v171
      %v181 = vunpack.c.l.bf16 %v172
      %v182 = vunpack.c.h.bf16 %v172
      %v183 = vunpack.c.l.bf16 %v173
      %v184 = vunpack.c.h.bf16 %v173
      %v185 = vunpack.c.l.bf16 %v174
      %v186 = vunpack.c.h.bf16 %v174
      %v187 = vunpack.c.l.bf16 %v175
      %v188 = vunpack.c.h.bf16 %v175
      %v189 = vunpack.c.l.bf16 %v176
      %v190 = vunpack.c.h.bf16 %v176
      %v191 = vunpack.c.l.bf16 %v177
      %v192 = vunpack.c.h.bf16 %v177
      %v193 = vunpack.c.l.bf16 %v178
      %v194 = vunpack.c.h.bf16 %v178
      %v195 = vsub.f32 %v155, %v179
      %v196 = vsub.f32 %v156, %v180
      %v197 = vsub.f32 %v157, %v181
      %v198 = vsub.f32 %v158, %v182
      %v199 = vsub.f32 %v159, %v183
      %v200 = vsub.f32 %v160, %v184
      %v201 = vsub.f32 %v161, %v185
      %v202 = vsub.f32 %v162, %v186
      %v203 = vsub.f32 %v163, %v187
      %v204 = vsub.f32 %v164, %v188
      %v205 = vsub.f32 %v165, %v189
      %v206 = vsub.f32 %v166, %v190
      %v207 = vsub.f32 %v167, %v191
      %v208 = vsub.f32 %v168, %v192
      %v209 = vsub.f32 %v169, %v193
      %v210 = vsub.f32 %v170, %v194
      %v211 = vand.u32 2147483647, %v195
      %v212 = vand.u32 2147483647, %v196
      %v213 = vand.u32 2147483647, %v197
      %v214 = vand.u32 2147483647, %v198
      %v215 = vand.u32 2147483647, %v199
      %v216 = vand.u32 2147483647, %v200
      %v217 = vand.u32 2147483647, %v201
      %v218 = vand.u32 2147483647, %v202
      %v219 = vand.u32 2147483647, %v203
      %v220 = vand.u32 2147483647, %v204
      %v221 = vand.u32 2147483647, %v205
      %v222 = vand.u32 2147483647, %v206
      %v223 = vand.u32 2147483647, %v207
      %v224 = vand.u32 2147483647, %v208
      %v225 = vand.u32 2147483647, %v209
      %v226 = vand.u32 2147483647, %v210
      %v243 = vcombine.high %v211, %v211
      %v245 = vunpack.c.l.s4 1983009808
      %v246 = vunpack.c.0.s8 %v245
      %v247 = vlaneseq
      %v248 = vshrl.u32 %v247, 7
      %v249 = vsub.s32 %v246, %v248
      %v250 = vrot.slane %v211, %v249
      %v252 = vunpack.c.l.s4 1983009808
      %v253 = vunpack.c.0.s8 %v252
      %v254 = vlaneseq
      %v255 = vshrl.u32 %v254, 7
      %v256 = vsub.s32 %v253, %v255
      %v257 = vrot.slane %v243, %v256
      %v258 = vcombine.high %v250, %v250
      %v259 = vcombine.high %v257, %v257
      %v260 = vcombine.high %v212, %v212
      %v262 = vunpack.c.l.s4 1983009808
      %v263 = vunpack.c.0.s8 %v262
      %v264 = vlaneseq
      %v265 = vshrl.u32 %v264, 7
      %v266 = vsub.s32 %v263, %v265
      %v267 = vrot.slane %v212, %v266
      %v269 = vunpack.c.l.s4 1983009808
      %v270 = vunpack.c.0.s8 %v269
      %v271 = vlaneseq
      %v272 = vshrl.u32 %v271, 7
      %v273 = vsub.s32 %v270, %v272
      %v274 = vrot.slane %v260, %v273
      %v275 = vcombine.high %v267, %v267
      %v276 = vcombine.high %v274, %v274
      %v277 = vcombine.high %v213, %v213
      %v279 = vunpack.c.l.s4 1983009808
      %v280 = vunpack.c.0.s8 %v279
      %v281 = vlaneseq
      %v282 = vshrl.u32 %v281, 7
      %v283 = vsub.s32 %v280, %v282
      %v284 = vrot.slane %v213, %v283
      %v286 = vunpack.c.l.s4 1983009808
      %v287 = vunpack.c.0.s8 %v286
      %v288 = vlaneseq
      %v289 = vshrl.u32 %v288, 7
      %v290 = vsub.s32 %v287, %v289
      %v291 = vrot.slane %v277, %v290
      %v292 = vcombine.high %v284, %v284
      %v293 = vcombine.high %v291, %v291
      %v294 = vcombine.high %v214, %v214
      %v296 = vunpack.c.l.s4 1983009808
      %v297 = vunpack.c.0.s8 %v296
      %v298 = vlaneseq
      %v299 = vshrl.u32 %v298, 7
      %v300 = vsub.s32 %v297, %v299
      %v301 = vrot.slane %v214, %v300
      %v303 = vunpack.c.l.s4 1983009808
      %v304 = vunpack.c.0.s8 %v303
      %v305 = vlaneseq
      %v306 = vshrl.u32 %v305, 7
      %v307 = vsub.s32 %v304, %v306
      %v308 = vrot.slane %v294, %v307
      %v309 = vcombine.high %v301, %v301
      %v310 = vcombine.high %v308, %v308
      %v311 = vcombine.high %v215, %v215
      %v313 = vunpack.c.l.s4 1983009808
      %v314 = vunpack.c.0.s8 %v313
      %v315 = vlaneseq
      %v316 = vshrl.u32 %v315, 7
      %v317 = vsub.s32 %v314, %v316
      %v318 = vrot.slane %v215, %v317
      %v320 = vunpack.c.l.s4 1983009808
      %v321 = vunpack.c.0.s8 %v320
      %v322 = vlaneseq
      %v323 = vshrl.u32 %v322, 7
      %v324 = vsub.s32 %v321, %v323
      %v325 = vrot.slane %v311, %v324
      %v326 = vcombine.high %v318, %v318
      %v327 = vcombine.high %v325, %v325
      %v328 = vcombine.high %v216, %v216
      %v330 = vunpack.c.l.s4 1983009808
      %v331 = vunpack.c.0.s8 %v330
      %v332 = vlaneseq
      %v333 = vshrl.u32 %v332, 7
      %v334 = vsub.s32 %v331, %v333
      %v335 = vrot.slane %v216, %v334
      %v337 = vunpack.c.l.s4 1983009808
      %v338 = vunpack.c.0.s8 %v337
      %v339 = vlaneseq
      %v340 = vshrl.u32 %v339, 7
      %v341 = vsub.s32 %v338, %v340
      %v342 = vrot.slane %v328, %v341
      %v343 = vcombine.high %v335, %v335
      %v344 = vcombine.high %v342, %v342
      %v345 = vcombine.high %v217, %v217
      %v347 = vunpack.c.l.s4 1983009808
      %v348 = vunpack.c.0.s8 %v347
      %v349 = vlaneseq
      %v350 = vshrl.u32 %v349, 7
      %v351 = vsub.s32 %v348, %v350
      %v352 = vrot.slane %v217, %v351
      %v354 = vunpack.c.l.s4 1983009808
      %v355 = vunpack.c.0.s8 %v354
      %v356 = vlaneseq
      %v357 = vshrl.u32 %v356, 7
      %v358 = vsub.s32 %v355, %v357
      %v359 = vrot.slane %v345, %v358
      %v360 = vcombine.high %v352, %v352
      %v361 = vcombine.high %v359, %v359
      %v362 = vcombine.high %v218, %v218
      %v364 = vunpack.c.l.s4 1983009808
      %v365 = vunpack.c.0.s8 %v364
      %v366 = vlaneseq
      %v367 = vshrl.u32 %v366, 7
      %v368 = vsub.s32 %v365, %v367
      %v369 = vrot.slane %v218, %v368
      %v371 = vunpack.c.l.s4 1983009808
      %v372 = vunpack.c.0.s8 %v371
      %v373 = vlaneseq
      %v374 = vshrl.u32 %v373, 7
      %v375 = vsub.s32 %v372, %v374
      %v376 = vrot.slane %v362, %v375
      %v377 = vcombine.high %v369, %v369
      %v378 = vcombine.high %v376, %v376
      %v379 = vcombine.high %v219, %v219
      %v381 = vunpack.c.l.s4 1983009808
      %v382 = vunpack.c.0.s8 %v381
      %v383 = vlaneseq
      %v384 = vshrl.u32 %v383, 7
      %v385 = vsub.s32 %v382, %v384
      %v386 = vrot.slane %v219, %v385
      %v388 = vunpack.c.l.s4 1983009808
      %v389 = vunpack.c.0.s8 %v388
      %v390 = vlaneseq
      %v391 = vshrl.u32 %v390, 7
      %v392 = vsub.s32 %v389, %v391
      %v393 = vrot.slane %v379, %v392
      %v394 = vcombine.high %v386, %v386
      %v395 = vcombine.high %v393, %v393
      %v396 = vcombine.high %v220, %v220
      %v398 = vunpack.c.l.s4 1983009808
      %v399 = vunpack.c.0.s8 %v398
      %v400 = vlaneseq
      %v401 = vshrl.u32 %v400, 7
      %v402 = vsub.s32 %v399, %v401
      %v403 = vrot.slane %v220, %v402
      %v405 = vunpack.c.l.s4 1983009808
      %v406 = vunpack.c.0.s8 %v405
      %v407 = vlaneseq
      %v408 = vshrl.u32 %v407, 7
      %v409 = vsub.s32 %v406, %v408
      %v410 = vrot.slane %v396, %v409
      %v411 = vcombine.high %v403, %v403
      %v412 = vcombine.high %v410, %v410
      %v413 = vcombine.high %v221, %v221
      %v415 = vunpack.c.l.s4 1983009808
      %v416 = vunpack.c.0.s8 %v415
      %v417 = vlaneseq
      %v418 = vshrl.u32 %v417, 7
      %v419 = vsub.s32 %v416, %v418
      %v420 = vrot.slane %v221, %v419
      %v422 = vunpack.c.l.s4 1983009808
      %v423 = vunpack.c.0.s8 %v422
      %v424 = vlaneseq
      %v425 = vshrl.u32 %v424, 7
      %v426 = vsub.s32 %v423, %v425
      %v427 = vrot.slane %v413, %v426
      %v428 = vcombine.high %v420, %v420
      %v429 = vcombine.high %v427, %v427
      %v430 = vcombine.high %v222, %v222
      %v432 = vunpack.c.l.s4 1983009808
      %v433 = vunpack.c.0.s8 %v432
      %v434 = vlaneseq
      %v435 = vshrl.u32 %v434, 7
      %v436 = vsub.s32 %v433, %v435
      %v437 = vrot.slane %v222, %v436
      %v439 = vunpack.c.l.s4 1983009808
      %v440 = vunpack.c.0.s8 %v439
      %v441 = vlaneseq
      %v442 = vshrl.u32 %v441, 7
      %v443 = vsub.s32 %v440, %v442
      %v444 = vrot.slane %v430, %v443
      %v445 = vcombine.high %v437, %v437
      %v446 = vcombine.high %v444, %v444
      %v447 = vcombine.high %v223, %v223
      %v449 = vunpack.c.l.s4 1983009808
      %v450 = vunpack.c.0.s8 %v449
      %v451 = vlaneseq
      %v452 = vshrl.u32 %v451, 7
      %v453 = vsub.s32 %v450, %v452
      %v454 = vrot.slane %v223, %v453
      %v456 = vunpack.c.l.s4 1983009808
      %v457 = vunpack.c.0.s8 %v456
      %v458 = vlaneseq
      %v459 = vshrl.u32 %v458, 7
      %v460 = vsub.s32 %v457, %v459
      %v461 = vrot.slane %v447, %v460
      %v462 = vcombine.high %v454, %v454
      %v463 = vcombine.high %v461, %v461
      %v464 = vcombine.high %v224, %v224
      %v466 = vunpack.c.l.s4 1983009808
      %v467 = vunpack.c.0.s8 %v466
      %v468 = vlaneseq
      %v469 = vshrl.u32 %v468, 7
      %v470 = vsub.s32 %v467, %v469
      %v471 = vrot.slane %v224, %v470
      %v473 = vunpack.c.l.s4 1983009808
      %v474 = vunpack.c.0.s8 %v473
      %v475 = vlaneseq
      %v476 = vshrl.u32 %v475, 7
      %v477 = vsub.s32 %v474, %v476
      %v478 = vrot.slane %v464, %v477
      %v479 = vcombine.high %v471, %v471
      %v480 = vcombine.high %v478, %v478
      %v481 = vcombine.high %v225, %v225
      %v483 = vunpack.c.l.s4 1983009808
      %v484 = vunpack.c.0.s8 %v483
      %v485 = vlaneseq
      %v486 = vshrl.u32 %v485, 7
      %v487 = vsub.s32 %v484, %v486
      %v488 = vrot.slane %v225, %v487
      %v490 = vunpack.c.l.s4 1983009808
      %v491 = vunpack.c.0.s8 %v490
      %v492 = vlaneseq
      %v493 = vshrl.u32 %v492, 7
      %v494 = vsub.s32 %v491, %v493
      %v495 = vrot.slane %v481, %v494
      %v496 = vcombine.high %v488, %v488
      %v497 = vcombine.high %v495, %v495
      %v498 = vcombine.high %v226, %v226
      %v500 = vunpack.c.l.s4 1983009808
      %v501 = vunpack.c.0.s8 %v500
      %v502 = vlaneseq
      %v503 = vshrl.u32 %v502, 7
      %v504 = vsub.s32 %v501, %v503
      %v505 = vrot.slane %v226, %v504
      %v507 = vunpack.c.l.s4 1983009808
      %v508 = vunpack.c.0.s8 %v507
      %v509 = vlaneseq
      %v510 = vshrl.u32 %v509, 7
      %v511 = vsub.s32 %v508, %v510
      %v512 = vrot.slane %v498, %v511
      %v513 = vcombine.high %v505, %v505
      %v514 = vcombine.high %v512, %v512
      %vm579 = vcmask 1041408
      %v580 = vsel %vm579, %v250, 0.0
      %v581 = vsel %vm579, %v258, 0.0
      %v582 = vadd.f32 %v580, %v581
      %v583 = vsel %vm579, %v257, 0.0
      %v584 = vadd.f32 %v582, %v583
      %v585 = vsel %vm579, %v259, 0.0
      %v586 = vadd.f32 %v584, %v585
      %v587 = vsel %vm579, %v267, 0.0
      %v588 = vadd.f32 %v586, %v587
      %v589 = vsel %vm579, %v275, 0.0
      %v590 = vadd.f32 %v588, %v589
      %v591 = vsel %vm579, %v274, 0.0
      %v592 = vadd.f32 %v590, %v591
      %v593 = vsel %vm579, %v276, 0.0
      %v594 = vadd.f32 %v592, %v593
      %v595 = vsel %vm579, %v284, 0.0
      %v596 = vadd.f32 %v594, %v595
      %v597 = vsel %vm579, %v292, 0.0
      %v598 = vadd.f32 %v596, %v597
      %v599 = vsel %vm579, %v291, 0.0
      %v600 = vadd.f32 %v598, %v599
      %v601 = vsel %vm579, %v293, 0.0
      %v602 = vadd.f32 %v600, %v601
      %v603 = vsel %vm579, %v301, 0.0
      %v604 = vadd.f32 %v602, %v603
      %v605 = vsel %vm579, %v309, 0.0
      %v606 = vadd.f32 %v604, %v605
      %v607 = vsel %vm579, %v308, 0.0
      %v608 = vadd.f32 %v606, %v607
      %v609 = vsel %vm579, %v310, 0.0
      %v610 = vadd.f32 %v608, %v609
      %v611 = vsel %vm579, %v318, 0.0
      %v612 = vadd.f32 %v610, %v611
      %v613 = vsel %vm579, %v326, 0.0
      %v614 = vadd.f32 %v612, %v613
      %v615 = vsel %vm579, %v325, 0.0
      %v616 = vadd.f32 %v614, %v615
      %v617 = vsel %vm579, %v327, 0.0
      %v618 = vadd.f32 %v616, %v617
      %v619 = vsel %vm579, %v335, 0.0
      %v620 = vadd.f32 %v618, %v619
      %v621 = vsel %vm579, %v343, 0.0
      %v622 = vadd.f32 %v620, %v621
      %v623 = vsel %vm579, %v342, 0.0
      %v624 = vadd.f32 %v622, %v623
      %v625 = vsel %vm579, %v344, 0.0
      %v626 = vadd.f32 %v624, %v625
      %v627 = vsel %vm579, %v352, 0.0
      %v628 = vadd.f32 %v626, %v627
      %v629 = vsel %vm579, %v360, 0.0
      %v630 = vadd.f32 %v628, %v629
      %v631 = vsel %vm579, %v359, 0.0
      %v632 = vadd.f32 %v630, %v631
      %v633 = vsel %vm579, %v361, 0.0
      %v634 = vadd.f32 %v632, %v633
      %v635 = vsel %vm579, %v369, 0.0
      %v636 = vadd.f32 %v634, %v635
      %v637 = vsel %vm579, %v377, 0.0
      %v638 = vadd.f32 %v636, %v637
      %v639 = vsel %vm579, %v376, 0.0
      %v640 = vadd.f32 %v638, %v639
      %v641 = vsel %vm579, %v378, 0.0
      %v642 = vadd.f32 %v640, %v641
      %v643 = vsel %vm579, %v386, 0.0
      %v644 = vadd.f32 %v642, %v643
      %v645 = vsel %vm579, %v394, 0.0
      %v646 = vadd.f32 %v644, %v645
      %v647 = vsel %vm579, %v393, 0.0
      %v648 = vadd.f32 %v646, %v647
      %v649 = vsel %vm579, %v395, 0.0
      %v650 = vadd.f32 %v648, %v649
      %v651 = vsel %vm579, %v403, 0.0
      %v652 = vadd.f32 %v650, %v651
      %v653 = vsel %vm579, %v411, 0.0
      %v654 = vadd.f32 %v652, %v653
      %v655 = vsel %vm579, %v410, 0.0
      %v656 = vadd.f32 %v654, %v655
      %v657 = vsel %vm579, %v412, 0.0
      %v658 = vadd.f32 %v656, %v657
      %v659 = vsel %vm579, %v420, 0.0
      %v660 = vadd.f32 %v658, %v659
      %v661 = vsel %vm579, %v428, 0.0
      %v662 = vadd.f32 %v660, %v661
      %v663 = vsel %vm579, %v427, 0.0
      %v664 = vadd.f32 %v662, %v663
      %v665 = vsel %vm579, %v429, 0.0
      %v666 = vadd.f32 %v664, %v665
      %v667 = vsel %vm579, %v437, 0.0
      %v668 = vadd.f32 %v666, %v667
      %v669 = vsel %vm579, %v445, 0.0
      %v670 = vadd.f32 %v668, %v669
      %v671 = vsel %vm579, %v444, 0.0
      %v672 = vadd.f32 %v670, %v671
      %v673 = vsel %vm579, %v446, 0.0
      %v674 = vadd.f32 %v672, %v673
      %v675 = vsel %vm579, %v454, 0.0
      %v676 = vadd.f32 %v674, %v675
      %v677 = vsel %vm579, %v462, 0.0
      %v678 = vadd.f32 %v676, %v677
      %v679 = vsel %vm579, %v461, 0.0
      %v680 = vadd.f32 %v678, %v679
      %v681 = vsel %vm579, %v463, 0.0
      %v682 = vadd.f32 %v680, %v681
      %v683 = vsel %vm579, %v471, 0.0
      %v684 = vadd.f32 %v682, %v683
      %v685 = vsel %vm579, %v479, 0.0
      %v686 = vadd.f32 %v684, %v685
      %v687 = vsel %vm579, %v478, 0.0
      %v688 = vadd.f32 %v686, %v687
      %v689 = vsel %vm579, %v480, 0.0
      %v690 = vadd.f32 %v688, %v689
      %v691 = vsel %vm579, %v488, 0.0
      %v692 = vadd.f32 %v690, %v691
      %v693 = vsel %vm579, %v496, 0.0
      %v694 = vadd.f32 %v692, %v693
      %v695 = vsel %vm579, %v495, 0.0
      %v696 = vadd.f32 %v694, %v695
      %v697 = vsel %vm579, %v497, 0.0
      %v698 = vadd.f32 %v696, %v697
      %v699 = vsel %vm579, %v505, 0.0
      %v700 = vadd.f32 %v698, %v699
      %v701 = vsel %vm579, %v513, 0.0
      %v702 = vadd.f32 %v700, %v701
      %v703 = vsel %vm579, %v512, 0.0
      %v704 = vadd.f32 %v702, %v703
      %v705 = vsel %vm579, %v514, 0.0
      %v706 = vadd.f32 %v704, %v705
      %707 = vadd.xlane.f32.xlu0 %v706
      %v708 = vpop.xlane.xlu0 %707
      %p709 = scmp.eq.s32.totalorder %s13, 0
      // Predicated region
      $region29: #{vgg_distance.28} parent=27 // pred_check
        %p710 = pneg %p709
      $region30: #{vgg_distance.28} parent=27 // pred_check_branch
        %712 = sbr.rel (%p710) target = $region32
      $region31: #{vgg_distance.28} parent=27 // pred_region
        %vm713 = vcmask 1024
        %714 = vst.msk [vmem:[%s2] sm:$0x3] %vm713, 0.0
      $region32: #{vgg_distance.28} parent=27 // pred_fallthru
        _
      %v715 = vld [vmem:[%s2] sm:$0x3]
      %v716 = vadd.f32 %v715, %v708
      %vm717 = vcmask 1024
      %718 = vst.msk [vmem:[%s2] sm:$0x3] %vm717, %v716
      %p719 = scmp.eq.s32.totalorder %s13, 1
      // Predicated region
      $region33: #{vgg_distance.28} parent=27 // pred_check
        %p720 = pneg %p719
      $region34: #{vgg_distance.28} parent=27 // pred_check_branch
        %722 = sbr.rel (%p720) target = $region36
      $region35: #{vgg_distance.28} parent=27 // pred_region
        %v723 = vld [vmem:[%s2] sm:$0x3]
        %v724 = vmul.f32 %v723, 6.1035156e-05
        %725 = vst.msk [vmem:[%s2] sm:$0x3] %vm717, %v724
      $region36: #{vgg_distance.28} parent=27 // pred_fallthru
        _
      // Predicated region
      $region37: #{vgg_distance.28} parent=27 // pred_check
        %p726 = pneg %p78
      $region38: #{vgg_distance.28} parent=27 // pred_check_branch
        %728 = sbr.rel (%p726) target = $region40
      $region39: #{vgg_distance.28} parent=27 // pred_region
        _
      $region40: #{vgg_distance.28} parent=27 // pred_fallthru
        _
      // Predicated region
      $region41: #{vgg_distance.28} parent=27 // pred_check
        %p729 = pneg %p78
      $region42: #{vgg_distance.28} parent=27 // pred_check_branch
        %731 = sbr.rel (%p729) target = $region44
      $region43: #{vgg_distance.28} parent=27 // pred_region
        _
      $region44: #{vgg_distance.28} parent=27 // pred_fallthru
        _
    $region28: #{vgg_distance.28} parent=5 // pred_fallthru
      _
    %p732 = scmp.le.s32.totalorder 2, %s8
    // Predicated region
    $region45: #{vgg_distance.28} parent=5 // pred_check
      %p733 = pneg %p732
    $region46: #{vgg_distance.28} parent=5 // pred_check_branch
      %735 = sbr.rel (%p733) target = $region48
    $region47: #{vgg_distance.28} parent=5 // pred_region
      %s736 = ssub.s32 %s8, 2
    $region48: #{vgg_distance.28} parent=5 // pred_fallthru
      _
  $region6: #{vgg_distance.28} parent=0 // loop_footer
    %s12 = sadd.s32 1, %s8
  $region7: #{vgg_distance.28} parent=0 // loop_footer_branch
    %7 = sbr.rel target = $region3
  $region8: #{vgg_distance.28} parent=0 // loop_exit
    _

// kernel: vgg_distance.19
$region0: #{vgg_distance.19}
  #allocation0 [shape = 'u32[]', space=smem, size = 0x4, offset = 0x4, fixed_abs, tag = 'smem constant byte address 0x4 - core index']
  #allocation1 [shape = 'u32[144,128]{1,0:T(1,128)}', space=vmem, size = 0x12000, scoped, tag = 'internal scratch']
  #allocation2 [shape = 'f32[64,128]{1,0:T(8,128)}', space=vmem, size = 0x8000, scoped, tag = 'scratch operand']
  %s0 = inlined_call_operand.vmem [shape: bf16[2,10,10,64], index: 0, kind: input, shape index: {}]
  %s1 = inlined_call_operand.vmem [shape: bf16[3,192,128], index: 1, kind: input, shape index: {}]
  %s2 = inlined_call_operand.vmem [shape: f32[1,128], index: 2, kind: input, shape index: {}]
  %s3 = inlined_call_operand.vmem [shape: bf16[2,8,8,128], index: 3, kind: output, shape index: {}]
  %s4 = sld [smem:[#allocation0]]
  $region45: #{vgg_distance.19} parent=0
    _
  %s6 = ssub.s32 1, %s4
  %s7 = scalar_select 0, %s6, %s4
  loop: start=0, step=1, limit=4
  $region2: #{vgg_distance.19} parent=0 // loop_pre_header
    _
  $region3: #{vgg_distance.19} parent=0 // loop_header
    %s9 = sphi 0, %s13
    %p10 = scmp.ge.s32.totalorder %s9, 4
    %s16 = sphi 0, %s35
    %s17 = sphi 0, %s31
    %s18 = sphi 0, %s27
    %s19 = sphi 0, %s16
    %s20 = sphi 0, %s17
    %s21 = sphi 0, %s18
    %s22 = sphi 0, %s19
    %s23 = sphi 0, %s20
    %s24 = sphi 0, %s21
    %s38 = sphi 0, %s40
    %s41 = sphi 0, %s38
    %s42 = sphi 0, %s41
    %s58 = sphi 0, %s42
    %s64 = sphi 0, %s66
    %s67 = sphi 0, %s64
    %s68 = sphi 0, %s67
    %s84 = sphi 0, %s68
    %s90 = sphi 0, %s92
    %s93 = sphi 0, %s90
    %s94 = sphi 0, %s93
    %s110 = sphi 0, %s94
    %s120 = sphi 0, %s122
    %s123 = sphi 0, %s120
    %s124 = sphi 0, %s123
    %s140 = sphi 0, %s124
  $region4: #{vgg_distance.19} parent=0 // loop_header_branch
    %12 = sbr.rel (%p10) target = $region8
  $region5: #{vgg_distance.19} parent=0 // loop_body
    %s14 = ssub.s32 %s9, 1
    %s15 = ssub.s32 %s9, 2
    %s25 = sadd.s32 1, %s18
    %p26 = scmp.ge.s32.totalorder %s25, 1
    %s27 = scalar_select %p26, 0, %s25
    %s28 = sadd.s32 1, %s17
    %s29 = scalar_select %p26, %s28, %s17
    %p30 = scmp.ge.s32.totalorder %s29, 1
    %s31 = scalar_select %p30, 0, %s29
    %s32 = sadd.s32 1, %s16
    %s33 = scalar_select %p30, %s32, %s16
    %p34 = scmp.ge.s32.totalorder %s33, 2
    %s35 = scalar_select %p34, 0, %s33
    %s36 = ssub.s32 %s16, %s35
    %p37 = scmp.eq.s32.totalorder %s36, 0
    %s39 = sadd.s32 %s38, 1
    %s40 = scalar_select %p37, %s38, %s39
    %p43 = pneg %p37
    %p44 = scmp.eq.s32.totalorder %s9, 1
    %p45 = por %p43, %p44
    %p46 = scmp.ne.s32.totalorder %s38, %s41
    %p47 = scmp.eq.s32.totalorder %s9, 0
    %p48 = por %p46, %p47
    %p49 = scmp.ne.s32.totalorder %s38, %s41
    %p50 = scmp.eq.s32.totalorder %s14, 1
    %p51 = por %p49, %p50
    %p52 = scmp.ne.s32.totalorder %s41, %s42
    %p53 = scmp.eq.s32.totalorder %s14, 0
    %p54 = por %p52, %p53
    %p55 = scmp.ne.s32.totalorder %s41, %s42
    %p56 = scmp.eq.s32.totalorder %s15, 1
    %p57 = por %p55, %p56
    %p59 = scmp.ne.s32.totalorder %s42, %s58
    %p60 = scmp.eq.s32.totalorder %s15, 0
    %p61 = por %p59, %p60
    %s62 = ssub.s32 %s18, %s27
    %p63 = scmp.eq.s32.totalorder %s62, 0
    %s65 = sadd.s32 %s64, 1
    %s66 = scalar_select %p63, %s64, %s65
    %p69 = pneg %p63
    %p70 = scmp.eq.s32.totalorder %s9, 1
    %p71 = por %p69, %p70
    %p72 = scmp.ne.s32.totalorder %s64, %s67
    %p73 = scmp.eq.s32.totalorder %s9, 0
    %p74 = por %p72, %p73
    %p75 = scmp.ne.s32.totalorder %s64, %s67
    %p76 = scmp.eq.s32.totalorder %s14, 1
    %p77 = por %p75, %p76
    %p78 = scmp.ne.s32.totalorder %s67, %s68
    %p79 = scmp.eq.s32.totalorder %s14, 0
    %p80 = por %p78, %p79
    %p81 = scmp.ne.s32.totalorder %s67, %s68
    %p82 = scmp.eq.s32.totalorder %s15, 1
    %p83 = por %p81, %p82
    %p85 = scmp.ne.s32.totalorder %s68, %s84
    %p86 = scmp.eq.s32.totalorder %s15, 0
    %p87 = por %p85, %p86
    %s88 = ssub.s32 %s18, %s27
    %p89 = scmp.eq.s32.totalorder %s88, 0
    %s91 = sadd.s32 %s90, 1
    %s92 = scalar_select %p89, %s90, %s91
    %p95 = pneg %p89
    %p96 = scmp.eq.s32.totalorder %s9, 1
    %p97 = por %p95, %p96
    %p98 = scmp.ne.s32.totalorder %s90, %s93
    %p99 = scmp.eq.s32.totalorder %s9, 0
    %p100 = por %p98, %p99
    %p101 = scmp.ne.s32.totalorder %s90, %s93
    %p102 = scmp.eq.s32.totalorder %s14, 1
    %p103 = por %p101, %p102
    %p104 = scmp.ne.s32.totalorder %s93, %s94
    %p105 = scmp.eq.s32.totalorder %s14, 0
    %p106 = por %p104, %p105
    %p107 = scmp.ne.s32.totalorder %s93, %s94
    %p108 = scmp.eq.s32.totalorder %s15, 1
    %p109 = por %p107, %p108
    %p111 = scmp.ne.s32.totalorder %s94, %s110
    %p112 = scmp.eq.s32.totalorder %s15, 0
    %p113 = por %p111, %p112
    %s114 = ssub.s32 %s16, %s35
    %s115 = ssub.s32 %s17, %s31
    %s116 = sor.u32 %s114, %s115
    %s117 = ssub.s32 %s18, %s27
    %s118 = sor.u32 %s116, %s117
    %p119 = scmp.eq.s32.totalorder %s118, 0
    %s121 = sadd.s32 %s120, 1
    %s122 = scalar_select %p119, %s120, %s121
    %p125 = pneg %p119
    %p126 = scmp.eq.s32.totalorder %s9, 1
    %p127 = por %p125, %p126
    %p128 = scmp.ne.s32.totalorder %s120, %s123
    %p129 = scmp.eq.s32.totalorder %s9, 0
    %p130 = por %p128, %p129
    %p131 = scmp.ne.s32.totalorder %s120, %s123
    %p132 = scmp.eq.s32.totalorder %s14, 1
    %p133 = por %p131, %p132
    %p134 = scmp.ne.s32.totalorder %s123, %s124
    %p135 = scmp.eq.s32.totalorder %s14, 0
    %p136 = por %p134, %p135
    %p137 = scmp.ne.s32.totalorder %s123, %s124
    %p138 = scmp.eq.s32.totalorder %s15, 1
    %p139 = por %p137, %p138
    %p141 = scmp.ne.s32.totalorder %s124, %s140
    %p142 = scmp.eq.s32.totalorder %s15, 0
    %p143 = por %p141, %p142
    %p144 = scmp.le.s32.totalorder 1, %s9
    %p145 = scmp.lt.s32.totalorder %s9, 3
    %p146 = pnand %p144, %p145
    %p147 = pneg %p146
    // Predicated region
    $region9: #{vgg_distance.19} parent=5 // pred_check
      _
    $region10: #{vgg_distance.19} parent=5 // pred_check_branch
      %149 = sbr.rel (%p146) target = $region12
    $region11: #{vgg_distance.19} parent=5 // pred_region
      %s150 = ssub.s32 %s9, 1
      // Predicated region
      $region13: #{vgg_distance.19} parent=11 // pred_check
        %p151 = pneg %p80
      $region14: #{vgg_distance.19} parent=11 // pred_check_branch
        %153 = sbr.rel (%p151) target = $region16
      $region15: #{vgg_distance.19} parent=11 // pred_region
        %p154 = scmp.lt.s32.totalorder %s21, 0
        %s155 = scalar_select %p154, %s21, 0
        %s156 = smul.addr %s155, 4
        %s157 = scalar_lea.vmem %s1, %s156
      $region16: #{vgg_distance.19} parent=11 // pred_fallthru
        _
      // Predicated region
      $region17: #{vgg_distance.19} parent=11 // pred_check
        %p158 = pneg %p106
      $region18: #{vgg_distance.19} parent=11 // pred_check_branch
        %160 = sbr.rel (%p158) target = $region20
      $region19: #{vgg_distance.19} parent=11 // pred_region
        %p161 = scmp.lt.s32.totalorder %s21, 0
        %s162 = scalar_select %p161, %s21, 0
        %s163 = scalar_lea.vmem %s2, %s162
      $region20: #{vgg_distance.19} parent=11 // pred_fallthru
        _
    $region12: #{vgg_distance.19} parent=5 // pred_fallthru
      _
    %p164 = scmp.lt.s32.totalorder %s9, 2
    // Predicated region
    $region21: #{vgg_distance.19} parent=5 // pred_check
      %p165 = pneg %p164
    $region22: #{vgg_distance.19} parent=5 // pred_check_branch
      %167 = sbr.rel (%p165) target = $region24
    $region23: #{vgg_distance.19} parent=5 // pred_region
      // Predicated region
      $region25: #{vgg_distance.19} parent=23 // pred_check
        %p168 = pneg %p48
      $region26: #{vgg_distance.19} parent=23 // pred_check_branch
        %170 = sbr.rel (%p168) target = $region28
      $region27: #{vgg_distance.19} parent=23 // pred_region
        %p171 = scmp.lt.s32.totalorder %s16, 1
        %s172 = scalar_select %p171, %s16, 1
        %s173 = smul.addr %s172, 20
        %s174 = smul.addr %s173, 4
        %s175 = scalar_lea.vmem %s0, %s174
      $region28: #{vgg_distance.19} parent=23 // pred_fallthru
        _
    $region24: #{vgg_distance.19} parent=5 // pred_fallthru
      _
    %p176 = scmp.le.s32.totalorder 1, %s9
    %p177 = scmp.lt.s32.totalorder %s9, 3
    %p178 = pnand %p176, %p177
    %p179 = pneg %p178
    // Predicated region
    $region29: #{vgg_distance.19} parent=5 // pred_check
      _
    $region30: #{vgg_distance.19} parent=5 // pred_check_branch
      %181 = sbr.rel (%p178) target = $region32
    $region31: #{vgg_distance.19} parent=5 // pred_region
      %s182 = ssub.s32 %s9, 1
      %p183 = scmp.lt.s32.totalorder %s19, 1
      %s184 = scalar_select %p183, %s19, 1
      %s185 = smul.addr %s184, 20
      %s186 = smul.addr %s185, 4
      %s187 = scalar_lea.vmem %s0, %s186
      %p188 = pneg %p54
      %p189 = pneg %p51
      %p190 = scmp.lt.s32.totalorder %s21, 0
      %s191 = scalar_select %p190, %s21, 0
      %s192 = smul.addr %s191, 4
      %s193 = scalar_lea.vmem %s1, %s192
      %p194 = pneg %p80
      %p195 = pneg %p77
      %p196 = scmp.lt.s32.totalorder %s21, 0
      %s197 = scalar_select %p196, %s21, 0
      %s198 = scalar_lea.vmem %s2, %s197
      %p199 = pneg %p106
      %p200 = pneg %p103
      %p201 = pneg %p136
      %p202 = pneg %p133
      %s203 = smul.u32 8, %s20
      %p204 = scmp.lt.s32.totalorder %s19, 1
      %s205 = scalar_select %p204, %s19, 1
      %p206 = scmp.lt.s32.totalorder %s203, 7
      %s207 = scalar_select %p206, %s203, 7
      %p208 = scmp.lt.s32.totalorder %s21, 0
      %s209 = scalar_select %p208, %s21, 0
      %s210 = sadd.s32 %s209, %s207
      %s211 = smul.addr %s205, 8
      %s212 = sadd.s32 %s210, %s211
      %s213 = smul.addr %s212, 4
      %s214 = scalar_lea.vmem %s3, %s213
      %p215 = scmp.lt.s32.totalorder %s19, 1
      %s216 = scalar_select %p215, %s19, 1
      %s217 = smul.addr %s216, 20
      %s218 = smul.addr %s217, 4
      %s219 = scalar_lea.vmem %s0, %s218
      %p220 = scmp.lt.s32.totalorder %s21, 0
      %s221 = scalar_select %p220, %s21, 0
      %s222 = smul.addr %s221, 4
      %s223 = scalar_lea.vmem %s1, %s222
      %p224 = scmp.lt.s32.totalorder %s21, 0
      %s225 = scalar_select %p224, %s21, 0
      %s226 = scalar_lea.vmem %s2, %s225
      %s227 = smul.u32 8, %s20
      %p228 = scmp.lt.s32.totalorder %s19, 1
      %s229 = scalar_select %p228, %s19, 1
      %p230 = scmp.lt.s32.totalorder %s227, 7
      %s231 = scalar_select %p230, %s227, 7
      %p232 = scmp.lt.s32.totalorder %s21, 0
      %s233 = scalar_select %p232, %s21, 0
      %s234 = sadd.s32 %s233, %s231
      %s235 = smul.addr %s229, 8
      %s236 = sadd.s32 %s234, %s235
      %s237 = smul.addr %s236, 4
      %s238 = scalar_lea.vmem %s3, %s237
      %s239 = smul.u32 8, %s20
      %s241 = smul.u32 %s20, 8
      %s242 = smul.u32 %s241, 2
      %s243 = smul.addr %s242, 4
      %s244 = scalar_lea.vmem %s219, %s243
      %v245 = vld [vmem:[%s244] sm:$0xf]
      %v246 = vld [vmem:[%s244 + $0x4] sm:$0x1]
      %v247 = vld [vmem:[%s244 + $0x8] sm:$0xf]
      %v248 = vld [vmem:[%s244 + $0xc] sm:$0x1]
      %v249 = vld [vmem:[%s244 + $0x10] sm:$0xf]
      %v250 = vld [vmem:[%s244 + $0x14] sm:$0x1]
      %v251 = vld [vmem:[%s244 + $0x18] sm:$0xf]
      %v252 = vld [vmem:[%s244 + $0x1c] sm:$0x1]
      %v253 = vld [vmem:[%s244 + $0x20] sm:$0xf]
      %v254 = vld [vmem:[%s244 + $0x24] sm:$0x1]
      %v255 = vld [vmem:[%s244 + $0x28] sm:$0xf]
      %v256 = vld [vmem:[%s244 + $0x2c] sm:$0x1]
      %v257 = vld [vmem:[%s244 + $0x30] sm:$0xf]
      %v258 = vld [vmem:[%s244 + $0x34] sm:$0x1]
      %v259 = vld [vmem:[%s244 + $0x38] sm:$0xf]
      %v260 = vld [vmem:[%s244 + $0x3c] sm:$0x1]
      %v261 = vld [vmem:[%s244 + $0x40] sm:$0xf]
      %v262 = vld [vmem:[%s244 + $0x44] sm:$0x1]
      %v263 = vld [vmem:[%s244 + $0x48] sm:$0xf]
      %v264 = vld [vmem:[%s244 + $0x4c] sm:$0x1]
      %v285 = vunpack.c.l.b16 %v245
      %v286 = vunpack.c.l.b16 %v246
      %v287 = vunpack.c.l.b16 %v247
      %v288 = vunpack.c.l.b16 %v248
      %v289 = vunpack.c.l.b16 %v249
      %v290 = vunpack.c.l.b16 %v250
      %v291 = vunpack.c.l.b16 %v251
      %v292 = vunpack.c.l.b16 %v252
      %v293 = vunpack.c.l.b16 %v253
      %v294 = vunpack.c.l.b16 %v254
      %v295 = vunpack.c.l.b16 %v255
      %v296 = vunpack.c.l.b16 %v256
      %v297 = vunpack.c.l.b16 %v257
      %v298 = vunpack.c.l.b16 %v258
      %v299 = vunpack.c.l.b16 %v259
      %v300 = vunpack.c.l.b16 %v260
      %v301 = vunpack.c.l.b16 %v261
      %v302 = vunpack.c.l.b16 %v262
      %v303 = vunpack.c.l.b16 %v263
      %v304 = vunpack.c.l.b16 %v264
      %v305 = vpack.c.b16 %v286, %v285
      %v306 = vpack.c.b16 %v288, %v287
      %v307 = vpack.c.b16 %v290, %v289
      %v308 = vpack.c.b16 %v292, %v291
      %v309 = vpack.c.b16 %v294, %v293
      %v310 = vpack.c.b16 %v296, %v295
      %v311 = vpack.c.b16 %v298, %v297
      %v312 = vpack.c.b16 %v300, %v299
      %v313 = vpack.c.b16 %v302, %v301
      %v314 = vpack.c.b16 %v304, %v303
      %v316 = vshrl.u32 %v305, 16
      %v318 = vshll.u32 %v305, 16
      %v320 = vrot.slane %v318, 1
      %v321 = vor.u32 %v316, %v320
      %v323 = vshrl.u32 %v306, 16
      %v325 = vshll.u32 %v306, 16
      %v327 = vrot.slane %v325, 1
      %v328 = vor.u32 %v323, %v327
      %v330 = vshrl.u32 %v307, 16
      %v332 = vshll.u32 %v307, 16
      %v334 = vrot.slane %v332, 1
      %v335 = vor.u32 %v330, %v334
      %v337 = vshrl.u32 %v308, 16
      %v339 = vshll.u32 %v308, 16
      %v341 = vrot.slane %v339, 1
      %v342 = vor.u32 %v337, %v341
      %v344 = vshrl.u32 %v309, 16
      %v346 = vshll.u32 %v309, 16
      %v348 = vrot.slane %v346, 1
      %v349 = vor.u32 %v344, %v348
      %v351 = vshrl.u32 %v310, 16
      %v353 = vshll.u32 %v310, 16
      %v355 = vrot.slane %v353, 1
      %v356 = vor.u32 %v351, %v355
      %v358 = vshrl.u32 %v311, 16
      %v360 = vshll.u32 %v311, 16
      %v362 = vrot.slane %v360, 1
      %v363 = vor.u32 %v358, %v362
      %v365 = vshrl.u32 %v312, 16
      %v367 = vshll.u32 %v312, 16
      %v369 = vrot.slane %v367, 1
      %v370 = vor.u32 %v365, %v369
      %v372 = vshrl.u32 %v313, 16
      %v374 = vshll.u32 %v313, 16
      %v376 = vrot.slane %v374, 1
      %v377 = vor.u32 %v372, %v376
      %v379 = vshrl.u32 %v314, 16
      %v381 = vshll.u32 %v314, 16
      %v383 = vrot.slane %v381, 1
      %v384 = vor.u32 %v379, %v383
      %385 = vrot.lane.b32.xlu0 %v321, 64
      %v386 = vpop.permute.xlu0 %385
      %387 = vrot.lane.b32.xlu0 %v328, 64
      %v388 = vpop.permute.xlu0 %387
      %389 = vrot.lane.b32.xlu0 %v335, 64
      %v390 = vpop.permute.xlu0 %389
      %391 = vrot.lane.b32.xlu0 %v342, 64
      %v392 = vpop.permute.xlu0 %391
      %393 = vrot.lane.b32.xlu0 %v349, 64
      %v394 = vpop.permute.xlu0 %393
      %395 = vrot.lane.b32.xlu0 %v356, 64
      %v396 = vpop.permute.xlu0 %395
      %397 = vrot.lane.b32.xlu0 %v363, 64
      %v398 = vpop.permute.xlu0 %397
      %399 = vrot.lane.b32.xlu0 %v370, 64
      %v400 = vpop.permute.xlu0 %399
      %401 = vrot.lane.b32.xlu0 %v377, 64
      %v402 = vpop.permute.xlu0 %401
      %403 = vrot.lane.b32.xlu0 %v384, 64
      %v404 = vpop.permute.xlu0 %403
      %v405 = vrot.slane %v305, 1
      %v406 = vrot.slane %v306, 1
      %v407 = vrot.slane %v307, 1
      %v408 = vrot.slane %v308, 1
      %v409 = vrot.slane %v309, 1
      %v410 = vrot.slane %v310, 1
      %v411 = vrot.slane %v311, 1
      %v412 = vrot.slane %v312, 1
      %v413 = vrot.slane %v313, 1
      %v414 = vrot.slane %v314, 1
      %vm415 = vcmask 523264
      %v418 = vsel %vm415, %v245, %v386
      %v421 = vsel %vm415, %v247, %v388
      %v424 = vsel %vm415, %v249, %v390
      %v427 = vsel %vm415, %v251, %v392
      %v430 = vsel %vm415, %v253, %v394
      %v433 = vsel %vm415, %v255, %v396
      %v436 = vsel %vm415, %v257, %v398
      %v439 = vsel %vm415, %v259, %v400
      %v442 = vsel %vm415, %v261, %v402
      %v445 = vsel %vm415, %v263, %v404
      %v454 = vunpack.c.l.b16 %v418
      %v455 = vunpack.c.l.b16 %v405
      %v456 = vunpack.c.l.b16 %v421
      %v457 = vunpack.c.l.b16 %v406
      %v458 = vunpack.c.l.b16 %v424
      %v459 = vunpack.c.l.b16 %v407
      %v460 = vunpack.c.l.b16 %v427
      %v461 = vunpack.c.l.b16 %v408
      %v462 = vunpack.c.l.b16 %v430
      %v463 = vunpack.c.l.b16 %v409
      %v464 = vunpack.c.l.b16 %v433
      %v465 = vunpack.c.l.b16 %v410
      %v466 = vunpack.c.l.b16 %v436
      %v467 = vunpack.c.l.b16 %v411
      %v468 = vunpack.c.l.b16 %v439
      %v469 = vunpack.c.l.b16 %v412
      %v470 = vld [vmem:[%s223] sm:$0xf]
      %v471 = vld [vmem:[%s223 + $0x4] sm:$0xf]
      %v472 = vld [vmem:[%s223 + $0x8] sm:$0xf]
      %v473 = vld [vmem:[%s223 + $0xc] sm:$0xf]
      %v474 = vld [vmem:[%s223 + $0x10] sm:$0xf]
      %v475 = vld [vmem:[%s223 + $0x14] sm:$0xf]
      %v476 = vld [vmem:[%s223 + $0x18] sm:$0xf]
      %v477 = vld [vmem:[%s223 + $0x1c] sm:$0xf]
      %v478 = vld [vmem:[%s223 + $0x20] sm:$0xf]
      %v479 = vld [vmem:[%s223 + $0x24] sm:$0xf]
      %v480 = vld [vmem:[%s223 + $0x28] sm:$0xf]
      %v481 = vld [vmem:[%s223 + $0x2c] sm:$0xf]
      %v482 = vld [vmem:[%s223 + $0x30] sm:$0xf]
      %v483 = vld [vmem:[%s223 + $0x34] sm:$0xf]
      %v484 = vld [vmem:[%s223 + $0x38] sm:$0xf]
      %v485 = vld [vmem:[%s223 + $0x3c] sm:$0xf]
      %v486 = vld [vmem:[%s223 + $0x40] sm:$0xf]
      %v487 = vld [vmem:[%s223 + $0x44] sm:$0xf]
      %v488 = vld [vmem:[%s223 + $0x48] sm:$0xf]
      %v489 = vld [vmem:[%s223 + $0x4c] sm:$0xf]
      %v490 = vld [vmem:[%s223 + $0x50] sm:$0xf]
      %v491 = vld [vmem:[%s223 + $0x54] sm:$0xf]
      %v492 = vld [vmem:[%s223 + $0x58] sm:$0xf]
      %v493 = vld [vmem:[%s223 + $0x5c] sm:$0xf]
      %v494 = vpack.c.b16 %v456, %v454
      %v495 = vpack.c.b16 %v457, %v455
      %v496 = vpack.c.b16 %v460, %v458
      %v497 = vpack.c.b16 %v461, %v459
      %v498 = vpack.c.b16 %v464, %v462
      %v499 = vpack.c.b16 %v465, %v463
      %v500 = vpack.c.b16 %v468, %v466
      %v501 = vpack.c.b16 %v469, %v467
      %v530 = vunpack.c.l.b16 %v470
      %v531 = vunpack.c.l.b16 %v471
      %v532 = vunpack.c.l.b16 %v472
      %v533 = vunpack.c.l.b16 %v473
      %v534 = vunpack.c.l.b16 %v474
      %v535 = vunpack.c.l.b16 %v475
      %v536 = vunpack.c.l.b16 %v476
      %v537 = vunpack.c.l.b16 %v477
      %v538 = vunpack.c.l.b16 %v478
      %v539 = vunpack.c.l.b16 %v479
      %v540 = vunpack.c.l.b16 %v480
      %v541 = vunpack.c.l.b16 %v481
      %v542 = vunpack.c.l.b16 %v482
      %v543 = vunpack.c.l.b16 %v483
      %v544 = vunpack.c.l.b16 %v484
      %v545 = vunpack.c.l.b16 %v485
      %v546 = vunpack.c.l.b16 %v486
      %v547 = vunpack.c.l.b16 %v487
      %v548 = vunpack.c.l.b16 %v488
      %v549 = vunpack.c.l.b16 %v489
      %v550 = vunpack.c.l.b16 %v490
      %v551 = vunpack.c.l.b16 %v491
      %v552 = vunpack.c.l.b16 %v492
      %v553 = vunpack.c.l.b16 %v493
      %v554 = vpack.c.b16 %v531, %v530
      %v555 = vpack.c.b16 %v533, %v532
      %v556 = vpack.c.b16 %v535, %v534
      %v557 = vpack.c.b16 %v537, %v536
      %v558 = vpack.c.b16 %v539, %v538
      %v559 = vpack.c.b16 %v541, %v540
      %v560 = vpack.c.b16 %v543, %v542
      %v561 = vpack.c.b16 %v545, %v544
      %v562 = vpack.c.b16 %v547, %v546
      %v563 = vpack.c.b16 %v549, %v548
      %v564 = vpack.c.b16 %v551, %v550
      %v565 = vpack.c.b16 %v553, %v552
      %v579 = vsel %vm415, %v495, 0
      %v582 = vsel %vm415, %v497, 0
      %v585 = vsel %vm415, %v499, 0
      %v588 = vsel %vm415, %v501, 0
      %590 = vmatprep.subr.bf16.mxu0 0
      %591 = vmatpush1.bf16.msra.mxu0 %v561
      %592 = vmatprep.subr.bf16.mxu0 0
      %593 = vmatpush1.bf16.msra.mxu0 %v560
      %594 = vmatprep.subr.bf16.mxu0 0
      %595 = vmatpush1.bf16.msra.mxu0 %v559
      %596 = vmatprep.subr.bf16.mxu0 0
      %597 = vmatpush1.bf16.msra.mxu0 %v558
      %598 = vmatprep.subr.bf16.mxu0 0
      %599 = vmatpush1.bf16.msra.mxu0 %v557
      %600 = vmatprep.subr.bf16.mxu0 0
      %601 = vmatpush1.bf16.msra.mxu0 %v556
      %602 = vmatprep.subr.bf16.mxu0 0
      %603 = vmatpush1.bf16.msra.mxu0 %v555
      %604 = vmatprep.subr.bf16.mxu0 0
      %605 = vmatpush1.bf16.msra.mxu0 %v554
      %606 = vmatprep.subr.bf16.mxu0 0
      %607 = vmatpush2.bf16.msra.mxu0 0
      %608 = vmatprep.subr.bf16.mxu0 0
      %609 = vmatpush2.bf16.msra.mxu0 0
      %610 = vmatprep.subr.bf16.mxu0 0
      %611 = vmatpush2.bf16.msra.mxu0 0
      %612 = vmatprep.subr.bf16.mxu0 0
      %613 = vmatpush2.bf16.msra.mxu0 0
      %614 = vmatprep.subr.bf16.mxu0 0
      %615 = vmatpush2.bf16.msra.mxu0 %v565
      %616 = vmatprep.subr.bf16.mxu0 0
      %617 = vmatpush2.bf16.msra.mxu0 %v564
      %618 = vmatprep.subr.bf16.mxu0 0
      %619 = vmatpush2.bf16.msra.mxu0 %v563
      %620 = vmatprep.subr.bf16.mxu0 0
      %621 = vmatpush2.bf16.msra.mxu0 %v562
      %622 = vmatprep.mubr.bf16.mxu0 %v579
      %623 = vmatmul.mubr.bf16.gmra.mxu0 %v494
      %v624 = vpop.f32.mrf.mxu0
      %v625 = vadd.f32 0.0, %v624
      %v626 = vpop.f32.mrf.mxu0
      %v627 = vpop.f32.mrf.mxu0
      %v628 = vadd.f32 0.0, %v627
      %v629 = vpop.f32.mrf.mxu0
      %630 = vmatprep.mubr.bf16.mxu0 %v582
      %631 = vmatmul.mubr.bf16.gmra.mxu0 %v496
      %v632 = vpop.f32.mrf.mxu0
      %v633 = vadd.f32 0.0, %v632
      %v634 = vpop.f32.mrf.mxu0
      %v635 = vpop.f32.mrf.mxu0
      %v636 = vadd.f32 0.0, %v635
      %v637 = vpop.f32.mrf.mxu0
      %638 = vmatprep.mubr.bf16.mxu0 %v585
      %639 = vmatmul.mubr.bf16.gmra.mxu0 %v498
      %v640 = vpop.f32.mrf.mxu0
      %v641 = vadd.f32 0.0, %v640
      %v642 = vpop.f32.mrf.mxu0
      %v643 = vpop.f32.mrf.mxu0
      %v644 = vadd.f32 0.0, %v643
      %v645 = vpop.f32.mrf.mxu0
      %646 = vmatprep.mubr.bf16.mxu0 %v588
      %647 = vmatmul.mubr.bf16.gmra.mxu0 %v500
      %v648 = vpop.f32.mrf.mxu0
      %v649 = vadd.f32 0.0, %v648
      %v650 = vpop.f32.mrf.mxu0
      %v651 = vpop.f32.mrf.mxu0
      %v652 = vadd.f32 0.0, %v651
      %v653 = vpop.f32.mrf.mxu0
      %654 = vdwg.mxu0
      %655 = vst [vmem:[#allocation2] sm:$0xff] %v625
      %656 = vst [vmem:[#allocation2 + $0x8] sm:$0xff] %v628
      %657 = vst [vmem:[#allocation2 + $0x10] sm:$0xff] %v633
      %658 = vst [vmem:[#allocation2 + $0x18] sm:$0xff] %v636
      %659 = vst [vmem:[#allocation2 + $0x20] sm:$0xff] %v641
      %660 = vst [vmem:[#allocation2 + $0x28] sm:$0xff] %v644
      %661 = vst [vmem:[#allocation2 + $0x30] sm:$0xff] %v649
      %662 = vst [vmem:[#allocation2 + $0x38] sm:$0xff] %v652
      %v664 = vunpack.c.l.b16 %v442
      %v665 = vunpack.c.l.b16 %v413
      %s666 = scalar_lea.vmem %s223, 96
      %v667 = vld [vmem:[%s666] sm:$0xf]
      %v668 = vld [vmem:[%s666 + $0x4] sm:$0xf]
      %v669 = vld [vmem:[%s666 + $0x8] sm:$0xf]
      %v670 = vld [vmem:[%s666 + $0xc] sm:$0xf]
      %v671 = vld [vmem:[%s666 + $0x10] sm:$0xf]
      %v672 = vld [vmem:[%s666 + $0x14] sm:$0xf]
      %v673 = vld [vmem:[%s666 + $0x18] sm:$0xf]
      %v674 = vld [vmem:[%s666 + $0x1c] sm:$0xf]
      %v675 = vld [vmem:[%s666 + $0x20] sm:$0xf]
      %v676 = vld [vmem:[%s666 + $0x24] sm:$0xf]
      %v677 = vld [vmem:[%s666 + $0x28] sm:$0xf]
      %v678 = vld [vmem:[%s666 + $0x2c] sm:$0xf]
      %v679 = vld [vmem:[%s666 + $0x30] sm:$0xf]
      %v680 = vld [vmem:[%s666 + $0x34] sm:$0xf]
      %v681 = vld [vmem:[%s666 + $0x38] sm:$0xf]
      %v682 = vld [vmem:[%s666 + $0x3c] sm:$0xf]
      %v683 = vld [vmem:[%s666 + $0x40] sm:$0xf]
      %v684 = vld [vmem:[%s666 + $0x44] sm:$0xf]
      %v685 = vld [vmem:[%s666 + $0x48] sm:$0xf]
      %v686 = vld [vmem:[%s666 + $0x4c] sm:$0xf]
      %v687 = vld [vmem:[%s666 + $0x50] sm:$0xf]
      %v688 = vld [vmem:[%s666 + $0x54] sm:$0xf]
      %v689 = vld [vmem:[%s666 + $0x58] sm:$0xf]
      %v690 = vld [vmem:[%s666 + $0x5c] sm:$0xf]
      %v691 = vpack.c.b16 %v458, %v456
      %v692 = vpack.c.b16 %v459, %v457
      %v693 = vpack.c.b16 %v462, %v460
      %v694 = vpack.c.b16 %v463, %v461
      %v695 = vpack.c.b16 %v466, %v464
      %v696 = vpack.c.b16 %v467, %v465
      %v697 = vpack.c.b16 %v664, %v468
      %v698 = vpack.c.b16 %v665, %v469
      %v727 = vunpack.c.l.b16 %v667
      %v728 = vunpack.c.l.b16 %v668
      %v729 = vunpack.c.l.b16 %v669
      %v730 = vunpack.c.l.b16 %v670
      %v731 = vunpack.c.l.b16 %v671
      %v732 = vunpack.c.l.b16 %v672
      %v733 = vunpack.c.l.b16 %v673
      %v734 = vunpack.c.l.b16 %v674
      %v735 = vunpack.c.l.b16 %v675
      %v736 = vunpack.c.l.b16 %v676
      %v737 = vunpack.c.l.b16 %v677
      %v738 = vunpack.c.l.b16 %v678
      %v739 = vunpack.c.l.b16 %v679
      %v740 = vunpack.c.l.b16 %v680
      %v741 = vunpack.c.l.b16 %v681
      %v742 = vunpack.c.l.b16 %v682
      %v743 = vunpack.c.l.b16 %v683
      %v744 = vunpack.c.l.b16 %v684
      %v745 = vunpack.c.l.b16 %v685
      %v746 = vunpack.c.l.b16 %v686
      %v747 = vunpack.c.l.b16 %v687
      %v748 = vunpack.c.l.b16 %v688
      %v749 = vunpack.c.l.b16 %v689
      %v750 = vunpack.c.l.b16 %v690
      %v751 = vpack.c.b16 %v728, %v727
      %v752 = vpack.c.b16 %v730, %v729
      %v753 = vpack.c.b16 %v732, %v731
      %v754 = vpack.c.b16 %v734, %v733
      %v755 = vpack.c.b16 %v736, %v735
      %v756 = vpack.c.b16 %v738, %v737
      %v757 = vpack.c.b16 %v740, %v739
      %v758 = vpack.c.b16 %v742, %v741
      %v759 = vpack.c.b16 %v744, %v743
      %v760 = vpack.c.b16 %v746, %v745
      %v761 = vpack.c.b16 %v748, %v747
      %v762 = vpack.c.b16 %v750, %v749
      %v776 = vsel %vm415, %v692, 0
      %v779 = vsel %vm415, %v694, 0
      %v782 = vsel %vm415, %v696, 0
      %v785 = vsel %vm415, %v698, 0
      %787 = vmatprep.subr.bf16.mxu0 0
      %788 = vmatpush1.bf16.msra.mxu0 %v758
      %789 = vmatprep.subr.bf16.mxu0 0
      %790 = vmatpush1.bf16.msra.mxu0 %v757
      %791 = vmatprep.subr.bf16.mxu0 0
      %792 = vmatpush1.bf16.msra.mxu0 %v756
      %793 = vmatprep.subr.bf16.mxu0 0
      %794 = vmatpush1.bf16.msra.mxu0 %v755
      %795 = vmatprep.subr.bf16.mxu0 0
      %796 = vmatpush1.bf16.msra.mxu0 %v754
      %797 = vmatprep.subr.bf16.mxu0 0
      %798 = vmatpush1.bf16.msra.mxu0 %v753
      %799 = vmatprep.subr.bf16.mxu0 0
      %800 = vmatpush1.bf16.msra.mxu0 %v752
      %801 = vmatprep.subr.bf16.mxu0 0
      %802 = vmatpush1.bf16.msra.mxu0 %v751
      %803 = vmatprep.subr.bf16.mxu0 0
      %804 = vmatpush2.bf16.msra.mxu0 0
      %805 = vmatprep.subr.bf16.mxu0 0
      %806 = vmatpush2.bf16.msra.mxu0 0
      %807 = vmatprep.subr.bf16.mxu0 0
      %808 = vmatpush2.bf16.msra.mxu0 0
      %809 = vmatprep.subr.bf16.mxu0 0
      %810 = vmatpush2.bf16.msra.mxu0 0
      %811 = vmatprep.subr.bf16.mxu0 0
      %812 = vmatpush2.bf16.msra.mxu0 %v762
      %813 = vmatprep.subr.bf16.mxu0 0
      %814 = vmatpush2.bf16.msra.mxu0 %v761
      %815 = vmatprep.subr.bf16.mxu0 0
      %816 = vmatpush2.bf16.msra.mxu0 %v760
      %817 = vmatprep.subr.bf16.mxu0 0
      %818 = vmatpush2.bf16.msra.mxu0 %v759
      %819 = vmatprep.mubr.bf16.mxu0 %v776
      %820 = vmatmul.mubr.bf16.gmra.mxu0 %v691
      %v821 = vpop.f32.mrf.mxu0
      %v822 = vadd.f32 0.0, %v821
      %v823 = vpop.f32.mrf.mxu0
      %v824 = vpop.f32.mrf.mxu0
      %v825 = vadd.f32 0.0, %v824
      %v826 = vpop.f32.mrf.mxu0
      %827 = vmatprep.mubr.bf16.mxu0 %v779
      %828 = vmatmul.mubr.bf16.gmra.mxu0 %v693
      %v829 = vpop.f32.mrf.mxu0
      %v830 = vadd.f32 0.0, %v829
      %v831 = vpop.f32.mrf.mxu0
      %v832 = vpop.f32.mrf.mxu0
      %v833 = vadd.f32 0.0, %v832
      %v834 = vpop.f32.mrf.mxu0
      %835 = vmatprep.mubr.bf16.mxu0 %v782
      %836 = vmatmul.mubr.bf16.gmra.mxu0 %v695
      %v837 = vpop.f32.mrf.mxu0
      %v838 = vadd.f32 0.0, %v837
      %v839 = vpop.f32.mrf.mxu0
      %v840 = vpop.f32.mrf.mxu0
      %v841 = vadd.f32 0.0, %v840
      %v842 = vpop.f32.mrf.mxu0
      %843 = vmatprep.mubr.bf16.mxu0 %v785
      %844 = vmatmul.mubr.bf16.gmra.mxu0 %v697
      %v845 = vpop.f32.mrf.mxu0
      %v846 = vadd.f32 0.0, %v845
      %v847 = vpop.f32.mrf.mxu0
      %v848 = vpop.f32.mrf.mxu0
      %v849 = vadd.f32 0.0, %v848
      %v850 = vpop.f32.mrf.mxu0
      %851 = vdwg.mxu0
      %v852 = vld [vmem:[#allocation2] sm:$0xff]
      %v853 = vld [vmem:[#allocation2 + $0x8] sm:$0xff]
      %v854 = vld [vmem:[#allocation2 + $0x10] sm:$0xff]
      %v855 = vld [vmem:[#allocation2 + $0x18] sm:$0xff]
      %v856 = vld [vmem:[#allocation2 + $0x20] sm:$0xff]
      %v857 = vld [vmem:[#allocation2 + $0x28] sm:$0xff]
      %v858 = vld [vmem:[#allocation2 + $0x30] sm:$0xff]
      %v859 = vld [vmem:[#allocation2 + $0x38] sm:$0xff]
      %v860 = vadd.f32 %v852, %v822
      %v861 = vadd.f32 %v853, %v825
      %v862 = vadd.f32 %v854, %v830
      %v863 = vadd.f32 %v855, %v833
      %v864 = vadd.f32 %v856, %v838
      %v865 = vadd.f32 %v857, %v841
      %v866 = vadd.f32 %v858, %v846
      %v867 = vadd.f32 %v859, %v849
      %868 = vst [vmem:[#allocation2] sm:$0xff] %v860
      %869 = vst [vmem:[#allocation2 + $0x8] sm:$0xff] %v861
      %870 = vst [vmem:[#allocation2 + $0x10] sm:$0xff] %v862
      %871 = vst [vmem:[#allocation2 + $0x18] sm:$0xff] %v863
      %872 = vst [vmem:[#allocation2 + $0x20] sm:$0xff] %v864
      %873 = vst [vmem:[#allocation2 + $0x28] sm:$0xff] %v865
      %874 = vst [vmem:[#allocation2 + $0x30] sm:$0xff] %v866
      %875 = vst [vmem:[#allocation2 + $0x38] sm:$0xff] %v867
      %v877 = vunpack.c.l.b16 %v445
      %v878 = vunpack.c.l.b16 %v414
      %s879 = scalar_lea.vmem %s223, 192
      %v880 = vld [vmem:[%s879] sm:$0xf]
      %v881 = vld [vmem:[%s879 + $0x4] sm:$0xf]
      %v882 = vld [vmem:[%s879 + $0x8] sm:$0xf]
      %v883 = vld [vmem:[%s879 + $0xc] sm:$0xf]
      %v884 = vld [vmem:[%s879 + $0x10] sm:$0xf]
      %v885 = vld [vmem:[%s879 + $0x14] sm:$0xf]
      %v886 = vld [vmem:[%s879 + $0x18] sm:$0xf]
      %v887 = vld [vmem:[%s879 + $0x1c] sm:$0xf]
      %v888 = vld [vmem:[%s879 + $0x20] sm:$0xf]
      %v889 = vld [vmem:[%s879 + $0x24] sm:$0xf]
      %v890 = vld [vmem:[%s879 + $0x28] sm:$0xf]
      %v891 = vld [vmem:[%s879 + $0x2c] sm:$0xf]
      %v892 = vld [vmem:[%s879 + $0x30] sm:$0xf]
      %v893 = vld [vmem:[%s879 + $0x34] sm:$0xf]
      %v894 = vld [vmem:[%s879 + $0x38] sm:$0xf]
      %v895 = vld [vmem:[%s879 + $0x3c] sm:$0xf]
      %v896 = vld [vmem:[%s879 + $0x40] sm:$0xf]
      %v897 = vld [vmem:[%s879 + $0x44] sm:$0xf]
      %v898 = vld [vmem:[%s879 + $0x48] sm:$0xf]
      %v899 = vld [vmem:[%s879 + $0x4c] sm:$0xf]
      %v900 = vld [vmem:[%s879 + $0x50] sm:$0xf]
      %v901 = vld [vmem:[%s879 + $0x54] sm:$0xf]
      %v902 = vld [vmem:[%s879 + $0x58] sm:$0xf]
      %v903 = vld [vmem:[%s879 + $0x5c] sm:$0xf]
      %v904 = vpack.c.b16 %v877, %v664
      %v905 = vpack.c.b16 %v878, %v665
      %v931 = vunpack.c.l.b16 %v880
      %v932 = vunpack.c.l.b16 %v881
      %v933 = vunpack.c.l.b16 %v882
      %v934 = vunpack.c.l.b16 %v883
      %v935 = vunpack.c.l.b16 %v884
      %v936 = vunpack.c.l.b16 %v885
      %v937 = vunpack.c.l.b16 %v886
      %v938 = vunpack.c.l.b16 %v887
      %v939 = vunpack.c.l.b16 %v888
      %v940 = vunpack.c.l.b16 %v889
      %v941 = vunpack.c.l.b16 %v890
      %v942 = vunpack.c.l.b16 %v891
      %v943 = vunpack.c.l.b16 %v892
      %v944 = vunpack.c.l.b16 %v893
      %v945 = vunpack.c.l.b16 %v894
      %v946 = vunpack.c.l.b16 %v895
      %v947 = vunpack.c.l.b16 %v896
      %v948 = vunpack.c.l.b16 %v897
      %v949 = vunpack.c.l.b16 %v898
      %v950 = vunpack.c.l.b16 %v899
      %v951 = vunpack.c.l.b16 %v900
      %v952 = vunpack.c.l.b16 %v901
      %v953 = vunpack.c.l.b16 %v902
      %v954 = vunpack.c.l.b16 %v903
      %v955 = vpack.c.b16 %v932, %v931
      %v956 = vpack.c.b16 %v934, %v933
      %v957 = vpack.c.b16 %v936, %v935
      %v958 = vpack.c.b16 %v938, %v937
      %v959 = vpack.c.b16 %v940, %v939
      %v960 = vpack.c.b16 %v942, %v941
      %v961 = vpack.c.b16 %v944, %v943
      %v962 = vpack.c.b16 %v946, %v945
      %v963 = vpack.c.b16 %v948, %v947
      %v964 = vpack.c.b16 %v950, %v949
      %v965 = vpack.c.b16 %v952, %v951
      %v966 = vpack.c.b16 %v954, %v953
      %v980 = vsel %vm415, %v905, 0
      %982 = vmatprep.subr.bf16.mxu0 0
      %983 = vmatpush1.bf16.msra.mxu0 %v962
      %984 = vmatprep.subr.bf16.mxu0 0
      %985 = vmatpush1.bf16.msra.mxu0 %v961
      %986 = vmatprep.subr.bf16.mxu0 0
      %987 = vmatpush1.bf16.msra.mxu0 %v960
      %988 = vmatprep.subr.bf16.mxu0 0
      %989 = vmatpush1.bf16.msra.mxu0 %v959
      %990 = vmatprep.subr.bf16.mxu0 0
      %991 = vmatpush1.bf16.msra.mxu0 %v958
      %992 = vmatprep.subr.bf16.mxu0 0
      %993 = vmatpush1.bf16.msra.mxu0 %v957
      %994 = vmatprep.subr.bf16.mxu0 0
      %995 = vmatpush1.bf16.msra.mxu0 %v956
      %996 = vmatprep.subr.bf16.mxu0 0
      %997 = vmatpush1.bf16.msra.mxu0 %v955
      %998 = vmatprep.subr.bf16.mxu0 0
      %999 = vmatpush2.bf16.msra.mxu0 0
      %1000 = vmatprep.subr.bf16.mxu0 0
      %1001 = vmatpush2.bf16.msra.mxu0 0
      %1002 = vmatprep.subr.bf16.mxu0 0
      %1003 = vmatpush2.bf16.msra.mxu0 0
      %1004 = vmatprep.subr.bf16.mxu0 0
      %1005 = vmatpush2.bf16.msra.mxu0 0
      %1006 = vmatprep.subr.bf16.mxu0 0
      %1007 = vmatpush2.bf16.msra.mxu0 %v966
      %1008 = vmatprep.subr.bf16.mxu0 0
      %1009 = vmatpush2.bf16.msra.mxu0 %v965
      %1010 = vmatprep.subr.bf16.mxu0 0
      %1011 = vmatpush2.bf16.msra.mxu0 %v964
      %1012 = vmatprep.subr.bf16.mxu0 0
      %1013 = vmatpush2.bf16.msra.mxu0 %v963
      %1014 = vmatprep.mubr.bf16.mxu0 %v582
      %1015 = vmatmul.mubr.bf16.gmra.mxu0 %v496
      %v1016 = vpop.f32.mrf.mxu0
      %v1017 = vadd.f32 0.0, %v1016
      %v1018 = vpop.f32.mrf.mxu0
      %v1019 = vpop.f32.mrf.mxu0
      %v1020 = vadd.f32 0.0, %v1019
      %v1021 = vpop.f32.mrf.mxu0
      %1022 = vmatprep.mubr.bf16.mxu0 %v585
      %1023 = vmatmul.mubr.bf16.gmra.mxu0 %v498
      %v1024 = vpop.f32.mrf.mxu0
      %v1025 = vadd.f32 0.0, %v1024
      %v1026 = vpop.f32.mrf.mxu0
      %v1027 = vpop.f32.mrf.mxu0
      %v1028 = vadd.f32 0.0, %v1027
      %v1029 = vpop.f32.mrf.mxu0
      %1030 = vmatprep.mubr.bf16.mxu0 %v588
      %1031 = vmatmul.mubr.bf16.gmra.mxu0 %v500
      %v1032 = vpop.f32.mrf.mxu0
      %v1033 = vadd.f32 0.0, %v1032
      %v1034 = vpop.f32.mrf.mxu0
      %v1035 = vpop.f32.mrf.mxu0
      %v1036 = vadd.f32 0.0, %v1035
      %v1037 = vpop.f32.mrf.mxu0
      %1038 = vmatprep.mubr.bf16.mxu0 %v980
      %1039 = vmatmul.mubr.bf16.gmra.mxu0 %v904
      %v1040 = vpop.f32.mrf.mxu0
      %v1041 = vadd.f32 0.0, %v1040
      %v1042 = vpop.f32.mrf.mxu0
      %v1043 = vpop.f32.mrf.mxu0
      %v1044 = vadd.f32 0.0, %v1043
      %v1045 = vpop.f32.mrf.mxu0
      %1046 = vdwg.mxu0
      %v1047 = vld [vmem:[#allocation2] sm:$0xff]
      %v1048 = vld [vmem:[#allocation2 + $0x8] sm:$0xff]
      %v1049 = vld [vmem:[#allocation2 + $0x10] sm:$0xff]
      %v1050 = vld [vmem:[#allocation2 + $0x18] sm:$0xff]
      %v1051 = vld [vmem:[#allocation2 + $0x20] sm:$0xff]
      %v1052 = vld [vmem:[#allocation2 + $0x28] sm:$0xff]
      %v1053 = vld [vmem:[#allocation2 + $0x30] sm:$0xff]
      %v1054 = vld [vmem:[#allocation2 + $0x38] sm:$0xff]
      %v1055 = vadd.f32 %v1047, %v1017
      %v1056 = vadd.f32 %v1048, %v1020
      %v1057 = vadd.f32 %v1049, %v1025
      %v1058 = vadd.f32 %v1050, %v1028
      %v1059 = vadd.f32 %v1051, %v1033
      %v1060 = vadd.f32 %v1052, %v1036
      %v1061 = vadd.f32 %v1053, %v1041
      %v1062 = vadd.f32 %v1054, %v1044
      %1063 = vst [vmem:[#allocation2] sm:$0xff] %v1055
      %1064 = vst [vmem:[#allocation2 + $0x8] sm:$0xff] %v1056
      %1065 = vst [vmem:[#allocation2 + $0x10] sm:$0xff] %v1057
      %1066 = vst [vmem:[#allocation2 + $0x18] sm:$0xff] %v1058
      %1067 = vst [vmem:[#allocation2 + $0x20] sm:$0xff] %v1059
      %1068 = vst [vmem:[#allocation2 + $0x28] sm:$0xff] %v1060
      %1069 = vst [vmem:[#allocation2 + $0x30] sm:$0xff] %v1061
      %1070 = vst [vmem:[#allocation2 + $0x38] sm:$0xff] %v1062
      %v1071 = vld [vmem:[#allocation2] sm:$0xff]
      %v1072 = vld [vmem:[#allocation2 + $0x8] sm:$0xff]
      %v1073 = vld [vmem:[#allocation2 + $0x10] sm:$0xff]
      %v1074 = vld [vmem:[#allocation2 + $0x18] sm:$0xff]
      %v1075 = vld [vmem:[#allocation2 + $0x20] sm:$0xff]
      %v1076 = vld [vmem:[#allocation2 + $0x28] sm:$0xff]
      %v1077 = vld [vmem:[#allocation2 + $0x30] sm:$0xff]
      %v1078 = vld [vmem:[#allocation2 + $0x38] sm:$0xff]
      %v1079 = vld [vmem:[%s226] sm:$0x1]
      %v1081 = vlaneseq
      %v1082 = vshrl.u32 %v1081, 7
      %v1083 = vsub.s32 0, %v1082
      %v1084 = vrot.slane %v1079, %v1083
      %v1086 = vadd.f32 %v1071, %v1084
      %v1087 = vadd.f32 %v1072, %v1084
      %v1088 = vadd.f32 %v1073, %v1084
      %v1089 = vadd.f32 %v1074, %v1084
      %v1090 = vadd.f32 %v1075, %v1084
      %v1091 = vadd.f32 %v1076, %v1084
      %v1092 = vadd.f32 %v1077, %v1084
      %v1093 = vadd.f32 %v1078, %v1084
      %v1094 = vmax.f32 %v1086, 0.0
      %v1095 = vmax.f32 %v1087, 0.0
      %v1096 = vmax.f32 %v1088, 0.0
      %v1097 = vmax.f32 %v1089, 0.0
      %v1098 = vmax.f32 %v1090, 0.0
      %v1099 = vmax.f32 %v1091, 0.0
      %v1100 = vmax.f32 %v1092, 0.0
      %v1101 = vmax.f32 %v1093, 0.0
      %v1102 = vpack.c.bf16 %v1094, %v1094
      %v1103 = vpack.c.bf16 %v1095, %v1095
      %v1104 = vpack.c.bf16 %v1096, %v1096
      %v1105 = vpack.c.bf16 %v1097, %v1097
      %v1106 = vpack.c.bf16 %v1098, %v1098
      %v1107 = vpack.c.bf16 %v1099, %v1099
      %v1108 = vpack.c.bf16 %v1100, %v1100
      %v1109 = vpack.c.bf16 %v1101, %v1101
      %1110 = vst [vmem:[%s238] sm:$0xf] %v1102
      %1111 = vst [vmem:[%s238 + $0x4] sm:$0xf] %v1103
      %1112 = vst [vmem:[%s238 + $0x8] sm:$0xf] %v1104
      %1113 = vst [vmem:[%s238 + $0xc] sm:$0xf] %v1105
      %1114 = vst [vmem:[%s238 + $0x10] sm:$0xf] %v1106
      %1115 = vst [vmem:[%s238 + $0x14] sm:$0xf] %v1107
      %1116 = vst [vmem:[%s238 + $0x18] sm:$0xf] %v1108
      %1117 = vst [vmem:[%s238 + $0x1c] sm:$0xf] %v1109
      %s1118 = smul.u32 8, %s20
      %p1119 = scmp.lt.s32.totalorder %s19, 1
      %s1120 = scalar_select %p1119, %s19, 1
      %p1121 = scmp.lt.s32.totalorder %s1118, 7
      %s1122 = scalar_select %p1121, %s1118, 7
      %p1123 = scmp.lt.s32.totalorder %s21, 0
      %s1124 = scalar_select %p1123, %s21, 0
      %s1125 = sadd.s32 %s1124, %s1122
      %s1126 = smul.addr %s1120, 8
      %s1127 = sadd.s32 %s1125, %s1126
      %s1128 = smul.addr %s1127, 4
      %s1129 = scalar_lea.vmem %s3, %s1128
      // Predicated region
      $region33: #{vgg_distance.19} parent=31 // pred_check
        %p1130 = pneg %p133
      $region34: #{vgg_distance.19} parent=31 // pred_check_branch
        %1132 = sbr.rel (%p1130) target = $region36
      $region35: #{vgg_distance.19} parent=31 // pred_region
        %s1133 = smul.u32 8, %s20
      $region36: #{vgg_distance.19} parent=31 // pred_fallthru
        _
    $region32: #{vgg_distance.19} parent=5 // pred_fallthru
      _
    %p1134 = scmp.le.s32.totalorder 2, %s9
    // Predicated region
    $region37: #{vgg_distance.19} parent=5 // pred_check
      %p1135 = pneg %p1134
    $region38: #{vgg_distance.19} parent=5 // pred_check_branch
      %1137 = sbr.rel (%p1135) target = $region40
    $region39: #{vgg_distance.19} parent=5 // pred_region
      %s1138 = ssub.s32 %s9, 2
      // Predicated region
      $region41: #{vgg_distance.19} parent=39 // pred_check
        %p1139 = pneg %p139
      $region42: #{vgg_distance.19} parent=39 // pred_check_branch
        %1141 = sbr.rel (%p1139) target = $region44
      $region43: #{vgg_distance.19} parent=39 // pred_region
        %s1142 = smul.u32 8, %s23
        %p1143 = scmp.lt.s32.totalorder %s22, 1
        %s1144 = scalar_select %p1143, %s22, 1
        %p1145 = scmp.lt.s32.totalorder %s1142, 7
        %s1146 = scalar_select %p1145, %s1142, 7
        %p1147 = scmp.lt.s32.totalorder %s24, 0
        %s1148 = scalar_select %p1147, %s24, 0
        %s1149 = sadd.s32 %s1148, %s1146
        %s1150 = smul.addr %s1144, 8
        %s1151 = sadd.s32 %s1149, %s1150
        %s1152 = smul.addr %s1151, 4
        %s1153 = scalar_lea.vmem %s3, %s1152
      $region44: #{vgg_distance.19} parent=39 // pred_fallthru
        _
    $region40: #{vgg_distance.19} parent=5 // pred_fallthru
      _
  $region6: #{vgg_distance.19} parent=0 // loop_footer
    %s13 = sadd.s32 1, %s9
  $region7: #{vgg_distance.19} parent=0 // loop_footer_branch
    %8 = sbr.rel target = $region3
  $region8: #{vgg_distance.19} parent=0 // loop_exit
    _

// kernel: vgg_distance.29
$region0: #{vgg_distance.29}
  #allocation0 [shape = 'u32[]', space=smem, size = 0x4, offset = 0x4, fixed_abs, tag = 'smem constant byte address 0x4 - core index']
  #allocation1 [shape = 'u32[144,128]{1,0:T(1,128)}', space=vmem, size = 0x12000, scoped, tag = 'internal scratch']
  %s0 = inlined_call_operand.vmem [shape: bf16[2,8192], index: 0, kind: input, shape index: {}]
  %s1 = inlined_call_operand.vmem [shape: bf16[2,8192], index: 1, kind: input, shape index: {}]
  %s2 = inlined_call_operand.vmem [shape: f32[2,1], index: 2, kind: output, shape index: {}]
  %s3 = sld [smem:[#allocation0]]
  $region26: #{vgg_distance.29} parent=0
    _
  %s5 = ssub.s32 1, %s3
  %s6 = scalar_select 0, %s5, %s3
  // Predicated region
  $region2: #{vgg_distance.29} parent=0 // pred_check
    _
  $region3: #{vgg_distance.29} parent=0 // pred_check_branch
    %8 = sbr.rel (0) target = $region5
  $region4: #{vgg_distance.29} parent=0 // pred_region
    _
  $region5: #{vgg_distance.29} parent=0 // pred_fallthru
    _
  // Predicated region
  $region6: #{vgg_distance.29} parent=0 // pred_check
    _
  $region7: #{vgg_distance.29} parent=0 // pred_check_branch
    %10 = sbr.rel (0) target = $region9
  $region8: #{vgg_distance.29} parent=0 // pred_region
    _
  $region9: #{vgg_distance.29} parent=0 // pred_fallthru
    _
  %v11 = vld [vmem:[%s0] sm:$0xff]
  %v12 = vld [vmem:[%s0 + $0x8] sm:$0xff]
  %v13 = vld [vmem:[%s0 + $0x10] sm:$0xff]
  %v14 = vld [vmem:[%s0 + $0x18] sm:$0xff]
  %v15 = vld [vmem:[%s0 + $0x20] sm:$0xff]
  %v16 = vld [vmem:[%s0 + $0x28] sm:$0xff]
  %v17 = vld [vmem:[%s0 + $0x30] sm:$0xff]
  %v18 = vld [vmem:[%s0 + $0x38] sm:$0xff]
  %v19 = vunpack.c.l.bf16 %v11
  %v20 = vunpack.c.h.bf16 %v11
  %v21 = vunpack.c.l.bf16 %v12
  %v22 = vunpack.c.h.bf16 %v12
  %v23 = vunpack.c.l.bf16 %v13
  %v24 = vunpack.c.h.bf16 %v13
  %v25 = vunpack.c.l.bf16 %v14
  %v26 = vunpack.c.h.bf16 %v14
  %v27 = vunpack.c.l.bf16 %v15
  %v28 = vunpack.c.h.bf16 %v15
  %v29 = vunpack.c.l.bf16 %v16
  %v30 = vunpack.c.h.bf16 %v16
  %v31 = vunpack.c.l.bf16 %v17
  %v32 = vunpack.c.h.bf16 %v17
  %v33 = vunpack.c.l.bf16 %v18
  %v34 = vunpack.c.h.bf16 %v18
  %v35 = vld [vmem:[%s1] sm:$0xff]
  %v36 = vld [vmem:[%s1 + $0x8] sm:$0xff]
  %v37 = vld [vmem:[%s1 + $0x10] sm:$0xff]
  %v38 = vld [vmem:[%s1 + $0x18] sm:$0xff]
  %v39 = vld [vmem:[%s1 + $0x20] sm:$0xff]
  %v40 = vld [vmem:[%s1 + $0x28] sm:$0xff]
  %v41 = vld [vmem:[%s1 + $0x30] sm:$0xff]
  %v42 = vld [vmem:[%s1 + $0x38] sm:$0xff]
  %v43 = vunpack.c.l.bf16 %v35
  %v44 = vunpack.c.h.bf16 %v35
  %v45 = vunpack.c.l.bf16 %v36
  %v46 = vunpack.c.h.bf16 %v36
  %v47 = vunpack.c.l.bf16 %v37
  %v48 = vunpack.c.h.bf16 %v37
  %v49 = vunpack.c.l.bf16 %v38
  %v50 = vunpack.c.h.bf16 %v38
  %v51 = vunpack.c.l.bf16 %v39
  %v52 = vunpack.c.h.bf16 %v39
  %v53 = vunpack.c.l.bf16 %v40
  %v54 = vunpack.c.h.bf16 %v40
  %v55 = vunpack.c.l.bf16 %v41
  %v56 = vunpack.c.h.bf16 %v41
  %v57 = vunpack.c.l.bf16 %v42
  %v58 = vunpack.c.h.bf16 %v42
  %v59 = vsub.f32 %v19, %v43
  %v60 = vsub.f32 %v20, %v44
  %v61 = vsub.f32 %v21, %v45
  %v62 = vsub.f32 %v22, %v46
  %v63 = vsub.f32 %v23, %v47
  %v64 = vsub.f32 %v24, %v48
  %v65 = vsub.f32 %v25, %v49
  %v66 = vsub.f32 %v26, %v50
  %v67 = vsub.f32 %v27, %v51
  %v68 = vsub.f32 %v28, %v52
  %v69 = vsub.f32 %v29, %v53
  %v70 = vsub.f32 %v30, %v54
  %v71 = vsub.f32 %v31, %v55
  %v72 = vsub.f32 %v32, %v56
  %v73 = vsub.f32 %v33, %v57
  %v74 = vsub.f32 %v34, %v58
  %v75 = vand.u32 2147483647, %v59
  %v76 = vand.u32 2147483647, %v60
  %v77 = vand.u32 2147483647, %v61
  %v78 = vand.u32 2147483647, %v62
  %v79 = vand.u32 2147483647, %v63
  %v80 = vand.u32 2147483647, %v64
  %v81 = vand.u32 2147483647, %v65
  %v82 = vand.u32 2147483647, %v66
  %v83 = vand.u32 2147483647, %v67
  %v84 = vand.u32 2147483647, %v68
  %v85 = vand.u32 2147483647, %v69
  %v86 = vand.u32 2147483647, %v70
  %v87 = vand.u32 2147483647, %v71
  %v88 = vand.u32 2147483647, %v72
  %v89 = vand.u32 2147483647, %v73
  %v90 = vand.u32 2147483647, %v74
  %v107 = vcombine.high %v75, %v75
  %v109 = vunpack.c.l.s4 1983009808
  %v110 = vunpack.c.0.s8 %v109
  %v111 = vlaneseq
  %v112 = vshrl.u32 %v111, 7
  %v113 = vsub.s32 %v110, %v112
  %v114 = vrot.slane %v75, %v113
  %v116 = vunpack.c.l.s4 1983009808
  %v117 = vunpack.c.0.s8 %v116
  %v118 = vlaneseq
  %v119 = vshrl.u32 %v118, 7
  %v120 = vsub.s32 %v117, %v119
  %v121 = vrot.slane %v107, %v120
  %v122 = vcombine.high %v114, %v114
  %v123 = vcombine.high %v121, %v121
  %v124 = vcombine.high %v76, %v76
  %v126 = vunpack.c.l.s4 1983009808
  %v127 = vunpack.c.0.s8 %v126
  %v128 = vlaneseq
  %v129 = vshrl.u32 %v128, 7
  %v130 = vsub.s32 %v127, %v129
  %v131 = vrot.slane %v76, %v130
  %v133 = vunpack.c.l.s4 1983009808
  %v134 = vunpack.c.0.s8 %v133
  %v135 = vlaneseq
  %v136 = vshrl.u32 %v135, 7
  %v137 = vsub.s32 %v134, %v136
  %v138 = vrot.slane %v124, %v137
  %v139 = vcombine.high %v131, %v131
  %v140 = vcombine.high %v138, %v138
  %v141 = vcombine.high %v77, %v77
  %v143 = vunpack.c.l.s4 1983009808
  %v144 = vunpack.c.0.s8 %v143
  %v145 = vlaneseq
  %v146 = vshrl.u32 %v145, 7
  %v147 = vsub.s32 %v144, %v146
  %v148 = vrot.slane %v77, %v147
  %v150 = vunpack.c.l.s4 1983009808
  %v151 = vunpack.c.0.s8 %v150
  %v152 = vlaneseq
  %v153 = vshrl.u32 %v152, 7
  %v154 = vsub.s32 %v151, %v153
  %v155 = vrot.slane %v141, %v154
  %v156 = vcombine.high %v148, %v148
  %v157 = vcombine.high %v155, %v155
  %v158 = vcombine.high %v78, %v78
  %v160 = vunpack.c.l.s4 1983009808
  %v161 = vunpack.c.0.s8 %v160
  %v162 = vlaneseq
  %v163 = vshrl.u32 %v162, 7
  %v164 = vsub.s32 %v161, %v163
  %v165 = vrot.slane %v78, %v164
  %v167 = vunpack.c.l.s4 1983009808
  %v168 = vunpack.c.0.s8 %v167
  %v169 = vlaneseq
  %v170 = vshrl.u32 %v169, 7
  %v171 = vsub.s32 %v168, %v170
  %v172 = vrot.slane %v158, %v171
  %v173 = vcombine.high %v165, %v165
  %v174 = vcombine.high %v172, %v172
  %v175 = vcombine.high %v79, %v79
  %v177 = vunpack.c.l.s4 1983009808
  %v178 = vunpack.c.0.s8 %v177
  %v179 = vlaneseq
  %v180 = vshrl.u32 %v179, 7
  %v181 = vsub.s32 %v178, %v180
  %v182 = vrot.slane %v79, %v181
  %v184 = vunpack.c.l.s4 1983009808
  %v185 = vunpack.c.0.s8 %v184
  %v186 = vlaneseq
  %v187 = vshrl.u32 %v186, 7
  %v188 = vsub.s32 %v185, %v187
  %v189 = vrot.slane %v175, %v188
  %v190 = vcombine.high %v182, %v182
  %v191 = vcombine.high %v189, %v189
  %v192 = vcombine.high %v80, %v80
  %v194 = vunpack.c.l.s4 1983009808
  %v195 = vunpack.c.0.s8 %v194
  %v196 = vlaneseq
  %v197 = vshrl.u32 %v196, 7
  %v198 = vsub.s32 %v195, %v197
  %v199 = vrot.slane %v80, %v198
  %v201 = vunpack.c.l.s4 1983009808
  %v202 = vunpack.c.0.s8 %v201
  %v203 = vlaneseq
  %v204 = vshrl.u32 %v203, 7
  %v205 = vsub.s32 %v202, %v204
  %v206 = vrot.slane %v192, %v205
  %v207 = vcombine.high %v199, %v199
  %v208 = vcombine.high %v206, %v206
  %v209 = vcombine.high %v81, %v81
  %v211 = vunpack.c.l.s4 1983009808
  %v212 = vunpack.c.0.s8 %v211
  %v213 = vlaneseq
  %v214 = vshrl.u32 %v213, 7
  %v215 = vsub.s32 %v212, %v214
  %v216 = vrot.slane %v81, %v215
  %v218 = vunpack.c.l.s4 1983009808
  %v219 = vunpack.c.0.s8 %v218
  %v220 = vlaneseq
  %v221 = vshrl.u32 %v220, 7
  %v222 = vsub.s32 %v219, %v221
  %v223 = vrot.slane %v209, %v222
  %v224 = vcombine.high %v216, %v216
  %v225 = vcombine.high %v223, %v223
  %v226 = vcombine.high %v82, %v82
  %v228 = vunpack.c.l.s4 1983009808
  %v229 = vunpack.c.0.s8 %v228
  %v230 = vlaneseq
  %v231 = vshrl.u32 %v230, 7
  %v232 = vsub.s32 %v229, %v231
  %v233 = vrot.slane %v82, %v232
  %v235 = vunpack.c.l.s4 1983009808
  %v236 = vunpack.c.0.s8 %v235
  %v237 = vlaneseq
  %v238 = vshrl.u32 %v237, 7
  %v239 = vsub.s32 %v236, %v238
  %v240 = vrot.slane %v226, %v239
  %v241 = vcombine.high %v233, %v233
  %v242 = vcombine.high %v240, %v240
  %v243 = vcombine.high %v83, %v83
  %v245 = vunpack.c.l.s4 1983009808
  %v246 = vunpack.c.0.s8 %v245
  %v247 = vlaneseq
  %v248 = vshrl.u32 %v247, 7
  %v249 = vsub.s32 %v246, %v248
  %v250 = vrot.slane %v83, %v249
  %v252 = vunpack.c.l.s4 1983009808
  %v253 = vunpack.c.0.s8 %v252
  %v254 = vlaneseq
  %v255 = vshrl.u32 %v254, 7
  %v256 = vsub.s32 %v253, %v255
  %v257 = vrot.slane %v243, %v256
  %v258 = vcombine.high %v250, %v250
  %v259 = vcombine.high %v257, %v257
  %v260 = vcombine.high %v84, %v84
  %v262 = vunpack.c.l.s4 1983009808
  %v263 = vunpack.c.0.s8 %v262
  %v264 = vlaneseq
  %v265 = vshrl.u32 %v264, 7
  %v266 = vsub.s32 %v263, %v265
  %v267 = vrot.slane %v84, %v266
  %v269 = vunpack.c.l.s4 1983009808
  %v270 = vunpack.c.0.s8 %v269
  %v271 = vlaneseq
  %v272 = vshrl.u32 %v271, 7
  %v273 = vsub.s32 %v270, %v272
  %v274 = vrot.slane %v260, %v273
  %v275 = vcombine.high %v267, %v267
  %v276 = vcombine.high %v274, %v274
  %v277 = vcombine.high %v85, %v85
  %v279 = vunpack.c.l.s4 1983009808
  %v280 = vunpack.c.0.s8 %v279
  %v281 = vlaneseq
  %v282 = vshrl.u32 %v281, 7
  %v283 = vsub.s32 %v280, %v282
  %v284 = vrot.slane %v85, %v283
  %v286 = vunpack.c.l.s4 1983009808
  %v287 = vunpack.c.0.s8 %v286
  %v288 = vlaneseq
  %v289 = vshrl.u32 %v288, 7
  %v290 = vsub.s32 %v287, %v289
  %v291 = vrot.slane %v277, %v290
  %v292 = vcombine.high %v284, %v284
  %v293 = vcombine.high %v291, %v291
  %v294 = vcombine.high %v86, %v86
  %v296 = vunpack.c.l.s4 1983009808
  %v297 = vunpack.c.0.s8 %v296
  %v298 = vlaneseq
  %v299 = vshrl.u32 %v298, 7
  %v300 = vsub.s32 %v297, %v299
  %v301 = vrot.slane %v86, %v300
  %v303 = vunpack.c.l.s4 1983009808
  %v304 = vunpack.c.0.s8 %v303
  %v305 = vlaneseq
  %v306 = vshrl.u32 %v305, 7
  %v307 = vsub.s32 %v304, %v306
  %v308 = vrot.slane %v294, %v307
  %v309 = vcombine.high %v301, %v301
  %v310 = vcombine.high %v308, %v308
  %v311 = vcombine.high %v87, %v87
  %v313 = vunpack.c.l.s4 1983009808
  %v314 = vunpack.c.0.s8 %v313
  %v315 = vlaneseq
  %v316 = vshrl.u32 %v315, 7
  %v317 = vsub.s32 %v314, %v316
  %v318 = vrot.slane %v87, %v317
  %v320 = vunpack.c.l.s4 1983009808
  %v321 = vunpack.c.0.s8 %v320
  %v322 = vlaneseq
  %v323 = vshrl.u32 %v322, 7
  %v324 = vsub.s32 %v321, %v323
  %v325 = vrot.slane %v311, %v324
  %v326 = vcombine.high %v318, %v318
  %v327 = vcombine.high %v325, %v325
  %v328 = vcombine.high %v88, %v88
  %v330 = vunpack.c.l.s4 1983009808
  %v331 = vunpack.c.0.s8 %v330
  %v332 = vlaneseq
  %v333 = vshrl.u32 %v332, 7
  %v334 = vsub.s32 %v331, %v333
  %v335 = vrot.slane %v88, %v334
  %v337 = vunpack.c.l.s4 1983009808
  %v338 = vunpack.c.0.s8 %v337
  %v339 = vlaneseq
  %v340 = vshrl.u32 %v339, 7
  %v341 = vsub.s32 %v338, %v340
  %v342 = vrot.slane %v328, %v341
  %v343 = vcombine.high %v335, %v335
  %v344 = vcombine.high %v342, %v342
  %v345 = vcombine.high %v89, %v89
  %v347 = vunpack.c.l.s4 1983009808
  %v348 = vunpack.c.0.s8 %v347
  %v349 = vlaneseq
  %v350 = vshrl.u32 %v349, 7
  %v351 = vsub.s32 %v348, %v350
  %v352 = vrot.slane %v89, %v351
  %v354 = vunpack.c.l.s4 1983009808
  %v355 = vunpack.c.0.s8 %v354
  %v356 = vlaneseq
  %v357 = vshrl.u32 %v356, 7
  %v358 = vsub.s32 %v355, %v357
  %v359 = vrot.slane %v345, %v358
  %v360 = vcombine.high %v352, %v352
  %v361 = vcombine.high %v359, %v359
  %v362 = vcombine.high %v90, %v90
  %v364 = vunpack.c.l.s4 1983009808
  %v365 = vunpack.c.0.s8 %v364
  %v366 = vlaneseq
  %v367 = vshrl.u32 %v366, 7
  %v368 = vsub.s32 %v365, %v367
  %v369 = vrot.slane %v90, %v368
  %v371 = vunpack.c.l.s4 1983009808
  %v372 = vunpack.c.0.s8 %v371
  %v373 = vlaneseq
  %v374 = vshrl.u32 %v373, 7
  %v375 = vsub.s32 %v372, %v374
  %v376 = vrot.slane %v362, %v375
  %v377 = vcombine.high %v369, %v369
  %v378 = vcombine.high %v376, %v376
  %vm443 = vcmask 1041408
  %v444 = vsel %vm443, %v114, 0.0
  %v445 = vsel %vm443, %v122, 0.0
  %v446 = vadd.f32 %v444, %v445
  %v447 = vsel %vm443, %v121, 0.0
  %v448 = vadd.f32 %v446, %v447
  %v449 = vsel %vm443, %v123, 0.0
  %v450 = vadd.f32 %v448, %v449
  %v451 = vsel %vm443, %v131, 0.0
  %v452 = vadd.f32 %v450, %v451
  %v453 = vsel %vm443, %v139, 0.0
  %v454 = vadd.f32 %v452, %v453
  %v455 = vsel %vm443, %v138, 0.0
  %v456 = vadd.f32 %v454, %v455
  %v457 = vsel %vm443, %v140, 0.0
  %v458 = vadd.f32 %v456, %v457
  %v459 = vsel %vm443, %v148, 0.0
  %v460 = vadd.f32 %v458, %v459
  %v461 = vsel %vm443, %v156, 0.0
  %v462 = vadd.f32 %v460, %v461
  %v463 = vsel %vm443, %v155, 0.0
  %v464 = vadd.f32 %v462, %v463
  %v465 = vsel %vm443, %v157, 0.0
  %v466 = vadd.f32 %v464, %v465
  %v467 = vsel %vm443, %v165, 0.0
  %v468 = vadd.f32 %v466, %v467
  %v469 = vsel %vm443, %v173, 0.0
  %v470 = vadd.f32 %v468, %v469
  %v471 = vsel %vm443, %v172, 0.0
  %v472 = vadd.f32 %v470, %v471
  %v473 = vsel %vm443, %v174, 0.0
  %v474 = vadd.f32 %v472, %v473
  %v475 = vsel %vm443, %v182, 0.0
  %v476 = vadd.f32 %v474, %v475
  %v477 = vsel %vm443, %v190, 0.0
  %v478 = vadd.f32 %v476, %v477
  %v479 = vsel %vm443, %v189, 0.0
  %v480 = vadd.f32 %v478, %v479
  %v481 = vsel %vm443, %v191, 0.0
  %v482 = vadd.f32 %v480, %v481
  %v483 = vsel %vm443, %v199, 0.0
  %v484 = vadd.f32 %v482, %v483
  %v485 = vsel %vm443, %v207, 0.0
  %v486 = vadd.f32 %v484, %v485
  %v487 = vsel %vm443, %v206, 0.0
  %v488 = vadd.f32 %v486, %v487
  %v489 = vsel %vm443, %v208, 0.0
  %v490 = vadd.f32 %v488, %v489
  %v491 = vsel %vm443, %v216, 0.0
  %v492 = vadd.f32 %v490, %v491
  %v493 = vsel %vm443, %v224, 0.0
  %v494 = vadd.f32 %v492, %v493
  %v495 = vsel %vm443, %v223, 0.0
  %v496 = vadd.f32 %v494, %v495
  %v497 = vsel %vm443, %v225, 0.0
  %v498 = vadd.f32 %v496, %v497
  %v499 = vsel %vm443, %v233, 0.0
  %v500 = vadd.f32 %v498, %v499
  %v501 = vsel %vm443, %v241, 0.0
  %v502 = vadd.f32 %v500, %v501
  %v503 = vsel %vm443, %v240, 0.0
  %v504 = vadd.f32 %v502, %v503
  %v505 = vsel %vm443, %v242, 0.0
  %v506 = vadd.f32 %v504, %v505
  %v507 = vsel %vm443, %v250, 0.0
  %v508 = vadd.f32 %v506, %v507
  %v509 = vsel %vm443, %v258, 0.0
  %v510 = vadd.f32 %v508, %v509
  %v511 = vsel %vm443, %v257, 0.0
  %v512 = vadd.f32 %v510, %v511
  %v513 = vsel %vm443, %v259, 0.0
  %v514 = vadd.f32 %v512, %v513
  %v515 = vsel %vm443, %v267, 0.0
  %v516 = vadd.f32 %v514, %v515
  %v517 = vsel %vm443, %v275, 0.0
  %v518 = vadd.f32 %v516, %v517
  %v519 = vsel %vm443, %v274, 0.0
  %v520 = vadd.f32 %v518, %v519
  %v521 = vsel %vm443, %v276, 0.0
  %v522 = vadd.f32 %v520, %v521
  %v523 = vsel %vm443, %v284, 0.0
  %v524 = vadd.f32 %v522, %v523
  %v525 = vsel %vm443, %v292, 0.0
  %v526 = vadd.f32 %v524, %v525
  %v527 = vsel %vm443, %v291, 0.0
  %v528 = vadd.f32 %v526, %v527
  %v529 = vsel %vm443, %v293, 0.0
  %v530 = vadd.f32 %v528, %v529
  %v531 = vsel %vm443, %v301, 0.0
  %v532 = vadd.f32 %v530, %v531
  %v533 = vsel %vm443, %v309, 0.0
  %v534 = vadd.f32 %v532, %v533
  %v535 = vsel %vm443, %v308, 0.0
  %v536 = vadd.f32 %v534, %v535
  %v537 = vsel %vm443, %v310, 0.0
  %v538 = vadd.f32 %v536, %v537
  %v539 = vsel %vm443, %v318, 0.0
  %v540 = vadd.f32 %v538, %v539
  %v541 = vsel %vm443, %v326, 0.0
  %v542 = vadd.f32 %v540, %v541
  %v543 = vsel %vm443, %v325, 0.0
  %v544 = vadd.f32 %v542, %v543
  %v545 = vsel %vm443, %v327, 0.0
  %v546 = vadd.f32 %v544, %v545
  %v547 = vsel %vm443, %v335, 0.0
  %v548 = vadd.f32 %v546, %v547
  %v549 = vsel %vm443, %v343, 0.0
  %v550 = vadd.f32 %v548, %v549
  %v551 = vsel %vm443, %v342, 0.0
  %v552 = vadd.f32 %v550, %v551
  %v553 = vsel %vm443, %v344, 0.0
  %v554 = vadd.f32 %v552, %v553
  %v555 = vsel %vm443, %v352, 0.0
  %v556 = vadd.f32 %v554, %v555
  %v557 = vsel %vm443, %v360, 0.0
  %v558 = vadd.f32 %v556, %v557
  %v559 = vsel %vm443, %v359, 0.0
  %v560 = vadd.f32 %v558, %v559
  %v561 = vsel %vm443, %v361, 0.0
  %v562 = vadd.f32 %v560, %v561
  %v563 = vsel %vm443, %v369, 0.0
  %v564 = vadd.f32 %v562, %v563
  %v565 = vsel %vm443, %v377, 0.0
  %v566 = vadd.f32 %v564, %v565
  %v567 = vsel %vm443, %v376, 0.0
  %v568 = vadd.f32 %v566, %v567
  %v569 = vsel %vm443, %v378, 0.0
  %v570 = vadd.f32 %v568, %v569
  %571 = vadd.xlane.f32.xlu0 %v570
  %v572 = vpop.xlane.xlu0 %571
  %p573 = scmp.eq.s32.totalorder 0, 0
  // Predicated region
  $region10: #{vgg_distance.29} parent=0 // pred_check
    %p574 = pneg %p573
  $region11: #{vgg_distance.29} parent=0 // pred_check_branch
    %576 = sbr.rel (%p574) target = $region13
  $region12: #{vgg_distance.29} parent=0 // pred_region
    %vm577 = vcmask 1024
    %578 = vst.msk [vmem:[%s2] sm:$0x3] %vm577, 0.0
  $region13: #{vgg_distance.29} parent=0 // pred_fallthru
    _
  %v579 = vld [vmem:[%s2] sm:$0x3]
  %v580 = vadd.f32 %v579, %v572
  %vm581 = vcmask 1024
  %582 = vst.msk [vmem:[%s2] sm:$0x3] %vm581, %v580
  // Predicated region
  $region14: #{vgg_distance.29} parent=0 // pred_check
    %p583 = pneg %p573
  $region15: #{vgg_distance.29} parent=0 // pred_check_branch
    %585 = sbr.rel (%p583) target = $region17
  $region16: #{vgg_distance.29} parent=0 // pred_region
    %v586 = vld [vmem:[%s2] sm:$0x3]
    %v587 = vmul.f32 %v586, 0.00012207031
    %588 = vst.msk [vmem:[%s2] sm:$0x3] %vm581, %v587
  $region17: #{vgg_distance.29} parent=0 // pred_fallthru
    _
  // Predicated region
  $region18: #{vgg_distance.29} parent=0 // pred_check
    _
  $region19: #{vgg_distance.29} parent=0 // pred_check_branch
    %590 = sbr.rel (0) target = $region21
  $region20: #{vgg_distance.29} parent=0 // pred_region
    _
  $region21: #{vgg_distance.29} parent=0 // pred_fallthru
    _
  // Predicated region
  $region22: #{vgg_distance.29} parent=0 // pred_check
    _
  $region23: #{vgg_distance.29} parent=0 // pred_check_branch
    %592 = sbr.rel (0) target = $region25
  $region24: #{vgg_distance.29} parent=0 // pred_region
    _
  $region25: #{vgg_distance.29} parent=0 // pred_fallthru
    _

// kernel: vgg_distance.26
$region0: #{vgg_distance.26}
  #allocation0 [shape = 'u32[]', space=smem, size = 0x4, offset = 0x4, fixed_abs, tag = 'smem constant byte address 0x4 - core index']
  #allocation1 [shape = 'u32[144,128]{1,0:T(1,128)}', space=vmem, size = 0x12000, scoped, tag = 'internal scratch']
  #allocation2 [shape = 'f32[64,128]{1,0:T(8,128)}', space=vmem, size = 0x8000, scoped, tag = 'scratch operand']
  %s0 = inlined_call_operand.vmem [shape: bf16[2,10,10,128], index: 0, kind: input, shape index: {}]
  %s1 = inlined_call_operand.vmem [shape: bf16[3,384,128], index: 1, kind: input, shape index: {}]
  %s2 = inlined_call_operand.vmem [shape: f32[1,128], index: 2, kind: input, shape index: {}]
  %s3 = inlined_call_operand.vmem [shape: bf16[2,8,8,128], index: 3, kind: output, shape index: {}]
  %s4 = sld [smem:[#allocation0]]
  $region45: #{vgg_distance.26} parent=0
    _
  %s6 = ssub.s32 1, %s4
  %s7 = scalar_select 0, %s6, %s4
  loop: start=0, step=1, limit=4
  $region2: #{vgg_distance.26} parent=0 // loop_pre_header
    _
  $region3: #{vgg_distance.26} parent=0 // loop_header
    %s9 = sphi 0, %s13
    %p10 = scmp.ge.s32.totalorder %s9, 4
    %s16 = sphi 0, %s35
    %s17 = sphi 0, %s31
    %s18 = sphi 0, %s27
    %s19 = sphi 0, %s16
    %s20 = sphi 0, %s17
    %s21 = sphi 0, %s18
    %s22 = sphi 0, %s19
    %s23 = sphi 0, %s20
    %s24 = sphi 0, %s21
    %s38 = sphi 0, %s40
    %s41 = sphi 0, %s38
    %s42 = sphi 0, %s41
    %s58 = sphi 0, %s42
    %s64 = sphi 0, %s66
    %s67 = sphi 0, %s64
    %s68 = sphi 0, %s67
    %s84 = sphi 0, %s68
    %s90 = sphi 0, %s92
    %s93 = sphi 0, %s90
    %s94 = sphi 0, %s93
    %s110 = sphi 0, %s94
    %s120 = sphi 0, %s122
    %s123 = sphi 0, %s120
    %s124 = sphi 0, %s123
    %s140 = sphi 0, %s124
  $region4: #{vgg_distance.26} parent=0 // loop_header_branch
    %12 = sbr.rel (%p10) target = $region8
  $region5: #{vgg_distance.26} parent=0 // loop_body
    %s14 = ssub.s32 %s9, 1
    %s15 = ssub.s32 %s9, 2
    %s25 = sadd.s32 1, %s18
    %p26 = scmp.ge.s32.totalorder %s25, 1
    %s27 = scalar_select %p26, 0, %s25
    %s28 = sadd.s32 1, %s17
    %s29 = scalar_select %p26, %s28, %s17
    %p30 = scmp.ge.s32.totalorder %s29, 1
    %s31 = scalar_select %p30, 0, %s29
    %s32 = sadd.s32 1, %s16
    %s33 = scalar_select %p30, %s32, %s16
    %p34 = scmp.ge.s32.totalorder %s33, 2
    %s35 = scalar_select %p34, 0, %s33
    %s36 = ssub.s32 %s16, %s35
    %p37 = scmp.eq.s32.totalorder %s36, 0
    %s39 = sadd.s32 %s38, 1
    %s40 = scalar_select %p37, %s38, %s39
    %p43 = pneg %p37
    %p44 = scmp.eq.s32.totalorder %s9, 1
    %p45 = por %p43, %p44
    %p46 = scmp.ne.s32.totalorder %s38, %s41
    %p47 = scmp.eq.s32.totalorder %s9, 0
    %p48 = por %p46, %p47
    %p49 = scmp.ne.s32.totalorder %s38, %s41
    %p50 = scmp.eq.s32.totalorder %s14, 1
    %p51 = por %p49, %p50
    %p52 = scmp.ne.s32.totalorder %s41, %s42
    %p53 = scmp.eq.s32.totalorder %s14, 0
    %p54 = por %p52, %p53
    %p55 = scmp.ne.s32.totalorder %s41, %s42
    %p56 = scmp.eq.s32.totalorder %s15, 1
    %p57 = por %p55, %p56
    %p59 = scmp.ne.s32.totalorder %s42, %s58
    %p60 = scmp.eq.s32.totalorder %s15, 0
    %p61 = por %p59, %p60
    %s62 = ssub.s32 %s18, %s27
    %p63 = scmp.eq.s32.totalorder %s62, 0
    %s65 = sadd.s32 %s64, 1
    %s66 = scalar_select %p63, %s64, %s65
    %p69 = pneg %p63
    %p70 = scmp.eq.s32.totalorder %s9, 1
    %p71 = por %p69, %p70
    %p72 = scmp.ne.s32.totalorder %s64, %s67
    %p73 = scmp.eq.s32.totalorder %s9, 0
    %p74 = por %p72, %p73
    %p75 = scmp.ne.s32.totalorder %s64, %s67
    %p76 = scmp.eq.s32.totalorder %s14, 1
    %p77 = por %p75, %p76
    %p78 = scmp.ne.s32.totalorder %s67, %s68
    %p79 = scmp.eq.s32.totalorder %s14, 0
    %p80 = por %p78, %p79
    %p81 = scmp.ne.s32.totalorder %s67, %s68
    %p82 = scmp.eq.s32.totalorder %s15, 1
    %p83 = por %p81, %p82
    %p85 = scmp.ne.s32.totalorder %s68, %s84
    %p86 = scmp.eq.s32.totalorder %s15, 0
    %p87 = por %p85, %p86
    %s88 = ssub.s32 %s18, %s27
    %p89 = scmp.eq.s32.totalorder %s88, 0
    %s91 = sadd.s32 %s90, 1
    %s92 = scalar_select %p89, %s90, %s91
    %p95 = pneg %p89
    %p96 = scmp.eq.s32.totalorder %s9, 1
    %p97 = por %p95, %p96
    %p98 = scmp.ne.s32.totalorder %s90, %s93
    %p99 = scmp.eq.s32.totalorder %s9, 0
    %p100 = por %p98, %p99
    %p101 = scmp.ne.s32.totalorder %s90, %s93
    %p102 = scmp.eq.s32.totalorder %s14, 1
    %p103 = por %p101, %p102
    %p104 = scmp.ne.s32.totalorder %s93, %s94
    %p105 = scmp.eq.s32.totalorder %s14, 0
    %p106 = por %p104, %p105
    %p107 = scmp.ne.s32.totalorder %s93, %s94
    %p108 = scmp.eq.s32.totalorder %s15, 1
    %p109 = por %p107, %p108
    %p111 = scmp.ne.s32.totalorder %s94, %s110
    %p112 = scmp.eq.s32.totalorder %s15, 0
    %p113 = por %p111, %p112
    %s114 = ssub.s32 %s16, %s35
    %s115 = ssub.s32 %s17, %s31
    %s116 = sor.u32 %s114, %s115
    %s117 = ssub.s32 %s18, %s27
    %s118 = sor.u32 %s116, %s117
    %p119 = scmp.eq.s32.totalorder %s118, 0
    %s121 = sadd.s32 %s120, 1
    %s122 = scalar_select %p119, %s120, %s121
    %p125 = pneg %p119
    %p126 = scmp.eq.s32.totalorder %s9, 1
    %p127 = por %p125, %p126
    %p128 = scmp.ne.s32.totalorder %s120, %s123
    %p129 = scmp.eq.s32.totalorder %s9, 0
    %p130 = por %p128, %p129
    %p131 = scmp.ne.s32.totalorder %s120, %s123
    %p132 = scmp.eq.s32.totalorder %s14, 1
    %p133 = por %p131, %p132
    %p134 = scmp.ne.s32.totalorder %s123, %s124
    %p135 = scmp.eq.s32.totalorder %s14, 0
    %p136 = por %p134, %p135
    %p137 = scmp.ne.s32.totalorder %s123, %s124
    %p138 = scmp.eq.s32.totalorder %s15, 1
    %p139 = por %p137, %p138
    %p141 = scmp.ne.s32.totalorder %s124, %s140
    %p142 = scmp.eq.s32.totalorder %s15, 0
    %p143 = por %p141, %p142
    %p144 = scmp.le.s32.totalorder 1, %s9
    %p145 = scmp.lt.s32.totalorder %s9, 3
    %p146 = pnand %p144, %p145
    %p147 = pneg %p146
    // Predicated region
    $region9: #{vgg_distance.26} parent=5 // pred_check
      _
    $region10: #{vgg_distance.26} parent=5 // pred_check_branch
      %149 = sbr.rel (%p146) target = $region12
    $region11: #{vgg_distance.26} parent=5 // pred_region
      %s150 = ssub.s32 %s9, 1
      // Predicated region
      $region13: #{vgg_distance.26} parent=11 // pred_check
        %p151 = pneg %p80
      $region14: #{vgg_distance.26} parent=11 // pred_check_branch
        %153 = sbr.rel (%p151) target = $region16
      $region15: #{vgg_distance.26} parent=11 // pred_region
        %p154 = scmp.lt.s32.totalorder %s21, 0
        %s155 = scalar_select %p154, %s21, 0
        %s156 = smul.addr %s155, 4
        %s157 = scalar_lea.vmem %s1, %s156
      $region16: #{vgg_distance.26} parent=11 // pred_fallthru
        _
      // Predicated region
      $region17: #{vgg_distance.26} parent=11 // pred_check
        %p158 = pneg %p106
      $region18: #{vgg_distance.26} parent=11 // pred_check_branch
        %160 = sbr.rel (%p158) target = $region20
      $region19: #{vgg_distance.26} parent=11 // pred_region
        %p161 = scmp.lt.s32.totalorder %s21, 0
        %s162 = scalar_select %p161, %s21, 0
        %s163 = scalar_lea.vmem %s2, %s162
      $region20: #{vgg_distance.26} parent=11 // pred_fallthru
        _
    $region12: #{vgg_distance.26} parent=5 // pred_fallthru
      _
    %p164 = scmp.lt.s32.totalorder %s9, 2
    // Predicated region
    $region21: #{vgg_distance.26} parent=5 // pred_check
      %p165 = pneg %p164
    $region22: #{vgg_distance.26} parent=5 // pred_check_branch
      %167 = sbr.rel (%p165) target = $region24
    $region23: #{vgg_distance.26} parent=5 // pred_region
      // Predicated region
      $region25: #{vgg_distance.26} parent=23 // pred_check
        %p168 = pneg %p48
      $region26: #{vgg_distance.26} parent=23 // pred_check_branch
        %170 = sbr.rel (%p168) target = $region28
      $region27: #{vgg_distance.26} parent=23 // pred_region
        %p171 = scmp.lt.s32.totalorder %s16, 1
        %s172 = scalar_select %p171, %s16, 1
        %s173 = smul.addr %s172, 20
        %s174 = smul.addr %s173, 4
        %s175 = scalar_lea.vmem %s0, %s174
      $region28: #{vgg_distance.26} parent=23 // pred_fallthru
        _
    $region24: #{vgg_distance.26} parent=5 // pred_fallthru
      _
    %p176 = scmp.le.s32.totalorder 1, %s9
    %p177 = scmp.lt.s32.totalorder %s9, 3
    %p178 = pnand %p176, %p177
    %p179 = pneg %p178
    // Predicated region
    $region29: #{vgg_distance.26} parent=5 // pred_check
      _
    $region30: #{vgg_distance.26} parent=5 // pred_check_branch
      %181 = sbr.rel (%p178) target = $region32
    $region31: #{vgg_distance.26} parent=5 // pred_region
      %s182 = ssub.s32 %s9, 1
      %p183 = scmp.lt.s32.totalorder %s19, 1
      %s184 = scalar_select %p183, %s19, 1
      %s185 = smul.addr %s184, 20
      %s186 = smul.addr %s185, 4
      %s187 = scalar_lea.vmem %s0, %s186
      %p188 = pneg %p54
      %p189 = pneg %p51
      %p190 = scmp.lt.s32.totalorder %s21, 0
      %s191 = scalar_select %p190, %s21, 0
      %s192 = smul.addr %s191, 4
      %s193 = scalar_lea.vmem %s1, %s192
      %p194 = pneg %p80
      %p195 = pneg %p77
      %p196 = scmp.lt.s32.totalorder %s21, 0
      %s197 = scalar_select %p196, %s21, 0
      %s198 = scalar_lea.vmem %s2, %s197
      %p199 = pneg %p106
      %p200 = pneg %p103
      %p201 = pneg %p136
      %p202 = pneg %p133
      %s203 = smul.u32 8, %s20
      %p204 = scmp.lt.s32.totalorder %s19, 1
      %s205 = scalar_select %p204, %s19, 1
      %p206 = scmp.lt.s32.totalorder %s203, 7
      %s207 = scalar_select %p206, %s203, 7
      %p208 = scmp.lt.s32.totalorder %s21, 0
      %s209 = scalar_select %p208, %s21, 0
      %s210 = sadd.s32 %s209, %s207
      %s211 = smul.addr %s205, 8
      %s212 = sadd.s32 %s210, %s211
      %s213 = smul.addr %s212, 4
      %s214 = scalar_lea.vmem %s3, %s213
      %p215 = scmp.lt.s32.totalorder %s19, 1
      %s216 = scalar_select %p215, %s19, 1
      %s217 = smul.addr %s216, 20
      %s218 = smul.addr %s217, 4
      %s219 = scalar_lea.vmem %s0, %s218
      %p220 = scmp.lt.s32.totalorder %s21, 0
      %s221 = scalar_select %p220, %s21, 0
      %s222 = smul.addr %s221, 4
      %s223 = scalar_lea.vmem %s1, %s222
      %p224 = scmp.lt.s32.totalorder %s21, 0
      %s225 = scalar_select %p224, %s21, 0
      %s226 = scalar_lea.vmem %s2, %s225
      %s227 = smul.u32 8, %s20
      %p228 = scmp.lt.s32.totalorder %s19, 1
      %s229 = scalar_select %p228, %s19, 1
      %p230 = scmp.lt.s32.totalorder %s227, 7
      %s231 = scalar_select %p230, %s227, 7
      %p232 = scmp.lt.s32.totalorder %s21, 0
      %s233 = scalar_select %p232, %s21, 0
      %s234 = sadd.s32 %s233, %s231
      %s235 = smul.addr %s229, 8
      %s236 = sadd.s32 %s234, %s235
      %s237 = smul.addr %s236, 4
      %s238 = scalar_lea.vmem %s3, %s237
      %s239 = smul.u32 8, %s20
      %s241 = smul.u32 %s20, 8
      %s242 = smul.u32 %s241, 2
      %s243 = smul.addr %s242, 4
      %s244 = scalar_lea.vmem %s219, %s243
      %v245 = vld [vmem:[%s244] sm:$0xf]
      %v246 = vld [vmem:[%s244 + $0x4] sm:$0x1]
      %v247 = vld [vmem:[%s244 + $0x8] sm:$0xf]
      %v248 = vld [vmem:[%s244 + $0xc] sm:$0x1]
      %v249 = vld [vmem:[%s244 + $0x10] sm:$0xf]
      %v250 = vld [vmem:[%s244 + $0x14] sm:$0x1]
      %v251 = vld [vmem:[%s244 + $0x18] sm:$0xf]
      %v252 = vld [vmem:[%s244 + $0x1c] sm:$0x1]
      %v253 = vld [vmem:[%s244 + $0x20] sm:$0xf]
      %v254 = vld [vmem:[%s244 + $0x24] sm:$0x1]
      %v255 = vld [vmem:[%s244 + $0x28] sm:$0xf]
      %v256 = vld [vmem:[%s244 + $0x2c] sm:$0x1]
      %v257 = vld [vmem:[%s244 + $0x30] sm:$0xf]
      %v258 = vld [vmem:[%s244 + $0x34] sm:$0x1]
      %v259 = vld [vmem:[%s244 + $0x38] sm:$0xf]
      %v260 = vld [vmem:[%s244 + $0x3c] sm:$0x1]
      %v261 = vld [vmem:[%s244 + $0x40] sm:$0xf]
      %v262 = vld [vmem:[%s244 + $0x44] sm:$0x1]
      %v263 = vld [vmem:[%s244 + $0x48] sm:$0xf]
      %v264 = vld [vmem:[%s244 + $0x4c] sm:$0x1]
      %v285 = vunpack.c.l.b16 %v245
      %v286 = vunpack.c.l.b16 %v246
      %v287 = vunpack.c.l.b16 %v247
      %v288 = vunpack.c.l.b16 %v248
      %v289 = vunpack.c.l.b16 %v249
      %v290 = vunpack.c.l.b16 %v250
      %v291 = vunpack.c.l.b16 %v251
      %v292 = vunpack.c.l.b16 %v252
      %v293 = vunpack.c.l.b16 %v253
      %v294 = vunpack.c.l.b16 %v254
      %v295 = vunpack.c.l.b16 %v255
      %v296 = vunpack.c.l.b16 %v256
      %v297 = vunpack.c.l.b16 %v257
      %v298 = vunpack.c.l.b16 %v258
      %v299 = vunpack.c.l.b16 %v259
      %v300 = vunpack.c.l.b16 %v260
      %v301 = vunpack.c.l.b16 %v261
      %v302 = vunpack.c.l.b16 %v262
      %v303 = vunpack.c.l.b16 %v263
      %v304 = vunpack.c.l.b16 %v264
      %v305 = vpack.c.b16 %v286, %v285
      %v306 = vpack.c.b16 %v288, %v287
      %v307 = vpack.c.b16 %v290, %v289
      %v308 = vpack.c.b16 %v292, %v291
      %v309 = vpack.c.b16 %v294, %v293
      %v310 = vpack.c.b16 %v296, %v295
      %v311 = vpack.c.b16 %v298, %v297
      %v312 = vpack.c.b16 %v300, %v299
      %v313 = vpack.c.b16 %v302, %v301
      %v314 = vpack.c.b16 %v304, %v303
      %v316 = vshrl.u32 %v305, 16
      %v318 = vshll.u32 %v305, 16
      %v320 = vrot.slane %v318, 1
      %v321 = vor.u32 %v316, %v320
      %v323 = vshrl.u32 %v306, 16
      %v325 = vshll.u32 %v306, 16
      %v327 = vrot.slane %v325, 1
      %v328 = vor.u32 %v323, %v327
      %v330 = vshrl.u32 %v307, 16
      %v332 = vshll.u32 %v307, 16
      %v334 = vrot.slane %v332, 1
      %v335 = vor.u32 %v330, %v334
      %v337 = vshrl.u32 %v308, 16
      %v339 = vshll.u32 %v308, 16
      %v341 = vrot.slane %v339, 1
      %v342 = vor.u32 %v337, %v341
      %v344 = vshrl.u32 %v309, 16
      %v346 = vshll.u32 %v309, 16
      %v348 = vrot.slane %v346, 1
      %v349 = vor.u32 %v344, %v348
      %v351 = vshrl.u32 %v310, 16
      %v353 = vshll.u32 %v310, 16
      %v355 = vrot.slane %v353, 1
      %v356 = vor.u32 %v351, %v355
      %v358 = vshrl.u32 %v311, 16
      %v360 = vshll.u32 %v311, 16
      %v362 = vrot.slane %v360, 1
      %v363 = vor.u32 %v358, %v362
      %v365 = vshrl.u32 %v312, 16
      %v367 = vshll.u32 %v312, 16
      %v369 = vrot.slane %v367, 1
      %v370 = vor.u32 %v365, %v369
      %v372 = vshrl.u32 %v313, 16
      %v374 = vshll.u32 %v313, 16
      %v376 = vrot.slane %v374, 1
      %v377 = vor.u32 %v372, %v376
      %v379 = vshrl.u32 %v314, 16
      %v381 = vshll.u32 %v314, 16
      %v383 = vrot.slane %v381, 1
      %v384 = vor.u32 %v379, %v383
      %v385 = vrot.slane %v305, 1
      %v386 = vrot.slane %v306, 1
      %v387 = vrot.slane %v307, 1
      %v388 = vrot.slane %v308, 1
      %v389 = vrot.slane %v309, 1
      %v390 = vrot.slane %v310, 1
      %v391 = vrot.slane %v311, 1
      %v392 = vrot.slane %v312, 1
      %v393 = vrot.slane %v313, 1
      %v394 = vrot.slane %v314, 1
      %v395 = vunpack.c.l.b16 %v321
      %v396 = vunpack.c.l.b16 %v385
      %v397 = vunpack.c.l.b16 %v328
      %v398 = vunpack.c.l.b16 %v386
      %v399 = vunpack.c.l.b16 %v335
      %v400 = vunpack.c.l.b16 %v387
      %v401 = vunpack.c.l.b16 %v342
      %v402 = vunpack.c.l.b16 %v388
      %v403 = vunpack.c.l.b16 %v349
      %v404 = vunpack.c.l.b16 %v389
      %v405 = vunpack.c.l.b16 %v356
      %v406 = vunpack.c.l.b16 %v390
      %v407 = vunpack.c.l.b16 %v363
      %v408 = vunpack.c.l.b16 %v391
      %v409 = vunpack.c.l.b16 %v370
      %v410 = vunpack.c.l.b16 %v392
      %v411 = vld [vmem:[%s223] sm:$0xf]
      %v412 = vld [vmem:[%s223 + $0x4] sm:$0xf]
      %v413 = vld [vmem:[%s223 + $0x8] sm:$0xf]
      %v414 = vld [vmem:[%s223 + $0xc] sm:$0xf]
      %v415 = vld [vmem:[%s223 + $0x10] sm:$0xf]
      %v416 = vld [vmem:[%s223 + $0x14] sm:$0xf]
      %v417 = vld [vmem:[%s223 + $0x18] sm:$0xf]
      %v418 = vld [vmem:[%s223 + $0x1c] sm:$0xf]
      %v419 = vld [vmem:[%s223 + $0x20] sm:$0xf]
      %v420 = vld [vmem:[%s223 + $0x24] sm:$0xf]
      %v421 = vld [vmem:[%s223 + $0x28] sm:$0xf]
      %v422 = vld [vmem:[%s223 + $0x2c] sm:$0xf]
      %v423 = vld [vmem:[%s223 + $0x30] sm:$0xf]
      %v424 = vld [vmem:[%s223 + $0x34] sm:$0xf]
      %v425 = vld [vmem:[%s223 + $0x38] sm:$0xf]
      %v426 = vld [vmem:[%s223 + $0x3c] sm:$0xf]
      %v427 = vld [vmem:[%s223 + $0x40] sm:$0xf]
      %v428 = vld [vmem:[%s223 + $0x44] sm:$0xf]
      %v429 = vld [vmem:[%s223 + $0x48] sm:$0xf]
      %v430 = vld [vmem:[%s223 + $0x4c] sm:$0xf]
      %v431 = vld [vmem:[%s223 + $0x50] sm:$0xf]
      %v432 = vld [vmem:[%s223 + $0x54] sm:$0xf]
      %v433 = vld [vmem:[%s223 + $0x58] sm:$0xf]
      %v434 = vld [vmem:[%s223 + $0x5c] sm:$0xf]
      %v435 = vld [vmem:[%s223 + $0x60] sm:$0xf]
      %v436 = vld [vmem:[%s223 + $0x64] sm:$0xf]
      %v437 = vld [vmem:[%s223 + $0x68] sm:$0xf]
      %v438 = vld [vmem:[%s223 + $0x6c] sm:$0xf]
      %v439 = vld [vmem:[%s223 + $0x70] sm:$0xf]
      %v440 = vld [vmem:[%s223 + $0x74] sm:$0xf]
      %v441 = vld [vmem:[%s223 + $0x78] sm:$0xf]
      %v442 = vld [vmem:[%s223 + $0x7c] sm:$0xf]
      %v443 = vld [vmem:[%s223 + $0x80] sm:$0xf]
      %v444 = vld [vmem:[%s223 + $0x84] sm:$0xf]
      %v445 = vld [vmem:[%s223 + $0x88] sm:$0xf]
      %v446 = vld [vmem:[%s223 + $0x8c] sm:$0xf]
      %v447 = vld [vmem:[%s223 + $0x90] sm:$0xf]
      %v448 = vld [vmem:[%s223 + $0x94] sm:$0xf]
      %v449 = vld [vmem:[%s223 + $0x98] sm:$0xf]
      %v450 = vld [vmem:[%s223 + $0x9c] sm:$0xf]
      %v451 = vld [vmem:[%s223 + $0xa0] sm:$0xf]
      %v452 = vld [vmem:[%s223 + $0xa4] sm:$0xf]
      %v453 = vld [vmem:[%s223 + $0xa8] sm:$0xf]
      %v454 = vld [vmem:[%s223 + $0xac] sm:$0xf]
      %v455 = vld [vmem:[%s223 + $0xb0] sm:$0xf]
      %v456 = vld [vmem:[%s223 + $0xb4] sm:$0xf]
      %v457 = vld [vmem:[%s223 + $0xb8] sm:$0xf]
      %v458 = vld [vmem:[%s223 + $0xbc] sm:$0xf]
      %v459 = vpack.c.b16 %v287, %v285
      %v460 = vpack.c.b16 %v397, %v395
      %v461 = vpack.c.b16 %v398, %v396
      %v462 = vpack.c.b16 %v291, %v289
      %v463 = vpack.c.b16 %v401, %v399
      %v464 = vpack.c.b16 %v402, %v400
      %v465 = vpack.c.b16 %v295, %v293
      %v466 = vpack.c.b16 %v405, %v403
      %v467 = vpack.c.b16 %v406, %v404
      %v468 = vpack.c.b16 %v299, %v297
      %v469 = vpack.c.b16 %v409, %v407
      %v470 = vpack.c.b16 %v410, %v408
      %v531 = vunpack.c.l.b16 %v411
      %v532 = vunpack.c.l.b16 %v412
      %v533 = vunpack.c.l.b16 %v413
      %v534 = vunpack.c.l.b16 %v414
      %v535 = vunpack.c.l.b16 %v415
      %v536 = vunpack.c.l.b16 %v416
      %v537 = vunpack.c.l.b16 %v417
      %v538 = vunpack.c.l.b16 %v418
      %v539 = vunpack.c.l.b16 %v419
      %v540 = vunpack.c.l.b16 %v420
      %v541 = vunpack.c.l.b16 %v421
      %v542 = vunpack.c.l.b16 %v422
      %v543 = vunpack.c.l.b16 %v423
      %v544 = vunpack.c.l.b16 %v424
      %v545 = vunpack.c.l.b16 %v425
      %v546 = vunpack.c.l.b16 %v426
      %v547 = vunpack.c.l.b16 %v427
      %v548 = vunpack.c.l.b16 %v428
      %v549 = vunpack.c.l.b16 %v429
      %v550 = vunpack.c.l.b16 %v430
      %v551 = vunpack.c.l.b16 %v431
      %v552 = vunpack.c.l.b16 %v432
      %v553 = vunpack.c.l.b16 %v433
      %v554 = vunpack.c.l.b16 %v434
      %v555 = vunpack.c.l.b16 %v435
      %v556 = vunpack.c.l.b16 %v436
      %v557 = vunpack.c.l.b16 %v437
      %v558 = vunpack.c.l.b16 %v438
      %v559 = vunpack.c.l.b16 %v439
      %v560 = vunpack.c.l.b16 %v440
      %v561 = vunpack.c.l.b16 %v441
      %v562 = vunpack.c.l.b16 %v442
      %v563 = vunpack.c.l.b16 %v443
      %v564 = vunpack.c.l.b16 %v444
      %v565 = vunpack.c.l.b16 %v445
      %v566 = vunpack.c.l.b16 %v446
      %v567 = vunpack.c.l.b16 %v447
      %v568 = vunpack.c.l.b16 %v448
      %v569 = vunpack.c.l.b16 %v449
      %v570 = vunpack.c.l.b16 %v450
      %v571 = vunpack.c.l.b16 %v451
      %v572 = vunpack.c.l.b16 %v452
      %v573 = vunpack.c.l.b16 %v453
      %v574 = vunpack.c.l.b16 %v454
      %v575 = vunpack.c.l.b16 %v455
      %v576 = vunpack.c.l.b16 %v456
      %v577 = vunpack.c.l.b16 %v457
      %v578 = vunpack.c.l.b16 %v458
      %v579 = vpack.c.b16 %v532, %v531
      %v580 = vpack.c.b16 %v534, %v533
      %v581 = vpack.c.b16 %v536, %v535
      %v582 = vpack.c.b16 %v538, %v537
      %v583 = vpack.c.b16 %v540, %v539
      %v584 = vpack.c.b16 %v542, %v541
      %v585 = vpack.c.b16 %v544, %v543
      %v586 = vpack.c.b16 %v546, %v545
      %v587 = vpack.c.b16 %v548, %v547
      %v588 = vpack.c.b16 %v550, %v549
      %v589 = vpack.c.b16 %v552, %v551
      %v590 = vpack.c.b16 %v554, %v553
      %v591 = vpack.c.b16 %v556, %v555
      %v592 = vpack.c.b16 %v558, %v557
      %v593 = vpack.c.b16 %v560, %v559
      %v594 = vpack.c.b16 %v562, %v561
      %v595 = vpack.c.b16 %v564, %v563
      %v596 = vpack.c.b16 %v566, %v565
      %v597 = vpack.c.b16 %v568, %v567
      %v598 = vpack.c.b16 %v570, %v569
      %v599 = vpack.c.b16 %v572, %v571
      %v600 = vpack.c.b16 %v574, %v573
      %v601 = vpack.c.b16 %v576, %v575
      %v602 = vpack.c.b16 %v578, %v577
      %627 = vmatprep.subr.bf16.mxu0 0
      %628 = vmatpush1.bf16.msra.mxu0 %v586
      %629 = vmatprep.subr.bf16.mxu0 0
      %630 = vmatpush1.bf16.msra.mxu0 %v585
      %631 = vmatprep.subr.bf16.mxu0 0
      %632 = vmatpush1.bf16.msra.mxu0 %v584
      %633 = vmatprep.subr.bf16.mxu0 0
      %634 = vmatpush1.bf16.msra.mxu0 %v583
      %635 = vmatprep.subr.bf16.mxu0 0
      %636 = vmatpush1.bf16.msra.mxu0 %v582
      %637 = vmatprep.subr.bf16.mxu0 0
      %638 = vmatpush1.bf16.msra.mxu0 %v581
      %639 = vmatprep.subr.bf16.mxu0 0
      %640 = vmatpush1.bf16.msra.mxu0 %v580
      %641 = vmatprep.subr.bf16.mxu0 0
      %642 = vmatpush1.bf16.msra.mxu0 %v579
      %643 = vmatprep.subr.bf16.mxu0 0
      %644 = vmatpush2.bf16.msra.mxu0 %v594
      %645 = vmatprep.subr.bf16.mxu0 0
      %646 = vmatpush2.bf16.msra.mxu0 %v593
      %647 = vmatprep.subr.bf16.mxu0 0
      %648 = vmatpush2.bf16.msra.mxu0 %v592
      %649 = vmatprep.subr.bf16.mxu0 0
      %650 = vmatpush2.bf16.msra.mxu0 %v591
      %651 = vmatprep.subr.bf16.mxu0 0
      %652 = vmatpush2.bf16.msra.mxu0 %v590
      %653 = vmatprep.subr.bf16.mxu0 0
      %654 = vmatpush2.bf16.msra.mxu0 %v589
      %655 = vmatprep.subr.bf16.mxu0 0
      %656 = vmatpush2.bf16.msra.mxu0 %v588
      %657 = vmatprep.subr.bf16.mxu0 0
      %658 = vmatpush2.bf16.msra.mxu0 %v587
      %659 = vmatprep.mubr.bf16.mxu0 %v460
      %660 = vmatmul.mubr.bf16.gmra.mxu0 %v459
      %v661 = vpop.f32.mrf.mxu0
      %v662 = vadd.f32 0.0, %v661
      %v663 = vpop.f32.mrf.mxu0
      %v664 = vpop.f32.mrf.mxu0
      %v665 = vadd.f32 0.0, %v664
      %v666 = vpop.f32.mrf.mxu0
      %667 = vmatprep.mubr.bf16.mxu0 %v463
      %668 = vmatmul.mubr.bf16.gmra.mxu0 %v462
      %v669 = vpop.f32.mrf.mxu0
      %v670 = vadd.f32 0.0, %v669
      %v671 = vpop.f32.mrf.mxu0
      %v672 = vpop.f32.mrf.mxu0
      %v673 = vadd.f32 0.0, %v672
      %v674 = vpop.f32.mrf.mxu0
      %675 = vmatprep.mubr.bf16.mxu0 %v466
      %676 = vmatmul.mubr.bf16.gmra.mxu0 %v465
      %v677 = vpop.f32.mrf.mxu0
      %v678 = vadd.f32 0.0, %v677
      %v679 = vpop.f32.mrf.mxu0
      %v680 = vpop.f32.mrf.mxu0
      %v681 = vadd.f32 0.0, %v680
      %v682 = vpop.f32.mrf.mxu0
      %683 = vmatprep.mubr.bf16.mxu0 %v469
      %684 = vmatmul.mubr.bf16.gmra.mxu0 %v468
      %v685 = vpop.f32.mrf.mxu0
      %v686 = vadd.f32 0.0, %v685
      %v687 = vpop.f32.mrf.mxu0
      %v688 = vpop.f32.mrf.mxu0
      %v689 = vadd.f32 0.0, %v688
      %v690 = vpop.f32.mrf.mxu0
      %691 = vdwg.mxu0
      %692 = vmatprep.subr.bf16.mxu0 0
      %693 = vmatpush1.bf16.msra.mxu0 %v602
      %694 = vmatprep.subr.bf16.mxu0 0
      %695 = vmatpush1.bf16.msra.mxu0 %v601
      %696 = vmatprep.subr.bf16.mxu0 0
      %697 = vmatpush1.bf16.msra.mxu0 %v600
      %698 = vmatprep.subr.bf16.mxu0 0
      %699 = vmatpush1.bf16.msra.mxu0 %v599
      %700 = vmatprep.subr.bf16.mxu0 0
      %701 = vmatpush1.bf16.msra.mxu0 %v598
      %702 = vmatprep.subr.bf16.mxu0 0
      %703 = vmatpush1.bf16.msra.mxu0 %v597
      %704 = vmatprep.subr.bf16.mxu0 0
      %705 = vmatpush1.bf16.msra.mxu0 %v596
      %706 = vmatprep.subr.bf16.mxu0 0
      %707 = vmatpush1.bf16.msra.mxu0 %v595
      %708 = vmatprep.subr.bf16.mxu0 0
      %709 = vmatpush2.bf16.msra.mxu0 0
      %710 = vmatprep.subr.bf16.mxu0 0
      %711 = vmatpush2.bf16.msra.mxu0 0
      %712 = vmatprep.subr.bf16.mxu0 0
      %713 = vmatpush2.bf16.msra.mxu0 0
      %714 = vmatprep.subr.bf16.mxu0 0
      %715 = vmatpush2.bf16.msra.mxu0 0
      %716 = vmatprep.subr.bf16.mxu0 0
      %717 = vmatpush2.bf16.msra.mxu0 0
      %718 = vmatprep.subr.bf16.mxu0 0
      %719 = vmatpush2.bf16.msra.mxu0 0
      %720 = vmatprep.subr.bf16.mxu0 0
      %721 = vmatpush2.bf16.msra.mxu0 0
      %722 = vmatprep.subr.bf16.mxu0 0
      %723 = vmatpush2.bf16.msra.mxu0 0
      %724 = vmatprep.mubr.bf16.mxu0 0
      %725 = vmatmul.mubr.bf16.gmra.mxu0 %v461
      %v726 = vpop.f32.mrf.mxu0
      %v727 = vadd.f32 %v662, %v726
      %v728 = vpop.f32.mrf.mxu0
      %v729 = vpop.f32.mrf.mxu0
      %v730 = vadd.f32 %v665, %v729
      %v731 = vpop.f32.mrf.mxu0
      %732 = vmatprep.mubr.bf16.mxu0 0
      %733 = vmatmul.mubr.bf16.gmra.mxu0 %v464
      %v734 = vpop.f32.mrf.mxu0
      %v735 = vadd.f32 %v670, %v734
      %v736 = vpop.f32.mrf.mxu0
      %v737 = vpop.f32.mrf.mxu0
      %v738 = vadd.f32 %v673, %v737
      %v739 = vpop.f32.mrf.mxu0
      %740 = vmatprep.mubr.bf16.mxu0 0
      %741 = vmatmul.mubr.bf16.gmra.mxu0 %v467
      %v742 = vpop.f32.mrf.mxu0
      %v743 = vadd.f32 %v678, %v742
      %v744 = vpop.f32.mrf.mxu0
      %v745 = vpop.f32.mrf.mxu0
      %v746 = vadd.f32 %v681, %v745
      %v747 = vpop.f32.mrf.mxu0
      %748 = vmatprep.mubr.bf16.mxu0 0
      %749 = vmatmul.mubr.bf16.gmra.mxu0 %v470
      %v750 = vpop.f32.mrf.mxu0
      %v751 = vadd.f32 %v686, %v750
      %v752 = vpop.f32.mrf.mxu0
      %v753 = vpop.f32.mrf.mxu0
      %v754 = vadd.f32 %v689, %v753
      %v755 = vpop.f32.mrf.mxu0
      %756 = vdwg.mxu0
      %757 = vst [vmem:[#allocation2] sm:$0xff] %v727
      %758 = vst [vmem:[#allocation2 + $0x8] sm:$0xff] %v730
      %759 = vst [vmem:[#allocation2 + $0x10] sm:$0xff] %v735
      %760 = vst [vmem:[#allocation2 + $0x18] sm:$0xff] %v738
      %761 = vst [vmem:[#allocation2 + $0x20] sm:$0xff] %v743
      %762 = vst [vmem:[#allocation2 + $0x28] sm:$0xff] %v746
      %763 = vst [vmem:[#allocation2 + $0x30] sm:$0xff] %v751
      %764 = vst [vmem:[#allocation2 + $0x38] sm:$0xff] %v754
      %v765 = vunpack.c.l.b16 %v377
      %v766 = vunpack.c.l.b16 %v393
      %s767 = scalar_lea.vmem %s223, 192
      %v768 = vld [vmem:[%s767] sm:$0xf]
      %v769 = vld [vmem:[%s767 + $0x4] sm:$0xf]
      %v770 = vld [vmem:[%s767 + $0x8] sm:$0xf]
      %v771 = vld [vmem:[%s767 + $0xc] sm:$0xf]
      %v772 = vld [vmem:[%s767 + $0x10] sm:$0xf]
      %v773 = vld [vmem:[%s767 + $0x14] sm:$0xf]
      %v774 = vld [vmem:[%s767 + $0x18] sm:$0xf]
      %v775 = vld [vmem:[%s767 + $0x1c] sm:$0xf]
      %v776 = vld [vmem:[%s767 + $0x20] sm:$0xf]
      %v777 = vld [vmem:[%s767 + $0x24] sm:$0xf]
      %v778 = vld [vmem:[%s767 + $0x28] sm:$0xf]
      %v779 = vld [vmem:[%s767 + $0x2c] sm:$0xf]
      %v780 = vld [vmem:[%s767 + $0x30] sm:$0xf]
      %v781 = vld [vmem:[%s767 + $0x34] sm:$0xf]
      %v782 = vld [vmem:[%s767 + $0x38] sm:$0xf]
      %v783 = vld [vmem:[%s767 + $0x3c] sm:$0xf]
      %v784 = vld [vmem:[%s767 + $0x40] sm:$0xf]
      %v785 = vld [vmem:[%s767 + $0x44] sm:$0xf]
      %v786 = vld [vmem:[%s767 + $0x48] sm:$0xf]
      %v787 = vld [vmem:[%s767 + $0x4c] sm:$0xf]
      %v788 = vld [vmem:[%s767 + $0x50] sm:$0xf]
      %v789 = vld [vmem:[%s767 + $0x54] sm:$0xf]
      %v790 = vld [vmem:[%s767 + $0x58] sm:$0xf]
      %v791 = vld [vmem:[%s767 + $0x5c] sm:$0xf]
      %v792 = vld [vmem:[%s767 + $0x60] sm:$0xf]
      %v793 = vld [vmem:[%s767 + $0x64] sm:$0xf]
      %v794 = vld [vmem:[%s767 + $0x68] sm:$0xf]
      %v795 = vld [vmem:[%s767 + $0x6c] sm:$0xf]
      %v796 = vld [vmem:[%s767 + $0x70] sm:$0xf]
      %v797 = vld [vmem:[%s767 + $0x74] sm:$0xf]
      %v798 = vld [vmem:[%s767 + $0x78] sm:$0xf]
      %v799 = vld [vmem:[%s767 + $0x7c] sm:$0xf]
      %v800 = vld [vmem:[%s767 + $0x80] sm:$0xf]
      %v801 = vld [vmem:[%s767 + $0x84] sm:$0xf]
      %v802 = vld [vmem:[%s767 + $0x88] sm:$0xf]
      %v803 = vld [vmem:[%s767 + $0x8c] sm:$0xf]
      %v804 = vld [vmem:[%s767 + $0x90] sm:$0xf]
      %v805 = vld [vmem:[%s767 + $0x94] sm:$0xf]
      %v806 = vld [vmem:[%s767 + $0x98] sm:$0xf]
      %v807 = vld [vmem:[%s767 + $0x9c] sm:$0xf]
      %v808 = vld [vmem:[%s767 + $0xa0] sm:$0xf]
      %v809 = vld [vmem:[%s767 + $0xa4] sm:$0xf]
      %v810 = vld [vmem:[%s767 + $0xa8] sm:$0xf]
      %v811 = vld [vmem:[%s767 + $0xac] sm:$0xf]
      %v812 = vld [vmem:[%s767 + $0xb0] sm:$0xf]
      %v813 = vld [vmem:[%s767 + $0xb4] sm:$0xf]
      %v814 = vld [vmem:[%s767 + $0xb8] sm:$0xf]
      %v815 = vld [vmem:[%s767 + $0xbc] sm:$0xf]
      %v816 = vpack.c.b16 %v289, %v287
      %v817 = vpack.c.b16 %v399, %v397
      %v818 = vpack.c.b16 %v400, %v398
      %v819 = vpack.c.b16 %v293, %v291
      %v820 = vpack.c.b16 %v403, %v401
      %v821 = vpack.c.b16 %v404, %v402
      %v822 = vpack.c.b16 %v297, %v295
      %v823 = vpack.c.b16 %v407, %v405
      %v824 = vpack.c.b16 %v408, %v406
      %v825 = vpack.c.b16 %v301, %v299
      %v826 = vpack.c.b16 %v765, %v409
      %v827 = vpack.c.b16 %v766, %v410
      %v888 = vunpack.c.l.b16 %v768
      %v889 = vunpack.c.l.b16 %v769
      %v890 = vunpack.c.l.b16 %v770
      %v891 = vunpack.c.l.b16 %v771
      %v892 = vunpack.c.l.b16 %v772
      %v893 = vunpack.c.l.b16 %v773
      %v894 = vunpack.c.l.b16 %v774
      %v895 = vunpack.c.l.b16 %v775
      %v896 = vunpack.c.l.b16 %v776
      %v897 = vunpack.c.l.b16 %v777
      %v898 = vunpack.c.l.b16 %v778
      %v899 = vunpack.c.l.b16 %v779
      %v900 = vunpack.c.l.b16 %v780
      %v901 = vunpack.c.l.b16 %v781
      %v902 = vunpack.c.l.b16 %v782
      %v903 = vunpack.c.l.b16 %v783
      %v904 = vunpack.c.l.b16 %v784
      %v905 = vunpack.c.l.b16 %v785
      %v906 = vunpack.c.l.b16 %v786
      %v907 = vunpack.c.l.b16 %v787
      %v908 = vunpack.c.l.b16 %v788
      %v909 = vunpack.c.l.b16 %v789
      %v910 = vunpack.c.l.b16 %v790
      %v911 = vunpack.c.l.b16 %v791
      %v912 = vunpack.c.l.b16 %v792
      %v913 = vunpack.c.l.b16 %v793
      %v914 = vunpack.c.l.b16 %v794
      %v915 = vunpack.c.l.b16 %v795
      %v916 = vunpack.c.l.b16 %v796
      %v917 = vunpack.c.l.b16 %v797
      %v918 = vunpack.c.l.b16 %v798
      %v919 = vunpack.c.l.b16 %v799
      %v920 = vunpack.c.l.b16 %v800
      %v921 = vunpack.c.l.b16 %v801
      %v922 = vunpack.c.l.b16 %v802
      %v923 = vunpack.c.l.b16 %v803
      %v924 = vunpack.c.l.b16 %v804
      %v925 = vunpack.c.l.b16 %v805
      %v926 = vunpack.c.l.b16 %v806
      %v927 = vunpack.c.l.b16 %v807
      %v928 = vunpack.c.l.b16 %v808
      %v929 = vunpack.c.l.b16 %v809
      %v930 = vunpack.c.l.b16 %v810
      %v931 = vunpack.c.l.b16 %v811
      %v932 = vunpack.c.l.b16 %v812
      %v933 = vunpack.c.l.b16 %v813
      %v934 = vunpack.c.l.b16 %v814
      %v935 = vunpack.c.l.b16 %v815
      %v936 = vpack.c.b16 %v889, %v888
      %v937 = vpack.c.b16 %v891, %v890
      %v938 = vpack.c.b16 %v893, %v892
      %v939 = vpack.c.b16 %v895, %v894
      %v940 = vpack.c.b16 %v897, %v896
      %v941 = vpack.c.b16 %v899, %v898
      %v942 = vpack.c.b16 %v901, %v900
      %v943 = vpack.c.b16 %v903, %v902
      %v944 = vpack.c.b16 %v905, %v904
      %v945 = vpack.c.b16 %v907, %v906
      %v946 = vpack.c.b16 %v909, %v908
      %v947 = vpack.c.b16 %v911, %v910
      %v948 = vpack.c.b16 %v913, %v912
      %v949 = vpack.c.b16 %v915, %v914
      %v950 = vpack.c.b16 %v917, %v916
      %v951 = vpack.c.b16 %v919, %v918
      %v952 = vpack.c.b16 %v921, %v920
      %v953 = vpack.c.b16 %v923, %v922
      %v954 = vpack.c.b16 %v925, %v924
      %v955 = vpack.c.b16 %v927, %v926
      %v956 = vpack.c.b16 %v929, %v928
      %v957 = vpack.c.b16 %v931, %v930
      %v958 = vpack.c.b16 %v933, %v932
      %v959 = vpack.c.b16 %v935, %v934
      %984 = vmatprep.subr.bf16.mxu0 0
      %985 = vmatpush1.bf16.msra.mxu0 %v943
      %986 = vmatprep.subr.bf16.mxu0 0
      %987 = vmatpush1.bf16.msra.mxu0 %v942
      %988 = vmatprep.subr.bf16.mxu0 0
      %989 = vmatpush1.bf16.msra.mxu0 %v941
      %990 = vmatprep.subr.bf16.mxu0 0
      %991 = vmatpush1.bf16.msra.mxu0 %v940
      %992 = vmatprep.subr.bf16.mxu0 0
      %993 = vmatpush1.bf16.msra.mxu0 %v939
      %994 = vmatprep.subr.bf16.mxu0 0
      %995 = vmatpush1.bf16.msra.mxu0 %v938
      %996 = vmatprep.subr.bf16.mxu0 0
      %997 = vmatpush1.bf16.msra.mxu0 %v937
      %998 = vmatprep.subr.bf16.mxu0 0
      %999 = vmatpush1.bf16.msra.mxu0 %v936
      %1000 = vmatprep.subr.bf16.mxu0 0
      %1001 = vmatpush2.bf16.msra.mxu0 %v951
      %1002 = vmatprep.subr.bf16.mxu0 0
      %1003 = vmatpush2.bf16.msra.mxu0 %v950
      %1004 = vmatprep.subr.bf16.mxu0 0
      %1005 = vmatpush2.bf16.msra.mxu0 %v949
      %1006 = vmatprep.subr.bf16.mxu0 0
      %1007 = vmatpush2.bf16.msra.mxu0 %v948
      %1008 = vmatprep.subr.bf16.mxu0 0
      %1009 = vmatpush2.bf16.msra.mxu0 %v947
      %1010 = vmatprep.subr.bf16.mxu0 0
      %1011 = vmatpush2.bf16.msra.mxu0 %v946
      %1012 = vmatprep.subr.bf16.mxu0 0
      %1013 = vmatpush2.bf16.msra.mxu0 %v945
      %1014 = vmatprep.subr.bf16.mxu0 0
      %1015 = vmatpush2.bf16.msra.mxu0 %v944
      %1016 = vmatprep.mubr.bf16.mxu0 %v817
      %1017 = vmatmul.mubr.bf16.gmra.mxu0 %v816
      %v1018 = vpop.f32.mrf.mxu0
      %v1019 = vadd.f32 0.0, %v1018
      %v1020 = vpop.f32.mrf.mxu0
      %v1021 = vpop.f32.mrf.mxu0
      %v1022 = vadd.f32 0.0, %v1021
      %v1023 = vpop.f32.mrf.mxu0
      %1024 = vmatprep.mubr.bf16.mxu0 %v820
      %1025 = vmatmul.mubr.bf16.gmra.mxu0 %v819
      %v1026 = vpop.f32.mrf.mxu0
      %v1027 = vadd.f32 0.0, %v1026
      %v1028 = vpop.f32.mrf.mxu0
      %v1029 = vpop.f32.mrf.mxu0
      %v1030 = vadd.f32 0.0, %v1029
      %v1031 = vpop.f32.mrf.mxu0
      %1032 = vmatprep.mubr.bf16.mxu0 %v823
      %1033 = vmatmul.mubr.bf16.gmra.mxu0 %v822
      %v1034 = vpop.f32.mrf.mxu0
      %v1035 = vadd.f32 0.0, %v1034
      %v1036 = vpop.f32.mrf.mxu0
      %v1037 = vpop.f32.mrf.mxu0
      %v1038 = vadd.f32 0.0, %v1037
      %v1039 = vpop.f32.mrf.mxu0
      %1040 = vmatprep.mubr.bf16.mxu0 %v826
      %1041 = vmatmul.mubr.bf16.gmra.mxu0 %v825
      %v1042 = vpop.f32.mrf.mxu0
      %v1043 = vadd.f32 0.0, %v1042
      %v1044 = vpop.f32.mrf.mxu0
      %v1045 = vpop.f32.mrf.mxu0
      %v1046 = vadd.f32 0.0, %v1045
      %v1047 = vpop.f32.mrf.mxu0
      %1048 = vdwg.mxu0
      %1049 = vmatprep.subr.bf16.mxu0 0
      %1050 = vmatpush1.bf16.msra.mxu0 %v959
      %1051 = vmatprep.subr.bf16.mxu0 0
      %1052 = vmatpush1.bf16.msra.mxu0 %v958
      %1053 = vmatprep.subr.bf16.mxu0 0
      %1054 = vmatpush1.bf16.msra.mxu0 %v957
      %1055 = vmatprep.subr.bf16.mxu0 0
      %1056 = vmatpush1.bf16.msra.mxu0 %v956
      %1057 = vmatprep.subr.bf16.mxu0 0
      %1058 = vmatpush1.bf16.msra.mxu0 %v955
      %1059 = vmatprep.subr.bf16.mxu0 0
      %1060 = vmatpush1.bf16.msra.mxu0 %v954
      %1061 = vmatprep.subr.bf16.mxu0 0
      %1062 = vmatpush1.bf16.msra.mxu0 %v953
      %1063 = vmatprep.subr.bf16.mxu0 0
      %1064 = vmatpush1.bf16.msra.mxu0 %v952
      %1065 = vmatprep.subr.bf16.mxu0 0
      %1066 = vmatpush2.bf16.msra.mxu0 0
      %1067 = vmatprep.subr.bf16.mxu0 0
      %1068 = vmatpush2.bf16.msra.mxu0 0
      %1069 = vmatprep.subr.bf16.mxu0 0
      %1070 = vmatpush2.bf16.msra.mxu0 0
      %1071 = vmatprep.subr.bf16.mxu0 0
      %1072 = vmatpush2.bf16.msra.mxu0 0
      %1073 = vmatprep.subr.bf16.mxu0 0
      %1074 = vmatpush2.bf16.msra.mxu0 0
      %1075 = vmatprep.subr.bf16.mxu0 0
      %1076 = vmatpush2.bf16.msra.mxu0 0
      %1077 = vmatprep.subr.bf16.mxu0 0
      %1078 = vmatpush2.bf16.msra.mxu0 0
      %1079 = vmatprep.subr.bf16.mxu0 0
      %1080 = vmatpush2.bf16.msra.mxu0 0
      %1081 = vmatprep.mubr.bf16.mxu0 0
      %1082 = vmatmul.mubr.bf16.gmra.mxu0 %v818
      %v1083 = vpop.f32.mrf.mxu0
      %v1084 = vadd.f32 %v1019, %v1083
      %v1085 = vpop.f32.mrf.mxu0
      %v1086 = vpop.f32.mrf.mxu0
      %v1087 = vadd.f32 %v1022, %v1086
      %v1088 = vpop.f32.mrf.mxu0
      %1089 = vmatprep.mubr.bf16.mxu0 0
      %1090 = vmatmul.mubr.bf16.gmra.mxu0 %v821
      %v1091 = vpop.f32.mrf.mxu0
      %v1092 = vadd.f32 %v1027, %v1091
      %v1093 = vpop.f32.mrf.mxu0
      %v1094 = vpop.f32.mrf.mxu0
      %v1095 = vadd.f32 %v1030, %v1094
      %v1096 = vpop.f32.mrf.mxu0
      %1097 = vmatprep.mubr.bf16.mxu0 0
      %1098 = vmatmul.mubr.bf16.gmra.mxu0 %v824
      %v1099 = vpop.f32.mrf.mxu0
      %v1100 = vadd.f32 %v1035, %v1099
      %v1101 = vpop.f32.mrf.mxu0
      %v1102 = vpop.f32.mrf.mxu0
      %v1103 = vadd.f32 %v1038, %v1102
      %v1104 = vpop.f32.mrf.mxu0
      %1105 = vmatprep.mubr.bf16.mxu0 0
      %1106 = vmatmul.mubr.bf16.gmra.mxu0 %v827
      %v1107 = vpop.f32.mrf.mxu0
      %v1108 = vadd.f32 %v1043, %v1107
      %v1109 = vpop.f32.mrf.mxu0
      %v1110 = vpop.f32.mrf.mxu0
      %v1111 = vadd.f32 %v1046, %v1110
      %v1112 = vpop.f32.mrf.mxu0
      %1113 = vdwg.mxu0
      %v1114 = vld [vmem:[#allocation2] sm:$0xff]
      %v1115 = vld [vmem:[#allocation2 + $0x8] sm:$0xff]
      %v1116 = vld [vmem:[#allocation2 + $0x10] sm:$0xff]
      %v1117 = vld [vmem:[#allocation2 + $0x18] sm:$0xff]
      %v1118 = vld [vmem:[#allocation2 + $0x20] sm:$0xff]
      %v1119 = vld [vmem:[#allocation2 + $0x28] sm:$0xff]
      %v1120 = vld [vmem:[#allocation2 + $0x30] sm:$0xff]
      %v1121 = vld [vmem:[#allocation2 + $0x38] sm:$0xff]
      %v1122 = vadd.f32 %v1114, %v1084
      %v1123 = vadd.f32 %v1115, %v1087
      %v1124 = vadd.f32 %v1116, %v1092
      %v1125 = vadd.f32 %v1117, %v1095
      %v1126 = vadd.f32 %v1118, %v1100
      %v1127 = vadd.f32 %v1119, %v1103
      %v1128 = vadd.f32 %v1120, %v1108
      %v1129 = vadd.f32 %v1121, %v1111
      %1130 = vst [vmem:[#allocation2] sm:$0xff] %v1122
      %1131 = vst [vmem:[#allocation2 + $0x8] sm:$0xff] %v1123
      %1132 = vst [vmem:[#allocation2 + $0x10] sm:$0xff] %v1124
      %1133 = vst [vmem:[#allocation2 + $0x18] sm:$0xff] %v1125
      %1134 = vst [vmem:[#allocation2 + $0x20] sm:$0xff] %v1126
      %1135 = vst [vmem:[#allocation2 + $0x28] sm:$0xff] %v1127
      %1136 = vst [vmem:[#allocation2 + $0x30] sm:$0xff] %v1128
      %1137 = vst [vmem:[#allocation2 + $0x38] sm:$0xff] %v1129
      %v1138 = vunpack.c.l.b16 %v384
      %v1139 = vunpack.c.l.b16 %v394
      %s1140 = scalar_lea.vmem %s223, 384
      %v1141 = vld [vmem:[%s1140] sm:$0xf]
      %v1142 = vld [vmem:[%s1140 + $0x4] sm:$0xf]
      %v1143 = vld [vmem:[%s1140 + $0x8] sm:$0xf]
      %v1144 = vld [vmem:[%s1140 + $0xc] sm:$0xf]
      %v1145 = vld [vmem:[%s1140 + $0x10] sm:$0xf]
      %v1146 = vld [vmem:[%s1140 + $0x14] sm:$0xf]
      %v1147 = vld [vmem:[%s1140 + $0x18] sm:$0xf]
      %v1148 = vld [vmem:[%s1140 + $0x1c] sm:$0xf]
      %v1149 = vld [vmem:[%s1140 + $0x20] sm:$0xf]
      %v1150 = vld [vmem:[%s1140 + $0x24] sm:$0xf]
      %v1151 = vld [vmem:[%s1140 + $0x28] sm:$0xf]
      %v1152 = vld [vmem:[%s1140 + $0x2c] sm:$0xf]
      %v1153 = vld [vmem:[%s1140 + $0x30] sm:$0xf]
      %v1154 = vld [vmem:[%s1140 + $0x34] sm:$0xf]
      %v1155 = vld [vmem:[%s1140 + $0x38] sm:$0xf]
      %v1156 = vld [vmem:[%s1140 + $0x3c] sm:$0xf]
      %v1157 = vld [vmem:[%s1140 + $0x40] sm:$0xf]
      %v1158 = vld [vmem:[%s1140 + $0x44] sm:$0xf]
      %v1159 = vld [vmem:[%s1140 + $0x48] sm:$0xf]
      %v1160 = vld [vmem:[%s1140 + $0x4c] sm:$0xf]
      %v1161 = vld [vmem:[%s1140 + $0x50] sm:$0xf]
      %v1162 = vld [vmem:[%s1140 + $0x54] sm:$0xf]
      %v1163 = vld [vmem:[%s1140 + $0x58] sm:$0xf]
      %v1164 = vld [vmem:[%s1140 + $0x5c] sm:$0xf]
      %v1165 = vld [vmem:[%s1140 + $0x60] sm:$0xf]
      %v1166 = vld [vmem:[%s1140 + $0x64] sm:$0xf]
      %v1167 = vld [vmem:[%s1140 + $0x68] sm:$0xf]
      %v1168 = vld [vmem:[%s1140 + $0x6c] sm:$0xf]
      %v1169 = vld [vmem:[%s1140 + $0x70] sm:$0xf]
      %v1170 = vld [vmem:[%s1140 + $0x74] sm:$0xf]
      %v1171 = vld [vmem:[%s1140 + $0x78] sm:$0xf]
      %v1172 = vld [vmem:[%s1140 + $0x7c] sm:$0xf]
      %v1173 = vld [vmem:[%s1140 + $0x80] sm:$0xf]
      %v1174 = vld [vmem:[%s1140 + $0x84] sm:$0xf]
      %v1175 = vld [vmem:[%s1140 + $0x88] sm:$0xf]
      %v1176 = vld [vmem:[%s1140 + $0x8c] sm:$0xf]
      %v1177 = vld [vmem:[%s1140 + $0x90] sm:$0xf]
      %v1178 = vld [vmem:[%s1140 + $0x94] sm:$0xf]
      %v1179 = vld [vmem:[%s1140 + $0x98] sm:$0xf]
      %v1180 = vld [vmem:[%s1140 + $0x9c] sm:$0xf]
      %v1181 = vld [vmem:[%s1140 + $0xa0] sm:$0xf]
      %v1182 = vld [vmem:[%s1140 + $0xa4] sm:$0xf]
      %v1183 = vld [vmem:[%s1140 + $0xa8] sm:$0xf]
      %v1184 = vld [vmem:[%s1140 + $0xac] sm:$0xf]
      %v1185 = vld [vmem:[%s1140 + $0xb0] sm:$0xf]
      %v1186 = vld [vmem:[%s1140 + $0xb4] sm:$0xf]
      %v1187 = vld [vmem:[%s1140 + $0xb8] sm:$0xf]
      %v1188 = vld [vmem:[%s1140 + $0xbc] sm:$0xf]
      %v1189 = vpack.c.b16 %v303, %v301
      %v1190 = vpack.c.b16 %v1138, %v765
      %v1191 = vpack.c.b16 %v1139, %v766
      %v1243 = vunpack.c.l.b16 %v1141
      %v1244 = vunpack.c.l.b16 %v1142
      %v1245 = vunpack.c.l.b16 %v1143
      %v1246 = vunpack.c.l.b16 %v1144
      %v1247 = vunpack.c.l.b16 %v1145
      %v1248 = vunpack.c.l.b16 %v1146
      %v1249 = vunpack.c.l.b16 %v1147
      %v1250 = vunpack.c.l.b16 %v1148
      %v1251 = vunpack.c.l.b16 %v1149
      %v1252 = vunpack.c.l.b16 %v1150
      %v1253 = vunpack.c.l.b16 %v1151
      %v1254 = vunpack.c.l.b16 %v1152
      %v1255 = vunpack.c.l.b16 %v1153
      %v1256 = vunpack.c.l.b16 %v1154
      %v1257 = vunpack.c.l.b16 %v1155
      %v1258 = vunpack.c.l.b16 %v1156
      %v1259 = vunpack.c.l.b16 %v1157
      %v1260 = vunpack.c.l.b16 %v1158
      %v1261 = vunpack.c.l.b16 %v1159
      %v1262 = vunpack.c.l.b16 %v1160
      %v1263 = vunpack.c.l.b16 %v1161
      %v1264 = vunpack.c.l.b16 %v1162
      %v1265 = vunpack.c.l.b16 %v1163
      %v1266 = vunpack.c.l.b16 %v1164
      %v1267 = vunpack.c.l.b16 %v1165
      %v1268 = vunpack.c.l.b16 %v1166
      %v1269 = vunpack.c.l.b16 %v1167
      %v1270 = vunpack.c.l.b16 %v1168
      %v1271 = vunpack.c.l.b16 %v1169
      %v1272 = vunpack.c.l.b16 %v1170
      %v1273 = vunpack.c.l.b16 %v1171
      %v1274 = vunpack.c.l.b16 %v1172
      %v1275 = vunpack.c.l.b16 %v1173
      %v1276 = vunpack.c.l.b16 %v1174
      %v1277 = vunpack.c.l.b16 %v1175
      %v1278 = vunpack.c.l.b16 %v1176
      %v1279 = vunpack.c.l.b16 %v1177
      %v1280 = vunpack.c.l.b16 %v1178
      %v1281 = vunpack.c.l.b16 %v1179
      %v1282 = vunpack.c.l.b16 %v1180
      %v1283 = vunpack.c.l.b16 %v1181
      %v1284 = vunpack.c.l.b16 %v1182
      %v1285 = vunpack.c.l.b16 %v1183
      %v1286 = vunpack.c.l.b16 %v1184
      %v1287 = vunpack.c.l.b16 %v1185
      %v1288 = vunpack.c.l.b16 %v1186
      %v1289 = vunpack.c.l.b16 %v1187
      %v1290 = vunpack.c.l.b16 %v1188
      %v1291 = vpack.c.b16 %v1244, %v1243
      %v1292 = vpack.c.b16 %v1246, %v1245
      %v1293 = vpack.c.b16 %v1248, %v1247
      %v1294 = vpack.c.b16 %v1250, %v1249
      %v1295 = vpack.c.b16 %v1252, %v1251
      %v1296 = vpack.c.b16 %v1254, %v1253
      %v1297 = vpack.c.b16 %v1256, %v1255
      %v1298 = vpack.c.b16 %v1258, %v1257
      %v1299 = vpack.c.b16 %v1260, %v1259
      %v1300 = vpack.c.b16 %v1262, %v1261
      %v1301 = vpack.c.b16 %v1264, %v1263
      %v1302 = vpack.c.b16 %v1266, %v1265
      %v1303 = vpack.c.b16 %v1268, %v1267
      %v1304 = vpack.c.b16 %v1270, %v1269
      %v1305 = vpack.c.b16 %v1272, %v1271
      %v1306 = vpack.c.b16 %v1274, %v1273
      %v1307 = vpack.c.b16 %v1276, %v1275
      %v1308 = vpack.c.b16 %v1278, %v1277
      %v1309 = vpack.c.b16 %v1280, %v1279
      %v1310 = vpack.c.b16 %v1282, %v1281
      %v1311 = vpack.c.b16 %v1284, %v1283
      %v1312 = vpack.c.b16 %v1286, %v1285
      %v1313 = vpack.c.b16 %v1288, %v1287
      %v1314 = vpack.c.b16 %v1290, %v1289
      %1339 = vmatprep.subr.bf16.mxu0 0
      %1340 = vmatpush1.bf16.msra.mxu0 %v1298
      %1341 = vmatprep.subr.bf16.mxu0 0
      %1342 = vmatpush1.bf16.msra.mxu0 %v1297
      %1343 = vmatprep.subr.bf16.mxu0 0
      %1344 = vmatpush1.bf16.msra.mxu0 %v1296
      %1345 = vmatprep.subr.bf16.mxu0 0
      %1346 = vmatpush1.bf16.msra.mxu0 %v1295
      %1347 = vmatprep.subr.bf16.mxu0 0
      %1348 = vmatpush1.bf16.msra.mxu0 %v1294
      %1349 = vmatprep.subr.bf16.mxu0 0
      %1350 = vmatpush1.bf16.msra.mxu0 %v1293
      %1351 = vmatprep.subr.bf16.mxu0 0
      %1352 = vmatpush1.bf16.msra.mxu0 %v1292
      %1353 = vmatprep.subr.bf16.mxu0 0
      %1354 = vmatpush1.bf16.msra.mxu0 %v1291
      %1355 = vmatprep.subr.bf16.mxu0 0
      %1356 = vmatpush2.bf16.msra.mxu0 %v1306
      %1357 = vmatprep.subr.bf16.mxu0 0
      %1358 = vmatpush2.bf16.msra.mxu0 %v1305
      %1359 = vmatprep.subr.bf16.mxu0 0
      %1360 = vmatpush2.bf16.msra.mxu0 %v1304
      %1361 = vmatprep.subr.bf16.mxu0 0
      %1362 = vmatpush2.bf16.msra.mxu0 %v1303
      %1363 = vmatprep.subr.bf16.mxu0 0
      %1364 = vmatpush2.bf16.msra.mxu0 %v1302
      %1365 = vmatprep.subr.bf16.mxu0 0
      %1366 = vmatpush2.bf16.msra.mxu0 %v1301
      %1367 = vmatprep.subr.bf16.mxu0 0
      %1368 = vmatpush2.bf16.msra.mxu0 %v1300
      %1369 = vmatprep.subr.bf16.mxu0 0
      %1370 = vmatpush2.bf16.msra.mxu0 %v1299
      %1371 = vmatprep.mubr.bf16.mxu0 %v463
      %1372 = vmatmul.mubr.bf16.gmra.mxu0 %v462
      %v1373 = vpop.f32.mrf.mxu0
      %v1374 = vadd.f32 0.0, %v1373
      %v1375 = vpop.f32.mrf.mxu0
      %v1376 = vpop.f32.mrf.mxu0
      %v1377 = vadd.f32 0.0, %v1376
      %v1378 = vpop.f32.mrf.mxu0
      %1379 = vmatprep.mubr.bf16.mxu0 %v466
      %1380 = vmatmul.mubr.bf16.gmra.mxu0 %v465
      %v1381 = vpop.f32.mrf.mxu0
      %v1382 = vadd.f32 0.0, %v1381
      %v1383 = vpop.f32.mrf.mxu0
      %v1384 = vpop.f32.mrf.mxu0
      %v1385 = vadd.f32 0.0, %v1384
      %v1386 = vpop.f32.mrf.mxu0
      %1387 = vmatprep.mubr.bf16.mxu0 %v469
      %1388 = vmatmul.mubr.bf16.gmra.mxu0 %v468
      %v1389 = vpop.f32.mrf.mxu0
      %v1390 = vadd.f32 0.0, %v1389
      %v1391 = vpop.f32.mrf.mxu0
      %v1392 = vpop.f32.mrf.mxu0
      %v1393 = vadd.f32 0.0, %v1392
      %v1394 = vpop.f32.mrf.mxu0
      %1395 = vmatprep.mubr.bf16.mxu0 %v1190
      %1396 = vmatmul.mubr.bf16.gmra.mxu0 %v1189
      %v1397 = vpop.f32.mrf.mxu0
      %v1398 = vadd.f32 0.0, %v1397
      %v1399 = vpop.f32.mrf.mxu0
      %v1400 = vpop.f32.mrf.mxu0
      %v1401 = vadd.f32 0.0, %v1400
      %v1402 = vpop.f32.mrf.mxu0
      %1403 = vdwg.mxu0
      %1404 = vmatprep.subr.bf16.mxu0 0
      %1405 = vmatpush1.bf16.msra.mxu0 %v1314
      %1406 = vmatprep.subr.bf16.mxu0 0
      %1407 = vmatpush1.bf16.msra.mxu0 %v1313
      %1408 = vmatprep.subr.bf16.mxu0 0
      %1409 = vmatpush1.bf16.msra.mxu0 %v1312
      %1410 = vmatprep.subr.bf16.mxu0 0
      %1411 = vmatpush1.bf16.msra.mxu0 %v1311
      %1412 = vmatprep.subr.bf16.mxu0 0
      %1413 = vmatpush1.bf16.msra.mxu0 %v1310
      %1414 = vmatprep.subr.bf16.mxu0 0
      %1415 = vmatpush1.bf16.msra.mxu0 %v1309
      %1416 = vmatprep.subr.bf16.mxu0 0
      %1417 = vmatpush1.bf16.msra.mxu0 %v1308
      %1418 = vmatprep.subr.bf16.mxu0 0
      %1419 = vmatpush1.bf16.msra.mxu0 %v1307
      %1420 = vmatprep.subr.bf16.mxu0 0
      %1421 = vmatpush2.bf16.msra.mxu0 0
      %1422 = vmatprep.subr.bf16.mxu0 0
      %1423 = vmatpush2.bf16.msra.mxu0 0
      %1424 = vmatprep.subr.bf16.mxu0 0
      %1425 = vmatpush2.bf16.msra.mxu0 0
      %1426 = vmatprep.subr.bf16.mxu0 0
      %1427 = vmatpush2.bf16.msra.mxu0 0
      %1428 = vmatprep.subr.bf16.mxu0 0
      %1429 = vmatpush2.bf16.msra.mxu0 0
      %1430 = vmatprep.subr.bf16.mxu0 0
      %1431 = vmatpush2.bf16.msra.mxu0 0
      %1432 = vmatprep.subr.bf16.mxu0 0
      %1433 = vmatpush2.bf16.msra.mxu0 0
      %1434 = vmatprep.subr.bf16.mxu0 0
      %1435 = vmatpush2.bf16.msra.mxu0 0
      %1436 = vmatprep.mubr.bf16.mxu0 0
      %1437 = vmatmul.mubr.bf16.gmra.mxu0 %v464
      %v1438 = vpop.f32.mrf.mxu0
      %v1439 = vadd.f32 %v1374, %v1438
      %v1440 = vpop.f32.mrf.mxu0
      %v1441 = vpop.f32.mrf.mxu0
      %v1442 = vadd.f32 %v1377, %v1441
      %v1443 = vpop.f32.mrf.mxu0
      %1444 = vmatprep.mubr.bf16.mxu0 0
      %1445 = vmatmul.mubr.bf16.gmra.mxu0 %v467
      %v1446 = vpop.f32.mrf.mxu0
      %v1447 = vadd.f32 %v1382, %v1446
      %v1448 = vpop.f32.mrf.mxu0
      %v1449 = vpop.f32.mrf.mxu0
      %v1450 = vadd.f32 %v1385, %v1449
      %v1451 = vpop.f32.mrf.mxu0
      %1452 = vmatprep.mubr.bf16.mxu0 0
      %1453 = vmatmul.mubr.bf16.gmra.mxu0 %v470
      %v1454 = vpop.f32.mrf.mxu0
      %v1455 = vadd.f32 %v1390, %v1454
      %v1456 = vpop.f32.mrf.mxu0
      %v1457 = vpop.f32.mrf.mxu0
      %v1458 = vadd.f32 %v1393, %v1457
      %v1459 = vpop.f32.mrf.mxu0
      %1460 = vmatprep.mubr.bf16.mxu0 0
      %1461 = vmatmul.mubr.bf16.gmra.mxu0 %v1191
      %v1462 = vpop.f32.mrf.mxu0
      %v1463 = vadd.f32 %v1398, %v1462
      %v1464 = vpop.f32.mrf.mxu0
      %v1465 = vpop.f32.mrf.mxu0
      %v1466 = vadd.f32 %v1401, %v1465
      %v1467 = vpop.f32.mrf.mxu0
      %1468 = vdwg.mxu0
      %v1469 = vld [vmem:[#allocation2] sm:$0xff]
      %v1470 = vld [vmem:[#allocation2 + $0x8] sm:$0xff]
      %v1471 = vld [vmem:[#allocation2 + $0x10] sm:$0xff]
      %v1472 = vld [vmem:[#allocation2 + $0x18] sm:$0xff]
      %v1473 = vld [vmem:[#allocation2 + $0x20] sm:$0xff]
      %v1474 = vld [vmem:[#allocation2 + $0x28] sm:$0xff]
      %v1475 = vld [vmem:[#allocation2 + $0x30] sm:$0xff]
      %v1476 = vld [vmem:[#allocation2 + $0x38] sm:$0xff]
      %v1477 = vadd.f32 %v1469, %v1439
      %v1478 = vadd.f32 %v1470, %v1442
      %v1479 = vadd.f32 %v1471, %v1447
      %v1480 = vadd.f32 %v1472, %v1450
      %v1481 = vadd.f32 %v1473, %v1455
      %v1482 = vadd.f32 %v1474, %v1458
      %v1483 = vadd.f32 %v1475, %v1463
      %v1484 = vadd.f32 %v1476, %v1466
      %1485 = vst [vmem:[#allocation2] sm:$0xff] %v1477
      %1486 = vst [vmem:[#allocation2 + $0x8] sm:$0xff] %v1478
      %1487 = vst [vmem:[#allocation2 + $0x10] sm:$0xff] %v1479
      %1488 = vst [vmem:[#allocation2 + $0x18] sm:$0xff] %v1480
      %1489 = vst [vmem:[#allocation2 + $0x20] sm:$0xff] %v1481
      %1490 = vst [vmem:[#allocation2 + $0x28] sm:$0xff] %v1482
      %1491 = vst [vmem:[#allocation2 + $0x30] sm:$0xff] %v1483
      %1492 = vst [vmem:[#allocation2 + $0x38] sm:$0xff] %v1484
      %v1493 = vld [vmem:[#allocation2] sm:$0xff]
      %v1494 = vld [vmem:[#allocation2 + $0x8] sm:$0xff]
      %v1495 = vld [vmem:[#allocation2 + $0x10] sm:$0xff]
      %v1496 = vld [vmem:[#allocation2 + $0x18] sm:$0xff]
      %v1497 = vld [vmem:[#allocation2 + $0x20] sm:$0xff]
      %v1498 = vld [vmem:[#allocation2 + $0x28] sm:$0xff]
      %v1499 = vld [vmem:[#allocation2 + $0x30] sm:$0xff]
      %v1500 = vld [vmem:[#allocation2 + $0x38] sm:$0xff]
      %v1501 = vld [vmem:[%s226] sm:$0x1]
      %v1503 = vlaneseq
      %v1504 = vshrl.u32 %v1503, 7
      %v1505 = vsub.s32 0, %v1504
      %v1506 = vrot.slane %v1501, %v1505
      %v1508 = vadd.f32 %v1493, %v1506
      %v1509 = vadd.f32 %v1494, %v1506
      %v1510 = vadd.f32 %v1495, %v1506
      %v1511 = vadd.f32 %v1496, %v1506
      %v1512 = vadd.f32 %v1497, %v1506
      %v1513 = vadd.f32 %v1498, %v1506
      %v1514 = vadd.f32 %v1499, %v1506
      %v1515 = vadd.f32 %v1500, %v1506
      %v1516 = vpack.c.bf16 %v1508, %v1508
      %v1517 = vpack.c.bf16 %v1509, %v1509
      %v1518 = vpack.c.bf16 %v1510, %v1510
      %v1519 = vpack.c.bf16 %v1511, %v1511
      %v1520 = vpack.c.bf16 %v1512, %v1512
      %v1521 = vpack.c.bf16 %v1513, %v1513
      %v1522 = vpack.c.bf16 %v1514, %v1514
      %v1523 = vpack.c.bf16 %v1515, %v1515
      %1524 = vst [vmem:[%s238] sm:$0xf] %v1516
      %1525 = vst [vmem:[%s238 + $0x4] sm:$0xf] %v1517
      %1526 = vst [vmem:[%s238 + $0x8] sm:$0xf] %v1518
      %1527 = vst [vmem:[%s238 + $0xc] sm:$0xf] %v1519
      %1528 = vst [vmem:[%s238 + $0x10] sm:$0xf] %v1520
      %1529 = vst [vmem:[%s238 + $0x14] sm:$0xf] %v1521
      %1530 = vst [vmem:[%s238 + $0x18] sm:$0xf] %v1522
      %1531 = vst [vmem:[%s238 + $0x1c] sm:$0xf] %v1523
      %s1532 = smul.u32 8, %s20
      %p1533 = scmp.lt.s32.totalorder %s19, 1
      %s1534 = scalar_select %p1533, %s19, 1
      %p1535 = scmp.lt.s32.totalorder %s1532, 7
      %s1536 = scalar_select %p1535, %s1532, 7
      %p1537 = scmp.lt.s32.totalorder %s21, 0
      %s1538 = scalar_select %p1537, %s21, 0
      %s1539 = sadd.s32 %s1538, %s1536
      %s1540 = smul.addr %s1534, 8
      %s1541 = sadd.s32 %s1539, %s1540
      %s1542 = smul.addr %s1541, 4
      %s1543 = scalar_lea.vmem %s3, %s1542
      // Predicated region
      $region33: #{vgg_distance.26} parent=31 // pred_check
        %p1544 = pneg %p133
      $region34: #{vgg_distance.26} parent=31 // pred_check_branch
        %1546 = sbr.rel (%p1544) target = $region36
      $region35: #{vgg_distance.26} parent=31 // pred_region
        %s1547 = smul.u32 8, %s20
      $region36: #{vgg_distance.26} parent=31 // pred_fallthru
        _
    $region32: #{vgg_distance.26} parent=5 // pred_fallthru
      _
    %p1548 = scmp.le.s32.totalorder 2, %s9
    // Predicated region
    $region37: #{vgg_distance.26} parent=5 // pred_check
      %p1549 = pneg %p1548
    $region38: #{vgg_distance.26} parent=5 // pred_check_branch
      %1551 = sbr.rel (%p1549) target = $region40
    $region39: #{vgg_distance.26} parent=5 // pred_region
      %s1552 = ssub.s32 %s9, 2
      // Predicated region
      $region41: #{vgg_distance.26} parent=39 // pred_check
        %p1553 = pneg %p139
      $region42: #{vgg_distance.26} parent=39 // pred_check_branch
        %1555 = sbr.rel (%p1553) target = $region44
      $region43: #{vgg_distance.26} parent=39 // pred_region
        %s1556 = smul.u32 8, %s23
        %p1557 = scmp.lt.s32.totalorder %s22, 1
        %s1558 = scalar_select %p1557, %s22, 1
        %p1559 = scmp.lt.s32.totalorder %s1556, 7
        %s1560 = scalar_select %p1559, %s1556, 7
        %p1561 = scmp.lt.s32.totalorder %s24, 0
        %s1562 = scalar_select %p1561, %s24, 0
        %s1563 = sadd.s32 %s1562, %s1560
        %s1564 = smul.addr %s1558, 8
        %s1565 = sadd.s32 %s1563, %s1564
        %s1566 = smul.addr %s1565, 4
        %s1567 = scalar_lea.vmem %s3, %s1566
      $region44: #{vgg_distance.26} parent=39 // pred_fallthru
        _
    $region40: #{vgg_distance.26} parent=5 // pred_fallthru
      _
  $region6: #{vgg_distance.26} parent=0 // loop_footer
    %s13 = sadd.s32 1, %s9
  $region7: #{vgg_distance.26} parent=0 // loop_footer_branch
    %8 = sbr.rel target = $region3
  $region8: #{vgg_distance.26} parent=0 // loop_exit
    _

</llo_original>
